<compile_context>
chip_gen: v7x
topology: tpu7x:2x2x1
jax: 0.10.0
libtpu: 0.0.40
codegen_flags: <defaults>
</compile_context>

<pallas_src>
import math

import jax
import jax.numpy as jnp
import numpy as np
from jax.experimental import pallas as pl
from jax.experimental.pallas import tpu as pltpu


# ----------------------------------------------------------------------------
# Kernel
# ----------------------------------------------------------------------------
def _pe_kernel(v_ref, dim1h_ref, tab_ref, out_ref):
    """One batch tile (all shapes in the lane-repacked layout).

    v_ref:     (TBr, Nw) f32   repacked input block (R original rows per row)
    dim1h_ref: (Nw, Ew)  f32   block-diagonal one-hot expansion matrix
    tab_ref:   (8,  Ew)  f32   row 0: coeff (2*pi*sigma**(k/M), 0 on id cols)
                               row 1: phase offset (0 cos cols, -pi/2 sin cols)
                               row 2: amplitude (w on trig cols, 0 on id cols)
                               row 3: identity selector (1 on id cols, else 0)
    out_ref:   (TBr, Ew) f32
    """
    # Expand v to the full encoding width with one MXU matmul.  The one-hot
    # matrix has only 0/1 entries and exactly one non-zero per column, so with
    # HIGHEST precision the result is the exact f32 value of v.
    v_full = jnp.dot(v_ref[...], dim1h_ref[...],
                     preferred_element_type=jnp.float32,
                     precision=jax.lax.Precision.HIGHEST)

    coeff = tab_ref[0:1, :]
    phase = tab_ref[1:2, :]
    amp = tab_ref[2:3, :]
    selv = tab_ref[3:4, :]

    # Single wide transcendental (sin(x) == cos(x - pi/2) via phase table),
    # followed by one lane-dense store of the whole tile.
    out_ref[...] = selv * v_full + amp * jnp.cos(v_full * coeff + phase)


# ----------------------------------------------------------------------------
# Constant-table construction (host-side numpy glue)
# ----------------------------------------------------------------------------
def _freq_constants(sigma, n_freqs, alpha):
    """coeffs[k] = 2*pi*sigma**(k/M); weight[k] = coarse-to-fine window."""
    k = np.arange(n_freqs, dtype=np.float64)
    w = 0.5 * (1.0 - np.cos((alpha * n_freqs - k) * np.pi))
    w = np.where(alpha * n_freqs < k, 0.0, w)
    w = np.where(alpha * n_freqs - k >= 1.0, 1.0, w)
    coeffs = 2.0 * np.pi * np.power(float(sigma), k / n_freqs)
    return coeffs.astype(np.float32), w.astype(np.float32)


def _build_tables(*, sigma, n_freqs, n_input, alpha, repeat):
    """Per-output-column constants, tiled `repeat` times along lanes."""
    m, n = n_freqs, n_input
    enc = (2 * m + 1) * n
    coeffs, weight = _freq_constants(sigma, m, alpha)

    col = np.arange(enc)
    is_id = col < n
    t = np.where(is_id, 0, col - n)                 # tail offset (0 on id cols)
    dim_idx = np.where(is_id, col, t // (2 * m))    # which input dim feeds this col
    within = t % (2 * m)
    is_cos = (~is_id) & (within < m)
    is_sin = (~is_id) & (within >= m)
    kk = np.clip(np.where(is_cos, within, within - m), 0, m - 1)

    coeff_col = np.where(is_id, 0.0, coeffs[kk]).astype(np.float32)
    amp_col = np.where(is_id, 0.0, weight[kk]).astype(np.float32)
    phase_col = np.where(is_sin, -np.pi / 2.0, 0.0).astype(np.float32)
    selv_col = is_id.astype(np.float32)

    ew = repeat * enc
    tab = np.zeros((8, ew), dtype=np.float32)
    tab[0] = np.tile(coeff_col, repeat)
    tab[1] = np.tile(phase_col, repeat)
    tab[2] = np.tile(amp_col, repeat)
    tab[3] = np.tile(selv_col, repeat)

    onehot = (dim_idx[None, :] == np.arange(n)[:, None]).astype(np.float32)  # (n, enc)
    dim1h = np.zeros((repeat * n, ew), dtype=np.float32)
    for r in range(repeat):
        dim1h[r * n:(r + 1) * n, r * enc:(r + 1) * enc] = onehot

    return jnp.asarray(dim1h), jnp.asarray(tab)


# ----------------------------------------------------------------------------
# Wrapper
# ----------------------------------------------------------------------------
def positional_encoding(v, *, sigma, n_freqs, alpha=None, block_rows=None):
    """v: (n_batch, n_input) -> (n_batch, (2*n_freqs+1)*n_input), float32."""
    v = jnp.asarray(v, jnp.float32)
    n_batch, n_input = v.shape
    if alpha is None:
        alpha = 1.0
    m = int(n_freqs)
    enc = (2 * m + 1) * n_input

    def cdiv(a, b):
        return -(-a // b)

    def rup(a, b):
        return cdiv(a, b) * b

    # Lane repack factor: fold R batch rows into the lane axis so the working
    # last dim R*enc is a multiple of 128 (dense vregs, unmasked stores).
    # Bound the one-hot expansion matrix (R*n, R*enc) to a few MiB.
    R = 128 // math.gcd(enc, 128)
    while R > 1 and (R * n_input) * (R * enc) * 4 > (4 << 20):
        R //= 2
    nw = R * n_input
    ew = R * enc

    dim1h, tab = _build_tables(sigma=sigma, n_freqs=m, n_input=n_input,
                               alpha=float(alpha), repeat=R)

    # ---- batch tiling (in repacked-row units) -----------------------------
    br_min = cdiv(n_batch, R)
    # Double-buffered in+out blocks must fit a conservative VMEM budget
    # (safe on v7x's 32 MiB scoped default; we request 32 MiB explicitly).
    budget = 22 << 20
    cap = max(8, (budget // (8 * (nw + ew))) // 8 * 8)

    if block_rows is not None:
        tbr = max(8, (int(block_rows) // R) // 8 * 8)
    elif br_min >= 16:
        # Aim for >= 8 grid steps so "parallel" megacore sharding and the
        # BlockSpec DMA pipeline both have work to overlap.
        tbr = rup(cdiv(br_min, 8), 8)
    else:
        tbr = br_min                      # single full-extent block (allowed)
    tbr = min(tbr, cap)

    if tbr >= br_min:
        tbr = br_min
        br = br_min
    else:
        br = rup(br_min, tbr)
    grid = (br // tbr,)

    # Pad batch so the repack + tiling are exact; slice the result afterwards.
    b_pad = br * R
    if b_pad != n_batch:
        v = jnp.pad(v, ((0, b_pad - n_batch), (0, 0)))
    v_rep = v.reshape(br, nw)             # free metadata reshape (row-major)

    out_rep = pl.pallas_call(
        _pe_kernel,
        out_shape=jax.ShapeDtypeStruct((br, ew), jnp.float32),
        grid=grid,
        in_specs=[
            pl.BlockSpec((tbr, nw), lambda i: (i, 0)),
            pl.BlockSpec((nw, ew), lambda i: (0, 0)),
            pl.BlockSpec((8, ew), lambda i: (0, 0)),
        ],
        out_specs=pl.BlockSpec((tbr, ew), lambda i: (i, 0)),
        compiler_params=pltpu.CompilerParams(
            dimension_semantics=("parallel",),
            vmem_limit_bytes=32 << 20),
    )(v_rep, dim1h, tab)

    out = out_rep.reshape(b_pad, enc)
    if b_pad != n_batch:
        out = out[:n_batch]
    return out


# ----------------------------------------------------------------------------
# Pure-JAX reference mirroring the PyTorch forward
# ----------------------------------------------------------------------------
def positional_encoding_ref(v, *, sigma, n_freqs, alpha=None):
    if alpha is None:
        alpha = 1.0
    v = jnp.asarray(v, jnp.float32)
    coeffs, weight = _freq_constants(sigma, n_freqs, float(alpha))
    coeffs = jnp.asarray(coeffs)
    weight = jnp.asarray(weight)
    vp = coeffs[None, None, :] * v[:, :, None]
    vp_cat = jnp.concatenate([weight[None, None, :] * jnp.cos(vp),
                              weight[None, None, :] * jnp.sin(vp)], axis=-1)
    out = vp_cat.reshape(v.shape[0], -1)
    return jnp.concatenate([v, out], axis=-1)


if __name__ == "__main__":
    key = jax.random.PRNGKey(0)

    # Case 1: typical NeRF-like config, multi-step parallel grid + batch padding.
    sigma, n_freqs, n_input, batch = 10.0, 8, 4, 520
    v1 = jax.random.uniform(key, (batch, n_input), dtype=jnp.float32)
    o1 = jax.block_until_ready(
        positional_encoding(v1, sigma=sigma, n_freqs=n_freqs, alpha=None))
    r1 = positional_encoding_ref(v1, sigma=sigma, n_freqs=n_freqs, alpha=None)
    np.testing.assert_allclose(np.asarray(o1), np.asarray(r1), rtol=1e-5, atol=2e-5)
    assert o1.shape == (batch, (2 * n_freqs + 1) * n_input)

    # Case 2: partial alpha (coarse-to-fine window), small batch, single tile.
    v2 = jax.random.uniform(jax.random.PRNGKey(1), (96, 4), dtype=jnp.float32)
    o2 = jax.block_until_ready(
        positional_encoding(v2, sigma=sigma, n_freqs=8, alpha=0.55))
    r2 = positional_encoding_ref(v2, sigma=sigma, n_freqs=8, alpha=0.55)
    np.testing.assert_allclose(np.asarray(o2), np.asarray(r2), rtol=1e-5, atol=2e-5)

    # Case 3: different encoding width (different lane-repack factor R).
    v3 = jax.random.uniform(jax.random.PRNGKey(2), (200, 2), dtype=jnp.float32)
    o3 = jax.block_until_ready(
        positional_encoding(v3, sigma=5.0, n_freqs=4, alpha=None))
    r3 = positional_encoding_ref(v3, sigma=5.0, n_freqs=4, alpha=None)
    np.testing.assert_allclose(np.asarray(o3), np.asarray(r3), rtol=1e-5, atol=2e-5)

    print("KERNEL_OK")
</pallas_src>

<mosaic_0001>
module attributes {stable_mosaic.version = 11 : i64} {
  func.func @_pe_kernel(%arg0: i32, %arg1: memref<8x128xf32, #tpu.memory_space<vmem>>, %arg2: memref<128x2176xf32, #tpu.memory_space<vmem>>, %arg3: memref<8x2176xf32, #tpu.memory_space<vmem>>, %arg4: memref<8x2176xf32, #tpu.memory_space<vmem>>) attributes {dimension_semantics = [#tpu.dimension_semantics<parallel>], iteration_bounds = array<i64: 3>, scalar_prefetch = 0 : i64, scratch_operands = 0 : i64, tpu.core_type = #tpu.core_type<tc>, window_params = [{transform_indices = @transform_0, window_bounds = array<i64: 8, 128>}, {pipeline_mode = #tpu.pipeline_mode<synchronous>, transform_indices = @transform_1, window_bounds = array<i64: 128, 2176>}, {pipeline_mode = #tpu.pipeline_mode<synchronous>, transform_indices = @transform_2, window_bounds = array<i64: 8, 2176>}, {transform_indices = @transform_3, window_bounds = array<i64: 8, 2176>}]} {
    %c0 = arith.constant 0 : index
    %c0_0 = arith.constant 0 : index
    %0 = vector.load %arg1[%c0, %c0_0] : memref<8x128xf32, #tpu.memory_space<vmem>>, vector<8x128xf32>
    %c0_1 = arith.constant 0 : index
    %c0_2 = arith.constant 0 : index
    %1 = vector.load %arg2[%c0_1, %c0_2] : memref<128x2176xf32, #tpu.memory_space<vmem>>, vector<128x2176xf32>
    %cst = arith.constant dense<0.000000e+00> : vector<8x2176xf32>
    %2 = tpu.matmul %0, %1, %cst {dimension_numbers = #tpu.dot_dimension_numbers<[1], [0], [0], [1], [0, 0, 1, 1], [], []>, precision = #tpu.contract_precision<fp32>} : vector<8x128xf32>, vector<128x2176xf32>, vector<8x2176xf32> -> vector<8x2176xf32>
    %c0_3 = arith.constant 0 : index
    %c0_4 = arith.constant 0 : index
    %3 = vector.load %arg3[%c0_3, %c0_4] : memref<8x2176xf32, #tpu.memory_space<vmem>>, vector<1x2176xf32>
    %c1 = arith.constant 1 : index
    %c0_5 = arith.constant 0 : index
    %4 = vector.load %arg3[%c1, %c0_5] : memref<8x2176xf32, #tpu.memory_space<vmem>>, vector<1x2176xf32>
    %c2 = arith.constant 2 : index
    %c0_6 = arith.constant 0 : index
    %5 = vector.load %arg3[%c2, %c0_6] : memref<8x2176xf32, #tpu.memory_space<vmem>>, vector<1x2176xf32>
    %c3 = arith.constant 3 : index
    %c0_7 = arith.constant 0 : index
    %6 = vector.load %arg3[%c3, %c0_7] : memref<8x2176xf32, #tpu.memory_space<vmem>>, vector<1x2176xf32>
    %7 = vector.broadcast %6 : vector<1x2176xf32> to vector<8x2176xf32>
    %8 = arith.mulf %7, %2 : vector<8x2176xf32>
    %9 = vector.broadcast %3 : vector<1x2176xf32> to vector<8x2176xf32>
    %10 = arith.mulf %2, %9 : vector<8x2176xf32>
    %11 = vector.broadcast %4 : vector<1x2176xf32> to vector<8x2176xf32>
    %12 = arith.addf %10, %11 : vector<8x2176xf32>
    %13 = math.cos %12 : vector<8x2176xf32>
    %14 = vector.broadcast %5 : vector<1x2176xf32> to vector<8x2176xf32>
    %15 = arith.mulf %14, %13 : vector<8x2176xf32>
    %16 = arith.addf %8, %15 : vector<8x2176xf32>
    %c0_8 = arith.constant 0 : index
    %c0_9 = arith.constant 0 : index
    %17 = vector.load %arg4[%c0_8, %c0_9] : memref<8x2176xf32, #tpu.memory_space<vmem>>, vector<8x2176xf32>
    tpu.vector_store %arg4[%c0_8, %c0_9], %16 {strides = array<i32>} : memref<8x2176xf32, #tpu.memory_space<vmem>>, vector<8x2176xf32>,
    return
  }
  func.func @transform_0(%arg0: i32) -> (i32, i32) {
    %c0_i32 = arith.constant 0 : i32
    %c0_i32_0 = arith.constant 0 : i32
    return %arg0, %c0_i32 : i32, i32
  }
  func.func @transform_1(%arg0: i32) -> (i32, i32) {
    %c0_i32 = arith.constant 0 : i32
    %c0_i32_0 = arith.constant 0 : i32
    %c0_i32_1 = arith.constant 0 : i32
    return %c0_i32, %c0_i32_0 : i32, i32
  }
  func.func @transform_2(%arg0: i32) -> (i32, i32) {
    %c0_i32 = arith.constant 0 : i32
    %c0_i32_0 = arith.constant 0 : i32
    %c0_i32_1 = arith.constant 0 : i32
    return %c0_i32, %c0_i32_0 : i32, i32
  }
  func.func @transform_3(%arg0: i32) -> (i32, i32) {
    %c0_i32 = arith.constant 0 : i32
    %c0_i32_0 = arith.constant 0 : i32
    return %arg0, %c0_i32 : i32, i32
  }
}

</mosaic_0001>

<llo_original>
// kernel: tpu_custom_call.1
$region0: #{tpu_custom_call.1}
  #allocation0 [shape = 'u32[]', space=smem, size = 0x4, offset = 0x4, fixed_abs, tag = 'smem constant byte address 0x4 - core index']
  #allocation1 [shape = 'u32[144,128]{1,0:T(1,128)}', space=vmem, size = 0x12000, scoped, tag = 'internal scratch']
  %s0 = inlined_call_operand.hbm [shape: f32[24,128], index: 0, kind: input, shape index: {}]
  %s1 = inlined_call_operand.hbm [shape: f32[128,2176], index: 1, kind: input, shape index: {}]
  %s2 = inlined_call_operand.hbm [shape: f32[8,2176], index: 2, kind: input, shape index: {}]
  %s3 = inlined_call_operand.hbm [shape: f32[24,2176], index: 3, kind: output, shape index: {}]
  %s4 = sld [smem:[#allocation0]]
  $region57: #{tpu_custom_call.1} parent=0
    _
  %s6 = ssub.s32 1, %s4
  %s7 = scalar_select 0, %s6, %s4
  $region1: #{tpu_custom_call.1} parent=0
    #allocation2 [shape = 'u8[8192]{0}', space=vmem, size = 0x2000, scoped, tag = 'input window, operand 0']
    #allocation3 [shape = 's32[2]{0}', space=sflag, size = 0x8, scoped, tag = 'scoped memory for tpu_custom_call.1']
    #allocation4 [shape = 's32[2]{0}', space=sflag, size = 0x8, scoped, tag = 'scoped memory for tpu_custom_call.1']
    #allocation5 [shape = 'u8[1114112]{0}', space=vmem, size = 0x110000, scoped, tag = 'input window, operand 1, single buffered']
    #allocation6 [shape = 's32[1]{0}', space=sflag, size = 0x4, scoped, tag = 'scoped memory for tpu_custom_call.1']
    #allocation7 [shape = 'u8[69632]{0}', space=vmem, size = 0x11000, scoped, tag = 'input window, operand 2, single buffered']
    #allocation8 [shape = 'u8[139264]{0}', space=vmem, size = 0x22000, scoped, tag = 'output window, operand 0']
    %8 = vsyncpa [#allocation3], 0
    %s9 = scalar_lea.sflag [#allocation3], 1
    %10 = vsyncpa %s9, 0
    %11 = vsyncpa [#allocation6], 0
    %12 = vsyncpa [#allocation4], 0
    %s13 = scalar_lea.sflag [#allocation4], 1
    %14 = vsyncpa %s13, 0
    loop: start=0, step=1, limit=5
    $region2: #{tpu_custom_call.1} parent=1 // loop_pre_header
      _
    $region3: #{tpu_custom_call.1} parent=1 // loop_header
      %s16 = sphi 0, %s20
      %p17 = scmp.ge.s32.totalorder %s16, 5
      %s26 = sphi 0, %s28
      %s29 = sphi 0, %s26
      %s30 = sphi 0, %s29
      %s46 = sphi 0, %s30
      %s50 = sphi 0, %s50
      %s52 = sphi 0, %s50
      %s53 = sphi 0, %s52
      %s67 = sphi 0, %s53
      %s71 = sphi 0, %s71
      %s73 = sphi 0, %s71
      %s74 = sphi 0, %s73
      %s88 = sphi 0, %s74
      %s94 = sphi 0, %s96
      %s97 = sphi 0, %s94
      %s98 = sphi 0, %s97
      %s114 = sphi 0, %s98
    $region4: #{tpu_custom_call.1} parent=1 // loop_header_branch
      %19 = sbr.rel (%p17) target = $region8
    $region5: #{tpu_custom_call.1} parent=1 // loop_body
      %s21 = ssub.s32 %s16, 1
      %s22 = ssub.s32 %s16, 2
      %s23 = sadd.s32 %s16, 1
      %s24 = ssub.s32 %s16, %s23
      %p25 = scmp.eq.s32.totalorder %s24, 0
      %s27 = sadd.s32 %s26, 1
      %s28 = scalar_select %p25, %s26, %s27
      %p31 = pneg %p25
      %p32 = scmp.eq.s32.totalorder %s16, 2
      %p33 = por %p31, %p32
      %p34 = scmp.ne.s32.totalorder %s26, %s29
      %p35 = scmp.eq.s32.totalorder %s16, 0
      %p36 = por %p34, %p35
      %p37 = scmp.ne.s32.totalorder %s26, %s29
      %p38 = scmp.eq.s32.totalorder %s21, 2
      %p39 = por %p37, %p38
      %p40 = scmp.ne.s32.totalorder %s29, %s30
      %p41 = scmp.eq.s32.totalorder %s21, 0
      %p42 = por %p40, %p41
      %p43 = scmp.ne.s32.totalorder %s29, %s30
      %p44 = scmp.eq.s32.totalorder %s22, 2
      %p45 = por %p43, %p44
      %p47 = scmp.ne.s32.totalorder %s30, %s46
      %p48 = scmp.eq.s32.totalorder %s22, 0
      %p49 = por %p47, %p48
      %s51 = sadd.s32 %s50, 1
      %p54 = scmp.eq.s32.totalorder %s16, 2
      %p55 = scmp.ne.s32.totalorder %s50, %s52
      %p56 = scmp.eq.s32.totalorder %s16, 0
      %p57 = por %p55, %p56
      %p58 = scmp.ne.s32.totalorder %s50, %s52
      %p59 = scmp.eq.s32.totalorder %s21, 2
      %p60 = por %p58, %p59
      %p61 = scmp.ne.s32.totalorder %s52, %s53
      %p62 = scmp.eq.s32.totalorder %s21, 0
      %p63 = por %p61, %p62
      %p64 = scmp.ne.s32.totalorder %s52, %s53
      %p65 = scmp.eq.s32.totalorder %s22, 2
      %p66 = por %p64, %p65
      %p68 = scmp.ne.s32.totalorder %s53, %s67
      %p69 = scmp.eq.s32.totalorder %s22, 0
      %p70 = por %p68, %p69
      %s72 = sadd.s32 %s71, 1
      %p75 = scmp.eq.s32.totalorder %s16, 2
      %p76 = scmp.ne.s32.totalorder %s71, %s73
      %p77 = scmp.eq.s32.totalorder %s16, 0
      %p78 = por %p76, %p77
      %p79 = scmp.ne.s32.totalorder %s71, %s73
      %p80 = scmp.eq.s32.totalorder %s21, 2
      %p81 = por %p79, %p80
      %p82 = scmp.ne.s32.totalorder %s73, %s74
      %p83 = scmp.eq.s32.totalorder %s21, 0
      %p84 = por %p82, %p83
      %p85 = scmp.ne.s32.totalorder %s73, %s74
      %p86 = scmp.eq.s32.totalorder %s22, 2
      %p87 = por %p85, %p86
      %p89 = scmp.ne.s32.totalorder %s74, %s88
      %p90 = scmp.eq.s32.totalorder %s22, 0
      %p91 = por %p89, %p90
      %s92 = ssub.s32 %s16, %s23
      %p93 = scmp.eq.s32.totalorder %s92, 0
      %s95 = sadd.s32 %s94, 1
      %s96 = scalar_select %p93, %s94, %s95
      %p99 = pneg %p93
      %p100 = scmp.eq.s32.totalorder %s16, 2
      %p101 = por %p99, %p100
      %p102 = scmp.ne.s32.totalorder %s94, %s97
      %p103 = scmp.eq.s32.totalorder %s16, 0
      %p104 = por %p102, %p103
      %p105 = scmp.ne.s32.totalorder %s94, %s97
      %p106 = scmp.eq.s32.totalorder %s21, 2
      %p107 = por %p105, %p106
      %p108 = scmp.ne.s32.totalorder %s97, %s98
      %p109 = scmp.eq.s32.totalorder %s21, 0
      %p110 = por %p108, %p109
      %p111 = scmp.ne.s32.totalorder %s97, %s98
      %p112 = scmp.eq.s32.totalorder %s22, 2
      %p113 = por %p111, %p112
      %p115 = scmp.ne.s32.totalorder %s98, %s114
      %p116 = scmp.eq.s32.totalorder %s22, 0
      %p117 = por %p115, %p116
      %p118 = scmp.le.s32.totalorder 1, %s16
      %p119 = scmp.lt.s32.totalorder %s16, 4
      %p120 = pnand %p118, %p119
      %p121 = pneg %p120
      // Predicated region
      $region9: #{tpu_custom_call.1} parent=5 // pred_check
        _
      $region10: #{tpu_custom_call.1} parent=5 // pred_check_branch
        %123 = sbr.rel (%p120) target = $region12
      $region11: #{tpu_custom_call.1} parent=5 // pred_region
        %s124 = ssub.s32 %s16, 1
        // Predicated region
        $region13: #{tpu_custom_call.1} parent=11 // pred_check
          %p125 = pneg %p63
        $region14: #{tpu_custom_call.1} parent=11 // pred_check_branch
          %127 = sbr.rel (%p125) target = $region16
        $region15: #{tpu_custom_call.1} parent=11 // pred_region
          %s129 = ssub.s32 34816, 34816
          %130 = vsyncadd [#allocation6], %s129
          %s131 = sshll.u32 [#allocation5], 4
          %s132 = int_to_ptr.vmem [resolvable:$true] %s131
          %137 = dma.hbm_to_vmem [thread:$0]  %s1, 34816, %s132, [#allocation6], 2176, 2176, 136
        $region16: #{tpu_custom_call.1} parent=11 // pred_fallthru
          _
        // Predicated region
        $region17: #{tpu_custom_call.1} parent=11 // pred_check
          %p138 = pneg %p84
        $region18: #{tpu_custom_call.1} parent=11 // pred_check_branch
          %140 = sbr.rel (%p138) target = $region20
        $region19: #{tpu_custom_call.1} parent=11 // pred_region
          %s142 = ssub.s32 2176, 2176
          %143 = vsyncadd [#allocation6], %s142
          %s145 = sshll.u32 [#allocation7], 4
          %s146 = int_to_ptr.vmem [resolvable:$true] %s145
          %148 = dma.hbm_to_vmem [thread:$0]  %s2, 2176, %s146, [#allocation6]
        $region20: #{tpu_custom_call.1} parent=11 // pred_fallthru
          _
      $region12: #{tpu_custom_call.1} parent=5 // pred_fallthru
        _
      %p149 = scmp.lt.s32.totalorder %s16, 3
      // Predicated region
      $region21: #{tpu_custom_call.1} parent=5 // pred_check
        %p150 = pneg %p149
      $region22: #{tpu_custom_call.1} parent=5 // pred_check_branch
        %152 = sbr.rel (%p150) target = $region24
      $region23: #{tpu_custom_call.1} parent=5 // pred_region
        // Predicated region
        $region25: #{tpu_custom_call.1} parent=23 // pred_check
          %p153 = pneg %p36
        $region26: #{tpu_custom_call.1} parent=23 // pred_check_branch
          %155 = sbr.rel (%p153) target = $region28
        $region27: #{tpu_custom_call.1} parent=23 // pred_region
          %s156 = sand.u32 %s26, 1
          %s157 = scalar_lea.sflag [#allocation3], %s156
          %s158 = sand.u32 %s26, 1
          %s159 = smul.addr %s158, 8
          %s160 = scalar_lea.vmem [#allocation2], %s159
          %s162 = ssub.s32 128, 128
          %163 = vsyncadd %s157, %s162
          %s164 = smul.addr %s16, 128
          %s165 = scalar_lea.hbm %s0, %s164
          %s167 = sshll.u32 %s160, 4
          %s168 = int_to_ptr.vmem [resolvable:$true] %s167
          %170 = dma.hbm_to_vmem [thread:$0]  %s165, 128, %s168, %s157
        $region28: #{tpu_custom_call.1} parent=23 // pred_fallthru
          _
      $region24: #{tpu_custom_call.1} parent=5 // pred_fallthru
        _
      %p171 = scmp.le.s32.totalorder 1, %s16
      %p172 = scmp.lt.s32.totalorder %s16, 4
      %p173 = pnand %p171, %p172
      %p174 = pneg %p173
      // Predicated region
      $region29: #{tpu_custom_call.1} parent=5 // pred_check
        _
      $region30: #{tpu_custom_call.1} parent=5 // pred_check_branch
        %176 = sbr.rel (%p173) target = $region32
      $region31: #{tpu_custom_call.1} parent=5 // pred_region
        %s177 = ssub.s32 %s16, 1
        %s178 = sand.u32 %s29, 1
        %s179 = scalar_lea.sflag [#allocation3], %s178
        %s180 = sand.u32 %s29, 1
        %s181 = smul.addr %s180, 8
        %s182 = scalar_lea.vmem [#allocation2], %s181
        // Predicated region
        $region33: #{tpu_custom_call.1} parent=31 // pred_check
          %p183 = pneg %p42
        $region34: #{tpu_custom_call.1} parent=31 // pred_check_branch
          %185 = sbr.rel (%p183) target = $region36
        $region35: #{tpu_custom_call.1} parent=31 // pred_region
          %186 = dma.done %s179, 128
        $region36: #{tpu_custom_call.1} parent=31 // pred_fallthru
          _
        // Predicated region
        $region37: #{tpu_custom_call.1} parent=31 // pred_check
          %p187 = pneg %p63
        $region38: #{tpu_custom_call.1} parent=31 // pred_check_branch
          %189 = sbr.rel (%p187) target = $region40
        $region39: #{tpu_custom_call.1} parent=31 // pred_region
          %190 = dma.done [#allocation6], 34816
        $region40: #{tpu_custom_call.1} parent=31 // pred_fallthru
          _
        // Predicated region
        $region41: #{tpu_custom_call.1} parent=31 // pred_check
          %p191 = pneg %p84
        $region42: #{tpu_custom_call.1} parent=31 // pred_check_branch
          %193 = sbr.rel (%p191) target = $region44
        $region43: #{tpu_custom_call.1} parent=31 // pred_region
          %194 = dma.done [#allocation6], 2176
        $region44: #{tpu_custom_call.1} parent=31 // pred_fallthru
          _
        %s195 = sand.u32 %s29, 1
        %s196 = scalar_lea.sflag [#allocation3], %s195
        %s197 = sand.u32 %s29, 1
        %s198 = smul.addr %s197, 8
        %s199 = scalar_lea.vmem [#allocation2], %s198
        %p200 = pneg %p42
        %p201 = pneg %p39
        %p202 = pneg %p63
        %p203 = pneg %p60
        %p204 = pneg %p84
        %p205 = pneg %p81
        %p206 = pneg %p110
        %p207 = pneg %p107
        %s208 = sand.u32 %s97, 1
        %s209 = scalar_lea.sflag [#allocation4], %s208
        %s210 = sand.u32 %s97, 1
        %s211 = smul.addr %s210, 136
        %s212 = scalar_lea.vmem [#allocation8], %s211
        %v213 = vld [vmem:[%s182] sm:$0xff]
        %v214 = vld [vmem:[#allocation5] sm:$0xff]
        %v215 = vld [vmem:[#allocation5 + $0x8] sm:$0xff]
        %v216 = vld [vmem:[#allocation5 + $0x10] sm:$0xff]
        %v217 = vld [vmem:[#allocation5 + $0x18] sm:$0xff]
        %v218 = vld [vmem:[#allocation5 + $0x20] sm:$0xff]
        %v219 = vld [vmem:[#allocation5 + $0x28] sm:$0xff]
        %v220 = vld [vmem:[#allocation5 + $0x30] sm:$0xff]
        %v221 = vld [vmem:[#allocation5 + $0x38] sm:$0xff]
        %v222 = vld [vmem:[#allocation5 + $0x40] sm:$0xff]
        %v223 = vld [vmem:[#allocation5 + $0x48] sm:$0xff]
        %v224 = vld [vmem:[#allocation5 + $0x50] sm:$0xff]
        %v225 = vld [vmem:[#allocation5 + $0x58] sm:$0xff]
        %v226 = vld [vmem:[#allocation5 + $0x60] sm:$0xff]
        %v227 = vld [vmem:[#allocation5 + $0x68] sm:$0xff]
        %v228 = vld [vmem:[#allocation5 + $0x70] sm:$0xff]
        %v229 = vld [vmem:[#allocation5 + $0x78] sm:$0xff]
        %v230 = vld [vmem:[#allocation5 + $0x80] sm:$0xff]
        %v231 = vld [vmem:[#allocation5 + $0x88] sm:$0xff]
        %v232 = vld [vmem:[#allocation5 + $0x90] sm:$0xff]
        %v233 = vld [vmem:[#allocation5 + $0x98] sm:$0xff]
        %v234 = vld [vmem:[#allocation5 + $0xa0] sm:$0xff]
        %v235 = vld [vmem:[#allocation5 + $0xa8] sm:$0xff]
        %v236 = vld [vmem:[#allocation5 + $0xb0] sm:$0xff]
        %v237 = vld [vmem:[#allocation5 + $0xb8] sm:$0xff]
        %v238 = vld [vmem:[#allocation5 + $0xc0] sm:$0xff]
        %v239 = vld [vmem:[#allocation5 + $0xc8] sm:$0xff]
        %v240 = vld [vmem:[#allocation5 + $0xd0] sm:$0xff]
        %v241 = vld [vmem:[#allocation5 + $0xd8] sm:$0xff]
        %v242 = vld [vmem:[#allocation5 + $0xe0] sm:$0xff]
        %v243 = vld [vmem:[#allocation5 + $0xe8] sm:$0xff]
        %v244 = vld [vmem:[#allocation5 + $0xf0] sm:$0xff]
        %v245 = vld [vmem:[#allocation5 + $0xf8] sm:$0xff]
        %v246 = vld [vmem:[#allocation5 + $0x100] sm:$0xff]
        %v247 = vld [vmem:[#allocation5 + $0x108] sm:$0xff]
        %v248 = vld [vmem:[#allocation5 + $0x110] sm:$0xff]
        %v249 = vld [vmem:[#allocation5 + $0x118] sm:$0xff]
        %v250 = vld [vmem:[#allocation5 + $0x120] sm:$0xff]
        %v251 = vld [vmem:[#allocation5 + $0x128] sm:$0xff]
        %v252 = vld [vmem:[#allocation5 + $0x130] sm:$0xff]
        %v253 = vld [vmem:[#allocation5 + $0x138] sm:$0xff]
        %v254 = vld [vmem:[#allocation5 + $0x140] sm:$0xff]
        %v255 = vld [vmem:[#allocation5 + $0x148] sm:$0xff]
        %v256 = vld [vmem:[#allocation5 + $0x150] sm:$0xff]
        %v257 = vld [vmem:[#allocation5 + $0x158] sm:$0xff]
        %v258 = vld [vmem:[#allocation5 + $0x160] sm:$0xff]
        %v259 = vld [vmem:[#allocation5 + $0x168] sm:$0xff]
        %v260 = vld [vmem:[#allocation5 + $0x170] sm:$0xff]
        %v261 = vld [vmem:[#allocation5 + $0x178] sm:$0xff]
        %v262 = vld [vmem:[#allocation5 + $0x180] sm:$0xff]
        %v263 = vld [vmem:[#allocation5 + $0x188] sm:$0xff]
        %v264 = vld [vmem:[#allocation5 + $0x190] sm:$0xff]
        %v265 = vld [vmem:[#allocation5 + $0x198] sm:$0xff]
        %v266 = vld [vmem:[#allocation5 + $0x1a0] sm:$0xff]
        %v267 = vld [vmem:[#allocation5 + $0x1a8] sm:$0xff]
        %v268 = vld [vmem:[#allocation5 + $0x1b0] sm:$0xff]
        %v269 = vld [vmem:[#allocation5 + $0x1b8] sm:$0xff]
        %v270 = vld [vmem:[#allocation5 + $0x1c0] sm:$0xff]
        %v271 = vld [vmem:[#allocation5 + $0x1c8] sm:$0xff]
        %v272 = vld [vmem:[#allocation5 + $0x1d0] sm:$0xff]
        %v273 = vld [vmem:[#allocation5 + $0x1d8] sm:$0xff]
        %v274 = vld [vmem:[#allocation5 + $0x1e0] sm:$0xff]
        %v275 = vld [vmem:[#allocation5 + $0x1e8] sm:$0xff]
        %v276 = vld [vmem:[#allocation5 + $0x1f0] sm:$0xff]
        %v277 = vld [vmem:[#allocation5 + $0x1f8] sm:$0xff]
        %v278 = vld [vmem:[#allocation5 + $0x200] sm:$0xff]
        %v279 = vld [vmem:[#allocation5 + $0x208] sm:$0xff]
        %v280 = vld [vmem:[#allocation5 + $0x210] sm:$0xff]
        %v281 = vld [vmem:[#allocation5 + $0x218] sm:$0xff]
        %v282 = vld [vmem:[#allocation5 + $0x220] sm:$0xff]
        %v283 = vld [vmem:[#allocation5 + $0x228] sm:$0xff]
        %v284 = vld [vmem:[#allocation5 + $0x230] sm:$0xff]
        %v285 = vld [vmem:[#allocation5 + $0x238] sm:$0xff]
        %v286 = vld [vmem:[#allocation5 + $0x240] sm:$0xff]
        %v287 = vld [vmem:[#allocation5 + $0x248] sm:$0xff]
        %v288 = vld [vmem:[#allocation5 + $0x250] sm:$0xff]
        %v289 = vld [vmem:[#allocation5 + $0x258] sm:$0xff]
        %v290 = vld [vmem:[#allocation5 + $0x260] sm:$0xff]
        %v291 = vld [vmem:[#allocation5 + $0x268] sm:$0xff]
        %v292 = vld [vmem:[#allocation5 + $0x270] sm:$0xff]
        %v293 = vld [vmem:[#allocation5 + $0x278] sm:$0xff]
        %v294 = vld [vmem:[#allocation5 + $0x280] sm:$0xff]
        %v295 = vld [vmem:[#allocation5 + $0x288] sm:$0xff]
        %v296 = vld [vmem:[#allocation5 + $0x290] sm:$0xff]
        %v297 = vld [vmem:[#allocation5 + $0x298] sm:$0xff]
        %v298 = vld [vmem:[#allocation5 + $0x2a0] sm:$0xff]
        %v299 = vld [vmem:[#allocation5 + $0x2a8] sm:$0xff]
        %v300 = vld [vmem:[#allocation5 + $0x2b0] sm:$0xff]
        %v301 = vld [vmem:[#allocation5 + $0x2b8] sm:$0xff]
        %v302 = vld [vmem:[#allocation5 + $0x2c0] sm:$0xff]
        %v303 = vld [vmem:[#allocation5 + $0x2c8] sm:$0xff]
        %v304 = vld [vmem:[#allocation5 + $0x2d0] sm:$0xff]
        %v305 = vld [vmem:[#allocation5 + $0x2d8] sm:$0xff]
        %v306 = vld [vmem:[#allocation5 + $0x2e0] sm:$0xff]
        %v307 = vld [vmem:[#allocation5 + $0x2e8] sm:$0xff]
        %v308 = vld [vmem:[#allocation5 + $0x2f0] sm:$0xff]
        %v309 = vld [vmem:[#allocation5 + $0x2f8] sm:$0xff]
        %v310 = vld [vmem:[#allocation5 + $0x300] sm:$0xff]
        %v311 = vld [vmem:[#allocation5 + $0x308] sm:$0xff]
        %v312 = vld [vmem:[#allocation5 + $0x310] sm:$0xff]
        %v313 = vld [vmem:[#allocation5 + $0x318] sm:$0xff]
        %v314 = vld [vmem:[#allocation5 + $0x320] sm:$0xff]
        %v315 = vld [vmem:[#allocation5 + $0x328] sm:$0xff]
        %v316 = vld [vmem:[#allocation5 + $0x330] sm:$0xff]
        %v317 = vld [vmem:[#allocation5 + $0x338] sm:$0xff]
        %v318 = vld [vmem:[#allocation5 + $0x340] sm:$0xff]
        %v319 = vld [vmem:[#allocation5 + $0x348] sm:$0xff]
        %v320 = vld [vmem:[#allocation5 + $0x350] sm:$0xff]
        %v321 = vld [vmem:[#allocation5 + $0x358] sm:$0xff]
        %v322 = vld [vmem:[#allocation5 + $0x360] sm:$0xff]
        %v323 = vld [vmem:[#allocation5 + $0x368] sm:$0xff]
        %v324 = vld [vmem:[#allocation5 + $0x370] sm:$0xff]
        %v325 = vld [vmem:[#allocation5 + $0x378] sm:$0xff]
        %v326 = vld [vmem:[#allocation5 + $0x380] sm:$0xff]
        %v327 = vld [vmem:[#allocation5 + $0x388] sm:$0xff]
        %v328 = vld [vmem:[#allocation5 + $0x390] sm:$0xff]
        %v329 = vld [vmem:[#allocation5 + $0x398] sm:$0xff]
        %v330 = vld [vmem:[#allocation5 + $0x3a0] sm:$0xff]
        %v331 = vld [vmem:[#allocation5 + $0x3a8] sm:$0xff]
        %v332 = vld [vmem:[#allocation5 + $0x3b0] sm:$0xff]
        %v333 = vld [vmem:[#allocation5 + $0x3b8] sm:$0xff]
        %v334 = vld [vmem:[#allocation5 + $0x3c0] sm:$0xff]
        %v335 = vld [vmem:[#allocation5 + $0x3c8] sm:$0xff]
        %v336 = vld [vmem:[#allocation5 + $0x3d0] sm:$0xff]
        %v337 = vld [vmem:[#allocation5 + $0x3d8] sm:$0xff]
        %v338 = vld [vmem:[#allocation5 + $0x3e0] sm:$0xff]
        %v339 = vld [vmem:[#allocation5 + $0x3e8] sm:$0xff]
        %v340 = vld [vmem:[#allocation5 + $0x3f0] sm:$0xff]
        %v341 = vld [vmem:[#allocation5 + $0x3f8] sm:$0xff]
        %v342 = vld [vmem:[#allocation5 + $0x400] sm:$0xff]
        %v343 = vld [vmem:[#allocation5 + $0x408] sm:$0xff]
        %v344 = vld [vmem:[#allocation5 + $0x410] sm:$0xff]
        %v345 = vld [vmem:[#allocation5 + $0x418] sm:$0xff]
        %v346 = vld [vmem:[#allocation5 + $0x420] sm:$0xff]
        %v347 = vld [vmem:[#allocation5 + $0x428] sm:$0xff]
        %v348 = vld [vmem:[#allocation5 + $0x430] sm:$0xff]
        %v349 = vld [vmem:[#allocation5 + $0x438] sm:$0xff]
        %v350 = vld [vmem:[#allocation5 + $0x440] sm:$0xff]
        %v351 = vld [vmem:[#allocation5 + $0x448] sm:$0xff]
        %v352 = vld [vmem:[#allocation5 + $0x450] sm:$0xff]
        %v353 = vld [vmem:[#allocation5 + $0x458] sm:$0xff]
        %v354 = vld [vmem:[#allocation5 + $0x460] sm:$0xff]
        %v355 = vld [vmem:[#allocation5 + $0x468] sm:$0xff]
        %v356 = vld [vmem:[#allocation5 + $0x470] sm:$0xff]
        %v357 = vld [vmem:[#allocation5 + $0x478] sm:$0xff]
        %v358 = vld [vmem:[#allocation5 + $0x480] sm:$0xff]
        %v359 = vld [vmem:[#allocation5 + $0x488] sm:$0xff]
        %v360 = vld [vmem:[#allocation5 + $0x490] sm:$0xff]
        %v361 = vld [vmem:[#allocation5 + $0x498] sm:$0xff]
        %v362 = vld [vmem:[#allocation5 + $0x4a0] sm:$0xff]
        %v363 = vld [vmem:[#allocation5 + $0x4a8] sm:$0xff]
        %v364 = vld [vmem:[#allocation5 + $0x4b0] sm:$0xff]
        %v365 = vld [vmem:[#allocation5 + $0x4b8] sm:$0xff]
        %v366 = vld [vmem:[#allocation5 + $0x4c0] sm:$0xff]
        %v367 = vld [vmem:[#allocation5 + $0x4c8] sm:$0xff]
        %v368 = vld [vmem:[#allocation5 + $0x4d0] sm:$0xff]
        %v369 = vld [vmem:[#allocation5 + $0x4d8] sm:$0xff]
        %v370 = vld [vmem:[#allocation5 + $0x4e0] sm:$0xff]
        %v371 = vld [vmem:[#allocation5 + $0x4e8] sm:$0xff]
        %v372 = vld [vmem:[#allocation5 + $0x4f0] sm:$0xff]
        %v373 = vld [vmem:[#allocation5 + $0x4f8] sm:$0xff]
        %v374 = vld [vmem:[#allocation5 + $0x500] sm:$0xff]
        %v375 = vld [vmem:[#allocation5 + $0x508] sm:$0xff]
        %v376 = vld [vmem:[#allocation5 + $0x510] sm:$0xff]
        %v377 = vld [vmem:[#allocation5 + $0x518] sm:$0xff]
        %v378 = vld [vmem:[#allocation5 + $0x520] sm:$0xff]
        %v379 = vld [vmem:[#allocation5 + $0x528] sm:$0xff]
        %v380 = vld [vmem:[#allocation5 + $0x530] sm:$0xff]
        %v381 = vld [vmem:[#allocation5 + $0x538] sm:$0xff]
        %v382 = vld [vmem:[#allocation5 + $0x540] sm:$0xff]
        %v383 = vld [vmem:[#allocation5 + $0x548] sm:$0xff]
        %v384 = vld [vmem:[#allocation5 + $0x550] sm:$0xff]
        %v385 = vld [vmem:[#allocation5 + $0x558] sm:$0xff]
        %v386 = vld [vmem:[#allocation5 + $0x560] sm:$0xff]
        %v387 = vld [vmem:[#allocation5 + $0x568] sm:$0xff]
        %v388 = vld [vmem:[#allocation5 + $0x570] sm:$0xff]
        %v389 = vld [vmem:[#allocation5 + $0x578] sm:$0xff]
        %v390 = vld [vmem:[#allocation5 + $0x580] sm:$0xff]
        %v391 = vld [vmem:[#allocation5 + $0x588] sm:$0xff]
        %v392 = vld [vmem:[#allocation5 + $0x590] sm:$0xff]
        %v393 = vld [vmem:[#allocation5 + $0x598] sm:$0xff]
        %v394 = vld [vmem:[#allocation5 + $0x5a0] sm:$0xff]
        %v395 = vld [vmem:[#allocation5 + $0x5a8] sm:$0xff]
        %v396 = vld [vmem:[#allocation5 + $0x5b0] sm:$0xff]
        %v397 = vld [vmem:[#allocation5 + $0x5b8] sm:$0xff]
        %v398 = vld [vmem:[#allocation5 + $0x5c0] sm:$0xff]
        %v399 = vld [vmem:[#allocation5 + $0x5c8] sm:$0xff]
        %v400 = vld [vmem:[#allocation5 + $0x5d0] sm:$0xff]
        %v401 = vld [vmem:[#allocation5 + $0x5d8] sm:$0xff]
        %v402 = vld [vmem:[#allocation5 + $0x5e0] sm:$0xff]
        %v403 = vld [vmem:[#allocation5 + $0x5e8] sm:$0xff]
        %v404 = vld [vmem:[#allocation5 + $0x5f0] sm:$0xff]
        %v405 = vld [vmem:[#allocation5 + $0x5f8] sm:$0xff]
        %v406 = vld [vmem:[#allocation5 + $0x600] sm:$0xff]
        %v407 = vld [vmem:[#allocation5 + $0x608] sm:$0xff]
        %v408 = vld [vmem:[#allocation5 + $0x610] sm:$0xff]
        %v409 = vld [vmem:[#allocation5 + $0x618] sm:$0xff]
        %v410 = vld [vmem:[#allocation5 + $0x620] sm:$0xff]
        %v411 = vld [vmem:[#allocation5 + $0x628] sm:$0xff]
        %v412 = vld [vmem:[#allocation5 + $0x630] sm:$0xff]
        %v413 = vld [vmem:[#allocation5 + $0x638] sm:$0xff]
        %v414 = vld [vmem:[#allocation5 + $0x640] sm:$0xff]
        %v415 = vld [vmem:[#allocation5 + $0x648] sm:$0xff]
        %v416 = vld [vmem:[#allocation5 + $0x650] sm:$0xff]
        %v417 = vld [vmem:[#allocation5 + $0x658] sm:$0xff]
        %v418 = vld [vmem:[#allocation5 + $0x660] sm:$0xff]
        %v419 = vld [vmem:[#allocation5 + $0x668] sm:$0xff]
        %v420 = vld [vmem:[#allocation5 + $0x670] sm:$0xff]
        %v421 = vld [vmem:[#allocation5 + $0x678] sm:$0xff]
        %v422 = vld [vmem:[#allocation5 + $0x680] sm:$0xff]
        %v423 = vld [vmem:[#allocation5 + $0x688] sm:$0xff]
        %v424 = vld [vmem:[#allocation5 + $0x690] sm:$0xff]
        %v425 = vld [vmem:[#allocation5 + $0x698] sm:$0xff]
        %v426 = vld [vmem:[#allocation5 + $0x6a0] sm:$0xff]
        %v427 = vld [vmem:[#allocation5 + $0x6a8] sm:$0xff]
        %v428 = vld [vmem:[#allocation5 + $0x6b0] sm:$0xff]
        %v429 = vld [vmem:[#allocation5 + $0x6b8] sm:$0xff]
        %v430 = vld [vmem:[#allocation5 + $0x6c0] sm:$0xff]
        %v431 = vld [vmem:[#allocation5 + $0x6c8] sm:$0xff]
        %v432 = vld [vmem:[#allocation5 + $0x6d0] sm:$0xff]
        %v433 = vld [vmem:[#allocation5 + $0x6d8] sm:$0xff]
        %v434 = vld [vmem:[#allocation5 + $0x6e0] sm:$0xff]
        %v435 = vld [vmem:[#allocation5 + $0x6e8] sm:$0xff]
        %v436 = vld [vmem:[#allocation5 + $0x6f0] sm:$0xff]
        %v437 = vld [vmem:[#allocation5 + $0x6f8] sm:$0xff]
        %v438 = vld [vmem:[#allocation5 + $0x700] sm:$0xff]
        %v439 = vld [vmem:[#allocation5 + $0x708] sm:$0xff]
        %v440 = vld [vmem:[#allocation5 + $0x710] sm:$0xff]
        %v441 = vld [vmem:[#allocation5 + $0x718] sm:$0xff]
        %v442 = vld [vmem:[#allocation5 + $0x720] sm:$0xff]
        %v443 = vld [vmem:[#allocation5 + $0x728] sm:$0xff]
        %v444 = vld [vmem:[#allocation5 + $0x730] sm:$0xff]
        %v445 = vld [vmem:[#allocation5 + $0x738] sm:$0xff]
        %v446 = vld [vmem:[#allocation5 + $0x740] sm:$0xff]
        %v447 = vld [vmem:[#allocation5 + $0x748] sm:$0xff]
        %v448 = vld [vmem:[#allocation5 + $0x750] sm:$0xff]
        %v449 = vld [vmem:[#allocation5 + $0x758] sm:$0xff]
        %v450 = vld [vmem:[#allocation5 + $0x760] sm:$0xff]
        %v451 = vld [vmem:[#allocation5 + $0x768] sm:$0xff]
        %v452 = vld [vmem:[#allocation5 + $0x770] sm:$0xff]
        %v453 = vld [vmem:[#allocation5 + $0x778] sm:$0xff]
        %v454 = vld [vmem:[#allocation5 + $0x780] sm:$0xff]
        %v455 = vld [vmem:[#allocation5 + $0x788] sm:$0xff]
        %v456 = vld [vmem:[#allocation5 + $0x790] sm:$0xff]
        %v457 = vld [vmem:[#allocation5 + $0x798] sm:$0xff]
        %v458 = vld [vmem:[#allocation5 + $0x7a0] sm:$0xff]
        %v459 = vld [vmem:[#allocation5 + $0x7a8] sm:$0xff]
        %v460 = vld [vmem:[#allocation5 + $0x7b0] sm:$0xff]
        %v461 = vld [vmem:[#allocation5 + $0x7b8] sm:$0xff]
        %v462 = vld [vmem:[#allocation5 + $0x7c0] sm:$0xff]
        %v463 = vld [vmem:[#allocation5 + $0x7c8] sm:$0xff]
        %v464 = vld [vmem:[#allocation5 + $0x7d0] sm:$0xff]
        %v465 = vld [vmem:[#allocation5 + $0x7d8] sm:$0xff]
        %v466 = vld [vmem:[#allocation5 + $0x7e0] sm:$0xff]
        %v467 = vld [vmem:[#allocation5 + $0x7e8] sm:$0xff]
        %v468 = vld [vmem:[#allocation5 + $0x7f0] sm:$0xff]
        %v469 = vld [vmem:[#allocation5 + $0x7f8] sm:$0xff]
        %v470 = vld [vmem:[#allocation5 + $0x800] sm:$0xff]
        %v471 = vld [vmem:[#allocation5 + $0x808] sm:$0xff]
        %v472 = vld [vmem:[#allocation5 + $0x810] sm:$0xff]
        %v473 = vld [vmem:[#allocation5 + $0x818] sm:$0xff]
        %v474 = vld [vmem:[#allocation5 + $0x820] sm:$0xff]
        %v475 = vld [vmem:[#allocation5 + $0x828] sm:$0xff]
        %v476 = vld [vmem:[#allocation5 + $0x830] sm:$0xff]
        %v477 = vld [vmem:[#allocation5 + $0x838] sm:$0xff]
        %v478 = vld [vmem:[#allocation5 + $0x840] sm:$0xff]
        %v479 = vld [vmem:[#allocation5 + $0x848] sm:$0xff]
        %v480 = vld [vmem:[#allocation5 + $0x850] sm:$0xff]
        %v481 = vld [vmem:[#allocation5 + $0x858] sm:$0xff]
        %v482 = vld [vmem:[#allocation5 + $0x860] sm:$0xff]
        %v483 = vld [vmem:[#allocation5 + $0x868] sm:$0xff]
        %v484 = vld [vmem:[#allocation5 + $0x870] sm:$0xff]
        %v485 = vld [vmem:[#allocation5 + $0x878] sm:$0xff]
        %v486 = vand.u32 %v215, 4294901760
        %487 = vmatprep.subr.mxu0 %v486
        %v488 = vand.u32 %v214, 4294901760
        %489 = vmatpush1.msra.mxu0 %v488
        %v490 = vand.u32 %v232, 4294901760
        %491 = vmatprep.subr.mxu0 %v490
        %v492 = vand.u32 %v231, 4294901760
        %493 = vmatpush1.msra.mxu0 %v492
        %v494 = vand.u32 %v249, 4294901760
        %495 = vmatprep.subr.mxu0 %v494
        %v496 = vand.u32 %v248, 4294901760
        %497 = vmatpush1.msra.mxu0 %v496
        %v498 = vand.u32 %v266, 4294901760
        %499 = vmatprep.subr.mxu0 %v498
        %v500 = vand.u32 %v265, 4294901760
        %501 = vmatpush1.msra.mxu0 %v500
        %v502 = vand.u32 %v283, 4294901760
        %503 = vmatprep.subr.mxu0 %v502
        %v504 = vand.u32 %v282, 4294901760
        %505 = vmatpush1.msra.mxu0 %v504
        %v506 = vand.u32 %v300, 4294901760
        %507 = vmatprep.subr.mxu0 %v506
        %v508 = vand.u32 %v299, 4294901760
        %509 = vmatpush1.msra.mxu0 %v508
        %v510 = vand.u32 %v317, 4294901760
        %511 = vmatprep.subr.mxu0 %v510
        %v512 = vand.u32 %v316, 4294901760
        %513 = vmatpush1.msra.mxu0 %v512
        %v514 = vand.u32 %v334, 4294901760
        %515 = vmatprep.subr.mxu0 %v514
        %v516 = vand.u32 %v333, 4294901760
        %517 = vmatpush1.msra.mxu0 %v516
        %v518 = vand.u32 %v351, 4294901760
        %519 = vmatprep.subr.mxu0 %v518
        %v520 = vand.u32 %v350, 4294901760
        %521 = vmatpush1.msra.mxu0 %v520
        %v522 = vand.u32 %v368, 4294901760
        %523 = vmatprep.subr.mxu0 %v522
        %v524 = vand.u32 %v367, 4294901760
        %525 = vmatpush1.msra.mxu0 %v524
        %v526 = vand.u32 %v385, 4294901760
        %527 = vmatprep.subr.mxu0 %v526
        %v528 = vand.u32 %v384, 4294901760
        %529 = vmatpush1.msra.mxu0 %v528
        %v530 = vand.u32 %v402, 4294901760
        %531 = vmatprep.subr.mxu0 %v530
        %v532 = vand.u32 %v401, 4294901760
        %533 = vmatpush1.msra.mxu0 %v532
        %v534 = vand.u32 %v419, 4294901760
        %535 = vmatprep.subr.mxu0 %v534
        %v536 = vand.u32 %v418, 4294901760
        %537 = vmatpush1.msra.mxu0 %v536
        %v538 = vand.u32 %v436, 4294901760
        %539 = vmatprep.subr.mxu0 %v538
        %v540 = vand.u32 %v435, 4294901760
        %541 = vmatpush1.msra.mxu0 %v540
        %v542 = vand.u32 %v453, 4294901760
        %543 = vmatprep.subr.mxu0 %v542
        %v544 = vand.u32 %v452, 4294901760
        %545 = vmatpush1.msra.mxu0 %v544
        %v546 = vand.u32 %v470, 4294901760
        %547 = vmatprep.subr.mxu0 %v546
        %v548 = vand.u32 %v469, 4294901760
        %549 = vmatpush1.msra.mxu0 %v548
        %550 = vmatprep.subr.mxu0 0.0
        %551 = vmatpush1.msra.mxu0 0.0
        %552 = vmatprep.subr.mxu0 0.0
        %553 = vmatpush1.msra.mxu0 0.0
        %554 = vmatprep.subr.mxu0 0.0
        %555 = vmatpush1.msra.mxu0 0.0
        %556 = vmatprep.subr.mxu0 0.0
        %557 = vmatpush1.msra.mxu0 0.0
        %558 = vmatprep.subr.mxu0 0.0
        %559 = vmatpush1.msra.mxu0 0.0
        %560 = vmatprep.subr.mxu0 0.0
        %561 = vmatpush1.msra.mxu0 0.0
        %562 = vmatprep.subr.mxu0 0.0
        %563 = vmatpush1.msra.mxu0 0.0
        %564 = vmatprep.subr.mxu0 0.0
        %565 = vmatpush1.msra.mxu0 0.0
        %566 = vmatprep.subr.mxu0 0.0
        %567 = vmatpush1.msra.mxu0 0.0
        %568 = vmatprep.subr.mxu0 0.0
        %569 = vmatpush1.msra.mxu0 0.0
        %570 = vmatprep.subr.mxu0 0.0
        %571 = vmatpush1.msra.mxu0 0.0
        %572 = vmatprep.subr.mxu0 0.0
        %573 = vmatpush1.msra.mxu0 0.0
        %574 = vmatprep.subr.mxu0 0.0
        %575 = vmatpush1.msra.mxu0 0.0
        %576 = vmatprep.subr.mxu0 0.0
        %577 = vmatpush1.msra.mxu0 0.0
        %578 = vmatprep.subr.mxu0 0.0
        %579 = vmatpush1.msra.mxu0 0.0
        %580 = vmatprep.subr.mxu0 0.0
        %581 = vmatpush1.msra.mxu0 0.0
        %582 = vmatprep.mubr.f32.mxu0 0.0
        %v583 = vand.u32 %v213, 4294901760
        %v584 = vsub.f32 %v213, %v583
        %v585 = vand.u32 %v584, 4294901760
        %v586 = vsub.f32 %v584, %v585
        %v587 = vand.u32 %v586, 4294901760
        %588 = vmatmul.mubr.f32.gmra.mrb[0].mxu0 %v587
        %v589 = vpop.f32.mrb[0].mxu0
        %v590 = vadd.f32 0.0, %v589
        %v591 = vpop.f32.mrb[0].mxu0
        %v592 = vadd.f32 0.0, %v591
        %593 = vdwg.mxu0
        %v594 = vand.u32 %v215, 4294901760
        %v595 = vsub.f32 %v215, %v594
        %v596 = vand.u32 %v595, 4294901760
        %v597 = vsub.f32 %v595, %v596
        %v598 = vand.u32 %v597, 4294901760
        %599 = vmatprep.subr.mxu0 %v598
        %v600 = vand.u32 %v214, 4294901760
        %v601 = vsub.f32 %v214, %v600
        %v602 = vand.u32 %v601, 4294901760
        %v603 = vsub.f32 %v601, %v602
        %v604 = vand.u32 %v603, 4294901760
        %605 = vmatpush1.msra.mxu0 %v604
        %v606 = vand.u32 %v232, 4294901760
        %v607 = vsub.f32 %v232, %v606
        %v608 = vand.u32 %v607, 4294901760
        %v609 = vsub.f32 %v607, %v608
        %v610 = vand.u32 %v609, 4294901760
        %611 = vmatprep.subr.mxu0 %v610
        %v612 = vand.u32 %v231, 4294901760
        %v613 = vsub.f32 %v231, %v612
        %v614 = vand.u32 %v613, 4294901760
        %v615 = vsub.f32 %v613, %v614
        %v616 = vand.u32 %v615, 4294901760
        %617 = vmatpush1.msra.mxu0 %v616
        %v618 = vand.u32 %v249, 4294901760
        %v619 = vsub.f32 %v249, %v618
        %v620 = vand.u32 %v619, 4294901760
        %v621 = vsub.f32 %v619, %v620
        %v622 = vand.u32 %v621, 4294901760
        %623 = vmatprep.subr.mxu0 %v622
        %v624 = vand.u32 %v248, 4294901760
        %v625 = vsub.f32 %v248, %v624
        %v626 = vand.u32 %v625, 4294901760
        %v627 = vsub.f32 %v625, %v626
        %v628 = vand.u32 %v627, 4294901760
        %629 = vmatpush1.msra.mxu0 %v628
        %v630 = vand.u32 %v266, 4294901760
        %v631 = vsub.f32 %v266, %v630
        %v632 = vand.u32 %v631, 4294901760
        %v633 = vsub.f32 %v631, %v632
        %v634 = vand.u32 %v633, 4294901760
        %635 = vmatprep.subr.mxu0 %v634
        %v636 = vand.u32 %v265, 4294901760
        %v637 = vsub.f32 %v265, %v636
        %v638 = vand.u32 %v637, 4294901760
        %v639 = vsub.f32 %v637, %v638
        %v640 = vand.u32 %v639, 4294901760
        %641 = vmatpush1.msra.mxu0 %v640
        %v642 = vand.u32 %v283, 4294901760
        %v643 = vsub.f32 %v283, %v642
        %v644 = vand.u32 %v643, 4294901760
        %v645 = vsub.f32 %v643, %v644
        %v646 = vand.u32 %v645, 4294901760
        %647 = vmatprep.subr.mxu0 %v646
        %v648 = vand.u32 %v282, 4294901760
        %v649 = vsub.f32 %v282, %v648
        %v650 = vand.u32 %v649, 4294901760
        %v651 = vsub.f32 %v649, %v650
        %v652 = vand.u32 %v651, 4294901760
        %653 = vmatpush1.msra.mxu0 %v652
        %v654 = vand.u32 %v300, 4294901760
        %v655 = vsub.f32 %v300, %v654
        %v656 = vand.u32 %v655, 4294901760
        %v657 = vsub.f32 %v655, %v656
        %v658 = vand.u32 %v657, 4294901760
        %659 = vmatprep.subr.mxu0 %v658
        %v660 = vand.u32 %v299, 4294901760
        %v661 = vsub.f32 %v299, %v660
        %v662 = vand.u32 %v661, 4294901760
        %v663 = vsub.f32 %v661, %v662
        %v664 = vand.u32 %v663, 4294901760
        %665 = vmatpush1.msra.mxu0 %v664
        %v666 = vand.u32 %v317, 4294901760
        %v667 = vsub.f32 %v317, %v666
        %v668 = vand.u32 %v667, 4294901760
        %v669 = vsub.f32 %v667, %v668
        %v670 = vand.u32 %v669, 4294901760
        %671 = vmatprep.subr.mxu0 %v670
        %v672 = vand.u32 %v316, 4294901760
        %v673 = vsub.f32 %v316, %v672
        %v674 = vand.u32 %v673, 4294901760
        %v675 = vsub.f32 %v673, %v674
        %v676 = vand.u32 %v675, 4294901760
        %677 = vmatpush1.msra.mxu0 %v676
        %v678 = vand.u32 %v334, 4294901760
        %v679 = vsub.f32 %v334, %v678
        %v680 = vand.u32 %v679, 4294901760
        %v681 = vsub.f32 %v679, %v680
        %v682 = vand.u32 %v681, 4294901760
        %683 = vmatprep.subr.mxu0 %v682
        %v684 = vand.u32 %v333, 4294901760
        %v685 = vsub.f32 %v333, %v684
        %v686 = vand.u32 %v685, 4294901760
        %v687 = vsub.f32 %v685, %v686
        %v688 = vand.u32 %v687, 4294901760
        %689 = vmatpush1.msra.mxu0 %v688
        %v690 = vand.u32 %v351, 4294901760
        %v691 = vsub.f32 %v351, %v690
        %v692 = vand.u32 %v691, 4294901760
        %v693 = vsub.f32 %v691, %v692
        %v694 = vand.u32 %v693, 4294901760
        %695 = vmatprep.subr.mxu0 %v694
        %v696 = vand.u32 %v350, 4294901760
        %v697 = vsub.f32 %v350, %v696
        %v698 = vand.u32 %v697, 4294901760
        %v699 = vsub.f32 %v697, %v698
        %v700 = vand.u32 %v699, 4294901760
        %701 = vmatpush1.msra.mxu0 %v700
        %v702 = vand.u32 %v368, 4294901760
        %v703 = vsub.f32 %v368, %v702
        %v704 = vand.u32 %v703, 4294901760
        %v705 = vsub.f32 %v703, %v704
        %v706 = vand.u32 %v705, 4294901760
        %707 = vmatprep.subr.mxu0 %v706
        %v708 = vand.u32 %v367, 4294901760
        %v709 = vsub.f32 %v367, %v708
        %v710 = vand.u32 %v709, 4294901760
        %v711 = vsub.f32 %v709, %v710
        %v712 = vand.u32 %v711, 4294901760
        %713 = vmatpush1.msra.mxu0 %v712
        %v714 = vand.u32 %v385, 4294901760
        %v715 = vsub.f32 %v385, %v714
        %v716 = vand.u32 %v715, 4294901760
        %v717 = vsub.f32 %v715, %v716
        %v718 = vand.u32 %v717, 4294901760
        %719 = vmatprep.subr.mxu0 %v718
        %v720 = vand.u32 %v384, 4294901760
        %v721 = vsub.f32 %v384, %v720
        %v722 = vand.u32 %v721, 4294901760
        %v723 = vsub.f32 %v721, %v722
        %v724 = vand.u32 %v723, 4294901760
        %725 = vmatpush1.msra.mxu0 %v724
        %v726 = vand.u32 %v402, 4294901760
        %v727 = vsub.f32 %v402, %v726
        %v728 = vand.u32 %v727, 4294901760
        %v729 = vsub.f32 %v727, %v728
        %v730 = vand.u32 %v729, 4294901760
        %731 = vmatprep.subr.mxu0 %v730
        %v732 = vand.u32 %v401, 4294901760
        %v733 = vsub.f32 %v401, %v732
        %v734 = vand.u32 %v733, 4294901760
        %v735 = vsub.f32 %v733, %v734
        %v736 = vand.u32 %v735, 4294901760
        %737 = vmatpush1.msra.mxu0 %v736
        %v738 = vand.u32 %v419, 4294901760
        %v739 = vsub.f32 %v419, %v738
        %v740 = vand.u32 %v739, 4294901760
        %v741 = vsub.f32 %v739, %v740
        %v742 = vand.u32 %v741, 4294901760
        %743 = vmatprep.subr.mxu0 %v742
        %v744 = vand.u32 %v418, 4294901760
        %v745 = vsub.f32 %v418, %v744
        %v746 = vand.u32 %v745, 4294901760
        %v747 = vsub.f32 %v745, %v746
        %v748 = vand.u32 %v747, 4294901760
        %749 = vmatpush1.msra.mxu0 %v748
        %v750 = vand.u32 %v436, 4294901760
        %v751 = vsub.f32 %v436, %v750
        %v752 = vand.u32 %v751, 4294901760
        %v753 = vsub.f32 %v751, %v752
        %v754 = vand.u32 %v753, 4294901760
        %755 = vmatprep.subr.mxu0 %v754
        %v756 = vand.u32 %v435, 4294901760
        %v757 = vsub.f32 %v435, %v756
        %v758 = vand.u32 %v757, 4294901760
        %v759 = vsub.f32 %v757, %v758
        %v760 = vand.u32 %v759, 4294901760
        %761 = vmatpush1.msra.mxu0 %v760
        %v762 = vand.u32 %v453, 4294901760
        %v763 = vsub.f32 %v453, %v762
        %v764 = vand.u32 %v763, 4294901760
        %v765 = vsub.f32 %v763, %v764
        %v766 = vand.u32 %v765, 4294901760
        %767 = vmatprep.subr.mxu0 %v766
        %v768 = vand.u32 %v452, 4294901760
        %v769 = vsub.f32 %v452, %v768
        %v770 = vand.u32 %v769, 4294901760
        %v771 = vsub.f32 %v769, %v770
        %v772 = vand.u32 %v771, 4294901760
        %773 = vmatpush1.msra.mxu0 %v772
        %v774 = vand.u32 %v470, 4294901760
        %v775 = vsub.f32 %v470, %v774
        %v776 = vand.u32 %v775, 4294901760
        %v777 = vsub.f32 %v775, %v776
        %v778 = vand.u32 %v777, 4294901760
        %779 = vmatprep.subr.mxu0 %v778
        %v780 = vand.u32 %v469, 4294901760
        %v781 = vsub.f32 %v469, %v780
        %v782 = vand.u32 %v781, 4294901760
        %v783 = vsub.f32 %v781, %v782
        %v784 = vand.u32 %v783, 4294901760
        %785 = vmatpush1.msra.mxu0 %v784
        %786 = vmatprep.subr.mxu0 0.0
        %787 = vmatpush1.msra.mxu0 0.0
        %788 = vmatprep.subr.mxu0 0.0
        %789 = vmatpush1.msra.mxu0 0.0
        %790 = vmatprep.subr.mxu0 0.0
        %791 = vmatpush1.msra.mxu0 0.0
        %792 = vmatprep.subr.mxu0 0.0
        %793 = vmatpush1.msra.mxu0 0.0
        %794 = vmatprep.subr.mxu0 0.0
        %795 = vmatpush1.msra.mxu0 0.0
        %796 = vmatprep.subr.mxu0 0.0
        %797 = vmatpush1.msra.mxu0 0.0
        %798 = vmatprep.subr.mxu0 0.0
        %799 = vmatpush1.msra.mxu0 0.0
        %800 = vmatprep.subr.mxu0 0.0
        %801 = vmatpush1.msra.mxu0 0.0
        %802 = vmatprep.subr.mxu0 0.0
        %803 = vmatpush1.msra.mxu0 0.0
        %804 = vmatprep.subr.mxu0 0.0
        %805 = vmatpush1.msra.mxu0 0.0
        %806 = vmatprep.subr.mxu0 0.0
        %807 = vmatpush1.msra.mxu0 0.0
        %808 = vmatprep.subr.mxu0 0.0
        %809 = vmatpush1.msra.mxu0 0.0
        %810 = vmatprep.subr.mxu0 0.0
        %811 = vmatpush1.msra.mxu0 0.0
        %812 = vmatprep.subr.mxu0 0.0
        %813 = vmatpush1.msra.mxu0 0.0
        %814 = vmatprep.subr.mxu0 0.0
        %815 = vmatpush1.msra.mxu0 0.0
        %816 = vmatprep.subr.mxu0 0.0
        %817 = vmatpush1.msra.mxu0 0.0
        %818 = vmatprep.mubr.f32.mxu0 0.0
        %v819 = vand.u32 %v213, 4294901760
        %820 = vmatmul.mubr.f32.gmra.mrb[0].mxu0 %v819
        %v821 = vpop.f32.mrb[0].mxu0
        %v822 = vadd.f32 %v590, %v821
        %v823 = vpop.f32.mrb[0].mxu0
        %v824 = vadd.f32 %v592, %v823
        %825 = vdwg.mxu0
        %v826 = vand.u32 %v215, 4294901760
        %v827 = vsub.f32 %v215, %v826
        %828 = vmatprep.subr.mxu0 %v827
        %v829 = vand.u32 %v214, 4294901760
        %v830 = vsub.f32 %v214, %v829
        %831 = vmatpush1.msra.mxu0 %v830
        %v832 = vand.u32 %v232, 4294901760
        %v833 = vsub.f32 %v232, %v832
        %834 = vmatprep.subr.mxu0 %v833
        %v835 = vand.u32 %v231, 4294901760
        %v836 = vsub.f32 %v231, %v835
        %837 = vmatpush1.msra.mxu0 %v836
        %v838 = vand.u32 %v249, 4294901760
        %v839 = vsub.f32 %v249, %v838
        %840 = vmatprep.subr.mxu0 %v839
        %v841 = vand.u32 %v248, 4294901760
        %v842 = vsub.f32 %v248, %v841
        %843 = vmatpush1.msra.mxu0 %v842
        %v844 = vand.u32 %v266, 4294901760
        %v845 = vsub.f32 %v266, %v844
        %846 = vmatprep.subr.mxu0 %v845
        %v847 = vand.u32 %v265, 4294901760
        %v848 = vsub.f32 %v265, %v847
        %849 = vmatpush1.msra.mxu0 %v848
        %v850 = vand.u32 %v283, 4294901760
        %v851 = vsub.f32 %v283, %v850
        %852 = vmatprep.subr.mxu0 %v851
        %v853 = vand.u32 %v282, 4294901760
        %v854 = vsub.f32 %v282, %v853
        %855 = vmatpush1.msra.mxu0 %v854
        %v856 = vand.u32 %v300, 4294901760
        %v857 = vsub.f32 %v300, %v856
        %858 = vmatprep.subr.mxu0 %v857
        %v859 = vand.u32 %v299, 4294901760
        %v860 = vsub.f32 %v299, %v859
        %861 = vmatpush1.msra.mxu0 %v860
        %v862 = vand.u32 %v317, 4294901760
        %v863 = vsub.f32 %v317, %v862
        %864 = vmatprep.subr.mxu0 %v863
        %v865 = vand.u32 %v316, 4294901760
        %v866 = vsub.f32 %v316, %v865
        %867 = vmatpush1.msra.mxu0 %v866
        %v868 = vand.u32 %v334, 4294901760
        %v869 = vsub.f32 %v334, %v868
        %870 = vmatprep.subr.mxu0 %v869
        %v871 = vand.u32 %v333, 4294901760
        %v872 = vsub.f32 %v333, %v871
        %873 = vmatpush1.msra.mxu0 %v872
        %v874 = vand.u32 %v351, 4294901760
        %v875 = vsub.f32 %v351, %v874
        %876 = vmatprep.subr.mxu0 %v875
        %v877 = vand.u32 %v350, 4294901760
        %v878 = vsub.f32 %v350, %v877
        %879 = vmatpush1.msra.mxu0 %v878
        %v880 = vand.u32 %v368, 4294901760
        %v881 = vsub.f32 %v368, %v880
        %882 = vmatprep.subr.mxu0 %v881
        %v883 = vand.u32 %v367, 4294901760
        %v884 = vsub.f32 %v367, %v883
        %885 = vmatpush1.msra.mxu0 %v884
        %v886 = vand.u32 %v385, 4294901760
        %v887 = vsub.f32 %v385, %v886
        %888 = vmatprep.subr.mxu0 %v887
        %v889 = vand.u32 %v384, 4294901760
        %v890 = vsub.f32 %v384, %v889
        %891 = vmatpush1.msra.mxu0 %v890
        %v892 = vand.u32 %v402, 4294901760
        %v893 = vsub.f32 %v402, %v892
        %894 = vmatprep.subr.mxu0 %v893
        %v895 = vand.u32 %v401, 4294901760
        %v896 = vsub.f32 %v401, %v895
        %897 = vmatpush1.msra.mxu0 %v896
        %v898 = vand.u32 %v419, 4294901760
        %v899 = vsub.f32 %v419, %v898
        %900 = vmatprep.subr.mxu0 %v899
        %v901 = vand.u32 %v418, 4294901760
        %v902 = vsub.f32 %v418, %v901
        %903 = vmatpush1.msra.mxu0 %v902
        %v904 = vand.u32 %v436, 4294901760
        %v905 = vsub.f32 %v436, %v904
        %906 = vmatprep.subr.mxu0 %v905
        %v907 = vand.u32 %v435, 4294901760
        %v908 = vsub.f32 %v435, %v907
        %909 = vmatpush1.msra.mxu0 %v908
        %v910 = vand.u32 %v453, 4294901760
        %v911 = vsub.f32 %v453, %v910
        %912 = vmatprep.subr.mxu0 %v911
        %v913 = vand.u32 %v452, 4294901760
        %v914 = vsub.f32 %v452, %v913
        %915 = vmatpush1.msra.mxu0 %v914
        %v916 = vand.u32 %v470, 4294901760
        %v917 = vsub.f32 %v470, %v916
        %918 = vmatprep.subr.mxu0 %v917
        %v919 = vand.u32 %v469, 4294901760
        %v920 = vsub.f32 %v469, %v919
        %921 = vmatpush1.msra.mxu0 %v920
        %922 = vmatprep.subr.mxu0 0.0
        %923 = vmatpush1.msra.mxu0 0.0
        %924 = vmatprep.subr.mxu0 0.0
        %925 = vmatpush1.msra.mxu0 0.0
        %926 = vmatprep.subr.mxu0 0.0
        %927 = vmatpush1.msra.mxu0 0.0
        %928 = vmatprep.subr.mxu0 0.0
        %929 = vmatpush1.msra.mxu0 0.0
        %930 = vmatprep.subr.mxu0 0.0
        %931 = vmatpush1.msra.mxu0 0.0
        %932 = vmatprep.subr.mxu0 0.0
        %933 = vmatpush1.msra.mxu0 0.0
        %934 = vmatprep.subr.mxu0 0.0
        %935 = vmatpush1.msra.mxu0 0.0
        %936 = vmatprep.subr.mxu0 0.0
        %937 = vmatpush1.msra.mxu0 0.0
        %938 = vmatprep.subr.mxu0 0.0
        %939 = vmatpush1.msra.mxu0 0.0
        %940 = vmatprep.subr.mxu0 0.0
        %941 = vmatpush1.msra.mxu0 0.0
        %942 = vmatprep.subr.mxu0 0.0
        %943 = vmatpush1.msra.mxu0 0.0
        %944 = vmatprep.subr.mxu0 0.0
        %945 = vmatpush1.msra.mxu0 0.0
        %946 = vmatprep.subr.mxu0 0.0
        %947 = vmatpush1.msra.mxu0 0.0
        %948 = vmatprep.subr.mxu0 0.0
        %949 = vmatpush1.msra.mxu0 0.0
        %950 = vmatprep.subr.mxu0 0.0
        %951 = vmatpush1.msra.mxu0 0.0
        %952 = vmatprep.subr.mxu0 0.0
        %953 = vmatpush1.msra.mxu0 0.0
        %954 = vmatprep.mubr.f32.mxu0 0.0
        %v955 = vand.u32 %v213, 4294901760
        %v956 = vsub.f32 %v213, %v955
        %957 = vmatmul.mubr.f32.gmra.mrb[0].mxu0 %v956
        %v958 = vpop.f32.mrb[0].mxu0
        %v959 = vadd.f32 %v822, %v958
        %v960 = vpop.f32.mrb[0].mxu0
        %v961 = vadd.f32 %v824, %v960
        %962 = vdwg.mxu0
        %v963 = vand.u32 %v215, 4294901760
        %964 = vmatprep.subr.mxu0 %v963
        %v965 = vand.u32 %v214, 4294901760
        %966 = vmatpush1.msra.mxu0 %v965
        %v967 = vand.u32 %v232, 4294901760
        %968 = vmatprep.subr.mxu0 %v967
        %v969 = vand.u32 %v231, 4294901760
        %970 = vmatpush1.msra.mxu0 %v969
        %v971 = vand.u32 %v249, 4294901760
        %972 = vmatprep.subr.mxu0 %v971
        %v973 = vand.u32 %v248, 4294901760
        %974 = vmatpush1.msra.mxu0 %v973
        %v975 = vand.u32 %v266, 4294901760
        %976 = vmatprep.subr.mxu0 %v975
        %v977 = vand.u32 %v265, 4294901760
        %978 = vmatpush1.msra.mxu0 %v977
        %v979 = vand.u32 %v283, 4294901760
        %980 = vmatprep.subr.mxu0 %v979
        %v981 = vand.u32 %v282, 4294901760
        %982 = vmatpush1.msra.mxu0 %v981
        %v983 = vand.u32 %v300, 4294901760
        %984 = vmatprep.subr.mxu0 %v983
        %v985 = vand.u32 %v299, 4294901760
        %986 = vmatpush1.msra.mxu0 %v985
        %v987 = vand.u32 %v317, 4294901760
        %988 = vmatprep.subr.mxu0 %v987
        %v989 = vand.u32 %v316, 4294901760
        %990 = vmatpush1.msra.mxu0 %v989
        %v991 = vand.u32 %v334, 4294901760
        %992 = vmatprep.subr.mxu0 %v991
        %v993 = vand.u32 %v333, 4294901760
        %994 = vmatpush1.msra.mxu0 %v993
        %v995 = vand.u32 %v351, 4294901760
        %996 = vmatprep.subr.mxu0 %v995
        %v997 = vand.u32 %v350, 4294901760
        %998 = vmatpush1.msra.mxu0 %v997
        %v999 = vand.u32 %v368, 4294901760
        %1000 = vmatprep.subr.mxu0 %v999
        %v1001 = vand.u32 %v367, 4294901760
        %1002 = vmatpush1.msra.mxu0 %v1001
        %v1003 = vand.u32 %v385, 4294901760
        %1004 = vmatprep.subr.mxu0 %v1003
        %v1005 = vand.u32 %v384, 4294901760
        %1006 = vmatpush1.msra.mxu0 %v1005
        %v1007 = vand.u32 %v402, 4294901760
        %1008 = vmatprep.subr.mxu0 %v1007
        %v1009 = vand.u32 %v401, 4294901760
        %1010 = vmatpush1.msra.mxu0 %v1009
        %v1011 = vand.u32 %v419, 4294901760
        %1012 = vmatprep.subr.mxu0 %v1011
        %v1013 = vand.u32 %v418, 4294901760
        %1014 = vmatpush1.msra.mxu0 %v1013
        %v1015 = vand.u32 %v436, 4294901760
        %1016 = vmatprep.subr.mxu0 %v1015
        %v1017 = vand.u32 %v435, 4294901760
        %1018 = vmatpush1.msra.mxu0 %v1017
        %v1019 = vand.u32 %v453, 4294901760
        %1020 = vmatprep.subr.mxu0 %v1019
        %v1021 = vand.u32 %v452, 4294901760
        %1022 = vmatpush1.msra.mxu0 %v1021
        %v1023 = vand.u32 %v470, 4294901760
        %1024 = vmatprep.subr.mxu0 %v1023
        %v1025 = vand.u32 %v469, 4294901760
        %1026 = vmatpush1.msra.mxu0 %v1025
        %1027 = vmatprep.subr.mxu0 0.0
        %1028 = vmatpush1.msra.mxu0 0.0
        %1029 = vmatprep.subr.mxu0 0.0
        %1030 = vmatpush1.msra.mxu0 0.0
        %1031 = vmatprep.subr.mxu0 0.0
        %1032 = vmatpush1.msra.mxu0 0.0
        %1033 = vmatprep.subr.mxu0 0.0
        %1034 = vmatpush1.msra.mxu0 0.0
        %1035 = vmatprep.subr.mxu0 0.0
        %1036 = vmatpush1.msra.mxu0 0.0
        %1037 = vmatprep.subr.mxu0 0.0
        %1038 = vmatpush1.msra.mxu0 0.0
        %1039 = vmatprep.subr.mxu0 0.0
        %1040 = vmatpush1.msra.mxu0 0.0
        %1041 = vmatprep.subr.mxu0 0.0
        %1042 = vmatpush1.msra.mxu0 0.0
        %1043 = vmatprep.subr.mxu0 0.0
        %1044 = vmatpush1.msra.mxu0 0.0
        %1045 = vmatprep.subr.mxu0 0.0
        %1046 = vmatpush1.msra.mxu0 0.0
        %1047 = vmatprep.subr.mxu0 0.0
        %1048 = vmatpush1.msra.mxu0 0.0
        %1049 = vmatprep.subr.mxu0 0.0
        %1050 = vmatpush1.msra.mxu0 0.0
        %1051 = vmatprep.subr.mxu0 0.0
        %1052 = vmatpush1.msra.mxu0 0.0
        %1053 = vmatprep.subr.mxu0 0.0
        %1054 = vmatpush1.msra.mxu0 0.0
        %1055 = vmatprep.subr.mxu0 0.0
        %1056 = vmatpush1.msra.mxu0 0.0
        %1057 = vmatprep.subr.mxu0 0.0
        %1058 = vmatpush1.msra.mxu0 0.0
        %1059 = vmatprep.mubr.f32.mxu0 0.0
        %v1060 = vand.u32 %v213, 4294901760
        %v1061 = vsub.f32 %v213, %v1060
        %v1062 = vand.u32 %v1061, 4294901760
        %1063 = vmatmul.mubr.f32.gmra.mrb[0].mxu0 %v1062
        %v1064 = vpop.f32.mrb[0].mxu0
        %v1065 = vadd.f32 %v959, %v1064
        %v1066 = vpop.f32.mrb[0].mxu0
        %v1067 = vadd.f32 %v961, %v1066
        %1068 = vdwg.mxu0
        %v1069 = vand.u32 %v215, 4294901760
        %v1070 = vsub.f32 %v215, %v1069
        %v1071 = vand.u32 %v1070, 4294901760
        %1072 = vmatprep.subr.mxu0 %v1071
        %v1073 = vand.u32 %v214, 4294901760
        %v1074 = vsub.f32 %v214, %v1073
        %v1075 = vand.u32 %v1074, 4294901760
        %1076 = vmatpush1.msra.mxu0 %v1075
        %v1077 = vand.u32 %v232, 4294901760
        %v1078 = vsub.f32 %v232, %v1077
        %v1079 = vand.u32 %v1078, 4294901760
        %1080 = vmatprep.subr.mxu0 %v1079
        %v1081 = vand.u32 %v231, 4294901760
        %v1082 = vsub.f32 %v231, %v1081
        %v1083 = vand.u32 %v1082, 4294901760
        %1084 = vmatpush1.msra.mxu0 %v1083
        %v1085 = vand.u32 %v249, 4294901760
        %v1086 = vsub.f32 %v249, %v1085
        %v1087 = vand.u32 %v1086, 4294901760
        %1088 = vmatprep.subr.mxu0 %v1087
        %v1089 = vand.u32 %v248, 4294901760
        %v1090 = vsub.f32 %v248, %v1089
        %v1091 = vand.u32 %v1090, 4294901760
        %1092 = vmatpush1.msra.mxu0 %v1091
        %v1093 = vand.u32 %v266, 4294901760
        %v1094 = vsub.f32 %v266, %v1093
        %v1095 = vand.u32 %v1094, 4294901760
        %1096 = vmatprep.subr.mxu0 %v1095
        %v1097 = vand.u32 %v265, 4294901760
        %v1098 = vsub.f32 %v265, %v1097
        %v1099 = vand.u32 %v1098, 4294901760
        %1100 = vmatpush1.msra.mxu0 %v1099
        %v1101 = vand.u32 %v283, 4294901760
        %v1102 = vsub.f32 %v283, %v1101
        %v1103 = vand.u32 %v1102, 4294901760
        %1104 = vmatprep.subr.mxu0 %v1103
        %v1105 = vand.u32 %v282, 4294901760
        %v1106 = vsub.f32 %v282, %v1105
        %v1107 = vand.u32 %v1106, 4294901760
        %1108 = vmatpush1.msra.mxu0 %v1107
        %v1109 = vand.u32 %v300, 4294901760
        %v1110 = vsub.f32 %v300, %v1109
        %v1111 = vand.u32 %v1110, 4294901760
        %1112 = vmatprep.subr.mxu0 %v1111
        %v1113 = vand.u32 %v299, 4294901760
        %v1114 = vsub.f32 %v299, %v1113
        %v1115 = vand.u32 %v1114, 4294901760
        %1116 = vmatpush1.msra.mxu0 %v1115
        %v1117 = vand.u32 %v317, 4294901760
        %v1118 = vsub.f32 %v317, %v1117
        %v1119 = vand.u32 %v1118, 4294901760
        %1120 = vmatprep.subr.mxu0 %v1119
        %v1121 = vand.u32 %v316, 4294901760
        %v1122 = vsub.f32 %v316, %v1121
        %v1123 = vand.u32 %v1122, 4294901760
        %1124 = vmatpush1.msra.mxu0 %v1123
        %v1125 = vand.u32 %v334, 4294901760
        %v1126 = vsub.f32 %v334, %v1125
        %v1127 = vand.u32 %v1126, 4294901760
        %1128 = vmatprep.subr.mxu0 %v1127
        %v1129 = vand.u32 %v333, 4294901760
        %v1130 = vsub.f32 %v333, %v1129
        %v1131 = vand.u32 %v1130, 4294901760
        %1132 = vmatpush1.msra.mxu0 %v1131
        %v1133 = vand.u32 %v351, 4294901760
        %v1134 = vsub.f32 %v351, %v1133
        %v1135 = vand.u32 %v1134, 4294901760
        %1136 = vmatprep.subr.mxu0 %v1135
        %v1137 = vand.u32 %v350, 4294901760
        %v1138 = vsub.f32 %v350, %v1137
        %v1139 = vand.u32 %v1138, 4294901760
        %1140 = vmatpush1.msra.mxu0 %v1139
        %v1141 = vand.u32 %v368, 4294901760
        %v1142 = vsub.f32 %v368, %v1141
        %v1143 = vand.u32 %v1142, 4294901760
        %1144 = vmatprep.subr.mxu0 %v1143
        %v1145 = vand.u32 %v367, 4294901760
        %v1146 = vsub.f32 %v367, %v1145
        %v1147 = vand.u32 %v1146, 4294901760
        %1148 = vmatpush1.msra.mxu0 %v1147
        %v1149 = vand.u32 %v385, 4294901760
        %v1150 = vsub.f32 %v385, %v1149
        %v1151 = vand.u32 %v1150, 4294901760
        %1152 = vmatprep.subr.mxu0 %v1151
        %v1153 = vand.u32 %v384, 4294901760
        %v1154 = vsub.f32 %v384, %v1153
        %v1155 = vand.u32 %v1154, 4294901760
        %1156 = vmatpush1.msra.mxu0 %v1155
        %v1157 = vand.u32 %v402, 4294901760
        %v1158 = vsub.f32 %v402, %v1157
        %v1159 = vand.u32 %v1158, 4294901760
        %1160 = vmatprep.subr.mxu0 %v1159
        %v1161 = vand.u32 %v401, 4294901760
        %v1162 = vsub.f32 %v401, %v1161
        %v1163 = vand.u32 %v1162, 4294901760
        %1164 = vmatpush1.msra.mxu0 %v1163
        %v1165 = vand.u32 %v419, 4294901760
        %v1166 = vsub.f32 %v419, %v1165
        %v1167 = vand.u32 %v1166, 4294901760
        %1168 = vmatprep.subr.mxu0 %v1167
        %v1169 = vand.u32 %v418, 4294901760
        %v1170 = vsub.f32 %v418, %v1169
        %v1171 = vand.u32 %v1170, 4294901760
        %1172 = vmatpush1.msra.mxu0 %v1171
        %v1173 = vand.u32 %v436, 4294901760
        %v1174 = vsub.f32 %v436, %v1173
        %v1175 = vand.u32 %v1174, 4294901760
        %1176 = vmatprep.subr.mxu0 %v1175
        %v1177 = vand.u32 %v435, 4294901760
        %v1178 = vsub.f32 %v435, %v1177
        %v1179 = vand.u32 %v1178, 4294901760
        %1180 = vmatpush1.msra.mxu0 %v1179
        %v1181 = vand.u32 %v453, 4294901760
        %v1182 = vsub.f32 %v453, %v1181
        %v1183 = vand.u32 %v1182, 4294901760
        %1184 = vmatprep.subr.mxu0 %v1183
        %v1185 = vand.u32 %v452, 4294901760
        %v1186 = vsub.f32 %v452, %v1185
        %v1187 = vand.u32 %v1186, 4294901760
        %1188 = vmatpush1.msra.mxu0 %v1187
        %v1189 = vand.u32 %v470, 4294901760
        %v1190 = vsub.f32 %v470, %v1189
        %v1191 = vand.u32 %v1190, 4294901760
        %1192 = vmatprep.subr.mxu0 %v1191
        %v1193 = vand.u32 %v469, 4294901760
        %v1194 = vsub.f32 %v469, %v1193
        %v1195 = vand.u32 %v1194, 4294901760
        %1196 = vmatpush1.msra.mxu0 %v1195
        %1197 = vmatprep.subr.mxu0 0.0
        %1198 = vmatpush1.msra.mxu0 0.0
        %1199 = vmatprep.subr.mxu0 0.0
        %1200 = vmatpush1.msra.mxu0 0.0
        %1201 = vmatprep.subr.mxu0 0.0
        %1202 = vmatpush1.msra.mxu0 0.0
        %1203 = vmatprep.subr.mxu0 0.0
        %1204 = vmatpush1.msra.mxu0 0.0
        %1205 = vmatprep.subr.mxu0 0.0
        %1206 = vmatpush1.msra.mxu0 0.0
        %1207 = vmatprep.subr.mxu0 0.0
        %1208 = vmatpush1.msra.mxu0 0.0
        %1209 = vmatprep.subr.mxu0 0.0
        %1210 = vmatpush1.msra.mxu0 0.0
        %1211 = vmatprep.subr.mxu0 0.0
        %1212 = vmatpush1.msra.mxu0 0.0
        %1213 = vmatprep.subr.mxu0 0.0
        %1214 = vmatpush1.msra.mxu0 0.0
        %1215 = vmatprep.subr.mxu0 0.0
        %1216 = vmatpush1.msra.mxu0 0.0
        %1217 = vmatprep.subr.mxu0 0.0
        %1218 = vmatpush1.msra.mxu0 0.0
        %1219 = vmatprep.subr.mxu0 0.0
        %1220 = vmatpush1.msra.mxu0 0.0
        %1221 = vmatprep.subr.mxu0 0.0
        %1222 = vmatpush1.msra.mxu0 0.0
        %1223 = vmatprep.subr.mxu0 0.0
        %1224 = vmatpush1.msra.mxu0 0.0
        %1225 = vmatprep.subr.mxu0 0.0
        %1226 = vmatpush1.msra.mxu0 0.0
        %1227 = vmatprep.subr.mxu0 0.0
        %1228 = vmatpush1.msra.mxu0 0.0
        %1229 = vmatprep.mubr.f32.mxu0 0.0
        %v1230 = vand.u32 %v213, 4294901760
        %1231 = vmatmul.mubr.f32.gmra.mrb[0].mxu0 %v1230
        %v1232 = vpop.f32.mrb[0].mxu0
        %v1233 = vadd.f32 %v1065, %v1232
        %v1234 = vpop.f32.mrb[0].mxu0
        %v1235 = vadd.f32 %v1067, %v1234
        %1236 = vdwg.mxu0
        %v1237 = vand.u32 %v215, 4294901760
        %1238 = vmatprep.subr.mxu0 %v1237
        %v1239 = vand.u32 %v214, 4294901760
        %1240 = vmatpush1.msra.mxu0 %v1239
        %v1241 = vand.u32 %v232, 4294901760
        %1242 = vmatprep.subr.mxu0 %v1241
        %v1243 = vand.u32 %v231, 4294901760
        %1244 = vmatpush1.msra.mxu0 %v1243
        %v1245 = vand.u32 %v249, 4294901760
        %1246 = vmatprep.subr.mxu0 %v1245
        %v1247 = vand.u32 %v248, 4294901760
        %1248 = vmatpush1.msra.mxu0 %v1247
        %v1249 = vand.u32 %v266, 4294901760
        %1250 = vmatprep.subr.mxu0 %v1249
        %v1251 = vand.u32 %v265, 4294901760
        %1252 = vmatpush1.msra.mxu0 %v1251
        %v1253 = vand.u32 %v283, 4294901760
        %1254 = vmatprep.subr.mxu0 %v1253
        %v1255 = vand.u32 %v282, 4294901760
        %1256 = vmatpush1.msra.mxu0 %v1255
        %v1257 = vand.u32 %v300, 4294901760
        %1258 = vmatprep.subr.mxu0 %v1257
        %v1259 = vand.u32 %v299, 4294901760
        %1260 = vmatpush1.msra.mxu0 %v1259
        %v1261 = vand.u32 %v317, 4294901760
        %1262 = vmatprep.subr.mxu0 %v1261
        %v1263 = vand.u32 %v316, 4294901760
        %1264 = vmatpush1.msra.mxu0 %v1263
        %v1265 = vand.u32 %v334, 4294901760
        %1266 = vmatprep.subr.mxu0 %v1265
        %v1267 = vand.u32 %v333, 4294901760
        %1268 = vmatpush1.msra.mxu0 %v1267
        %v1269 = vand.u32 %v351, 4294901760
        %1270 = vmatprep.subr.mxu0 %v1269
        %v1271 = vand.u32 %v350, 4294901760
        %1272 = vmatpush1.msra.mxu0 %v1271
        %v1273 = vand.u32 %v368, 4294901760
        %1274 = vmatprep.subr.mxu0 %v1273
        %v1275 = vand.u32 %v367, 4294901760
        %1276 = vmatpush1.msra.mxu0 %v1275
        %v1277 = vand.u32 %v385, 4294901760
        %1278 = vmatprep.subr.mxu0 %v1277
        %v1279 = vand.u32 %v384, 4294901760
        %1280 = vmatpush1.msra.mxu0 %v1279
        %v1281 = vand.u32 %v402, 4294901760
        %1282 = vmatprep.subr.mxu0 %v1281
        %v1283 = vand.u32 %v401, 4294901760
        %1284 = vmatpush1.msra.mxu0 %v1283
        %v1285 = vand.u32 %v419, 4294901760
        %1286 = vmatprep.subr.mxu0 %v1285
        %v1287 = vand.u32 %v418, 4294901760
        %1288 = vmatpush1.msra.mxu0 %v1287
        %v1289 = vand.u32 %v436, 4294901760
        %1290 = vmatprep.subr.mxu0 %v1289
        %v1291 = vand.u32 %v435, 4294901760
        %1292 = vmatpush1.msra.mxu0 %v1291
        %v1293 = vand.u32 %v453, 4294901760
        %1294 = vmatprep.subr.mxu0 %v1293
        %v1295 = vand.u32 %v452, 4294901760
        %1296 = vmatpush1.msra.mxu0 %v1295
        %v1297 = vand.u32 %v470, 4294901760
        %1298 = vmatprep.subr.mxu0 %v1297
        %v1299 = vand.u32 %v469, 4294901760
        %1300 = vmatpush1.msra.mxu0 %v1299
        %1301 = vmatprep.subr.mxu0 0.0
        %1302 = vmatpush1.msra.mxu0 0.0
        %1303 = vmatprep.subr.mxu0 0.0
        %1304 = vmatpush1.msra.mxu0 0.0
        %1305 = vmatprep.subr.mxu0 0.0
        %1306 = vmatpush1.msra.mxu0 0.0
        %1307 = vmatprep.subr.mxu0 0.0
        %1308 = vmatpush1.msra.mxu0 0.0
        %1309 = vmatprep.subr.mxu0 0.0
        %1310 = vmatpush1.msra.mxu0 0.0
        %1311 = vmatprep.subr.mxu0 0.0
        %1312 = vmatpush1.msra.mxu0 0.0
        %1313 = vmatprep.subr.mxu0 0.0
        %1314 = vmatpush1.msra.mxu0 0.0
        %1315 = vmatprep.subr.mxu0 0.0
        %1316 = vmatpush1.msra.mxu0 0.0
        %1317 = vmatprep.subr.mxu0 0.0
        %1318 = vmatpush1.msra.mxu0 0.0
        %1319 = vmatprep.subr.mxu0 0.0
        %1320 = vmatpush1.msra.mxu0 0.0
        %1321 = vmatprep.subr.mxu0 0.0
        %1322 = vmatpush1.msra.mxu0 0.0
        %1323 = vmatprep.subr.mxu0 0.0
        %1324 = vmatpush1.msra.mxu0 0.0
        %1325 = vmatprep.subr.mxu0 0.0
        %1326 = vmatpush1.msra.mxu0 0.0
        %1327 = vmatprep.subr.mxu0 0.0
        %1328 = vmatpush1.msra.mxu0 0.0
        %1329 = vmatprep.subr.mxu0 0.0
        %1330 = vmatpush1.msra.mxu0 0.0
        %1331 = vmatprep.subr.mxu0 0.0
        %1332 = vmatpush1.msra.mxu0 0.0
        %1333 = vmatprep.mubr.f32.mxu0 0.0
        %v1334 = vand.u32 %v213, 4294901760
        %1335 = vmatmul.mubr.f32.gmra.mrb[0].mxu0 %v1334
        %v1336 = vpop.f32.mrb[0].mxu0
        %v1337 = vadd.f32 %v1233, %v1336
        %v1338 = vpop.f32.mrb[0].mxu0
        %v1339 = vadd.f32 %v1235, %v1338
        %1340 = vdwg.mxu0
        %v1341 = vand.u32 %v217, 4294901760
        %1342 = vmatprep.subr.mxu0 %v1341
        %v1343 = vand.u32 %v216, 4294901760
        %1344 = vmatpush1.msra.mxu0 %v1343
        %v1345 = vand.u32 %v234, 4294901760
        %1346 = vmatprep.subr.mxu0 %v1345
        %v1347 = vand.u32 %v233, 4294901760
        %1348 = vmatpush1.msra.mxu0 %v1347
        %v1349 = vand.u32 %v251, 4294901760
        %1350 = vmatprep.subr.mxu0 %v1349
        %v1351 = vand.u32 %v250, 4294901760
        %1352 = vmatpush1.msra.mxu0 %v1351
        %v1353 = vand.u32 %v268, 4294901760
        %1354 = vmatprep.subr.mxu0 %v1353
        %v1355 = vand.u32 %v267, 4294901760
        %1356 = vmatpush1.msra.mxu0 %v1355
        %v1357 = vand.u32 %v285, 4294901760
        %1358 = vmatprep.subr.mxu0 %v1357
        %v1359 = vand.u32 %v284, 4294901760
        %1360 = vmatpush1.msra.mxu0 %v1359
        %v1361 = vand.u32 %v302, 4294901760
        %1362 = vmatprep.subr.mxu0 %v1361
        %v1363 = vand.u32 %v301, 4294901760
        %1364 = vmatpush1.msra.mxu0 %v1363
        %v1365 = vand.u32 %v319, 4294901760
        %1366 = vmatprep.subr.mxu0 %v1365
        %v1367 = vand.u32 %v318, 4294901760
        %1368 = vmatpush1.msra.mxu0 %v1367
        %v1369 = vand.u32 %v336, 4294901760
        %1370 = vmatprep.subr.mxu0 %v1369
        %v1371 = vand.u32 %v335, 4294901760
        %1372 = vmatpush1.msra.mxu0 %v1371
        %v1373 = vand.u32 %v353, 4294901760
        %1374 = vmatprep.subr.mxu0 %v1373
        %v1375 = vand.u32 %v352, 4294901760
        %1376 = vmatpush1.msra.mxu0 %v1375
        %v1377 = vand.u32 %v370, 4294901760
        %1378 = vmatprep.subr.mxu0 %v1377
        %v1379 = vand.u32 %v369, 4294901760
        %1380 = vmatpush1.msra.mxu0 %v1379
        %v1381 = vand.u32 %v387, 4294901760
        %1382 = vmatprep.subr.mxu0 %v1381
        %v1383 = vand.u32 %v386, 4294901760
        %1384 = vmatpush1.msra.mxu0 %v1383
        %v1385 = vand.u32 %v404, 4294901760
        %1386 = vmatprep.subr.mxu0 %v1385
        %v1387 = vand.u32 %v403, 4294901760
        %1388 = vmatpush1.msra.mxu0 %v1387
        %v1389 = vand.u32 %v421, 4294901760
        %1390 = vmatprep.subr.mxu0 %v1389
        %v1391 = vand.u32 %v420, 4294901760
        %1392 = vmatpush1.msra.mxu0 %v1391
        %v1393 = vand.u32 %v438, 4294901760
        %1394 = vmatprep.subr.mxu0 %v1393
        %v1395 = vand.u32 %v437, 4294901760
        %1396 = vmatpush1.msra.mxu0 %v1395
        %v1397 = vand.u32 %v455, 4294901760
        %1398 = vmatprep.subr.mxu0 %v1397
        %v1399 = vand.u32 %v454, 4294901760
        %1400 = vmatpush1.msra.mxu0 %v1399
        %v1401 = vand.u32 %v472, 4294901760
        %1402 = vmatprep.subr.mxu0 %v1401
        %v1403 = vand.u32 %v471, 4294901760
        %1404 = vmatpush1.msra.mxu0 %v1403
        %1405 = vmatprep.subr.mxu0 0.0
        %1406 = vmatpush1.msra.mxu0 0.0
        %1407 = vmatprep.subr.mxu0 0.0
        %1408 = vmatpush1.msra.mxu0 0.0
        %1409 = vmatprep.subr.mxu0 0.0
        %1410 = vmatpush1.msra.mxu0 0.0
        %1411 = vmatprep.subr.mxu0 0.0
        %1412 = vmatpush1.msra.mxu0 0.0
        %1413 = vmatprep.subr.mxu0 0.0
        %1414 = vmatpush1.msra.mxu0 0.0
        %1415 = vmatprep.subr.mxu0 0.0
        %1416 = vmatpush1.msra.mxu0 0.0
        %1417 = vmatprep.subr.mxu0 0.0
        %1418 = vmatpush1.msra.mxu0 0.0
        %1419 = vmatprep.subr.mxu0 0.0
        %1420 = vmatpush1.msra.mxu0 0.0
        %1421 = vmatprep.subr.mxu0 0.0
        %1422 = vmatpush1.msra.mxu0 0.0
        %1423 = vmatprep.subr.mxu0 0.0
        %1424 = vmatpush1.msra.mxu0 0.0
        %1425 = vmatprep.subr.mxu0 0.0
        %1426 = vmatpush1.msra.mxu0 0.0
        %1427 = vmatprep.subr.mxu0 0.0
        %1428 = vmatpush1.msra.mxu0 0.0
        %1429 = vmatprep.subr.mxu0 0.0
        %1430 = vmatpush1.msra.mxu0 0.0
        %1431 = vmatprep.subr.mxu0 0.0
        %1432 = vmatpush1.msra.mxu0 0.0
        %1433 = vmatprep.subr.mxu0 0.0
        %1434 = vmatpush1.msra.mxu0 0.0
        %1435 = vmatprep.subr.mxu0 0.0
        %1436 = vmatpush1.msra.mxu0 0.0
        %1437 = vmatprep.mubr.f32.mxu0 0.0
        %v1438 = vand.u32 %v213, 4294901760
        %v1439 = vsub.f32 %v213, %v1438
        %v1440 = vand.u32 %v1439, 4294901760
        %v1441 = vsub.f32 %v1439, %v1440
        %v1442 = vand.u32 %v1441, 4294901760
        %1443 = vmatmul.mubr.f32.gmra.mrb[0].mxu0 %v1442
        %v1444 = vpop.f32.mrb[0].mxu0
        %v1445 = vadd.f32 0.0, %v1444
        %v1446 = vpop.f32.mrb[0].mxu0
        %v1447 = vadd.f32 0.0, %v1446
        %1448 = vdwg.mxu0
        %v1449 = vand.u32 %v217, 4294901760
        %v1450 = vsub.f32 %v217, %v1449
        %v1451 = vand.u32 %v1450, 4294901760
        %v1452 = vsub.f32 %v1450, %v1451
        %v1453 = vand.u32 %v1452, 4294901760
        %1454 = vmatprep.subr.mxu0 %v1453
        %v1455 = vand.u32 %v216, 4294901760
        %v1456 = vsub.f32 %v216, %v1455
        %v1457 = vand.u32 %v1456, 4294901760
        %v1458 = vsub.f32 %v1456, %v1457
        %v1459 = vand.u32 %v1458, 4294901760
        %1460 = vmatpush1.msra.mxu0 %v1459
        %v1461 = vand.u32 %v234, 4294901760
        %v1462 = vsub.f32 %v234, %v1461
        %v1463 = vand.u32 %v1462, 4294901760
        %v1464 = vsub.f32 %v1462, %v1463
        %v1465 = vand.u32 %v1464, 4294901760
        %1466 = vmatprep.subr.mxu0 %v1465
        %v1467 = vand.u32 %v233, 4294901760
        %v1468 = vsub.f32 %v233, %v1467
        %v1469 = vand.u32 %v1468, 4294901760
        %v1470 = vsub.f32 %v1468, %v1469
        %v1471 = vand.u32 %v1470, 4294901760
        %1472 = vmatpush1.msra.mxu0 %v1471
        %v1473 = vand.u32 %v251, 4294901760
        %v1474 = vsub.f32 %v251, %v1473
        %v1475 = vand.u32 %v1474, 4294901760
        %v1476 = vsub.f32 %v1474, %v1475
        %v1477 = vand.u32 %v1476, 4294901760
        %1478 = vmatprep.subr.mxu0 %v1477
        %v1479 = vand.u32 %v250, 4294901760
        %v1480 = vsub.f32 %v250, %v1479
        %v1481 = vand.u32 %v1480, 4294901760
        %v1482 = vsub.f32 %v1480, %v1481
        %v1483 = vand.u32 %v1482, 4294901760
        %1484 = vmatpush1.msra.mxu0 %v1483
        %v1485 = vand.u32 %v268, 4294901760
        %v1486 = vsub.f32 %v268, %v1485
        %v1487 = vand.u32 %v1486, 4294901760
        %v1488 = vsub.f32 %v1486, %v1487
        %v1489 = vand.u32 %v1488, 4294901760
        %1490 = vmatprep.subr.mxu0 %v1489
        %v1491 = vand.u32 %v267, 4294901760
        %v1492 = vsub.f32 %v267, %v1491
        %v1493 = vand.u32 %v1492, 4294901760
        %v1494 = vsub.f32 %v1492, %v1493
        %v1495 = vand.u32 %v1494, 4294901760
        %1496 = vmatpush1.msra.mxu0 %v1495
        %v1497 = vand.u32 %v285, 4294901760
        %v1498 = vsub.f32 %v285, %v1497
        %v1499 = vand.u32 %v1498, 4294901760
        %v1500 = vsub.f32 %v1498, %v1499
        %v1501 = vand.u32 %v1500, 4294901760
        %1502 = vmatprep.subr.mxu0 %v1501
        %v1503 = vand.u32 %v284, 4294901760
        %v1504 = vsub.f32 %v284, %v1503
        %v1505 = vand.u32 %v1504, 4294901760
        %v1506 = vsub.f32 %v1504, %v1505
        %v1507 = vand.u32 %v1506, 4294901760
        %1508 = vmatpush1.msra.mxu0 %v1507
        %v1509 = vand.u32 %v302, 4294901760
        %v1510 = vsub.f32 %v302, %v1509
        %v1511 = vand.u32 %v1510, 4294901760
        %v1512 = vsub.f32 %v1510, %v1511
        %v1513 = vand.u32 %v1512, 4294901760
        %1514 = vmatprep.subr.mxu0 %v1513
        %v1515 = vand.u32 %v301, 4294901760
        %v1516 = vsub.f32 %v301, %v1515
        %v1517 = vand.u32 %v1516, 4294901760
        %v1518 = vsub.f32 %v1516, %v1517
        %v1519 = vand.u32 %v1518, 4294901760
        %1520 = vmatpush1.msra.mxu0 %v1519
        %v1521 = vand.u32 %v319, 4294901760
        %v1522 = vsub.f32 %v319, %v1521
        %v1523 = vand.u32 %v1522, 4294901760
        %v1524 = vsub.f32 %v1522, %v1523
        %v1525 = vand.u32 %v1524, 4294901760
        %1526 = vmatprep.subr.mxu0 %v1525
        %v1527 = vand.u32 %v318, 4294901760
        %v1528 = vsub.f32 %v318, %v1527
        %v1529 = vand.u32 %v1528, 4294901760
        %v1530 = vsub.f32 %v1528, %v1529
        %v1531 = vand.u32 %v1530, 4294901760
        %1532 = vmatpush1.msra.mxu0 %v1531
        %v1533 = vand.u32 %v336, 4294901760
        %v1534 = vsub.f32 %v336, %v1533
        %v1535 = vand.u32 %v1534, 4294901760
        %v1536 = vsub.f32 %v1534, %v1535
        %v1537 = vand.u32 %v1536, 4294901760
        %1538 = vmatprep.subr.mxu0 %v1537
        %v1539 = vand.u32 %v335, 4294901760
        %v1540 = vsub.f32 %v335, %v1539
        %v1541 = vand.u32 %v1540, 4294901760
        %v1542 = vsub.f32 %v1540, %v1541
        %v1543 = vand.u32 %v1542, 4294901760
        %1544 = vmatpush1.msra.mxu0 %v1543
        %v1545 = vand.u32 %v353, 4294901760
        %v1546 = vsub.f32 %v353, %v1545
        %v1547 = vand.u32 %v1546, 4294901760
        %v1548 = vsub.f32 %v1546, %v1547
        %v1549 = vand.u32 %v1548, 4294901760
        %1550 = vmatprep.subr.mxu0 %v1549
        %v1551 = vand.u32 %v352, 4294901760
        %v1552 = vsub.f32 %v352, %v1551
        %v1553 = vand.u32 %v1552, 4294901760
        %v1554 = vsub.f32 %v1552, %v1553
        %v1555 = vand.u32 %v1554, 4294901760
        %1556 = vmatpush1.msra.mxu0 %v1555
        %v1557 = vand.u32 %v370, 4294901760
        %v1558 = vsub.f32 %v370, %v1557
        %v1559 = vand.u32 %v1558, 4294901760
        %v1560 = vsub.f32 %v1558, %v1559
        %v1561 = vand.u32 %v1560, 4294901760
        %1562 = vmatprep.subr.mxu0 %v1561
        %v1563 = vand.u32 %v369, 4294901760
        %v1564 = vsub.f32 %v369, %v1563
        %v1565 = vand.u32 %v1564, 4294901760
        %v1566 = vsub.f32 %v1564, %v1565
        %v1567 = vand.u32 %v1566, 4294901760
        %1568 = vmatpush1.msra.mxu0 %v1567
        %v1569 = vand.u32 %v387, 4294901760
        %v1570 = vsub.f32 %v387, %v1569
        %v1571 = vand.u32 %v1570, 4294901760
        %v1572 = vsub.f32 %v1570, %v1571
        %v1573 = vand.u32 %v1572, 4294901760
        %1574 = vmatprep.subr.mxu0 %v1573
        %v1575 = vand.u32 %v386, 4294901760
        %v1576 = vsub.f32 %v386, %v1575
        %v1577 = vand.u32 %v1576, 4294901760
        %v1578 = vsub.f32 %v1576, %v1577
        %v1579 = vand.u32 %v1578, 4294901760
        %1580 = vmatpush1.msra.mxu0 %v1579
        %v1581 = vand.u32 %v404, 4294901760
        %v1582 = vsub.f32 %v404, %v1581
        %v1583 = vand.u32 %v1582, 4294901760
        %v1584 = vsub.f32 %v1582, %v1583
        %v1585 = vand.u32 %v1584, 4294901760
        %1586 = vmatprep.subr.mxu0 %v1585
        %v1587 = vand.u32 %v403, 4294901760
        %v1588 = vsub.f32 %v403, %v1587
        %v1589 = vand.u32 %v1588, 4294901760
        %v1590 = vsub.f32 %v1588, %v1589
        %v1591 = vand.u32 %v1590, 4294901760
        %1592 = vmatpush1.msra.mxu0 %v1591
        %v1593 = vand.u32 %v421, 4294901760
        %v1594 = vsub.f32 %v421, %v1593
        %v1595 = vand.u32 %v1594, 4294901760
        %v1596 = vsub.f32 %v1594, %v1595
        %v1597 = vand.u32 %v1596, 4294901760
        %1598 = vmatprep.subr.mxu0 %v1597
        %v1599 = vand.u32 %v420, 4294901760
        %v1600 = vsub.f32 %v420, %v1599
        %v1601 = vand.u32 %v1600, 4294901760
        %v1602 = vsub.f32 %v1600, %v1601
        %v1603 = vand.u32 %v1602, 4294901760
        %1604 = vmatpush1.msra.mxu0 %v1603
        %v1605 = vand.u32 %v438, 4294901760
        %v1606 = vsub.f32 %v438, %v1605
        %v1607 = vand.u32 %v1606, 4294901760
        %v1608 = vsub.f32 %v1606, %v1607
        %v1609 = vand.u32 %v1608, 4294901760
        %1610 = vmatprep.subr.mxu0 %v1609
        %v1611 = vand.u32 %v437, 4294901760
        %v1612 = vsub.f32 %v437, %v1611
        %v1613 = vand.u32 %v1612, 4294901760
        %v1614 = vsub.f32 %v1612, %v1613
        %v1615 = vand.u32 %v1614, 4294901760
        %1616 = vmatpush1.msra.mxu0 %v1615
        %v1617 = vand.u32 %v455, 4294901760
        %v1618 = vsub.f32 %v455, %v1617
        %v1619 = vand.u32 %v1618, 4294901760
        %v1620 = vsub.f32 %v1618, %v1619
        %v1621 = vand.u32 %v1620, 4294901760
        %1622 = vmatprep.subr.mxu0 %v1621
        %v1623 = vand.u32 %v454, 4294901760
        %v1624 = vsub.f32 %v454, %v1623
        %v1625 = vand.u32 %v1624, 4294901760
        %v1626 = vsub.f32 %v1624, %v1625
        %v1627 = vand.u32 %v1626, 4294901760
        %1628 = vmatpush1.msra.mxu0 %v1627
        %v1629 = vand.u32 %v472, 4294901760
        %v1630 = vsub.f32 %v472, %v1629
        %v1631 = vand.u32 %v1630, 4294901760
        %v1632 = vsub.f32 %v1630, %v1631
        %v1633 = vand.u32 %v1632, 4294901760
        %1634 = vmatprep.subr.mxu0 %v1633
        %v1635 = vand.u32 %v471, 4294901760
        %v1636 = vsub.f32 %v471, %v1635
        %v1637 = vand.u32 %v1636, 4294901760
        %v1638 = vsub.f32 %v1636, %v1637
        %v1639 = vand.u32 %v1638, 4294901760
        %1640 = vmatpush1.msra.mxu0 %v1639
        %1641 = vmatprep.subr.mxu0 0.0
        %1642 = vmatpush1.msra.mxu0 0.0
        %1643 = vmatprep.subr.mxu0 0.0
        %1644 = vmatpush1.msra.mxu0 0.0
        %1645 = vmatprep.subr.mxu0 0.0
        %1646 = vmatpush1.msra.mxu0 0.0
        %1647 = vmatprep.subr.mxu0 0.0
        %1648 = vmatpush1.msra.mxu0 0.0
        %1649 = vmatprep.subr.mxu0 0.0
        %1650 = vmatpush1.msra.mxu0 0.0
        %1651 = vmatprep.subr.mxu0 0.0
        %1652 = vmatpush1.msra.mxu0 0.0
        %1653 = vmatprep.subr.mxu0 0.0
        %1654 = vmatpush1.msra.mxu0 0.0
        %1655 = vmatprep.subr.mxu0 0.0
        %1656 = vmatpush1.msra.mxu0 0.0
        %1657 = vmatprep.subr.mxu0 0.0
        %1658 = vmatpush1.msra.mxu0 0.0
        %1659 = vmatprep.subr.mxu0 0.0
        %1660 = vmatpush1.msra.mxu0 0.0
        %1661 = vmatprep.subr.mxu0 0.0
        %1662 = vmatpush1.msra.mxu0 0.0
        %1663 = vmatprep.subr.mxu0 0.0
        %1664 = vmatpush1.msra.mxu0 0.0
        %1665 = vmatprep.subr.mxu0 0.0
        %1666 = vmatpush1.msra.mxu0 0.0
        %1667 = vmatprep.subr.mxu0 0.0
        %1668 = vmatpush1.msra.mxu0 0.0
        %1669 = vmatprep.subr.mxu0 0.0
        %1670 = vmatpush1.msra.mxu0 0.0
        %1671 = vmatprep.subr.mxu0 0.0
        %1672 = vmatpush1.msra.mxu0 0.0
        %1673 = vmatprep.mubr.f32.mxu0 0.0
        %v1674 = vand.u32 %v213, 4294901760
        %1675 = vmatmul.mubr.f32.gmra.mrb[0].mxu0 %v1674
        %v1676 = vpop.f32.mrb[0].mxu0
        %v1677 = vadd.f32 %v1445, %v1676
        %v1678 = vpop.f32.mrb[0].mxu0
        %v1679 = vadd.f32 %v1447, %v1678
        %1680 = vdwg.mxu0
        %v1681 = vand.u32 %v217, 4294901760
        %v1682 = vsub.f32 %v217, %v1681
        %1683 = vmatprep.subr.mxu0 %v1682
        %v1684 = vand.u32 %v216, 4294901760
        %v1685 = vsub.f32 %v216, %v1684
        %1686 = vmatpush1.msra.mxu0 %v1685
        %v1687 = vand.u32 %v234, 4294901760
        %v1688 = vsub.f32 %v234, %v1687
        %1689 = vmatprep.subr.mxu0 %v1688
        %v1690 = vand.u32 %v233, 4294901760
        %v1691 = vsub.f32 %v233, %v1690
        %1692 = vmatpush1.msra.mxu0 %v1691
        %v1693 = vand.u32 %v251, 4294901760
        %v1694 = vsub.f32 %v251, %v1693
        %1695 = vmatprep.subr.mxu0 %v1694
        %v1696 = vand.u32 %v250, 4294901760
        %v1697 = vsub.f32 %v250, %v1696
        %1698 = vmatpush1.msra.mxu0 %v1697
        %v1699 = vand.u32 %v268, 4294901760
        %v1700 = vsub.f32 %v268, %v1699
        %1701 = vmatprep.subr.mxu0 %v1700
        %v1702 = vand.u32 %v267, 4294901760
        %v1703 = vsub.f32 %v267, %v1702
        %1704 = vmatpush1.msra.mxu0 %v1703
        %v1705 = vand.u32 %v285, 4294901760
        %v1706 = vsub.f32 %v285, %v1705
        %1707 = vmatprep.subr.mxu0 %v1706
        %v1708 = vand.u32 %v284, 4294901760
        %v1709 = vsub.f32 %v284, %v1708
        %1710 = vmatpush1.msra.mxu0 %v1709
        %v1711 = vand.u32 %v302, 4294901760
        %v1712 = vsub.f32 %v302, %v1711
        %1713 = vmatprep.subr.mxu0 %v1712
        %v1714 = vand.u32 %v301, 4294901760
        %v1715 = vsub.f32 %v301, %v1714
        %1716 = vmatpush1.msra.mxu0 %v1715
        %v1717 = vand.u32 %v319, 4294901760
        %v1718 = vsub.f32 %v319, %v1717
        %1719 = vmatprep.subr.mxu0 %v1718
        %v1720 = vand.u32 %v318, 4294901760
        %v1721 = vsub.f32 %v318, %v1720
        %1722 = vmatpush1.msra.mxu0 %v1721
        %v1723 = vand.u32 %v336, 4294901760
        %v1724 = vsub.f32 %v336, %v1723
        %1725 = vmatprep.subr.mxu0 %v1724
        %v1726 = vand.u32 %v335, 4294901760
        %v1727 = vsub.f32 %v335, %v1726
        %1728 = vmatpush1.msra.mxu0 %v1727
        %v1729 = vand.u32 %v353, 4294901760
        %v1730 = vsub.f32 %v353, %v1729
        %1731 = vmatprep.subr.mxu0 %v1730
        %v1732 = vand.u32 %v352, 4294901760
        %v1733 = vsub.f32 %v352, %v1732
        %1734 = vmatpush1.msra.mxu0 %v1733
        %v1735 = vand.u32 %v370, 4294901760
        %v1736 = vsub.f32 %v370, %v1735
        %1737 = vmatprep.subr.mxu0 %v1736
        %v1738 = vand.u32 %v369, 4294901760
        %v1739 = vsub.f32 %v369, %v1738
        %1740 = vmatpush1.msra.mxu0 %v1739
        %v1741 = vand.u32 %v387, 4294901760
        %v1742 = vsub.f32 %v387, %v1741
        %1743 = vmatprep.subr.mxu0 %v1742
        %v1744 = vand.u32 %v386, 4294901760
        %v1745 = vsub.f32 %v386, %v1744
        %1746 = vmatpush1.msra.mxu0 %v1745
        %v1747 = vand.u32 %v404, 4294901760
        %v1748 = vsub.f32 %v404, %v1747
        %1749 = vmatprep.subr.mxu0 %v1748
        %v1750 = vand.u32 %v403, 4294901760
        %v1751 = vsub.f32 %v403, %v1750
        %1752 = vmatpush1.msra.mxu0 %v1751
        %v1753 = vand.u32 %v421, 4294901760
        %v1754 = vsub.f32 %v421, %v1753
        %1755 = vmatprep.subr.mxu0 %v1754
        %v1756 = vand.u32 %v420, 4294901760
        %v1757 = vsub.f32 %v420, %v1756
        %1758 = vmatpush1.msra.mxu0 %v1757
        %v1759 = vand.u32 %v438, 4294901760
        %v1760 = vsub.f32 %v438, %v1759
        %1761 = vmatprep.subr.mxu0 %v1760
        %v1762 = vand.u32 %v437, 4294901760
        %v1763 = vsub.f32 %v437, %v1762
        %1764 = vmatpush1.msra.mxu0 %v1763
        %v1765 = vand.u32 %v455, 4294901760
        %v1766 = vsub.f32 %v455, %v1765
        %1767 = vmatprep.subr.mxu0 %v1766
        %v1768 = vand.u32 %v454, 4294901760
        %v1769 = vsub.f32 %v454, %v1768
        %1770 = vmatpush1.msra.mxu0 %v1769
        %v1771 = vand.u32 %v472, 4294901760
        %v1772 = vsub.f32 %v472, %v1771
        %1773 = vmatprep.subr.mxu0 %v1772
        %v1774 = vand.u32 %v471, 4294901760
        %v1775 = vsub.f32 %v471, %v1774
        %1776 = vmatpush1.msra.mxu0 %v1775
        %1777 = vmatprep.subr.mxu0 0.0
        %1778 = vmatpush1.msra.mxu0 0.0
        %1779 = vmatprep.subr.mxu0 0.0
        %1780 = vmatpush1.msra.mxu0 0.0
        %1781 = vmatprep.subr.mxu0 0.0
        %1782 = vmatpush1.msra.mxu0 0.0
        %1783 = vmatprep.subr.mxu0 0.0
        %1784 = vmatpush1.msra.mxu0 0.0
        %1785 = vmatprep.subr.mxu0 0.0
        %1786 = vmatpush1.msra.mxu0 0.0
        %1787 = vmatprep.subr.mxu0 0.0
        %1788 = vmatpush1.msra.mxu0 0.0
        %1789 = vmatprep.subr.mxu0 0.0
        %1790 = vmatpush1.msra.mxu0 0.0
        %1791 = vmatprep.subr.mxu0 0.0
        %1792 = vmatpush1.msra.mxu0 0.0
        %1793 = vmatprep.subr.mxu0 0.0
        %1794 = vmatpush1.msra.mxu0 0.0
        %1795 = vmatprep.subr.mxu0 0.0
        %1796 = vmatpush1.msra.mxu0 0.0
        %1797 = vmatprep.subr.mxu0 0.0
        %1798 = vmatpush1.msra.mxu0 0.0
        %1799 = vmatprep.subr.mxu0 0.0
        %1800 = vmatpush1.msra.mxu0 0.0
        %1801 = vmatprep.subr.mxu0 0.0
        %1802 = vmatpush1.msra.mxu0 0.0
        %1803 = vmatprep.subr.mxu0 0.0
        %1804 = vmatpush1.msra.mxu0 0.0
        %1805 = vmatprep.subr.mxu0 0.0
        %1806 = vmatpush1.msra.mxu0 0.0
        %1807 = vmatprep.subr.mxu0 0.0
        %1808 = vmatpush1.msra.mxu0 0.0
        %1809 = vmatprep.mubr.f32.mxu0 0.0
        %v1810 = vand.u32 %v213, 4294901760
        %v1811 = vsub.f32 %v213, %v1810
        %1812 = vmatmul.mubr.f32.gmra.mrb[0].mxu0 %v1811
        %v1813 = vpop.f32.mrb[0].mxu0
        %v1814 = vadd.f32 %v1677, %v1813
        %v1815 = vpop.f32.mrb[0].mxu0
        %v1816 = vadd.f32 %v1679, %v1815
        %1817 = vdwg.mxu0
        %v1818 = vand.u32 %v217, 4294901760
        %1819 = vmatprep.subr.mxu0 %v1818
        %v1820 = vand.u32 %v216, 4294901760
        %1821 = vmatpush1.msra.mxu0 %v1820
        %v1822 = vand.u32 %v234, 4294901760
        %1823 = vmatprep.subr.mxu0 %v1822
        %v1824 = vand.u32 %v233, 4294901760
        %1825 = vmatpush1.msra.mxu0 %v1824
        %v1826 = vand.u32 %v251, 4294901760
        %1827 = vmatprep.subr.mxu0 %v1826
        %v1828 = vand.u32 %v250, 4294901760
        %1829 = vmatpush1.msra.mxu0 %v1828
        %v1830 = vand.u32 %v268, 4294901760
        %1831 = vmatprep.subr.mxu0 %v1830
        %v1832 = vand.u32 %v267, 4294901760
        %1833 = vmatpush1.msra.mxu0 %v1832
        %v1834 = vand.u32 %v285, 4294901760
        %1835 = vmatprep.subr.mxu0 %v1834
        %v1836 = vand.u32 %v284, 4294901760
        %1837 = vmatpush1.msra.mxu0 %v1836
        %v1838 = vand.u32 %v302, 4294901760
        %1839 = vmatprep.subr.mxu0 %v1838
        %v1840 = vand.u32 %v301, 4294901760
        %1841 = vmatpush1.msra.mxu0 %v1840
        %v1842 = vand.u32 %v319, 4294901760
        %1843 = vmatprep.subr.mxu0 %v1842
        %v1844 = vand.u32 %v318, 4294901760
        %1845 = vmatpush1.msra.mxu0 %v1844
        %v1846 = vand.u32 %v336, 4294901760
        %1847 = vmatprep.subr.mxu0 %v1846
        %v1848 = vand.u32 %v335, 4294901760
        %1849 = vmatpush1.msra.mxu0 %v1848
        %v1850 = vand.u32 %v353, 4294901760
        %1851 = vmatprep.subr.mxu0 %v1850
        %v1852 = vand.u32 %v352, 4294901760
        %1853 = vmatpush1.msra.mxu0 %v1852
        %v1854 = vand.u32 %v370, 4294901760
        %1855 = vmatprep.subr.mxu0 %v1854
        %v1856 = vand.u32 %v369, 4294901760
        %1857 = vmatpush1.msra.mxu0 %v1856
        %v1858 = vand.u32 %v387, 4294901760
        %1859 = vmatprep.subr.mxu0 %v1858
        %v1860 = vand.u32 %v386, 4294901760
        %1861 = vmatpush1.msra.mxu0 %v1860
        %v1862 = vand.u32 %v404, 4294901760
        %1863 = vmatprep.subr.mxu0 %v1862
        %v1864 = vand.u32 %v403, 4294901760
        %1865 = vmatpush1.msra.mxu0 %v1864
        %v1866 = vand.u32 %v421, 4294901760
        %1867 = vmatprep.subr.mxu0 %v1866
        %v1868 = vand.u32 %v420, 4294901760
        %1869 = vmatpush1.msra.mxu0 %v1868
        %v1870 = vand.u32 %v438, 4294901760
        %1871 = vmatprep.subr.mxu0 %v1870
        %v1872 = vand.u32 %v437, 4294901760
        %1873 = vmatpush1.msra.mxu0 %v1872
        %v1874 = vand.u32 %v455, 4294901760
        %1875 = vmatprep.subr.mxu0 %v1874
        %v1876 = vand.u32 %v454, 4294901760
        %1877 = vmatpush1.msra.mxu0 %v1876
        %v1878 = vand.u32 %v472, 4294901760
        %1879 = vmatprep.subr.mxu0 %v1878
        %v1880 = vand.u32 %v471, 4294901760
        %1881 = vmatpush1.msra.mxu0 %v1880
        %1882 = vmatprep.subr.mxu0 0.0
        %1883 = vmatpush1.msra.mxu0 0.0
        %1884 = vmatprep.subr.mxu0 0.0
        %1885 = vmatpush1.msra.mxu0 0.0
        %1886 = vmatprep.subr.mxu0 0.0
        %1887 = vmatpush1.msra.mxu0 0.0
        %1888 = vmatprep.subr.mxu0 0.0
        %1889 = vmatpush1.msra.mxu0 0.0
        %1890 = vmatprep.subr.mxu0 0.0
        %1891 = vmatpush1.msra.mxu0 0.0
        %1892 = vmatprep.subr.mxu0 0.0
        %1893 = vmatpush1.msra.mxu0 0.0
        %1894 = vmatprep.subr.mxu0 0.0
        %1895 = vmatpush1.msra.mxu0 0.0
        %1896 = vmatprep.subr.mxu0 0.0
        %1897 = vmatpush1.msra.mxu0 0.0
        %1898 = vmatprep.subr.mxu0 0.0
        %1899 = vmatpush1.msra.mxu0 0.0
        %1900 = vmatprep.subr.mxu0 0.0
        %1901 = vmatpush1.msra.mxu0 0.0
        %1902 = vmatprep.subr.mxu0 0.0
        %1903 = vmatpush1.msra.mxu0 0.0
        %1904 = vmatprep.subr.mxu0 0.0
        %1905 = vmatpush1.msra.mxu0 0.0
        %1906 = vmatprep.subr.mxu0 0.0
        %1907 = vmatpush1.msra.mxu0 0.0
        %1908 = vmatprep.subr.mxu0 0.0
        %1909 = vmatpush1.msra.mxu0 0.0
        %1910 = vmatprep.subr.mxu0 0.0
        %1911 = vmatpush1.msra.mxu0 0.0
        %1912 = vmatprep.subr.mxu0 0.0
        %1913 = vmatpush1.msra.mxu0 0.0
        %1914 = vmatprep.mubr.f32.mxu0 0.0
        %v1915 = vand.u32 %v213, 4294901760
        %v1916 = vsub.f32 %v213, %v1915
        %v1917 = vand.u32 %v1916, 4294901760
        %1918 = vmatmul.mubr.f32.gmra.mrb[0].mxu0 %v1917
        %v1919 = vpop.f32.mrb[0].mxu0
        %v1920 = vadd.f32 %v1814, %v1919
        %v1921 = vpop.f32.mrb[0].mxu0
        %v1922 = vadd.f32 %v1816, %v1921
        %1923 = vdwg.mxu0
        %v1924 = vand.u32 %v217, 4294901760
        %v1925 = vsub.f32 %v217, %v1924
        %v1926 = vand.u32 %v1925, 4294901760
        %1927 = vmatprep.subr.mxu0 %v1926
        %v1928 = vand.u32 %v216, 4294901760
        %v1929 = vsub.f32 %v216, %v1928
        %v1930 = vand.u32 %v1929, 4294901760
        %1931 = vmatpush1.msra.mxu0 %v1930
        %v1932 = vand.u32 %v234, 4294901760
        %v1933 = vsub.f32 %v234, %v1932
        %v1934 = vand.u32 %v1933, 4294901760
        %1935 = vmatprep.subr.mxu0 %v1934
        %v1936 = vand.u32 %v233, 4294901760
        %v1937 = vsub.f32 %v233, %v1936
        %v1938 = vand.u32 %v1937, 4294901760
        %1939 = vmatpush1.msra.mxu0 %v1938
        %v1940 = vand.u32 %v251, 4294901760
        %v1941 = vsub.f32 %v251, %v1940
        %v1942 = vand.u32 %v1941, 4294901760
        %1943 = vmatprep.subr.mxu0 %v1942
        %v1944 = vand.u32 %v250, 4294901760
        %v1945 = vsub.f32 %v250, %v1944
        %v1946 = vand.u32 %v1945, 4294901760
        %1947 = vmatpush1.msra.mxu0 %v1946
        %v1948 = vand.u32 %v268, 4294901760
        %v1949 = vsub.f32 %v268, %v1948
        %v1950 = vand.u32 %v1949, 4294901760
        %1951 = vmatprep.subr.mxu0 %v1950
        %v1952 = vand.u32 %v267, 4294901760
        %v1953 = vsub.f32 %v267, %v1952
        %v1954 = vand.u32 %v1953, 4294901760
        %1955 = vmatpush1.msra.mxu0 %v1954
        %v1956 = vand.u32 %v285, 4294901760
        %v1957 = vsub.f32 %v285, %v1956
        %v1958 = vand.u32 %v1957, 4294901760
        %1959 = vmatprep.subr.mxu0 %v1958
        %v1960 = vand.u32 %v284, 4294901760
        %v1961 = vsub.f32 %v284, %v1960
        %v1962 = vand.u32 %v1961, 4294901760
        %1963 = vmatpush1.msra.mxu0 %v1962
        %v1964 = vand.u32 %v302, 4294901760
        %v1965 = vsub.f32 %v302, %v1964
        %v1966 = vand.u32 %v1965, 4294901760
        %1967 = vmatprep.subr.mxu0 %v1966
        %v1968 = vand.u32 %v301, 4294901760
        %v1969 = vsub.f32 %v301, %v1968
        %v1970 = vand.u32 %v1969, 4294901760
        %1971 = vmatpush1.msra.mxu0 %v1970
        %v1972 = vand.u32 %v319, 4294901760
        %v1973 = vsub.f32 %v319, %v1972
        %v1974 = vand.u32 %v1973, 4294901760
        %1975 = vmatprep.subr.mxu0 %v1974
        %v1976 = vand.u32 %v318, 4294901760
        %v1977 = vsub.f32 %v318, %v1976
        %v1978 = vand.u32 %v1977, 4294901760
        %1979 = vmatpush1.msra.mxu0 %v1978
        %v1980 = vand.u32 %v336, 4294901760
        %v1981 = vsub.f32 %v336, %v1980
        %v1982 = vand.u32 %v1981, 4294901760
        %1983 = vmatprep.subr.mxu0 %v1982
        %v1984 = vand.u32 %v335, 4294901760
        %v1985 = vsub.f32 %v335, %v1984
        %v1986 = vand.u32 %v1985, 4294901760
        %1987 = vmatpush1.msra.mxu0 %v1986
        %v1988 = vand.u32 %v353, 4294901760
        %v1989 = vsub.f32 %v353, %v1988
        %v1990 = vand.u32 %v1989, 4294901760
        %1991 = vmatprep.subr.mxu0 %v1990
        %v1992 = vand.u32 %v352, 4294901760
        %v1993 = vsub.f32 %v352, %v1992
        %v1994 = vand.u32 %v1993, 4294901760
        %1995 = vmatpush1.msra.mxu0 %v1994
        %v1996 = vand.u32 %v370, 4294901760
        %v1997 = vsub.f32 %v370, %v1996
        %v1998 = vand.u32 %v1997, 4294901760
        %1999 = vmatprep.subr.mxu0 %v1998
        %v2000 = vand.u32 %v369, 4294901760
        %v2001 = vsub.f32 %v369, %v2000
        %v2002 = vand.u32 %v2001, 4294901760
        %2003 = vmatpush1.msra.mxu0 %v2002
        %v2004 = vand.u32 %v387, 4294901760
        %v2005 = vsub.f32 %v387, %v2004
        %v2006 = vand.u32 %v2005, 4294901760
        %2007 = vmatprep.subr.mxu0 %v2006
        %v2008 = vand.u32 %v386, 4294901760
        %v2009 = vsub.f32 %v386, %v2008
        %v2010 = vand.u32 %v2009, 4294901760
        %2011 = vmatpush1.msra.mxu0 %v2010
        %v2012 = vand.u32 %v404, 4294901760
        %v2013 = vsub.f32 %v404, %v2012
        %v2014 = vand.u32 %v2013, 4294901760
        %2015 = vmatprep.subr.mxu0 %v2014
        %v2016 = vand.u32 %v403, 4294901760
        %v2017 = vsub.f32 %v403, %v2016
        %v2018 = vand.u32 %v2017, 4294901760
        %2019 = vmatpush1.msra.mxu0 %v2018
        %v2020 = vand.u32 %v421, 4294901760
        %v2021 = vsub.f32 %v421, %v2020
        %v2022 = vand.u32 %v2021, 4294901760
        %2023 = vmatprep.subr.mxu0 %v2022
        %v2024 = vand.u32 %v420, 4294901760
        %v2025 = vsub.f32 %v420, %v2024
        %v2026 = vand.u32 %v2025, 4294901760
        %2027 = vmatpush1.msra.mxu0 %v2026
        %v2028 = vand.u32 %v438, 4294901760
        %v2029 = vsub.f32 %v438, %v2028
        %v2030 = vand.u32 %v2029, 4294901760
        %2031 = vmatprep.subr.mxu0 %v2030
        %v2032 = vand.u32 %v437, 4294901760
        %v2033 = vsub.f32 %v437, %v2032
        %v2034 = vand.u32 %v2033, 4294901760
        %2035 = vmatpush1.msra.mxu0 %v2034
        %v2036 = vand.u32 %v455, 4294901760
        %v2037 = vsub.f32 %v455, %v2036
        %v2038 = vand.u32 %v2037, 4294901760
        %2039 = vmatprep.subr.mxu0 %v2038
        %v2040 = vand.u32 %v454, 4294901760
        %v2041 = vsub.f32 %v454, %v2040
        %v2042 = vand.u32 %v2041, 4294901760
        %2043 = vmatpush1.msra.mxu0 %v2042
        %v2044 = vand.u32 %v472, 4294901760
        %v2045 = vsub.f32 %v472, %v2044
        %v2046 = vand.u32 %v2045, 4294901760
        %2047 = vmatprep.subr.mxu0 %v2046
        %v2048 = vand.u32 %v471, 4294901760
        %v2049 = vsub.f32 %v471, %v2048
        %v2050 = vand.u32 %v2049, 4294901760
        %2051 = vmatpush1.msra.mxu0 %v2050
        %2052 = vmatprep.subr.mxu0 0.0
        %2053 = vmatpush1.msra.mxu0 0.0
        %2054 = vmatprep.subr.mxu0 0.0
        %2055 = vmatpush1.msra.mxu0 0.0
        %2056 = vmatprep.subr.mxu0 0.0
        %2057 = vmatpush1.msra.mxu0 0.0
        %2058 = vmatprep.subr.mxu0 0.0
        %2059 = vmatpush1.msra.mxu0 0.0
        %2060 = vmatprep.subr.mxu0 0.0
        %2061 = vmatpush1.msra.mxu0 0.0
        %2062 = vmatprep.subr.mxu0 0.0
        %2063 = vmatpush1.msra.mxu0 0.0
        %2064 = vmatprep.subr.mxu0 0.0
        %2065 = vmatpush1.msra.mxu0 0.0
        %2066 = vmatprep.subr.mxu0 0.0
        %2067 = vmatpush1.msra.mxu0 0.0
        %2068 = vmatprep.subr.mxu0 0.0
        %2069 = vmatpush1.msra.mxu0 0.0
        %2070 = vmatprep.subr.mxu0 0.0
        %2071 = vmatpush1.msra.mxu0 0.0
        %2072 = vmatprep.subr.mxu0 0.0
        %2073 = vmatpush1.msra.mxu0 0.0
        %2074 = vmatprep.subr.mxu0 0.0
        %2075 = vmatpush1.msra.mxu0 0.0
        %2076 = vmatprep.subr.mxu0 0.0
        %2077 = vmatpush1.msra.mxu0 0.0
        %2078 = vmatprep.subr.mxu0 0.0
        %2079 = vmatpush1.msra.mxu0 0.0
        %2080 = vmatprep.subr.mxu0 0.0
        %2081 = vmatpush1.msra.mxu0 0.0
        %2082 = vmatprep.subr.mxu0 0.0
        %2083 = vmatpush1.msra.mxu0 0.0
        %2084 = vmatprep.mubr.f32.mxu0 0.0
        %v2085 = vand.u32 %v213, 4294901760
        %2086 = vmatmul.mubr.f32.gmra.mrb[0].mxu0 %v2085
        %v2087 = vpop.f32.mrb[0].mxu0
        %v2088 = vadd.f32 %v1920, %v2087
        %v2089 = vpop.f32.mrb[0].mxu0
        %v2090 = vadd.f32 %v1922, %v2089
        %2091 = vdwg.mxu0
        %v2092 = vand.u32 %v217, 4294901760
        %2093 = vmatprep.subr.mxu0 %v2092
        %v2094 = vand.u32 %v216, 4294901760
        %2095 = vmatpush1.msra.mxu0 %v2094
        %v2096 = vand.u32 %v234, 4294901760
        %2097 = vmatprep.subr.mxu0 %v2096
        %v2098 = vand.u32 %v233, 4294901760
        %2099 = vmatpush1.msra.mxu0 %v2098
        %v2100 = vand.u32 %v251, 4294901760
        %2101 = vmatprep.subr.mxu0 %v2100
        %v2102 = vand.u32 %v250, 4294901760
        %2103 = vmatpush1.msra.mxu0 %v2102
        %v2104 = vand.u32 %v268, 4294901760
        %2105 = vmatprep.subr.mxu0 %v2104
        %v2106 = vand.u32 %v267, 4294901760
        %2107 = vmatpush1.msra.mxu0 %v2106
        %v2108 = vand.u32 %v285, 4294901760
        %2109 = vmatprep.subr.mxu0 %v2108
        %v2110 = vand.u32 %v284, 4294901760
        %2111 = vmatpush1.msra.mxu0 %v2110
        %v2112 = vand.u32 %v302, 4294901760
        %2113 = vmatprep.subr.mxu0 %v2112
        %v2114 = vand.u32 %v301, 4294901760
        %2115 = vmatpush1.msra.mxu0 %v2114
        %v2116 = vand.u32 %v319, 4294901760
        %2117 = vmatprep.subr.mxu0 %v2116
        %v2118 = vand.u32 %v318, 4294901760
        %2119 = vmatpush1.msra.mxu0 %v2118
        %v2120 = vand.u32 %v336, 4294901760
        %2121 = vmatprep.subr.mxu0 %v2120
        %v2122 = vand.u32 %v335, 4294901760
        %2123 = vmatpush1.msra.mxu0 %v2122
        %v2124 = vand.u32 %v353, 4294901760
        %2125 = vmatprep.subr.mxu0 %v2124
        %v2126 = vand.u32 %v352, 4294901760
        %2127 = vmatpush1.msra.mxu0 %v2126
        %v2128 = vand.u32 %v370, 4294901760
        %2129 = vmatprep.subr.mxu0 %v2128
        %v2130 = vand.u32 %v369, 4294901760
        %2131 = vmatpush1.msra.mxu0 %v2130
        %v2132 = vand.u32 %v387, 4294901760
        %2133 = vmatprep.subr.mxu0 %v2132
        %v2134 = vand.u32 %v386, 4294901760
        %2135 = vmatpush1.msra.mxu0 %v2134
        %v2136 = vand.u32 %v404, 4294901760
        %2137 = vmatprep.subr.mxu0 %v2136
        %v2138 = vand.u32 %v403, 4294901760
        %2139 = vmatpush1.msra.mxu0 %v2138
        %v2140 = vand.u32 %v421, 4294901760
        %2141 = vmatprep.subr.mxu0 %v2140
        %v2142 = vand.u32 %v420, 4294901760
        %2143 = vmatpush1.msra.mxu0 %v2142
        %v2144 = vand.u32 %v438, 4294901760
        %2145 = vmatprep.subr.mxu0 %v2144
        %v2146 = vand.u32 %v437, 4294901760
        %2147 = vmatpush1.msra.mxu0 %v2146
        %v2148 = vand.u32 %v455, 4294901760
        %2149 = vmatprep.subr.mxu0 %v2148
        %v2150 = vand.u32 %v454, 4294901760
        %2151 = vmatpush1.msra.mxu0 %v2150
        %v2152 = vand.u32 %v472, 4294901760
        %2153 = vmatprep.subr.mxu0 %v2152
        %v2154 = vand.u32 %v471, 4294901760
        %2155 = vmatpush1.msra.mxu0 %v2154
        %2156 = vmatprep.subr.mxu0 0.0
        %2157 = vmatpush1.msra.mxu0 0.0
        %2158 = vmatprep.subr.mxu0 0.0
        %2159 = vmatpush1.msra.mxu0 0.0
        %2160 = vmatprep.subr.mxu0 0.0
        %2161 = vmatpush1.msra.mxu0 0.0
        %2162 = vmatprep.subr.mxu0 0.0
        %2163 = vmatpush1.msra.mxu0 0.0
        %2164 = vmatprep.subr.mxu0 0.0
        %2165 = vmatpush1.msra.mxu0 0.0
        %2166 = vmatprep.subr.mxu0 0.0
        %2167 = vmatpush1.msra.mxu0 0.0
        %2168 = vmatprep.subr.mxu0 0.0
        %2169 = vmatpush1.msra.mxu0 0.0
        %2170 = vmatprep.subr.mxu0 0.0
        %2171 = vmatpush1.msra.mxu0 0.0
        %2172 = vmatprep.subr.mxu0 0.0
        %2173 = vmatpush1.msra.mxu0 0.0
        %2174 = vmatprep.subr.mxu0 0.0
        %2175 = vmatpush1.msra.mxu0 0.0
        %2176 = vmatprep.subr.mxu0 0.0
        %2177 = vmatpush1.msra.mxu0 0.0
        %2178 = vmatprep.subr.mxu0 0.0
        %2179 = vmatpush1.msra.mxu0 0.0
        %2180 = vmatprep.subr.mxu0 0.0
        %2181 = vmatpush1.msra.mxu0 0.0
        %2182 = vmatprep.subr.mxu0 0.0
        %2183 = vmatpush1.msra.mxu0 0.0
        %2184 = vmatprep.subr.mxu0 0.0
        %2185 = vmatpush1.msra.mxu0 0.0
        %2186 = vmatprep.subr.mxu0 0.0
        %2187 = vmatpush1.msra.mxu0 0.0
        %2188 = vmatprep.mubr.f32.mxu0 0.0
        %v2189 = vand.u32 %v213, 4294901760
        %2190 = vmatmul.mubr.f32.gmra.mrb[0].mxu0 %v2189
        %v2191 = vpop.f32.mrb[0].mxu0
        %v2192 = vadd.f32 %v2088, %v2191
        %v2193 = vpop.f32.mrb[0].mxu0
        %v2194 = vadd.f32 %v2090, %v2193
        %2195 = vdwg.mxu0
        %v2196 = vand.u32 %v219, 4294901760
        %2197 = vmatprep.subr.mxu0 %v2196
        %v2198 = vand.u32 %v218, 4294901760
        %2199 = vmatpush1.msra.mxu0 %v2198
        %v2200 = vand.u32 %v236, 4294901760
        %2201 = vmatprep.subr.mxu0 %v2200
        %v2202 = vand.u32 %v235, 4294901760
        %2203 = vmatpush1.msra.mxu0 %v2202
        %v2204 = vand.u32 %v253, 4294901760
        %2205 = vmatprep.subr.mxu0 %v2204
        %v2206 = vand.u32 %v252, 4294901760
        %2207 = vmatpush1.msra.mxu0 %v2206
        %v2208 = vand.u32 %v270, 4294901760
        %2209 = vmatprep.subr.mxu0 %v2208
        %v2210 = vand.u32 %v269, 4294901760
        %2211 = vmatpush1.msra.mxu0 %v2210
        %v2212 = vand.u32 %v287, 4294901760
        %2213 = vmatprep.subr.mxu0 %v2212
        %v2214 = vand.u32 %v286, 4294901760
        %2215 = vmatpush1.msra.mxu0 %v2214
        %v2216 = vand.u32 %v304, 4294901760
        %2217 = vmatprep.subr.mxu0 %v2216
        %v2218 = vand.u32 %v303, 4294901760
        %2219 = vmatpush1.msra.mxu0 %v2218
        %v2220 = vand.u32 %v321, 4294901760
        %2221 = vmatprep.subr.mxu0 %v2220
        %v2222 = vand.u32 %v320, 4294901760
        %2223 = vmatpush1.msra.mxu0 %v2222
        %v2224 = vand.u32 %v338, 4294901760
        %2225 = vmatprep.subr.mxu0 %v2224
        %v2226 = vand.u32 %v337, 4294901760
        %2227 = vmatpush1.msra.mxu0 %v2226
        %v2228 = vand.u32 %v355, 4294901760
        %2229 = vmatprep.subr.mxu0 %v2228
        %v2230 = vand.u32 %v354, 4294901760
        %2231 = vmatpush1.msra.mxu0 %v2230
        %v2232 = vand.u32 %v372, 4294901760
        %2233 = vmatprep.subr.mxu0 %v2232
        %v2234 = vand.u32 %v371, 4294901760
        %2235 = vmatpush1.msra.mxu0 %v2234
        %v2236 = vand.u32 %v389, 4294901760
        %2237 = vmatprep.subr.mxu0 %v2236
        %v2238 = vand.u32 %v388, 4294901760
        %2239 = vmatpush1.msra.mxu0 %v2238
        %v2240 = vand.u32 %v406, 4294901760
        %2241 = vmatprep.subr.mxu0 %v2240
        %v2242 = vand.u32 %v405, 4294901760
        %2243 = vmatpush1.msra.mxu0 %v2242
        %v2244 = vand.u32 %v423, 4294901760
        %2245 = vmatprep.subr.mxu0 %v2244
        %v2246 = vand.u32 %v422, 4294901760
        %2247 = vmatpush1.msra.mxu0 %v2246
        %v2248 = vand.u32 %v440, 4294901760
        %2249 = vmatprep.subr.mxu0 %v2248
        %v2250 = vand.u32 %v439, 4294901760
        %2251 = vmatpush1.msra.mxu0 %v2250
        %v2252 = vand.u32 %v457, 4294901760
        %2253 = vmatprep.subr.mxu0 %v2252
        %v2254 = vand.u32 %v456, 4294901760
        %2255 = vmatpush1.msra.mxu0 %v2254
        %v2256 = vand.u32 %v474, 4294901760
        %2257 = vmatprep.subr.mxu0 %v2256
        %v2258 = vand.u32 %v473, 4294901760
        %2259 = vmatpush1.msra.mxu0 %v2258
        %2260 = vmatprep.subr.mxu0 0.0
        %2261 = vmatpush1.msra.mxu0 0.0
        %2262 = vmatprep.subr.mxu0 0.0
        %2263 = vmatpush1.msra.mxu0 0.0
        %2264 = vmatprep.subr.mxu0 0.0
        %2265 = vmatpush1.msra.mxu0 0.0
        %2266 = vmatprep.subr.mxu0 0.0
        %2267 = vmatpush1.msra.mxu0 0.0
        %2268 = vmatprep.subr.mxu0 0.0
        %2269 = vmatpush1.msra.mxu0 0.0
        %2270 = vmatprep.subr.mxu0 0.0
        %2271 = vmatpush1.msra.mxu0 0.0
        %2272 = vmatprep.subr.mxu0 0.0
        %2273 = vmatpush1.msra.mxu0 0.0
        %2274 = vmatprep.subr.mxu0 0.0
        %2275 = vmatpush1.msra.mxu0 0.0
        %2276 = vmatprep.subr.mxu0 0.0
        %2277 = vmatpush1.msra.mxu0 0.0
        %2278 = vmatprep.subr.mxu0 0.0
        %2279 = vmatpush1.msra.mxu0 0.0
        %2280 = vmatprep.subr.mxu0 0.0
        %2281 = vmatpush1.msra.mxu0 0.0
        %2282 = vmatprep.subr.mxu0 0.0
        %2283 = vmatpush1.msra.mxu0 0.0
        %2284 = vmatprep.subr.mxu0 0.0
        %2285 = vmatpush1.msra.mxu0 0.0
        %2286 = vmatprep.subr.mxu0 0.0
        %2287 = vmatpush1.msra.mxu0 0.0
        %2288 = vmatprep.subr.mxu0 0.0
        %2289 = vmatpush1.msra.mxu0 0.0
        %2290 = vmatprep.subr.mxu0 0.0
        %2291 = vmatpush1.msra.mxu0 0.0
        %2292 = vmatprep.mubr.f32.mxu0 0.0
        %v2293 = vand.u32 %v213, 4294901760
        %v2294 = vsub.f32 %v213, %v2293
        %v2295 = vand.u32 %v2294, 4294901760
        %v2296 = vsub.f32 %v2294, %v2295
        %v2297 = vand.u32 %v2296, 4294901760
        %2298 = vmatmul.mubr.f32.gmra.mrb[0].mxu0 %v2297
        %v2299 = vpop.f32.mrb[0].mxu0
        %v2300 = vadd.f32 0.0, %v2299
        %v2301 = vpop.f32.mrb[0].mxu0
        %v2302 = vadd.f32 0.0, %v2301
        %2303 = vdwg.mxu0
        %v2304 = vand.u32 %v219, 4294901760
        %v2305 = vsub.f32 %v219, %v2304
        %v2306 = vand.u32 %v2305, 4294901760
        %v2307 = vsub.f32 %v2305, %v2306
        %v2308 = vand.u32 %v2307, 4294901760
        %2309 = vmatprep.subr.mxu0 %v2308
        %v2310 = vand.u32 %v218, 4294901760
        %v2311 = vsub.f32 %v218, %v2310
        %v2312 = vand.u32 %v2311, 4294901760
        %v2313 = vsub.f32 %v2311, %v2312
        %v2314 = vand.u32 %v2313, 4294901760
        %2315 = vmatpush1.msra.mxu0 %v2314
        %v2316 = vand.u32 %v236, 4294901760
        %v2317 = vsub.f32 %v236, %v2316
        %v2318 = vand.u32 %v2317, 4294901760
        %v2319 = vsub.f32 %v2317, %v2318
        %v2320 = vand.u32 %v2319, 4294901760
        %2321 = vmatprep.subr.mxu0 %v2320
        %v2322 = vand.u32 %v235, 4294901760
        %v2323 = vsub.f32 %v235, %v2322
        %v2324 = vand.u32 %v2323, 4294901760
        %v2325 = vsub.f32 %v2323, %v2324
        %v2326 = vand.u32 %v2325, 4294901760
        %2327 = vmatpush1.msra.mxu0 %v2326
        %v2328 = vand.u32 %v253, 4294901760
        %v2329 = vsub.f32 %v253, %v2328
        %v2330 = vand.u32 %v2329, 4294901760
        %v2331 = vsub.f32 %v2329, %v2330
        %v2332 = vand.u32 %v2331, 4294901760
        %2333 = vmatprep.subr.mxu0 %v2332
        %v2334 = vand.u32 %v252, 4294901760
        %v2335 = vsub.f32 %v252, %v2334
        %v2336 = vand.u32 %v2335, 4294901760
        %v2337 = vsub.f32 %v2335, %v2336
        %v2338 = vand.u32 %v2337, 4294901760
        %2339 = vmatpush1.msra.mxu0 %v2338
        %v2340 = vand.u32 %v270, 4294901760
        %v2341 = vsub.f32 %v270, %v2340
        %v2342 = vand.u32 %v2341, 4294901760
        %v2343 = vsub.f32 %v2341, %v2342
        %v2344 = vand.u32 %v2343, 4294901760
        %2345 = vmatprep.subr.mxu0 %v2344
        %v2346 = vand.u32 %v269, 4294901760
        %v2347 = vsub.f32 %v269, %v2346
        %v2348 = vand.u32 %v2347, 4294901760
        %v2349 = vsub.f32 %v2347, %v2348
        %v2350 = vand.u32 %v2349, 4294901760
        %2351 = vmatpush1.msra.mxu0 %v2350
        %v2352 = vand.u32 %v287, 4294901760
        %v2353 = vsub.f32 %v287, %v2352
        %v2354 = vand.u32 %v2353, 4294901760
        %v2355 = vsub.f32 %v2353, %v2354
        %v2356 = vand.u32 %v2355, 4294901760
        %2357 = vmatprep.subr.mxu0 %v2356
        %v2358 = vand.u32 %v286, 4294901760
        %v2359 = vsub.f32 %v286, %v2358
        %v2360 = vand.u32 %v2359, 4294901760
        %v2361 = vsub.f32 %v2359, %v2360
        %v2362 = vand.u32 %v2361, 4294901760
        %2363 = vmatpush1.msra.mxu0 %v2362
        %v2364 = vand.u32 %v304, 4294901760
        %v2365 = vsub.f32 %v304, %v2364
        %v2366 = vand.u32 %v2365, 4294901760
        %v2367 = vsub.f32 %v2365, %v2366
        %v2368 = vand.u32 %v2367, 4294901760
        %2369 = vmatprep.subr.mxu0 %v2368
        %v2370 = vand.u32 %v303, 4294901760
        %v2371 = vsub.f32 %v303, %v2370
        %v2372 = vand.u32 %v2371, 4294901760
        %v2373 = vsub.f32 %v2371, %v2372
        %v2374 = vand.u32 %v2373, 4294901760
        %2375 = vmatpush1.msra.mxu0 %v2374
        %v2376 = vand.u32 %v321, 4294901760
        %v2377 = vsub.f32 %v321, %v2376
        %v2378 = vand.u32 %v2377, 4294901760
        %v2379 = vsub.f32 %v2377, %v2378
        %v2380 = vand.u32 %v2379, 4294901760
        %2381 = vmatprep.subr.mxu0 %v2380
        %v2382 = vand.u32 %v320, 4294901760
        %v2383 = vsub.f32 %v320, %v2382
        %v2384 = vand.u32 %v2383, 4294901760
        %v2385 = vsub.f32 %v2383, %v2384
        %v2386 = vand.u32 %v2385, 4294901760
        %2387 = vmatpush1.msra.mxu0 %v2386
        %v2388 = vand.u32 %v338, 4294901760
        %v2389 = vsub.f32 %v338, %v2388
        %v2390 = vand.u32 %v2389, 4294901760
        %v2391 = vsub.f32 %v2389, %v2390
        %v2392 = vand.u32 %v2391, 4294901760
        %2393 = vmatprep.subr.mxu0 %v2392
        %v2394 = vand.u32 %v337, 4294901760
        %v2395 = vsub.f32 %v337, %v2394
        %v2396 = vand.u32 %v2395, 4294901760
        %v2397 = vsub.f32 %v2395, %v2396
        %v2398 = vand.u32 %v2397, 4294901760
        %2399 = vmatpush1.msra.mxu0 %v2398
        %v2400 = vand.u32 %v355, 4294901760
        %v2401 = vsub.f32 %v355, %v2400
        %v2402 = vand.u32 %v2401, 4294901760
        %v2403 = vsub.f32 %v2401, %v2402
        %v2404 = vand.u32 %v2403, 4294901760
        %2405 = vmatprep.subr.mxu0 %v2404
        %v2406 = vand.u32 %v354, 4294901760
        %v2407 = vsub.f32 %v354, %v2406
        %v2408 = vand.u32 %v2407, 4294901760
        %v2409 = vsub.f32 %v2407, %v2408
        %v2410 = vand.u32 %v2409, 4294901760
        %2411 = vmatpush1.msra.mxu0 %v2410
        %v2412 = vand.u32 %v372, 4294901760
        %v2413 = vsub.f32 %v372, %v2412
        %v2414 = vand.u32 %v2413, 4294901760
        %v2415 = vsub.f32 %v2413, %v2414
        %v2416 = vand.u32 %v2415, 4294901760
        %2417 = vmatprep.subr.mxu0 %v2416
        %v2418 = vand.u32 %v371, 4294901760
        %v2419 = vsub.f32 %v371, %v2418
        %v2420 = vand.u32 %v2419, 4294901760
        %v2421 = vsub.f32 %v2419, %v2420
        %v2422 = vand.u32 %v2421, 4294901760
        %2423 = vmatpush1.msra.mxu0 %v2422
        %v2424 = vand.u32 %v389, 4294901760
        %v2425 = vsub.f32 %v389, %v2424
        %v2426 = vand.u32 %v2425, 4294901760
        %v2427 = vsub.f32 %v2425, %v2426
        %v2428 = vand.u32 %v2427, 4294901760
        %2429 = vmatprep.subr.mxu0 %v2428
        %v2430 = vand.u32 %v388, 4294901760
        %v2431 = vsub.f32 %v388, %v2430
        %v2432 = vand.u32 %v2431, 4294901760
        %v2433 = vsub.f32 %v2431, %v2432
        %v2434 = vand.u32 %v2433, 4294901760
        %2435 = vmatpush1.msra.mxu0 %v2434
        %v2436 = vand.u32 %v406, 4294901760
        %v2437 = vsub.f32 %v406, %v2436
        %v2438 = vand.u32 %v2437, 4294901760
        %v2439 = vsub.f32 %v2437, %v2438
        %v2440 = vand.u32 %v2439, 4294901760
        %2441 = vmatprep.subr.mxu0 %v2440
        %v2442 = vand.u32 %v405, 4294901760
        %v2443 = vsub.f32 %v405, %v2442
        %v2444 = vand.u32 %v2443, 4294901760
        %v2445 = vsub.f32 %v2443, %v2444
        %v2446 = vand.u32 %v2445, 4294901760
        %2447 = vmatpush1.msra.mxu0 %v2446
        %v2448 = vand.u32 %v423, 4294901760
        %v2449 = vsub.f32 %v423, %v2448
        %v2450 = vand.u32 %v2449, 4294901760
        %v2451 = vsub.f32 %v2449, %v2450
        %v2452 = vand.u32 %v2451, 4294901760
        %2453 = vmatprep.subr.mxu0 %v2452
        %v2454 = vand.u32 %v422, 4294901760
        %v2455 = vsub.f32 %v422, %v2454
        %v2456 = vand.u32 %v2455, 4294901760
        %v2457 = vsub.f32 %v2455, %v2456
        %v2458 = vand.u32 %v2457, 4294901760
        %2459 = vmatpush1.msra.mxu0 %v2458
        %v2460 = vand.u32 %v440, 4294901760
        %v2461 = vsub.f32 %v440, %v2460
        %v2462 = vand.u32 %v2461, 4294901760
        %v2463 = vsub.f32 %v2461, %v2462
        %v2464 = vand.u32 %v2463, 4294901760
        %2465 = vmatprep.subr.mxu0 %v2464
        %v2466 = vand.u32 %v439, 4294901760
        %v2467 = vsub.f32 %v439, %v2466
        %v2468 = vand.u32 %v2467, 4294901760
        %v2469 = vsub.f32 %v2467, %v2468
        %v2470 = vand.u32 %v2469, 4294901760
        %2471 = vmatpush1.msra.mxu0 %v2470
        %v2472 = vand.u32 %v457, 4294901760
        %v2473 = vsub.f32 %v457, %v2472
        %v2474 = vand.u32 %v2473, 4294901760
        %v2475 = vsub.f32 %v2473, %v2474
        %v2476 = vand.u32 %v2475, 4294901760
        %2477 = vmatprep.subr.mxu0 %v2476
        %v2478 = vand.u32 %v456, 4294901760
        %v2479 = vsub.f32 %v456, %v2478
        %v2480 = vand.u32 %v2479, 4294901760
        %v2481 = vsub.f32 %v2479, %v2480
        %v2482 = vand.u32 %v2481, 4294901760
        %2483 = vmatpush1.msra.mxu0 %v2482
        %v2484 = vand.u32 %v474, 4294901760
        %v2485 = vsub.f32 %v474, %v2484
        %v2486 = vand.u32 %v2485, 4294901760
        %v2487 = vsub.f32 %v2485, %v2486
        %v2488 = vand.u32 %v2487, 4294901760
        %2489 = vmatprep.subr.mxu0 %v2488
        %v2490 = vand.u32 %v473, 4294901760
        %v2491 = vsub.f32 %v473, %v2490
        %v2492 = vand.u32 %v2491, 4294901760
        %v2493 = vsub.f32 %v2491, %v2492
        %v2494 = vand.u32 %v2493, 4294901760
        %2495 = vmatpush1.msra.mxu0 %v2494
        %2496 = vmatprep.subr.mxu0 0.0
        %2497 = vmatpush1.msra.mxu0 0.0
        %2498 = vmatprep.subr.mxu0 0.0
        %2499 = vmatpush1.msra.mxu0 0.0
        %2500 = vmatprep.subr.mxu0 0.0
        %2501 = vmatpush1.msra.mxu0 0.0
        %2502 = vmatprep.subr.mxu0 0.0
        %2503 = vmatpush1.msra.mxu0 0.0
        %2504 = vmatprep.subr.mxu0 0.0
        %2505 = vmatpush1.msra.mxu0 0.0
        %2506 = vmatprep.subr.mxu0 0.0
        %2507 = vmatpush1.msra.mxu0 0.0
        %2508 = vmatprep.subr.mxu0 0.0
        %2509 = vmatpush1.msra.mxu0 0.0
        %2510 = vmatprep.subr.mxu0 0.0
        %2511 = vmatpush1.msra.mxu0 0.0
        %2512 = vmatprep.subr.mxu0 0.0
        %2513 = vmatpush1.msra.mxu0 0.0
        %2514 = vmatprep.subr.mxu0 0.0
        %2515 = vmatpush1.msra.mxu0 0.0
        %2516 = vmatprep.subr.mxu0 0.0
        %2517 = vmatpush1.msra.mxu0 0.0
        %2518 = vmatprep.subr.mxu0 0.0
        %2519 = vmatpush1.msra.mxu0 0.0
        %2520 = vmatprep.subr.mxu0 0.0
        %2521 = vmatpush1.msra.mxu0 0.0
        %2522 = vmatprep.subr.mxu0 0.0
        %2523 = vmatpush1.msra.mxu0 0.0
        %2524 = vmatprep.subr.mxu0 0.0
        %2525 = vmatpush1.msra.mxu0 0.0
        %2526 = vmatprep.subr.mxu0 0.0
        %2527 = vmatpush1.msra.mxu0 0.0
        %2528 = vmatprep.mubr.f32.mxu0 0.0
        %v2529 = vand.u32 %v213, 4294901760
        %2530 = vmatmul.mubr.f32.gmra.mrb[0].mxu0 %v2529
        %v2531 = vpop.f32.mrb[0].mxu0
        %v2532 = vadd.f32 %v2300, %v2531
        %v2533 = vpop.f32.mrb[0].mxu0
        %v2534 = vadd.f32 %v2302, %v2533
        %2535 = vdwg.mxu0
        %v2536 = vand.u32 %v219, 4294901760
        %v2537 = vsub.f32 %v219, %v2536
        %2538 = vmatprep.subr.mxu0 %v2537
        %v2539 = vand.u32 %v218, 4294901760
        %v2540 = vsub.f32 %v218, %v2539
        %2541 = vmatpush1.msra.mxu0 %v2540
        %v2542 = vand.u32 %v236, 4294901760
        %v2543 = vsub.f32 %v236, %v2542
        %2544 = vmatprep.subr.mxu0 %v2543
        %v2545 = vand.u32 %v235, 4294901760
        %v2546 = vsub.f32 %v235, %v2545
        %2547 = vmatpush1.msra.mxu0 %v2546
        %v2548 = vand.u32 %v253, 4294901760
        %v2549 = vsub.f32 %v253, %v2548
        %2550 = vmatprep.subr.mxu0 %v2549
        %v2551 = vand.u32 %v252, 4294901760
        %v2552 = vsub.f32 %v252, %v2551
        %2553 = vmatpush1.msra.mxu0 %v2552
        %v2554 = vand.u32 %v270, 4294901760
        %v2555 = vsub.f32 %v270, %v2554
        %2556 = vmatprep.subr.mxu0 %v2555
        %v2557 = vand.u32 %v269, 4294901760
        %v2558 = vsub.f32 %v269, %v2557
        %2559 = vmatpush1.msra.mxu0 %v2558
        %v2560 = vand.u32 %v287, 4294901760
        %v2561 = vsub.f32 %v287, %v2560
        %2562 = vmatprep.subr.mxu0 %v2561
        %v2563 = vand.u32 %v286, 4294901760
        %v2564 = vsub.f32 %v286, %v2563
        %2565 = vmatpush1.msra.mxu0 %v2564
        %v2566 = vand.u32 %v304, 4294901760
        %v2567 = vsub.f32 %v304, %v2566
        %2568 = vmatprep.subr.mxu0 %v2567
        %v2569 = vand.u32 %v303, 4294901760
        %v2570 = vsub.f32 %v303, %v2569
        %2571 = vmatpush1.msra.mxu0 %v2570
        %v2572 = vand.u32 %v321, 4294901760
        %v2573 = vsub.f32 %v321, %v2572
        %2574 = vmatprep.subr.mxu0 %v2573
        %v2575 = vand.u32 %v320, 4294901760
        %v2576 = vsub.f32 %v320, %v2575
        %2577 = vmatpush1.msra.mxu0 %v2576
        %v2578 = vand.u32 %v338, 4294901760
        %v2579 = vsub.f32 %v338, %v2578
        %2580 = vmatprep.subr.mxu0 %v2579
        %v2581 = vand.u32 %v337, 4294901760
        %v2582 = vsub.f32 %v337, %v2581
        %2583 = vmatpush1.msra.mxu0 %v2582
        %v2584 = vand.u32 %v355, 4294901760
        %v2585 = vsub.f32 %v355, %v2584
        %2586 = vmatprep.subr.mxu0 %v2585
        %v2587 = vand.u32 %v354, 4294901760
        %v2588 = vsub.f32 %v354, %v2587
        %2589 = vmatpush1.msra.mxu0 %v2588
        %v2590 = vand.u32 %v372, 4294901760
        %v2591 = vsub.f32 %v372, %v2590
        %2592 = vmatprep.subr.mxu0 %v2591
        %v2593 = vand.u32 %v371, 4294901760
        %v2594 = vsub.f32 %v371, %v2593
        %2595 = vmatpush1.msra.mxu0 %v2594
        %v2596 = vand.u32 %v389, 4294901760
        %v2597 = vsub.f32 %v389, %v2596
        %2598 = vmatprep.subr.mxu0 %v2597
        %v2599 = vand.u32 %v388, 4294901760
        %v2600 = vsub.f32 %v388, %v2599
        %2601 = vmatpush1.msra.mxu0 %v2600
        %v2602 = vand.u32 %v406, 4294901760
        %v2603 = vsub.f32 %v406, %v2602
        %2604 = vmatprep.subr.mxu0 %v2603
        %v2605 = vand.u32 %v405, 4294901760
        %v2606 = vsub.f32 %v405, %v2605
        %2607 = vmatpush1.msra.mxu0 %v2606
        %v2608 = vand.u32 %v423, 4294901760
        %v2609 = vsub.f32 %v423, %v2608
        %2610 = vmatprep.subr.mxu0 %v2609
        %v2611 = vand.u32 %v422, 4294901760
        %v2612 = vsub.f32 %v422, %v2611
        %2613 = vmatpush1.msra.mxu0 %v2612
        %v2614 = vand.u32 %v440, 4294901760
        %v2615 = vsub.f32 %v440, %v2614
        %2616 = vmatprep.subr.mxu0 %v2615
        %v2617 = vand.u32 %v439, 4294901760
        %v2618 = vsub.f32 %v439, %v2617
        %2619 = vmatpush1.msra.mxu0 %v2618
        %v2620 = vand.u32 %v457, 4294901760
        %v2621 = vsub.f32 %v457, %v2620
        %2622 = vmatprep.subr.mxu0 %v2621
        %v2623 = vand.u32 %v456, 4294901760
        %v2624 = vsub.f32 %v456, %v2623
        %2625 = vmatpush1.msra.mxu0 %v2624
        %v2626 = vand.u32 %v474, 4294901760
        %v2627 = vsub.f32 %v474, %v2626
        %2628 = vmatprep.subr.mxu0 %v2627
        %v2629 = vand.u32 %v473, 4294901760
        %v2630 = vsub.f32 %v473, %v2629
        %2631 = vmatpush1.msra.mxu0 %v2630
        %2632 = vmatprep.subr.mxu0 0.0
        %2633 = vmatpush1.msra.mxu0 0.0
        %2634 = vmatprep.subr.mxu0 0.0
        %2635 = vmatpush1.msra.mxu0 0.0
        %2636 = vmatprep.subr.mxu0 0.0
        %2637 = vmatpush1.msra.mxu0 0.0
        %2638 = vmatprep.subr.mxu0 0.0
        %2639 = vmatpush1.msra.mxu0 0.0
        %2640 = vmatprep.subr.mxu0 0.0
        %2641 = vmatpush1.msra.mxu0 0.0
        %2642 = vmatprep.subr.mxu0 0.0
        %2643 = vmatpush1.msra.mxu0 0.0
        %2644 = vmatprep.subr.mxu0 0.0
        %2645 = vmatpush1.msra.mxu0 0.0
        %2646 = vmatprep.subr.mxu0 0.0
        %2647 = vmatpush1.msra.mxu0 0.0
        %2648 = vmatprep.subr.mxu0 0.0
        %2649 = vmatpush1.msra.mxu0 0.0
        %2650 = vmatprep.subr.mxu0 0.0
        %2651 = vmatpush1.msra.mxu0 0.0
        %2652 = vmatprep.subr.mxu0 0.0
        %2653 = vmatpush1.msra.mxu0 0.0
        %2654 = vmatprep.subr.mxu0 0.0
        %2655 = vmatpush1.msra.mxu0 0.0
        %2656 = vmatprep.subr.mxu0 0.0
        %2657 = vmatpush1.msra.mxu0 0.0
        %2658 = vmatprep.subr.mxu0 0.0
        %2659 = vmatpush1.msra.mxu0 0.0
        %2660 = vmatprep.subr.mxu0 0.0
        %2661 = vmatpush1.msra.mxu0 0.0
        %2662 = vmatprep.subr.mxu0 0.0
        %2663 = vmatpush1.msra.mxu0 0.0
        %2664 = vmatprep.mubr.f32.mxu0 0.0
        %v2665 = vand.u32 %v213, 4294901760
        %v2666 = vsub.f32 %v213, %v2665
        %2667 = vmatmul.mubr.f32.gmra.mrb[0].mxu0 %v2666
        %v2668 = vpop.f32.mrb[0].mxu0
        %v2669 = vadd.f32 %v2532, %v2668
        %v2670 = vpop.f32.mrb[0].mxu0
        %v2671 = vadd.f32 %v2534, %v2670
        %2672 = vdwg.mxu0
        %v2673 = vand.u32 %v219, 4294901760
        %2674 = vmatprep.subr.mxu0 %v2673
        %v2675 = vand.u32 %v218, 4294901760
        %2676 = vmatpush1.msra.mxu0 %v2675
        %v2677 = vand.u32 %v236, 4294901760
        %2678 = vmatprep.subr.mxu0 %v2677
        %v2679 = vand.u32 %v235, 4294901760
        %2680 = vmatpush1.msra.mxu0 %v2679
        %v2681 = vand.u32 %v253, 4294901760
        %2682 = vmatprep.subr.mxu0 %v2681
        %v2683 = vand.u32 %v252, 4294901760
        %2684 = vmatpush1.msra.mxu0 %v2683
        %v2685 = vand.u32 %v270, 4294901760
        %2686 = vmatprep.subr.mxu0 %v2685
        %v2687 = vand.u32 %v269, 4294901760
        %2688 = vmatpush1.msra.mxu0 %v2687
        %v2689 = vand.u32 %v287, 4294901760
        %2690 = vmatprep.subr.mxu0 %v2689
        %v2691 = vand.u32 %v286, 4294901760
        %2692 = vmatpush1.msra.mxu0 %v2691
        %v2693 = vand.u32 %v304, 4294901760
        %2694 = vmatprep.subr.mxu0 %v2693
        %v2695 = vand.u32 %v303, 4294901760
        %2696 = vmatpush1.msra.mxu0 %v2695
        %v2697 = vand.u32 %v321, 4294901760
        %2698 = vmatprep.subr.mxu0 %v2697
        %v2699 = vand.u32 %v320, 4294901760
        %2700 = vmatpush1.msra.mxu0 %v2699
        %v2701 = vand.u32 %v338, 4294901760
        %2702 = vmatprep.subr.mxu0 %v2701
        %v2703 = vand.u32 %v337, 4294901760
        %2704 = vmatpush1.msra.mxu0 %v2703
        %v2705 = vand.u32 %v355, 4294901760
        %2706 = vmatprep.subr.mxu0 %v2705
        %v2707 = vand.u32 %v354, 4294901760
        %2708 = vmatpush1.msra.mxu0 %v2707
        %v2709 = vand.u32 %v372, 4294901760
        %2710 = vmatprep.subr.mxu0 %v2709
        %v2711 = vand.u32 %v371, 4294901760
        %2712 = vmatpush1.msra.mxu0 %v2711
        %v2713 = vand.u32 %v389, 4294901760
        %2714 = vmatprep.subr.mxu0 %v2713
        %v2715 = vand.u32 %v388, 4294901760
        %2716 = vmatpush1.msra.mxu0 %v2715
        %v2717 = vand.u32 %v406, 4294901760
        %2718 = vmatprep.subr.mxu0 %v2717
        %v2719 = vand.u32 %v405, 4294901760
        %2720 = vmatpush1.msra.mxu0 %v2719
        %v2721 = vand.u32 %v423, 4294901760
        %2722 = vmatprep.subr.mxu0 %v2721
        %v2723 = vand.u32 %v422, 4294901760
        %2724 = vmatpush1.msra.mxu0 %v2723
        %v2725 = vand.u32 %v440, 4294901760
        %2726 = vmatprep.subr.mxu0 %v2725
        %v2727 = vand.u32 %v439, 4294901760
        %2728 = vmatpush1.msra.mxu0 %v2727
        %v2729 = vand.u32 %v457, 4294901760
        %2730 = vmatprep.subr.mxu0 %v2729
        %v2731 = vand.u32 %v456, 4294901760
        %2732 = vmatpush1.msra.mxu0 %v2731
        %v2733 = vand.u32 %v474, 4294901760
        %2734 = vmatprep.subr.mxu0 %v2733
        %v2735 = vand.u32 %v473, 4294901760
        %2736 = vmatpush1.msra.mxu0 %v2735
        %2737 = vmatprep.subr.mxu0 0.0
        %2738 = vmatpush1.msra.mxu0 0.0
        %2739 = vmatprep.subr.mxu0 0.0
        %2740 = vmatpush1.msra.mxu0 0.0
        %2741 = vmatprep.subr.mxu0 0.0
        %2742 = vmatpush1.msra.mxu0 0.0
        %2743 = vmatprep.subr.mxu0 0.0
        %2744 = vmatpush1.msra.mxu0 0.0
        %2745 = vmatprep.subr.mxu0 0.0
        %2746 = vmatpush1.msra.mxu0 0.0
        %2747 = vmatprep.subr.mxu0 0.0
        %2748 = vmatpush1.msra.mxu0 0.0
        %2749 = vmatprep.subr.mxu0 0.0
        %2750 = vmatpush1.msra.mxu0 0.0
        %2751 = vmatprep.subr.mxu0 0.0
        %2752 = vmatpush1.msra.mxu0 0.0
        %2753 = vmatprep.subr.mxu0 0.0
        %2754 = vmatpush1.msra.mxu0 0.0
        %2755 = vmatprep.subr.mxu0 0.0
        %2756 = vmatpush1.msra.mxu0 0.0
        %2757 = vmatprep.subr.mxu0 0.0
        %2758 = vmatpush1.msra.mxu0 0.0
        %2759 = vmatprep.subr.mxu0 0.0
        %2760 = vmatpush1.msra.mxu0 0.0
        %2761 = vmatprep.subr.mxu0 0.0
        %2762 = vmatpush1.msra.mxu0 0.0
        %2763 = vmatprep.subr.mxu0 0.0
        %2764 = vmatpush1.msra.mxu0 0.0
        %2765 = vmatprep.subr.mxu0 0.0
        %2766 = vmatpush1.msra.mxu0 0.0
        %2767 = vmatprep.subr.mxu0 0.0
        %2768 = vmatpush1.msra.mxu0 0.0
        %2769 = vmatprep.mubr.f32.mxu0 0.0
        %v2770 = vand.u32 %v213, 4294901760
        %v2771 = vsub.f32 %v213, %v2770
        %v2772 = vand.u32 %v2771, 4294901760
        %2773 = vmatmul.mubr.f32.gmra.mrb[0].mxu0 %v2772
        %v2774 = vpop.f32.mrb[0].mxu0
        %v2775 = vadd.f32 %v2669, %v2774
        %v2776 = vpop.f32.mrb[0].mxu0
        %v2777 = vadd.f32 %v2671, %v2776
        %2778 = vdwg.mxu0
        %v2779 = vand.u32 %v219, 4294901760
        %v2780 = vsub.f32 %v219, %v2779
        %v2781 = vand.u32 %v2780, 4294901760
        %2782 = vmatprep.subr.mxu0 %v2781
        %v2783 = vand.u32 %v218, 4294901760
        %v2784 = vsub.f32 %v218, %v2783
        %v2785 = vand.u32 %v2784, 4294901760
        %2786 = vmatpush1.msra.mxu0 %v2785
        %v2787 = vand.u32 %v236, 4294901760
        %v2788 = vsub.f32 %v236, %v2787
        %v2789 = vand.u32 %v2788, 4294901760
        %2790 = vmatprep.subr.mxu0 %v2789
        %v2791 = vand.u32 %v235, 4294901760
        %v2792 = vsub.f32 %v235, %v2791
        %v2793 = vand.u32 %v2792, 4294901760
        %2794 = vmatpush1.msra.mxu0 %v2793
        %v2795 = vand.u32 %v253, 4294901760
        %v2796 = vsub.f32 %v253, %v2795
        %v2797 = vand.u32 %v2796, 4294901760
        %2798 = vmatprep.subr.mxu0 %v2797
        %v2799 = vand.u32 %v252, 4294901760
        %v2800 = vsub.f32 %v252, %v2799
        %v2801 = vand.u32 %v2800, 4294901760
        %2802 = vmatpush1.msra.mxu0 %v2801
        %v2803 = vand.u32 %v270, 4294901760
        %v2804 = vsub.f32 %v270, %v2803
        %v2805 = vand.u32 %v2804, 4294901760
        %2806 = vmatprep.subr.mxu0 %v2805
        %v2807 = vand.u32 %v269, 4294901760
        %v2808 = vsub.f32 %v269, %v2807
        %v2809 = vand.u32 %v2808, 4294901760
        %2810 = vmatpush1.msra.mxu0 %v2809
        %v2811 = vand.u32 %v287, 4294901760
        %v2812 = vsub.f32 %v287, %v2811
        %v2813 = vand.u32 %v2812, 4294901760
        %2814 = vmatprep.subr.mxu0 %v2813
        %v2815 = vand.u32 %v286, 4294901760
        %v2816 = vsub.f32 %v286, %v2815
        %v2817 = vand.u32 %v2816, 4294901760
        %2818 = vmatpush1.msra.mxu0 %v2817
        %v2819 = vand.u32 %v304, 4294901760
        %v2820 = vsub.f32 %v304, %v2819
        %v2821 = vand.u32 %v2820, 4294901760
        %2822 = vmatprep.subr.mxu0 %v2821
        %v2823 = vand.u32 %v303, 4294901760
        %v2824 = vsub.f32 %v303, %v2823
        %v2825 = vand.u32 %v2824, 4294901760
        %2826 = vmatpush1.msra.mxu0 %v2825
        %v2827 = vand.u32 %v321, 4294901760
        %v2828 = vsub.f32 %v321, %v2827
        %v2829 = vand.u32 %v2828, 4294901760
        %2830 = vmatprep.subr.mxu0 %v2829
        %v2831 = vand.u32 %v320, 4294901760
        %v2832 = vsub.f32 %v320, %v2831
        %v2833 = vand.u32 %v2832, 4294901760
        %2834 = vmatpush1.msra.mxu0 %v2833
        %v2835 = vand.u32 %v338, 4294901760
        %v2836 = vsub.f32 %v338, %v2835
        %v2837 = vand.u32 %v2836, 4294901760
        %2838 = vmatprep.subr.mxu0 %v2837
        %v2839 = vand.u32 %v337, 4294901760
        %v2840 = vsub.f32 %v337, %v2839
        %v2841 = vand.u32 %v2840, 4294901760
        %2842 = vmatpush1.msra.mxu0 %v2841
        %v2843 = vand.u32 %v355, 4294901760
        %v2844 = vsub.f32 %v355, %v2843
        %v2845 = vand.u32 %v2844, 4294901760
        %2846 = vmatprep.subr.mxu0 %v2845
        %v2847 = vand.u32 %v354, 4294901760
        %v2848 = vsub.f32 %v354, %v2847
        %v2849 = vand.u32 %v2848, 4294901760
        %2850 = vmatpush1.msra.mxu0 %v2849
        %v2851 = vand.u32 %v372, 4294901760
        %v2852 = vsub.f32 %v372, %v2851
        %v2853 = vand.u32 %v2852, 4294901760
        %2854 = vmatprep.subr.mxu0 %v2853
        %v2855 = vand.u32 %v371, 4294901760
        %v2856 = vsub.f32 %v371, %v2855
        %v2857 = vand.u32 %v2856, 4294901760
        %2858 = vmatpush1.msra.mxu0 %v2857
        %v2859 = vand.u32 %v389, 4294901760
        %v2860 = vsub.f32 %v389, %v2859
        %v2861 = vand.u32 %v2860, 4294901760
        %2862 = vmatprep.subr.mxu0 %v2861
        %v2863 = vand.u32 %v388, 4294901760
        %v2864 = vsub.f32 %v388, %v2863
        %v2865 = vand.u32 %v2864, 4294901760
        %2866 = vmatpush1.msra.mxu0 %v2865
        %v2867 = vand.u32 %v406, 4294901760
        %v2868 = vsub.f32 %v406, %v2867
        %v2869 = vand.u32 %v2868, 4294901760
        %2870 = vmatprep.subr.mxu0 %v2869
        %v2871 = vand.u32 %v405, 4294901760
        %v2872 = vsub.f32 %v405, %v2871
        %v2873 = vand.u32 %v2872, 4294901760
        %2874 = vmatpush1.msra.mxu0 %v2873
        %v2875 = vand.u32 %v423, 4294901760
        %v2876 = vsub.f32 %v423, %v2875
        %v2877 = vand.u32 %v2876, 4294901760
        %2878 = vmatprep.subr.mxu0 %v2877
        %v2879 = vand.u32 %v422, 4294901760
        %v2880 = vsub.f32 %v422, %v2879
        %v2881 = vand.u32 %v2880, 4294901760
        %2882 = vmatpush1.msra.mxu0 %v2881
        %v2883 = vand.u32 %v440, 4294901760
        %v2884 = vsub.f32 %v440, %v2883
        %v2885 = vand.u32 %v2884, 4294901760
        %2886 = vmatprep.subr.mxu0 %v2885
        %v2887 = vand.u32 %v439, 4294901760
        %v2888 = vsub.f32 %v439, %v2887
        %v2889 = vand.u32 %v2888, 4294901760
        %2890 = vmatpush1.msra.mxu0 %v2889
        %v2891 = vand.u32 %v457, 4294901760
        %v2892 = vsub.f32 %v457, %v2891
        %v2893 = vand.u32 %v2892, 4294901760
        %2894 = vmatprep.subr.mxu0 %v2893
        %v2895 = vand.u32 %v456, 4294901760
        %v2896 = vsub.f32 %v456, %v2895
        %v2897 = vand.u32 %v2896, 4294901760
        %2898 = vmatpush1.msra.mxu0 %v2897
        %v2899 = vand.u32 %v474, 4294901760
        %v2900 = vsub.f32 %v474, %v2899
        %v2901 = vand.u32 %v2900, 4294901760
        %2902 = vmatprep.subr.mxu0 %v2901
        %v2903 = vand.u32 %v473, 4294901760
        %v2904 = vsub.f32 %v473, %v2903
        %v2905 = vand.u32 %v2904, 4294901760
        %2906 = vmatpush1.msra.mxu0 %v2905
        %2907 = vmatprep.subr.mxu0 0.0
        %2908 = vmatpush1.msra.mxu0 0.0
        %2909 = vmatprep.subr.mxu0 0.0
        %2910 = vmatpush1.msra.mxu0 0.0
        %2911 = vmatprep.subr.mxu0 0.0
        %2912 = vmatpush1.msra.mxu0 0.0
        %2913 = vmatprep.subr.mxu0 0.0
        %2914 = vmatpush1.msra.mxu0 0.0
        %2915 = vmatprep.subr.mxu0 0.0
        %2916 = vmatpush1.msra.mxu0 0.0
        %2917 = vmatprep.subr.mxu0 0.0
        %2918 = vmatpush1.msra.mxu0 0.0
        %2919 = vmatprep.subr.mxu0 0.0
        %2920 = vmatpush1.msra.mxu0 0.0
        %2921 = vmatprep.subr.mxu0 0.0
        %2922 = vmatpush1.msra.mxu0 0.0
        %2923 = vmatprep.subr.mxu0 0.0
        %2924 = vmatpush1.msra.mxu0 0.0
        %2925 = vmatprep.subr.mxu0 0.0
        %2926 = vmatpush1.msra.mxu0 0.0
        %2927 = vmatprep.subr.mxu0 0.0
        %2928 = vmatpush1.msra.mxu0 0.0
        %2929 = vmatprep.subr.mxu0 0.0
        %2930 = vmatpush1.msra.mxu0 0.0
        %2931 = vmatprep.subr.mxu0 0.0
        %2932 = vmatpush1.msra.mxu0 0.0
        %2933 = vmatprep.subr.mxu0 0.0
        %2934 = vmatpush1.msra.mxu0 0.0
        %2935 = vmatprep.subr.mxu0 0.0
        %2936 = vmatpush1.msra.mxu0 0.0
        %2937 = vmatprep.subr.mxu0 0.0
        %2938 = vmatpush1.msra.mxu0 0.0
        %2939 = vmatprep.mubr.f32.mxu0 0.0
        %v2940 = vand.u32 %v213, 4294901760
        %2941 = vmatmul.mubr.f32.gmra.mrb[0].mxu0 %v2940
        %v2942 = vpop.f32.mrb[0].mxu0
        %v2943 = vadd.f32 %v2775, %v2942
        %v2944 = vpop.f32.mrb[0].mxu0
        %v2945 = vadd.f32 %v2777, %v2944
        %2946 = vdwg.mxu0
        %v2947 = vand.u32 %v219, 4294901760
        %2948 = vmatprep.subr.mxu0 %v2947
        %v2949 = vand.u32 %v218, 4294901760
        %2950 = vmatpush1.msra.mxu0 %v2949
        %v2951 = vand.u32 %v236, 4294901760
        %2952 = vmatprep.subr.mxu0 %v2951
        %v2953 = vand.u32 %v235, 4294901760
        %2954 = vmatpush1.msra.mxu0 %v2953
        %v2955 = vand.u32 %v253, 4294901760
        %2956 = vmatprep.subr.mxu0 %v2955
        %v2957 = vand.u32 %v252, 4294901760
        %2958 = vmatpush1.msra.mxu0 %v2957
        %v2959 = vand.u32 %v270, 4294901760
        %2960 = vmatprep.subr.mxu0 %v2959
        %v2961 = vand.u32 %v269, 4294901760
        %2962 = vmatpush1.msra.mxu0 %v2961
        %v2963 = vand.u32 %v287, 4294901760
        %2964 = vmatprep.subr.mxu0 %v2963
        %v2965 = vand.u32 %v286, 4294901760
        %2966 = vmatpush1.msra.mxu0 %v2965
        %v2967 = vand.u32 %v304, 4294901760
        %2968 = vmatprep.subr.mxu0 %v2967
        %v2969 = vand.u32 %v303, 4294901760
        %2970 = vmatpush1.msra.mxu0 %v2969
        %v2971 = vand.u32 %v321, 4294901760
        %2972 = vmatprep.subr.mxu0 %v2971
        %v2973 = vand.u32 %v320, 4294901760
        %2974 = vmatpush1.msra.mxu0 %v2973
        %v2975 = vand.u32 %v338, 4294901760
        %2976 = vmatprep.subr.mxu0 %v2975
        %v2977 = vand.u32 %v337, 4294901760
        %2978 = vmatpush1.msra.mxu0 %v2977
        %v2979 = vand.u32 %v355, 4294901760
        %2980 = vmatprep.subr.mxu0 %v2979
        %v2981 = vand.u32 %v354, 4294901760
        %2982 = vmatpush1.msra.mxu0 %v2981
        %v2983 = vand.u32 %v372, 4294901760
        %2984 = vmatprep.subr.mxu0 %v2983
        %v2985 = vand.u32 %v371, 4294901760
        %2986 = vmatpush1.msra.mxu0 %v2985
        %v2987 = vand.u32 %v389, 4294901760
        %2988 = vmatprep.subr.mxu0 %v2987
        %v2989 = vand.u32 %v388, 4294901760
        %2990 = vmatpush1.msra.mxu0 %v2989
        %v2991 = vand.u32 %v406, 4294901760
        %2992 = vmatprep.subr.mxu0 %v2991
        %v2993 = vand.u32 %v405, 4294901760
        %2994 = vmatpush1.msra.mxu0 %v2993
        %v2995 = vand.u32 %v423, 4294901760
        %2996 = vmatprep.subr.mxu0 %v2995
        %v2997 = vand.u32 %v422, 4294901760
        %2998 = vmatpush1.msra.mxu0 %v2997
        %v2999 = vand.u32 %v440, 4294901760
        %3000 = vmatprep.subr.mxu0 %v2999
        %v3001 = vand.u32 %v439, 4294901760
        %3002 = vmatpush1.msra.mxu0 %v3001
        %v3003 = vand.u32 %v457, 4294901760
        %3004 = vmatprep.subr.mxu0 %v3003
        %v3005 = vand.u32 %v456, 4294901760
        %3006 = vmatpush1.msra.mxu0 %v3005
        %v3007 = vand.u32 %v474, 4294901760
        %3008 = vmatprep.subr.mxu0 %v3007
        %v3009 = vand.u32 %v473, 4294901760
        %3010 = vmatpush1.msra.mxu0 %v3009
        %3011 = vmatprep.subr.mxu0 0.0
        %3012 = vmatpush1.msra.mxu0 0.0
        %3013 = vmatprep.subr.mxu0 0.0
        %3014 = vmatpush1.msra.mxu0 0.0
        %3015 = vmatprep.subr.mxu0 0.0
        %3016 = vmatpush1.msra.mxu0 0.0
        %3017 = vmatprep.subr.mxu0 0.0
        %3018 = vmatpush1.msra.mxu0 0.0
        %3019 = vmatprep.subr.mxu0 0.0
        %3020 = vmatpush1.msra.mxu0 0.0
        %3021 = vmatprep.subr.mxu0 0.0
        %3022 = vmatpush1.msra.mxu0 0.0
        %3023 = vmatprep.subr.mxu0 0.0
        %3024 = vmatpush1.msra.mxu0 0.0
        %3025 = vmatprep.subr.mxu0 0.0
        %3026 = vmatpush1.msra.mxu0 0.0
        %3027 = vmatprep.subr.mxu0 0.0
        %3028 = vmatpush1.msra.mxu0 0.0
        %3029 = vmatprep.subr.mxu0 0.0
        %3030 = vmatpush1.msra.mxu0 0.0
        %3031 = vmatprep.subr.mxu0 0.0
        %3032 = vmatpush1.msra.mxu0 0.0
        %3033 = vmatprep.subr.mxu0 0.0
        %3034 = vmatpush1.msra.mxu0 0.0
        %3035 = vmatprep.subr.mxu0 0.0
        %3036 = vmatpush1.msra.mxu0 0.0
        %3037 = vmatprep.subr.mxu0 0.0
        %3038 = vmatpush1.msra.mxu0 0.0
        %3039 = vmatprep.subr.mxu0 0.0
        %3040 = vmatpush1.msra.mxu0 0.0
        %3041 = vmatprep.subr.mxu0 0.0
        %3042 = vmatpush1.msra.mxu0 0.0
        %3043 = vmatprep.mubr.f32.mxu0 0.0
        %v3044 = vand.u32 %v213, 4294901760
        %3045 = vmatmul.mubr.f32.gmra.mrb[0].mxu0 %v3044
        %v3046 = vpop.f32.mrb[0].mxu0
        %v3047 = vadd.f32 %v2943, %v3046
        %v3048 = vpop.f32.mrb[0].mxu0
        %v3049 = vadd.f32 %v2945, %v3048
        %3050 = vdwg.mxu0
        %v3051 = vand.u32 %v221, 4294901760
        %3052 = vmatprep.subr.mxu0 %v3051
        %v3053 = vand.u32 %v220, 4294901760
        %3054 = vmatpush1.msra.mxu0 %v3053
        %v3055 = vand.u32 %v238, 4294901760
        %3056 = vmatprep.subr.mxu0 %v3055
        %v3057 = vand.u32 %v237, 4294901760
        %3058 = vmatpush1.msra.mxu0 %v3057
        %v3059 = vand.u32 %v255, 4294901760
        %3060 = vmatprep.subr.mxu0 %v3059
        %v3061 = vand.u32 %v254, 4294901760
        %3062 = vmatpush1.msra.mxu0 %v3061
        %v3063 = vand.u32 %v272, 4294901760
        %3064 = vmatprep.subr.mxu0 %v3063
        %v3065 = vand.u32 %v271, 4294901760
        %3066 = vmatpush1.msra.mxu0 %v3065
        %v3067 = vand.u32 %v289, 4294901760
        %3068 = vmatprep.subr.mxu0 %v3067
        %v3069 = vand.u32 %v288, 4294901760
        %3070 = vmatpush1.msra.mxu0 %v3069
        %v3071 = vand.u32 %v306, 4294901760
        %3072 = vmatprep.subr.mxu0 %v3071
        %v3073 = vand.u32 %v305, 4294901760
        %3074 = vmatpush1.msra.mxu0 %v3073
        %v3075 = vand.u32 %v323, 4294901760
        %3076 = vmatprep.subr.mxu0 %v3075
        %v3077 = vand.u32 %v322, 4294901760
        %3078 = vmatpush1.msra.mxu0 %v3077
        %v3079 = vand.u32 %v340, 4294901760
        %3080 = vmatprep.subr.mxu0 %v3079
        %v3081 = vand.u32 %v339, 4294901760
        %3082 = vmatpush1.msra.mxu0 %v3081
        %v3083 = vand.u32 %v357, 4294901760
        %3084 = vmatprep.subr.mxu0 %v3083
        %v3085 = vand.u32 %v356, 4294901760
        %3086 = vmatpush1.msra.mxu0 %v3085
        %v3087 = vand.u32 %v374, 4294901760
        %3088 = vmatprep.subr.mxu0 %v3087
        %v3089 = vand.u32 %v373, 4294901760
        %3090 = vmatpush1.msra.mxu0 %v3089
        %v3091 = vand.u32 %v391, 4294901760
        %3092 = vmatprep.subr.mxu0 %v3091
        %v3093 = vand.u32 %v390, 4294901760
        %3094 = vmatpush1.msra.mxu0 %v3093
        %v3095 = vand.u32 %v408, 4294901760
        %3096 = vmatprep.subr.mxu0 %v3095
        %v3097 = vand.u32 %v407, 4294901760
        %3098 = vmatpush1.msra.mxu0 %v3097
        %v3099 = vand.u32 %v425, 4294901760
        %3100 = vmatprep.subr.mxu0 %v3099
        %v3101 = vand.u32 %v424, 4294901760
        %3102 = vmatpush1.msra.mxu0 %v3101
        %v3103 = vand.u32 %v442, 4294901760
        %3104 = vmatprep.subr.mxu0 %v3103
        %v3105 = vand.u32 %v441, 4294901760
        %3106 = vmatpush1.msra.mxu0 %v3105
        %v3107 = vand.u32 %v459, 4294901760
        %3108 = vmatprep.subr.mxu0 %v3107
        %v3109 = vand.u32 %v458, 4294901760
        %3110 = vmatpush1.msra.mxu0 %v3109
        %v3111 = vand.u32 %v476, 4294901760
        %3112 = vmatprep.subr.mxu0 %v3111
        %v3113 = vand.u32 %v475, 4294901760
        %3114 = vmatpush1.msra.mxu0 %v3113
        %3115 = vmatprep.subr.mxu0 0.0
        %3116 = vmatpush1.msra.mxu0 0.0
        %3117 = vmatprep.subr.mxu0 0.0
        %3118 = vmatpush1.msra.mxu0 0.0
        %3119 = vmatprep.subr.mxu0 0.0
        %3120 = vmatpush1.msra.mxu0 0.0
        %3121 = vmatprep.subr.mxu0 0.0
        %3122 = vmatpush1.msra.mxu0 0.0
        %3123 = vmatprep.subr.mxu0 0.0
        %3124 = vmatpush1.msra.mxu0 0.0
        %3125 = vmatprep.subr.mxu0 0.0
        %3126 = vmatpush1.msra.mxu0 0.0
        %3127 = vmatprep.subr.mxu0 0.0
        %3128 = vmatpush1.msra.mxu0 0.0
        %3129 = vmatprep.subr.mxu0 0.0
        %3130 = vmatpush1.msra.mxu0 0.0
        %3131 = vmatprep.subr.mxu0 0.0
        %3132 = vmatpush1.msra.mxu0 0.0
        %3133 = vmatprep.subr.mxu0 0.0
        %3134 = vmatpush1.msra.mxu0 0.0
        %3135 = vmatprep.subr.mxu0 0.0
        %3136 = vmatpush1.msra.mxu0 0.0
        %3137 = vmatprep.subr.mxu0 0.0
        %3138 = vmatpush1.msra.mxu0 0.0
        %3139 = vmatprep.subr.mxu0 0.0
        %3140 = vmatpush1.msra.mxu0 0.0
        %3141 = vmatprep.subr.mxu0 0.0
        %3142 = vmatpush1.msra.mxu0 0.0
        %3143 = vmatprep.subr.mxu0 0.0
        %3144 = vmatpush1.msra.mxu0 0.0
        %3145 = vmatprep.subr.mxu0 0.0
        %3146 = vmatpush1.msra.mxu0 0.0
        %3147 = vmatprep.mubr.f32.mxu0 0.0
        %v3148 = vand.u32 %v213, 4294901760
        %v3149 = vsub.f32 %v213, %v3148
        %v3150 = vand.u32 %v3149, 4294901760
        %v3151 = vsub.f32 %v3149, %v3150
        %v3152 = vand.u32 %v3151, 4294901760
        %3153 = vmatmul.mubr.f32.gmra.mrb[0].mxu0 %v3152
        %v3154 = vpop.f32.mrb[0].mxu0
        %v3155 = vadd.f32 0.0, %v3154
        %v3156 = vpop.f32.mrb[0].mxu0
        %v3157 = vadd.f32 0.0, %v3156
        %3158 = vdwg.mxu0
        %v3159 = vand.u32 %v221, 4294901760
        %v3160 = vsub.f32 %v221, %v3159
        %v3161 = vand.u32 %v3160, 4294901760
        %v3162 = vsub.f32 %v3160, %v3161
        %v3163 = vand.u32 %v3162, 4294901760
        %3164 = vmatprep.subr.mxu0 %v3163
        %v3165 = vand.u32 %v220, 4294901760
        %v3166 = vsub.f32 %v220, %v3165
        %v3167 = vand.u32 %v3166, 4294901760
        %v3168 = vsub.f32 %v3166, %v3167
        %v3169 = vand.u32 %v3168, 4294901760
        %3170 = vmatpush1.msra.mxu0 %v3169
        %v3171 = vand.u32 %v238, 4294901760
        %v3172 = vsub.f32 %v238, %v3171
        %v3173 = vand.u32 %v3172, 4294901760
        %v3174 = vsub.f32 %v3172, %v3173
        %v3175 = vand.u32 %v3174, 4294901760
        %3176 = vmatprep.subr.mxu0 %v3175
        %v3177 = vand.u32 %v237, 4294901760
        %v3178 = vsub.f32 %v237, %v3177
        %v3179 = vand.u32 %v3178, 4294901760
        %v3180 = vsub.f32 %v3178, %v3179
        %v3181 = vand.u32 %v3180, 4294901760
        %3182 = vmatpush1.msra.mxu0 %v3181
        %v3183 = vand.u32 %v255, 4294901760
        %v3184 = vsub.f32 %v255, %v3183
        %v3185 = vand.u32 %v3184, 4294901760
        %v3186 = vsub.f32 %v3184, %v3185
        %v3187 = vand.u32 %v3186, 4294901760
        %3188 = vmatprep.subr.mxu0 %v3187
        %v3189 = vand.u32 %v254, 4294901760
        %v3190 = vsub.f32 %v254, %v3189
        %v3191 = vand.u32 %v3190, 4294901760
        %v3192 = vsub.f32 %v3190, %v3191
        %v3193 = vand.u32 %v3192, 4294901760
        %3194 = vmatpush1.msra.mxu0 %v3193
        %v3195 = vand.u32 %v272, 4294901760
        %v3196 = vsub.f32 %v272, %v3195
        %v3197 = vand.u32 %v3196, 4294901760
        %v3198 = vsub.f32 %v3196, %v3197
        %v3199 = vand.u32 %v3198, 4294901760
        %3200 = vmatprep.subr.mxu0 %v3199
        %v3201 = vand.u32 %v271, 4294901760
        %v3202 = vsub.f32 %v271, %v3201
        %v3203 = vand.u32 %v3202, 4294901760
        %v3204 = vsub.f32 %v3202, %v3203
        %v3205 = vand.u32 %v3204, 4294901760
        %3206 = vmatpush1.msra.mxu0 %v3205
        %v3207 = vand.u32 %v289, 4294901760
        %v3208 = vsub.f32 %v289, %v3207
        %v3209 = vand.u32 %v3208, 4294901760
        %v3210 = vsub.f32 %v3208, %v3209
        %v3211 = vand.u32 %v3210, 4294901760
        %3212 = vmatprep.subr.mxu0 %v3211
        %v3213 = vand.u32 %v288, 4294901760
        %v3214 = vsub.f32 %v288, %v3213
        %v3215 = vand.u32 %v3214, 4294901760
        %v3216 = vsub.f32 %v3214, %v3215
        %v3217 = vand.u32 %v3216, 4294901760
        %3218 = vmatpush1.msra.mxu0 %v3217
        %v3219 = vand.u32 %v306, 4294901760
        %v3220 = vsub.f32 %v306, %v3219
        %v3221 = vand.u32 %v3220, 4294901760
        %v3222 = vsub.f32 %v3220, %v3221
        %v3223 = vand.u32 %v3222, 4294901760
        %3224 = vmatprep.subr.mxu0 %v3223
        %v3225 = vand.u32 %v305, 4294901760
        %v3226 = vsub.f32 %v305, %v3225
        %v3227 = vand.u32 %v3226, 4294901760
        %v3228 = vsub.f32 %v3226, %v3227
        %v3229 = vand.u32 %v3228, 4294901760
        %3230 = vmatpush1.msra.mxu0 %v3229
        %v3231 = vand.u32 %v323, 4294901760
        %v3232 = vsub.f32 %v323, %v3231
        %v3233 = vand.u32 %v3232, 4294901760
        %v3234 = vsub.f32 %v3232, %v3233
        %v3235 = vand.u32 %v3234, 4294901760
        %3236 = vmatprep.subr.mxu0 %v3235
        %v3237 = vand.u32 %v322, 4294901760
        %v3238 = vsub.f32 %v322, %v3237
        %v3239 = vand.u32 %v3238, 4294901760
        %v3240 = vsub.f32 %v3238, %v3239
        %v3241 = vand.u32 %v3240, 4294901760
        %3242 = vmatpush1.msra.mxu0 %v3241
        %v3243 = vand.u32 %v340, 4294901760
        %v3244 = vsub.f32 %v340, %v3243
        %v3245 = vand.u32 %v3244, 4294901760
        %v3246 = vsub.f32 %v3244, %v3245
        %v3247 = vand.u32 %v3246, 4294901760
        %3248 = vmatprep.subr.mxu0 %v3247
        %v3249 = vand.u32 %v339, 4294901760
        %v3250 = vsub.f32 %v339, %v3249
        %v3251 = vand.u32 %v3250, 4294901760
        %v3252 = vsub.f32 %v3250, %v3251
        %v3253 = vand.u32 %v3252, 4294901760
        %3254 = vmatpush1.msra.mxu0 %v3253
        %v3255 = vand.u32 %v357, 4294901760
        %v3256 = vsub.f32 %v357, %v3255
        %v3257 = vand.u32 %v3256, 4294901760
        %v3258 = vsub.f32 %v3256, %v3257
        %v3259 = vand.u32 %v3258, 4294901760
        %3260 = vmatprep.subr.mxu0 %v3259
        %v3261 = vand.u32 %v356, 4294901760
        %v3262 = vsub.f32 %v356, %v3261
        %v3263 = vand.u32 %v3262, 4294901760
        %v3264 = vsub.f32 %v3262, %v3263
        %v3265 = vand.u32 %v3264, 4294901760
        %3266 = vmatpush1.msra.mxu0 %v3265
        %v3267 = vand.u32 %v374, 4294901760
        %v3268 = vsub.f32 %v374, %v3267
        %v3269 = vand.u32 %v3268, 4294901760
        %v3270 = vsub.f32 %v3268, %v3269
        %v3271 = vand.u32 %v3270, 4294901760
        %3272 = vmatprep.subr.mxu0 %v3271
        %v3273 = vand.u32 %v373, 4294901760
        %v3274 = vsub.f32 %v373, %v3273
        %v3275 = vand.u32 %v3274, 4294901760
        %v3276 = vsub.f32 %v3274, %v3275
        %v3277 = vand.u32 %v3276, 4294901760
        %3278 = vmatpush1.msra.mxu0 %v3277
        %v3279 = vand.u32 %v391, 4294901760
        %v3280 = vsub.f32 %v391, %v3279
        %v3281 = vand.u32 %v3280, 4294901760
        %v3282 = vsub.f32 %v3280, %v3281
        %v3283 = vand.u32 %v3282, 4294901760
        %3284 = vmatprep.subr.mxu0 %v3283
        %v3285 = vand.u32 %v390, 4294901760
        %v3286 = vsub.f32 %v390, %v3285
        %v3287 = vand.u32 %v3286, 4294901760
        %v3288 = vsub.f32 %v3286, %v3287
        %v3289 = vand.u32 %v3288, 4294901760
        %3290 = vmatpush1.msra.mxu0 %v3289
        %v3291 = vand.u32 %v408, 4294901760
        %v3292 = vsub.f32 %v408, %v3291
        %v3293 = vand.u32 %v3292, 4294901760
        %v3294 = vsub.f32 %v3292, %v3293
        %v3295 = vand.u32 %v3294, 4294901760
        %3296 = vmatprep.subr.mxu0 %v3295
        %v3297 = vand.u32 %v407, 4294901760
        %v3298 = vsub.f32 %v407, %v3297
        %v3299 = vand.u32 %v3298, 4294901760
        %v3300 = vsub.f32 %v3298, %v3299
        %v3301 = vand.u32 %v3300, 4294901760
        %3302 = vmatpush1.msra.mxu0 %v3301
        %v3303 = vand.u32 %v425, 4294901760
        %v3304 = vsub.f32 %v425, %v3303
        %v3305 = vand.u32 %v3304, 4294901760
        %v3306 = vsub.f32 %v3304, %v3305
        %v3307 = vand.u32 %v3306, 4294901760
        %3308 = vmatprep.subr.mxu0 %v3307
        %v3309 = vand.u32 %v424, 4294901760
        %v3310 = vsub.f32 %v424, %v3309
        %v3311 = vand.u32 %v3310, 4294901760
        %v3312 = vsub.f32 %v3310, %v3311
        %v3313 = vand.u32 %v3312, 4294901760
        %3314 = vmatpush1.msra.mxu0 %v3313
        %v3315 = vand.u32 %v442, 4294901760
        %v3316 = vsub.f32 %v442, %v3315
        %v3317 = vand.u32 %v3316, 4294901760
        %v3318 = vsub.f32 %v3316, %v3317
        %v3319 = vand.u32 %v3318, 4294901760
        %3320 = vmatprep.subr.mxu0 %v3319
        %v3321 = vand.u32 %v441, 4294901760
        %v3322 = vsub.f32 %v441, %v3321
        %v3323 = vand.u32 %v3322, 4294901760
        %v3324 = vsub.f32 %v3322, %v3323
        %v3325 = vand.u32 %v3324, 4294901760
        %3326 = vmatpush1.msra.mxu0 %v3325
        %v3327 = vand.u32 %v459, 4294901760
        %v3328 = vsub.f32 %v459, %v3327
        %v3329 = vand.u32 %v3328, 4294901760
        %v3330 = vsub.f32 %v3328, %v3329
        %v3331 = vand.u32 %v3330, 4294901760
        %3332 = vmatprep.subr.mxu0 %v3331
        %v3333 = vand.u32 %v458, 4294901760
        %v3334 = vsub.f32 %v458, %v3333
        %v3335 = vand.u32 %v3334, 4294901760
        %v3336 = vsub.f32 %v3334, %v3335
        %v3337 = vand.u32 %v3336, 4294901760
        %3338 = vmatpush1.msra.mxu0 %v3337
        %v3339 = vand.u32 %v476, 4294901760
        %v3340 = vsub.f32 %v476, %v3339
        %v3341 = vand.u32 %v3340, 4294901760
        %v3342 = vsub.f32 %v3340, %v3341
        %v3343 = vand.u32 %v3342, 4294901760
        %3344 = vmatprep.subr.mxu0 %v3343
        %v3345 = vand.u32 %v475, 4294901760
        %v3346 = vsub.f32 %v475, %v3345
        %v3347 = vand.u32 %v3346, 4294901760
        %v3348 = vsub.f32 %v3346, %v3347
        %v3349 = vand.u32 %v3348, 4294901760
        %3350 = vmatpush1.msra.mxu0 %v3349
        %3351 = vmatprep.subr.mxu0 0.0
        %3352 = vmatpush1.msra.mxu0 0.0
        %3353 = vmatprep.subr.mxu0 0.0
        %3354 = vmatpush1.msra.mxu0 0.0
        %3355 = vmatprep.subr.mxu0 0.0
        %3356 = vmatpush1.msra.mxu0 0.0
        %3357 = vmatprep.subr.mxu0 0.0
        %3358 = vmatpush1.msra.mxu0 0.0
        %3359 = vmatprep.subr.mxu0 0.0
        %3360 = vmatpush1.msra.mxu0 0.0
        %3361 = vmatprep.subr.mxu0 0.0
        %3362 = vmatpush1.msra.mxu0 0.0
        %3363 = vmatprep.subr.mxu0 0.0
        %3364 = vmatpush1.msra.mxu0 0.0
        %3365 = vmatprep.subr.mxu0 0.0
        %3366 = vmatpush1.msra.mxu0 0.0
        %3367 = vmatprep.subr.mxu0 0.0
        %3368 = vmatpush1.msra.mxu0 0.0
        %3369 = vmatprep.subr.mxu0 0.0
        %3370 = vmatpush1.msra.mxu0 0.0
        %3371 = vmatprep.subr.mxu0 0.0
        %3372 = vmatpush1.msra.mxu0 0.0
        %3373 = vmatprep.subr.mxu0 0.0
        %3374 = vmatpush1.msra.mxu0 0.0
        %3375 = vmatprep.subr.mxu0 0.0
        %3376 = vmatpush1.msra.mxu0 0.0
        %3377 = vmatprep.subr.mxu0 0.0
        %3378 = vmatpush1.msra.mxu0 0.0
        %3379 = vmatprep.subr.mxu0 0.0
        %3380 = vmatpush1.msra.mxu0 0.0
        %3381 = vmatprep.subr.mxu0 0.0
        %3382 = vmatpush1.msra.mxu0 0.0
        %3383 = vmatprep.mubr.f32.mxu0 0.0
        %v3384 = vand.u32 %v213, 4294901760
        %3385 = vmatmul.mubr.f32.gmra.mrb[0].mxu0 %v3384
        %v3386 = vpop.f32.mrb[0].mxu0
        %v3387 = vadd.f32 %v3155, %v3386
        %v3388 = vpop.f32.mrb[0].mxu0
        %v3389 = vadd.f32 %v3157, %v3388
        %3390 = vdwg.mxu0
        %v3391 = vand.u32 %v221, 4294901760
        %v3392 = vsub.f32 %v221, %v3391
        %3393 = vmatprep.subr.mxu0 %v3392
        %v3394 = vand.u32 %v220, 4294901760
        %v3395 = vsub.f32 %v220, %v3394
        %3396 = vmatpush1.msra.mxu0 %v3395
        %v3397 = vand.u32 %v238, 4294901760
        %v3398 = vsub.f32 %v238, %v3397
        %3399 = vmatprep.subr.mxu0 %v3398
        %v3400 = vand.u32 %v237, 4294901760
        %v3401 = vsub.f32 %v237, %v3400
        %3402 = vmatpush1.msra.mxu0 %v3401
        %v3403 = vand.u32 %v255, 4294901760
        %v3404 = vsub.f32 %v255, %v3403
        %3405 = vmatprep.subr.mxu0 %v3404
        %v3406 = vand.u32 %v254, 4294901760
        %v3407 = vsub.f32 %v254, %v3406
        %3408 = vmatpush1.msra.mxu0 %v3407
        %v3409 = vand.u32 %v272, 4294901760
        %v3410 = vsub.f32 %v272, %v3409
        %3411 = vmatprep.subr.mxu0 %v3410
        %v3412 = vand.u32 %v271, 4294901760
        %v3413 = vsub.f32 %v271, %v3412
        %3414 = vmatpush1.msra.mxu0 %v3413
        %v3415 = vand.u32 %v289, 4294901760
        %v3416 = vsub.f32 %v289, %v3415
        %3417 = vmatprep.subr.mxu0 %v3416
        %v3418 = vand.u32 %v288, 4294901760
        %v3419 = vsub.f32 %v288, %v3418
        %3420 = vmatpush1.msra.mxu0 %v3419
        %v3421 = vand.u32 %v306, 4294901760
        %v3422 = vsub.f32 %v306, %v3421
        %3423 = vmatprep.subr.mxu0 %v3422
        %v3424 = vand.u32 %v305, 4294901760
        %v3425 = vsub.f32 %v305, %v3424
        %3426 = vmatpush1.msra.mxu0 %v3425
        %v3427 = vand.u32 %v323, 4294901760
        %v3428 = vsub.f32 %v323, %v3427
        %3429 = vmatprep.subr.mxu0 %v3428
        %v3430 = vand.u32 %v322, 4294901760
        %v3431 = vsub.f32 %v322, %v3430
        %3432 = vmatpush1.msra.mxu0 %v3431
        %v3433 = vand.u32 %v340, 4294901760
        %v3434 = vsub.f32 %v340, %v3433
        %3435 = vmatprep.subr.mxu0 %v3434
        %v3436 = vand.u32 %v339, 4294901760
        %v3437 = vsub.f32 %v339, %v3436
        %3438 = vmatpush1.msra.mxu0 %v3437
        %v3439 = vand.u32 %v357, 4294901760
        %v3440 = vsub.f32 %v357, %v3439
        %3441 = vmatprep.subr.mxu0 %v3440
        %v3442 = vand.u32 %v356, 4294901760
        %v3443 = vsub.f32 %v356, %v3442
        %3444 = vmatpush1.msra.mxu0 %v3443
        %v3445 = vand.u32 %v374, 4294901760
        %v3446 = vsub.f32 %v374, %v3445
        %3447 = vmatprep.subr.mxu0 %v3446
        %v3448 = vand.u32 %v373, 4294901760
        %v3449 = vsub.f32 %v373, %v3448
        %3450 = vmatpush1.msra.mxu0 %v3449
        %v3451 = vand.u32 %v391, 4294901760
        %v3452 = vsub.f32 %v391, %v3451
        %3453 = vmatprep.subr.mxu0 %v3452
        %v3454 = vand.u32 %v390, 4294901760
        %v3455 = vsub.f32 %v390, %v3454
        %3456 = vmatpush1.msra.mxu0 %v3455
        %v3457 = vand.u32 %v408, 4294901760
        %v3458 = vsub.f32 %v408, %v3457
        %3459 = vmatprep.subr.mxu0 %v3458
        %v3460 = vand.u32 %v407, 4294901760
        %v3461 = vsub.f32 %v407, %v3460
        %3462 = vmatpush1.msra.mxu0 %v3461
        %v3463 = vand.u32 %v425, 4294901760
        %v3464 = vsub.f32 %v425, %v3463
        %3465 = vmatprep.subr.mxu0 %v3464
        %v3466 = vand.u32 %v424, 4294901760
        %v3467 = vsub.f32 %v424, %v3466
        %3468 = vmatpush1.msra.mxu0 %v3467
        %v3469 = vand.u32 %v442, 4294901760
        %v3470 = vsub.f32 %v442, %v3469
        %3471 = vmatprep.subr.mxu0 %v3470
        %v3472 = vand.u32 %v441, 4294901760
        %v3473 = vsub.f32 %v441, %v3472
        %3474 = vmatpush1.msra.mxu0 %v3473
        %v3475 = vand.u32 %v459, 4294901760
        %v3476 = vsub.f32 %v459, %v3475
        %3477 = vmatprep.subr.mxu0 %v3476
        %v3478 = vand.u32 %v458, 4294901760
        %v3479 = vsub.f32 %v458, %v3478
        %3480 = vmatpush1.msra.mxu0 %v3479
        %v3481 = vand.u32 %v476, 4294901760
        %v3482 = vsub.f32 %v476, %v3481
        %3483 = vmatprep.subr.mxu0 %v3482
        %v3484 = vand.u32 %v475, 4294901760
        %v3485 = vsub.f32 %v475, %v3484
        %3486 = vmatpush1.msra.mxu0 %v3485
        %3487 = vmatprep.subr.mxu0 0.0
        %3488 = vmatpush1.msra.mxu0 0.0
        %3489 = vmatprep.subr.mxu0 0.0
        %3490 = vmatpush1.msra.mxu0 0.0
        %3491 = vmatprep.subr.mxu0 0.0
        %3492 = vmatpush1.msra.mxu0 0.0
        %3493 = vmatprep.subr.mxu0 0.0
        %3494 = vmatpush1.msra.mxu0 0.0
        %3495 = vmatprep.subr.mxu0 0.0
        %3496 = vmatpush1.msra.mxu0 0.0
        %3497 = vmatprep.subr.mxu0 0.0
        %3498 = vmatpush1.msra.mxu0 0.0
        %3499 = vmatprep.subr.mxu0 0.0
        %3500 = vmatpush1.msra.mxu0 0.0
        %3501 = vmatprep.subr.mxu0 0.0
        %3502 = vmatpush1.msra.mxu0 0.0
        %3503 = vmatprep.subr.mxu0 0.0
        %3504 = vmatpush1.msra.mxu0 0.0
        %3505 = vmatprep.subr.mxu0 0.0
        %3506 = vmatpush1.msra.mxu0 0.0
        %3507 = vmatprep.subr.mxu0 0.0
        %3508 = vmatpush1.msra.mxu0 0.0
        %3509 = vmatprep.subr.mxu0 0.0
        %3510 = vmatpush1.msra.mxu0 0.0
        %3511 = vmatprep.subr.mxu0 0.0
        %3512 = vmatpush1.msra.mxu0 0.0
        %3513 = vmatprep.subr.mxu0 0.0
        %3514 = vmatpush1.msra.mxu0 0.0
        %3515 = vmatprep.subr.mxu0 0.0
        %3516 = vmatpush1.msra.mxu0 0.0
        %3517 = vmatprep.subr.mxu0 0.0
        %3518 = vmatpush1.msra.mxu0 0.0
        %3519 = vmatprep.mubr.f32.mxu0 0.0
        %v3520 = vand.u32 %v213, 4294901760
        %v3521 = vsub.f32 %v213, %v3520
        %3522 = vmatmul.mubr.f32.gmra.mrb[0].mxu0 %v3521
        %v3523 = vpop.f32.mrb[0].mxu0
        %v3524 = vadd.f32 %v3387, %v3523
        %v3525 = vpop.f32.mrb[0].mxu0
        %v3526 = vadd.f32 %v3389, %v3525
        %3527 = vdwg.mxu0
        %v3528 = vand.u32 %v221, 4294901760
        %3529 = vmatprep.subr.mxu0 %v3528
        %v3530 = vand.u32 %v220, 4294901760
        %3531 = vmatpush1.msra.mxu0 %v3530
        %v3532 = vand.u32 %v238, 4294901760
        %3533 = vmatprep.subr.mxu0 %v3532
        %v3534 = vand.u32 %v237, 4294901760
        %3535 = vmatpush1.msra.mxu0 %v3534
        %v3536 = vand.u32 %v255, 4294901760
        %3537 = vmatprep.subr.mxu0 %v3536
        %v3538 = vand.u32 %v254, 4294901760
        %3539 = vmatpush1.msra.mxu0 %v3538
        %v3540 = vand.u32 %v272, 4294901760
        %3541 = vmatprep.subr.mxu0 %v3540
        %v3542 = vand.u32 %v271, 4294901760
        %3543 = vmatpush1.msra.mxu0 %v3542
        %v3544 = vand.u32 %v289, 4294901760
        %3545 = vmatprep.subr.mxu0 %v3544
        %v3546 = vand.u32 %v288, 4294901760
        %3547 = vmatpush1.msra.mxu0 %v3546
        %v3548 = vand.u32 %v306, 4294901760
        %3549 = vmatprep.subr.mxu0 %v3548
        %v3550 = vand.u32 %v305, 4294901760
        %3551 = vmatpush1.msra.mxu0 %v3550
        %v3552 = vand.u32 %v323, 4294901760
        %3553 = vmatprep.subr.mxu0 %v3552
        %v3554 = vand.u32 %v322, 4294901760
        %3555 = vmatpush1.msra.mxu0 %v3554
        %v3556 = vand.u32 %v340, 4294901760
        %3557 = vmatprep.subr.mxu0 %v3556
        %v3558 = vand.u32 %v339, 4294901760
        %3559 = vmatpush1.msra.mxu0 %v3558
        %v3560 = vand.u32 %v357, 4294901760
        %3561 = vmatprep.subr.mxu0 %v3560
        %v3562 = vand.u32 %v356, 4294901760
        %3563 = vmatpush1.msra.mxu0 %v3562
        %v3564 = vand.u32 %v374, 4294901760
        %3565 = vmatprep.subr.mxu0 %v3564
        %v3566 = vand.u32 %v373, 4294901760
        %3567 = vmatpush1.msra.mxu0 %v3566
        %v3568 = vand.u32 %v391, 4294901760
        %3569 = vmatprep.subr.mxu0 %v3568
        %v3570 = vand.u32 %v390, 4294901760
        %3571 = vmatpush1.msra.mxu0 %v3570
        %v3572 = vand.u32 %v408, 4294901760
        %3573 = vmatprep.subr.mxu0 %v3572
        %v3574 = vand.u32 %v407, 4294901760
        %3575 = vmatpush1.msra.mxu0 %v3574
        %v3576 = vand.u32 %v425, 4294901760
        %3577 = vmatprep.subr.mxu0 %v3576
        %v3578 = vand.u32 %v424, 4294901760
        %3579 = vmatpush1.msra.mxu0 %v3578
        %v3580 = vand.u32 %v442, 4294901760
        %3581 = vmatprep.subr.mxu0 %v3580
        %v3582 = vand.u32 %v441, 4294901760
        %3583 = vmatpush1.msra.mxu0 %v3582
        %v3584 = vand.u32 %v459, 4294901760
        %3585 = vmatprep.subr.mxu0 %v3584
        %v3586 = vand.u32 %v458, 4294901760
        %3587 = vmatpush1.msra.mxu0 %v3586
        %v3588 = vand.u32 %v476, 4294901760
        %3589 = vmatprep.subr.mxu0 %v3588
        %v3590 = vand.u32 %v475, 4294901760
        %3591 = vmatpush1.msra.mxu0 %v3590
        %3592 = vmatprep.subr.mxu0 0.0
        %3593 = vmatpush1.msra.mxu0 0.0
        %3594 = vmatprep.subr.mxu0 0.0
        %3595 = vmatpush1.msra.mxu0 0.0
        %3596 = vmatprep.subr.mxu0 0.0
        %3597 = vmatpush1.msra.mxu0 0.0
        %3598 = vmatprep.subr.mxu0 0.0
        %3599 = vmatpush1.msra.mxu0 0.0
        %3600 = vmatprep.subr.mxu0 0.0
        %3601 = vmatpush1.msra.mxu0 0.0
        %3602 = vmatprep.subr.mxu0 0.0
        %3603 = vmatpush1.msra.mxu0 0.0
        %3604 = vmatprep.subr.mxu0 0.0
        %3605 = vmatpush1.msra.mxu0 0.0
        %3606 = vmatprep.subr.mxu0 0.0
        %3607 = vmatpush1.msra.mxu0 0.0
        %3608 = vmatprep.subr.mxu0 0.0
        %3609 = vmatpush1.msra.mxu0 0.0
        %3610 = vmatprep.subr.mxu0 0.0
        %3611 = vmatpush1.msra.mxu0 0.0
        %3612 = vmatprep.subr.mxu0 0.0
        %3613 = vmatpush1.msra.mxu0 0.0
        %3614 = vmatprep.subr.mxu0 0.0
        %3615 = vmatpush1.msra.mxu0 0.0
        %3616 = vmatprep.subr.mxu0 0.0
        %3617 = vmatpush1.msra.mxu0 0.0
        %3618 = vmatprep.subr.mxu0 0.0
        %3619 = vmatpush1.msra.mxu0 0.0
        %3620 = vmatprep.subr.mxu0 0.0
        %3621 = vmatpush1.msra.mxu0 0.0
        %3622 = vmatprep.subr.mxu0 0.0
        %3623 = vmatpush1.msra.mxu0 0.0
        %3624 = vmatprep.mubr.f32.mxu0 0.0
        %v3625 = vand.u32 %v213, 4294901760
        %v3626 = vsub.f32 %v213, %v3625
        %v3627 = vand.u32 %v3626, 4294901760
        %3628 = vmatmul.mubr.f32.gmra.mrb[0].mxu0 %v3627
        %v3629 = vpop.f32.mrb[0].mxu0
        %v3630 = vadd.f32 %v3524, %v3629
        %v3631 = vpop.f32.mrb[0].mxu0
        %v3632 = vadd.f32 %v3526, %v3631
        %3633 = vdwg.mxu0
        %v3634 = vand.u32 %v221, 4294901760
        %v3635 = vsub.f32 %v221, %v3634
        %v3636 = vand.u32 %v3635, 4294901760
        %3637 = vmatprep.subr.mxu0 %v3636
        %v3638 = vand.u32 %v220, 4294901760
        %v3639 = vsub.f32 %v220, %v3638
        %v3640 = vand.u32 %v3639, 4294901760
        %3641 = vmatpush1.msra.mxu0 %v3640
        %v3642 = vand.u32 %v238, 4294901760
        %v3643 = vsub.f32 %v238, %v3642
        %v3644 = vand.u32 %v3643, 4294901760
        %3645 = vmatprep.subr.mxu0 %v3644
        %v3646 = vand.u32 %v237, 4294901760
        %v3647 = vsub.f32 %v237, %v3646
        %v3648 = vand.u32 %v3647, 4294901760
        %3649 = vmatpush1.msra.mxu0 %v3648
        %v3650 = vand.u32 %v255, 4294901760
        %v3651 = vsub.f32 %v255, %v3650
        %v3652 = vand.u32 %v3651, 4294901760
        %3653 = vmatprep.subr.mxu0 %v3652
        %v3654 = vand.u32 %v254, 4294901760
        %v3655 = vsub.f32 %v254, %v3654
        %v3656 = vand.u32 %v3655, 4294901760
        %3657 = vmatpush1.msra.mxu0 %v3656
        %v3658 = vand.u32 %v272, 4294901760
        %v3659 = vsub.f32 %v272, %v3658
        %v3660 = vand.u32 %v3659, 4294901760
        %3661 = vmatprep.subr.mxu0 %v3660
        %v3662 = vand.u32 %v271, 4294901760
        %v3663 = vsub.f32 %v271, %v3662
        %v3664 = vand.u32 %v3663, 4294901760
        %3665 = vmatpush1.msra.mxu0 %v3664
        %v3666 = vand.u32 %v289, 4294901760
        %v3667 = vsub.f32 %v289, %v3666
        %v3668 = vand.u32 %v3667, 4294901760
        %3669 = vmatprep.subr.mxu0 %v3668
        %v3670 = vand.u32 %v288, 4294901760
        %v3671 = vsub.f32 %v288, %v3670
        %v3672 = vand.u32 %v3671, 4294901760
        %3673 = vmatpush1.msra.mxu0 %v3672
        %v3674 = vand.u32 %v306, 4294901760
        %v3675 = vsub.f32 %v306, %v3674
        %v3676 = vand.u32 %v3675, 4294901760
        %3677 = vmatprep.subr.mxu0 %v3676
        %v3678 = vand.u32 %v305, 4294901760
        %v3679 = vsub.f32 %v305, %v3678
        %v3680 = vand.u32 %v3679, 4294901760
        %3681 = vmatpush1.msra.mxu0 %v3680
        %v3682 = vand.u32 %v323, 4294901760
        %v3683 = vsub.f32 %v323, %v3682
        %v3684 = vand.u32 %v3683, 4294901760
        %3685 = vmatprep.subr.mxu0 %v3684
        %v3686 = vand.u32 %v322, 4294901760
        %v3687 = vsub.f32 %v322, %v3686
        %v3688 = vand.u32 %v3687, 4294901760
        %3689 = vmatpush1.msra.mxu0 %v3688
        %v3690 = vand.u32 %v340, 4294901760
        %v3691 = vsub.f32 %v340, %v3690
        %v3692 = vand.u32 %v3691, 4294901760
        %3693 = vmatprep.subr.mxu0 %v3692
        %v3694 = vand.u32 %v339, 4294901760
        %v3695 = vsub.f32 %v339, %v3694
        %v3696 = vand.u32 %v3695, 4294901760
        %3697 = vmatpush1.msra.mxu0 %v3696
        %v3698 = vand.u32 %v357, 4294901760
        %v3699 = vsub.f32 %v357, %v3698
        %v3700 = vand.u32 %v3699, 4294901760
        %3701 = vmatprep.subr.mxu0 %v3700
        %v3702 = vand.u32 %v356, 4294901760
        %v3703 = vsub.f32 %v356, %v3702
        %v3704 = vand.u32 %v3703, 4294901760
        %3705 = vmatpush1.msra.mxu0 %v3704
        %v3706 = vand.u32 %v374, 4294901760
        %v3707 = vsub.f32 %v374, %v3706
        %v3708 = vand.u32 %v3707, 4294901760
        %3709 = vmatprep.subr.mxu0 %v3708
        %v3710 = vand.u32 %v373, 4294901760
        %v3711 = vsub.f32 %v373, %v3710
        %v3712 = vand.u32 %v3711, 4294901760
        %3713 = vmatpush1.msra.mxu0 %v3712
        %v3714 = vand.u32 %v391, 4294901760
        %v3715 = vsub.f32 %v391, %v3714
        %v3716 = vand.u32 %v3715, 4294901760
        %3717 = vmatprep.subr.mxu0 %v3716
        %v3718 = vand.u32 %v390, 4294901760
        %v3719 = vsub.f32 %v390, %v3718
        %v3720 = vand.u32 %v3719, 4294901760
        %3721 = vmatpush1.msra.mxu0 %v3720
        %v3722 = vand.u32 %v408, 4294901760
        %v3723 = vsub.f32 %v408, %v3722
        %v3724 = vand.u32 %v3723, 4294901760
        %3725 = vmatprep.subr.mxu0 %v3724
        %v3726 = vand.u32 %v407, 4294901760
        %v3727 = vsub.f32 %v407, %v3726
        %v3728 = vand.u32 %v3727, 4294901760
        %3729 = vmatpush1.msra.mxu0 %v3728
        %v3730 = vand.u32 %v425, 4294901760
        %v3731 = vsub.f32 %v425, %v3730
        %v3732 = vand.u32 %v3731, 4294901760
        %3733 = vmatprep.subr.mxu0 %v3732
        %v3734 = vand.u32 %v424, 4294901760
        %v3735 = vsub.f32 %v424, %v3734
        %v3736 = vand.u32 %v3735, 4294901760
        %3737 = vmatpush1.msra.mxu0 %v3736
        %v3738 = vand.u32 %v442, 4294901760
        %v3739 = vsub.f32 %v442, %v3738
        %v3740 = vand.u32 %v3739, 4294901760
        %3741 = vmatprep.subr.mxu0 %v3740
        %v3742 = vand.u32 %v441, 4294901760
        %v3743 = vsub.f32 %v441, %v3742
        %v3744 = vand.u32 %v3743, 4294901760
        %3745 = vmatpush1.msra.mxu0 %v3744
        %v3746 = vand.u32 %v459, 4294901760
        %v3747 = vsub.f32 %v459, %v3746
        %v3748 = vand.u32 %v3747, 4294901760
        %3749 = vmatprep.subr.mxu0 %v3748
        %v3750 = vand.u32 %v458, 4294901760
        %v3751 = vsub.f32 %v458, %v3750
        %v3752 = vand.u32 %v3751, 4294901760
        %3753 = vmatpush1.msra.mxu0 %v3752
        %v3754 = vand.u32 %v476, 4294901760
        %v3755 = vsub.f32 %v476, %v3754
        %v3756 = vand.u32 %v3755, 4294901760
        %3757 = vmatprep.subr.mxu0 %v3756
        %v3758 = vand.u32 %v475, 4294901760
        %v3759 = vsub.f32 %v475, %v3758
        %v3760 = vand.u32 %v3759, 4294901760
        %3761 = vmatpush1.msra.mxu0 %v3760
        %3762 = vmatprep.subr.mxu0 0.0
        %3763 = vmatpush1.msra.mxu0 0.0
        %3764 = vmatprep.subr.mxu0 0.0
        %3765 = vmatpush1.msra.mxu0 0.0
        %3766 = vmatprep.subr.mxu0 0.0
        %3767 = vmatpush1.msra.mxu0 0.0
        %3768 = vmatprep.subr.mxu0 0.0
        %3769 = vmatpush1.msra.mxu0 0.0
        %3770 = vmatprep.subr.mxu0 0.0
        %3771 = vmatpush1.msra.mxu0 0.0
        %3772 = vmatprep.subr.mxu0 0.0
        %3773 = vmatpush1.msra.mxu0 0.0
        %3774 = vmatprep.subr.mxu0 0.0
        %3775 = vmatpush1.msra.mxu0 0.0
        %3776 = vmatprep.subr.mxu0 0.0
        %3777 = vmatpush1.msra.mxu0 0.0
        %3778 = vmatprep.subr.mxu0 0.0
        %3779 = vmatpush1.msra.mxu0 0.0
        %3780 = vmatprep.subr.mxu0 0.0
        %3781 = vmatpush1.msra.mxu0 0.0
        %3782 = vmatprep.subr.mxu0 0.0
        %3783 = vmatpush1.msra.mxu0 0.0
        %3784 = vmatprep.subr.mxu0 0.0
        %3785 = vmatpush1.msra.mxu0 0.0
        %3786 = vmatprep.subr.mxu0 0.0
        %3787 = vmatpush1.msra.mxu0 0.0
        %3788 = vmatprep.subr.mxu0 0.0
        %3789 = vmatpush1.msra.mxu0 0.0
        %3790 = vmatprep.subr.mxu0 0.0
        %3791 = vmatpush1.msra.mxu0 0.0
        %3792 = vmatprep.subr.mxu0 0.0
        %3793 = vmatpush1.msra.mxu0 0.0
        %3794 = vmatprep.mubr.f32.mxu0 0.0
        %v3795 = vand.u32 %v213, 4294901760
        %3796 = vmatmul.mubr.f32.gmra.mrb[0].mxu0 %v3795
        %v3797 = vpop.f32.mrb[0].mxu0
        %v3798 = vadd.f32 %v3630, %v3797
        %v3799 = vpop.f32.mrb[0].mxu0
        %v3800 = vadd.f32 %v3632, %v3799
        %3801 = vdwg.mxu0
        %v3802 = vand.u32 %v221, 4294901760
        %3803 = vmatprep.subr.mxu0 %v3802
        %v3804 = vand.u32 %v220, 4294901760
        %3805 = vmatpush1.msra.mxu0 %v3804
        %v3806 = vand.u32 %v238, 4294901760
        %3807 = vmatprep.subr.mxu0 %v3806
        %v3808 = vand.u32 %v237, 4294901760
        %3809 = vmatpush1.msra.mxu0 %v3808
        %v3810 = vand.u32 %v255, 4294901760
        %3811 = vmatprep.subr.mxu0 %v3810
        %v3812 = vand.u32 %v254, 4294901760
        %3813 = vmatpush1.msra.mxu0 %v3812
        %v3814 = vand.u32 %v272, 4294901760
        %3815 = vmatprep.subr.mxu0 %v3814
        %v3816 = vand.u32 %v271, 4294901760
        %3817 = vmatpush1.msra.mxu0 %v3816
        %v3818 = vand.u32 %v289, 4294901760
        %3819 = vmatprep.subr.mxu0 %v3818
        %v3820 = vand.u32 %v288, 4294901760
        %3821 = vmatpush1.msra.mxu0 %v3820
        %v3822 = vand.u32 %v306, 4294901760
        %3823 = vmatprep.subr.mxu0 %v3822
        %v3824 = vand.u32 %v305, 4294901760
        %3825 = vmatpush1.msra.mxu0 %v3824
        %v3826 = vand.u32 %v323, 4294901760
        %3827 = vmatprep.subr.mxu0 %v3826
        %v3828 = vand.u32 %v322, 4294901760
        %3829 = vmatpush1.msra.mxu0 %v3828
        %v3830 = vand.u32 %v340, 4294901760
        %3831 = vmatprep.subr.mxu0 %v3830
        %v3832 = vand.u32 %v339, 4294901760
        %3833 = vmatpush1.msra.mxu0 %v3832
        %v3834 = vand.u32 %v357, 4294901760
        %3835 = vmatprep.subr.mxu0 %v3834
        %v3836 = vand.u32 %v356, 4294901760
        %3837 = vmatpush1.msra.mxu0 %v3836
        %v3838 = vand.u32 %v374, 4294901760
        %3839 = vmatprep.subr.mxu0 %v3838
        %v3840 = vand.u32 %v373, 4294901760
        %3841 = vmatpush1.msra.mxu0 %v3840
        %v3842 = vand.u32 %v391, 4294901760
        %3843 = vmatprep.subr.mxu0 %v3842
        %v3844 = vand.u32 %v390, 4294901760
        %3845 = vmatpush1.msra.mxu0 %v3844
        %v3846 = vand.u32 %v408, 4294901760
        %3847 = vmatprep.subr.mxu0 %v3846
        %v3848 = vand.u32 %v407, 4294901760
        %3849 = vmatpush1.msra.mxu0 %v3848
        %v3850 = vand.u32 %v425, 4294901760
        %3851 = vmatprep.subr.mxu0 %v3850
        %v3852 = vand.u32 %v424, 4294901760
        %3853 = vmatpush1.msra.mxu0 %v3852
        %v3854 = vand.u32 %v442, 4294901760
        %3855 = vmatprep.subr.mxu0 %v3854
        %v3856 = vand.u32 %v441, 4294901760
        %3857 = vmatpush1.msra.mxu0 %v3856
        %v3858 = vand.u32 %v459, 4294901760
        %3859 = vmatprep.subr.mxu0 %v3858
        %v3860 = vand.u32 %v458, 4294901760
        %3861 = vmatpush1.msra.mxu0 %v3860
        %v3862 = vand.u32 %v476, 4294901760
        %3863 = vmatprep.subr.mxu0 %v3862
        %v3864 = vand.u32 %v475, 4294901760
        %3865 = vmatpush1.msra.mxu0 %v3864
        %3866 = vmatprep.subr.mxu0 0.0
        %3867 = vmatpush1.msra.mxu0 0.0
        %3868 = vmatprep.subr.mxu0 0.0
        %3869 = vmatpush1.msra.mxu0 0.0
        %3870 = vmatprep.subr.mxu0 0.0
        %3871 = vmatpush1.msra.mxu0 0.0
        %3872 = vmatprep.subr.mxu0 0.0
        %3873 = vmatpush1.msra.mxu0 0.0
        %3874 = vmatprep.subr.mxu0 0.0
        %3875 = vmatpush1.msra.mxu0 0.0
        %3876 = vmatprep.subr.mxu0 0.0
        %3877 = vmatpush1.msra.mxu0 0.0
        %3878 = vmatprep.subr.mxu0 0.0
        %3879 = vmatpush1.msra.mxu0 0.0
        %3880 = vmatprep.subr.mxu0 0.0
        %3881 = vmatpush1.msra.mxu0 0.0
        %3882 = vmatprep.subr.mxu0 0.0
        %3883 = vmatpush1.msra.mxu0 0.0
        %3884 = vmatprep.subr.mxu0 0.0
        %3885 = vmatpush1.msra.mxu0 0.0
        %3886 = vmatprep.subr.mxu0 0.0
        %3887 = vmatpush1.msra.mxu0 0.0
        %3888 = vmatprep.subr.mxu0 0.0
        %3889 = vmatpush1.msra.mxu0 0.0
        %3890 = vmatprep.subr.mxu0 0.0
        %3891 = vmatpush1.msra.mxu0 0.0
        %3892 = vmatprep.subr.mxu0 0.0
        %3893 = vmatpush1.msra.mxu0 0.0
        %3894 = vmatprep.subr.mxu0 0.0
        %3895 = vmatpush1.msra.mxu0 0.0
        %3896 = vmatprep.subr.mxu0 0.0
        %3897 = vmatpush1.msra.mxu0 0.0
        %3898 = vmatprep.mubr.f32.mxu0 0.0
        %v3899 = vand.u32 %v213, 4294901760
        %3900 = vmatmul.mubr.f32.gmra.mrb[0].mxu0 %v3899
        %v3901 = vpop.f32.mrb[0].mxu0
        %v3902 = vadd.f32 %v3798, %v3901
        %v3903 = vpop.f32.mrb[0].mxu0
        %v3904 = vadd.f32 %v3800, %v3903
        %3905 = vdwg.mxu0
        %v3906 = vand.u32 %v223, 4294901760
        %3907 = vmatprep.subr.mxu0 %v3906
        %v3908 = vand.u32 %v222, 4294901760
        %3909 = vmatpush1.msra.mxu0 %v3908
        %v3910 = vand.u32 %v240, 4294901760
        %3911 = vmatprep.subr.mxu0 %v3910
        %v3912 = vand.u32 %v239, 4294901760
        %3913 = vmatpush1.msra.mxu0 %v3912
        %v3914 = vand.u32 %v257, 4294901760
        %3915 = vmatprep.subr.mxu0 %v3914
        %v3916 = vand.u32 %v256, 4294901760
        %3917 = vmatpush1.msra.mxu0 %v3916
        %v3918 = vand.u32 %v274, 4294901760
        %3919 = vmatprep.subr.mxu0 %v3918
        %v3920 = vand.u32 %v273, 4294901760
        %3921 = vmatpush1.msra.mxu0 %v3920
        %v3922 = vand.u32 %v291, 4294901760
        %3923 = vmatprep.subr.mxu0 %v3922
        %v3924 = vand.u32 %v290, 4294901760
        %3925 = vmatpush1.msra.mxu0 %v3924
        %v3926 = vand.u32 %v308, 4294901760
        %3927 = vmatprep.subr.mxu0 %v3926
        %v3928 = vand.u32 %v307, 4294901760
        %3929 = vmatpush1.msra.mxu0 %v3928
        %v3930 = vand.u32 %v325, 4294901760
        %3931 = vmatprep.subr.mxu0 %v3930
        %v3932 = vand.u32 %v324, 4294901760
        %3933 = vmatpush1.msra.mxu0 %v3932
        %v3934 = vand.u32 %v342, 4294901760
        %3935 = vmatprep.subr.mxu0 %v3934
        %v3936 = vand.u32 %v341, 4294901760
        %3937 = vmatpush1.msra.mxu0 %v3936
        %v3938 = vand.u32 %v359, 4294901760
        %3939 = vmatprep.subr.mxu0 %v3938
        %v3940 = vand.u32 %v358, 4294901760
        %3941 = vmatpush1.msra.mxu0 %v3940
        %v3942 = vand.u32 %v376, 4294901760
        %3943 = vmatprep.subr.mxu0 %v3942
        %v3944 = vand.u32 %v375, 4294901760
        %3945 = vmatpush1.msra.mxu0 %v3944
        %v3946 = vand.u32 %v393, 4294901760
        %3947 = vmatprep.subr.mxu0 %v3946
        %v3948 = vand.u32 %v392, 4294901760
        %3949 = vmatpush1.msra.mxu0 %v3948
        %v3950 = vand.u32 %v410, 4294901760
        %3951 = vmatprep.subr.mxu0 %v3950
        %v3952 = vand.u32 %v409, 4294901760
        %3953 = vmatpush1.msra.mxu0 %v3952
        %v3954 = vand.u32 %v427, 4294901760
        %3955 = vmatprep.subr.mxu0 %v3954
        %v3956 = vand.u32 %v426, 4294901760
        %3957 = vmatpush1.msra.mxu0 %v3956
        %v3958 = vand.u32 %v444, 4294901760
        %3959 = vmatprep.subr.mxu0 %v3958
        %v3960 = vand.u32 %v443, 4294901760
        %3961 = vmatpush1.msra.mxu0 %v3960
        %v3962 = vand.u32 %v461, 4294901760
        %3963 = vmatprep.subr.mxu0 %v3962
        %v3964 = vand.u32 %v460, 4294901760
        %3965 = vmatpush1.msra.mxu0 %v3964
        %v3966 = vand.u32 %v478, 4294901760
        %3967 = vmatprep.subr.mxu0 %v3966
        %v3968 = vand.u32 %v477, 4294901760
        %3969 = vmatpush1.msra.mxu0 %v3968
        %3970 = vmatprep.subr.mxu0 0.0
        %3971 = vmatpush1.msra.mxu0 0.0
        %3972 = vmatprep.subr.mxu0 0.0
        %3973 = vmatpush1.msra.mxu0 0.0
        %3974 = vmatprep.subr.mxu0 0.0
        %3975 = vmatpush1.msra.mxu0 0.0
        %3976 = vmatprep.subr.mxu0 0.0
        %3977 = vmatpush1.msra.mxu0 0.0
        %3978 = vmatprep.subr.mxu0 0.0
        %3979 = vmatpush1.msra.mxu0 0.0
        %3980 = vmatprep.subr.mxu0 0.0
        %3981 = vmatpush1.msra.mxu0 0.0
        %3982 = vmatprep.subr.mxu0 0.0
        %3983 = vmatpush1.msra.mxu0 0.0
        %3984 = vmatprep.subr.mxu0 0.0
        %3985 = vmatpush1.msra.mxu0 0.0
        %3986 = vmatprep.subr.mxu0 0.0
        %3987 = vmatpush1.msra.mxu0 0.0
        %3988 = vmatprep.subr.mxu0 0.0
        %3989 = vmatpush1.msra.mxu0 0.0
        %3990 = vmatprep.subr.mxu0 0.0
        %3991 = vmatpush1.msra.mxu0 0.0
        %3992 = vmatprep.subr.mxu0 0.0
        %3993 = vmatpush1.msra.mxu0 0.0
        %3994 = vmatprep.subr.mxu0 0.0
        %3995 = vmatpush1.msra.mxu0 0.0
        %3996 = vmatprep.subr.mxu0 0.0
        %3997 = vmatpush1.msra.mxu0 0.0
        %3998 = vmatprep.subr.mxu0 0.0
        %3999 = vmatpush1.msra.mxu0 0.0
        %4000 = vmatprep.subr.mxu0 0.0
        %4001 = vmatpush1.msra.mxu0 0.0
        %4002 = vmatprep.mubr.f32.mxu0 0.0
        %v4003 = vand.u32 %v213, 4294901760
        %v4004 = vsub.f32 %v213, %v4003
        %v4005 = vand.u32 %v4004, 4294901760
        %v4006 = vsub.f32 %v4004, %v4005
        %v4007 = vand.u32 %v4006, 4294901760
        %4008 = vmatmul.mubr.f32.gmra.mrb[0].mxu0 %v4007
        %v4009 = vpop.f32.mrb[0].mxu0
        %v4010 = vadd.f32 0.0, %v4009
        %v4011 = vpop.f32.mrb[0].mxu0
        %v4012 = vadd.f32 0.0, %v4011
        %4013 = vdwg.mxu0
        %v4014 = vand.u32 %v223, 4294901760
        %v4015 = vsub.f32 %v223, %v4014
        %v4016 = vand.u32 %v4015, 4294901760
        %v4017 = vsub.f32 %v4015, %v4016
        %v4018 = vand.u32 %v4017, 4294901760
        %4019 = vmatprep.subr.mxu0 %v4018
        %v4020 = vand.u32 %v222, 4294901760
        %v4021 = vsub.f32 %v222, %v4020
        %v4022 = vand.u32 %v4021, 4294901760
        %v4023 = vsub.f32 %v4021, %v4022
        %v4024 = vand.u32 %v4023, 4294901760
        %4025 = vmatpush1.msra.mxu0 %v4024
        %v4026 = vand.u32 %v240, 4294901760
        %v4027 = vsub.f32 %v240, %v4026
        %v4028 = vand.u32 %v4027, 4294901760
        %v4029 = vsub.f32 %v4027, %v4028
        %v4030 = vand.u32 %v4029, 4294901760
        %4031 = vmatprep.subr.mxu0 %v4030
        %v4032 = vand.u32 %v239, 4294901760
        %v4033 = vsub.f32 %v239, %v4032
        %v4034 = vand.u32 %v4033, 4294901760
        %v4035 = vsub.f32 %v4033, %v4034
        %v4036 = vand.u32 %v4035, 4294901760
        %4037 = vmatpush1.msra.mxu0 %v4036
        %v4038 = vand.u32 %v257, 4294901760
        %v4039 = vsub.f32 %v257, %v4038
        %v4040 = vand.u32 %v4039, 4294901760
        %v4041 = vsub.f32 %v4039, %v4040
        %v4042 = vand.u32 %v4041, 4294901760
        %4043 = vmatprep.subr.mxu0 %v4042
        %v4044 = vand.u32 %v256, 4294901760
        %v4045 = vsub.f32 %v256, %v4044
        %v4046 = vand.u32 %v4045, 4294901760
        %v4047 = vsub.f32 %v4045, %v4046
        %v4048 = vand.u32 %v4047, 4294901760
        %4049 = vmatpush1.msra.mxu0 %v4048
        %v4050 = vand.u32 %v274, 4294901760
        %v4051 = vsub.f32 %v274, %v4050
        %v4052 = vand.u32 %v4051, 4294901760
        %v4053 = vsub.f32 %v4051, %v4052
        %v4054 = vand.u32 %v4053, 4294901760
        %4055 = vmatprep.subr.mxu0 %v4054
        %v4056 = vand.u32 %v273, 4294901760
        %v4057 = vsub.f32 %v273, %v4056
        %v4058 = vand.u32 %v4057, 4294901760
        %v4059 = vsub.f32 %v4057, %v4058
        %v4060 = vand.u32 %v4059, 4294901760
        %4061 = vmatpush1.msra.mxu0 %v4060
        %v4062 = vand.u32 %v291, 4294901760
        %v4063 = vsub.f32 %v291, %v4062
        %v4064 = vand.u32 %v4063, 4294901760
        %v4065 = vsub.f32 %v4063, %v4064
        %v4066 = vand.u32 %v4065, 4294901760
        %4067 = vmatprep.subr.mxu0 %v4066
        %v4068 = vand.u32 %v290, 4294901760
        %v4069 = vsub.f32 %v290, %v4068
        %v4070 = vand.u32 %v4069, 4294901760
        %v4071 = vsub.f32 %v4069, %v4070
        %v4072 = vand.u32 %v4071, 4294901760
        %4073 = vmatpush1.msra.mxu0 %v4072
        %v4074 = vand.u32 %v308, 4294901760
        %v4075 = vsub.f32 %v308, %v4074
        %v4076 = vand.u32 %v4075, 4294901760
        %v4077 = vsub.f32 %v4075, %v4076
        %v4078 = vand.u32 %v4077, 4294901760
        %4079 = vmatprep.subr.mxu0 %v4078
        %v4080 = vand.u32 %v307, 4294901760
        %v4081 = vsub.f32 %v307, %v4080
        %v4082 = vand.u32 %v4081, 4294901760
        %v4083 = vsub.f32 %v4081, %v4082
        %v4084 = vand.u32 %v4083, 4294901760
        %4085 = vmatpush1.msra.mxu0 %v4084
        %v4086 = vand.u32 %v325, 4294901760
        %v4087 = vsub.f32 %v325, %v4086
        %v4088 = vand.u32 %v4087, 4294901760
        %v4089 = vsub.f32 %v4087, %v4088
        %v4090 = vand.u32 %v4089, 4294901760
        %4091 = vmatprep.subr.mxu0 %v4090
        %v4092 = vand.u32 %v324, 4294901760
        %v4093 = vsub.f32 %v324, %v4092
        %v4094 = vand.u32 %v4093, 4294901760
        %v4095 = vsub.f32 %v4093, %v4094
        %v4096 = vand.u32 %v4095, 4294901760
        %4097 = vmatpush1.msra.mxu0 %v4096
        %v4098 = vand.u32 %v342, 4294901760
        %v4099 = vsub.f32 %v342, %v4098
        %v4100 = vand.u32 %v4099, 4294901760
        %v4101 = vsub.f32 %v4099, %v4100
        %v4102 = vand.u32 %v4101, 4294901760
        %4103 = vmatprep.subr.mxu0 %v4102
        %v4104 = vand.u32 %v341, 4294901760
        %v4105 = vsub.f32 %v341, %v4104
        %v4106 = vand.u32 %v4105, 4294901760
        %v4107 = vsub.f32 %v4105, %v4106
        %v4108 = vand.u32 %v4107, 4294901760
        %4109 = vmatpush1.msra.mxu0 %v4108
        %v4110 = vand.u32 %v359, 4294901760
        %v4111 = vsub.f32 %v359, %v4110
        %v4112 = vand.u32 %v4111, 4294901760
        %v4113 = vsub.f32 %v4111, %v4112
        %v4114 = vand.u32 %v4113, 4294901760
        %4115 = vmatprep.subr.mxu0 %v4114
        %v4116 = vand.u32 %v358, 4294901760
        %v4117 = vsub.f32 %v358, %v4116
        %v4118 = vand.u32 %v4117, 4294901760
        %v4119 = vsub.f32 %v4117, %v4118
        %v4120 = vand.u32 %v4119, 4294901760
        %4121 = vmatpush1.msra.mxu0 %v4120
        %v4122 = vand.u32 %v376, 4294901760
        %v4123 = vsub.f32 %v376, %v4122
        %v4124 = vand.u32 %v4123, 4294901760
        %v4125 = vsub.f32 %v4123, %v4124
        %v4126 = vand.u32 %v4125, 4294901760
        %4127 = vmatprep.subr.mxu0 %v4126
        %v4128 = vand.u32 %v375, 4294901760
        %v4129 = vsub.f32 %v375, %v4128
        %v4130 = vand.u32 %v4129, 4294901760
        %v4131 = vsub.f32 %v4129, %v4130
        %v4132 = vand.u32 %v4131, 4294901760
        %4133 = vmatpush1.msra.mxu0 %v4132
        %v4134 = vand.u32 %v393, 4294901760
        %v4135 = vsub.f32 %v393, %v4134
        %v4136 = vand.u32 %v4135, 4294901760
        %v4137 = vsub.f32 %v4135, %v4136
        %v4138 = vand.u32 %v4137, 4294901760
        %4139 = vmatprep.subr.mxu0 %v4138
        %v4140 = vand.u32 %v392, 4294901760
        %v4141 = vsub.f32 %v392, %v4140
        %v4142 = vand.u32 %v4141, 4294901760
        %v4143 = vsub.f32 %v4141, %v4142
        %v4144 = vand.u32 %v4143, 4294901760
        %4145 = vmatpush1.msra.mxu0 %v4144
        %v4146 = vand.u32 %v410, 4294901760
        %v4147 = vsub.f32 %v410, %v4146
        %v4148 = vand.u32 %v4147, 4294901760
        %v4149 = vsub.f32 %v4147, %v4148
        %v4150 = vand.u32 %v4149, 4294901760
        %4151 = vmatprep.subr.mxu0 %v4150
        %v4152 = vand.u32 %v409, 4294901760
        %v4153 = vsub.f32 %v409, %v4152
        %v4154 = vand.u32 %v4153, 4294901760
        %v4155 = vsub.f32 %v4153, %v4154
        %v4156 = vand.u32 %v4155, 4294901760
        %4157 = vmatpush1.msra.mxu0 %v4156
        %v4158 = vand.u32 %v427, 4294901760
        %v4159 = vsub.f32 %v427, %v4158
        %v4160 = vand.u32 %v4159, 4294901760
        %v4161 = vsub.f32 %v4159, %v4160
        %v4162 = vand.u32 %v4161, 4294901760
        %4163 = vmatprep.subr.mxu0 %v4162
        %v4164 = vand.u32 %v426, 4294901760
        %v4165 = vsub.f32 %v426, %v4164
        %v4166 = vand.u32 %v4165, 4294901760
        %v4167 = vsub.f32 %v4165, %v4166
        %v4168 = vand.u32 %v4167, 4294901760
        %4169 = vmatpush1.msra.mxu0 %v4168
        %v4170 = vand.u32 %v444, 4294901760
        %v4171 = vsub.f32 %v444, %v4170
        %v4172 = vand.u32 %v4171, 4294901760
        %v4173 = vsub.f32 %v4171, %v4172
        %v4174 = vand.u32 %v4173, 4294901760
        %4175 = vmatprep.subr.mxu0 %v4174
        %v4176 = vand.u32 %v443, 4294901760
        %v4177 = vsub.f32 %v443, %v4176
        %v4178 = vand.u32 %v4177, 4294901760
        %v4179 = vsub.f32 %v4177, %v4178
        %v4180 = vand.u32 %v4179, 4294901760
        %4181 = vmatpush1.msra.mxu0 %v4180
        %v4182 = vand.u32 %v461, 4294901760
        %v4183 = vsub.f32 %v461, %v4182
        %v4184 = vand.u32 %v4183, 4294901760
        %v4185 = vsub.f32 %v4183, %v4184
        %v4186 = vand.u32 %v4185, 4294901760
        %4187 = vmatprep.subr.mxu0 %v4186
        %v4188 = vand.u32 %v460, 4294901760
        %v4189 = vsub.f32 %v460, %v4188
        %v4190 = vand.u32 %v4189, 4294901760
        %v4191 = vsub.f32 %v4189, %v4190
        %v4192 = vand.u32 %v4191, 4294901760
        %4193 = vmatpush1.msra.mxu0 %v4192
        %v4194 = vand.u32 %v478, 4294901760
        %v4195 = vsub.f32 %v478, %v4194
        %v4196 = vand.u32 %v4195, 4294901760
        %v4197 = vsub.f32 %v4195, %v4196
        %v4198 = vand.u32 %v4197, 4294901760
        %4199 = vmatprep.subr.mxu0 %v4198
        %v4200 = vand.u32 %v477, 4294901760
        %v4201 = vsub.f32 %v477, %v4200
        %v4202 = vand.u32 %v4201, 4294901760
        %v4203 = vsub.f32 %v4201, %v4202
        %v4204 = vand.u32 %v4203, 4294901760
        %4205 = vmatpush1.msra.mxu0 %v4204
        %4206 = vmatprep.subr.mxu0 0.0
        %4207 = vmatpush1.msra.mxu0 0.0
        %4208 = vmatprep.subr.mxu0 0.0
        %4209 = vmatpush1.msra.mxu0 0.0
        %4210 = vmatprep.subr.mxu0 0.0
        %4211 = vmatpush1.msra.mxu0 0.0
        %4212 = vmatprep.subr.mxu0 0.0
        %4213 = vmatpush1.msra.mxu0 0.0
        %4214 = vmatprep.subr.mxu0 0.0
        %4215 = vmatpush1.msra.mxu0 0.0
        %4216 = vmatprep.subr.mxu0 0.0
        %4217 = vmatpush1.msra.mxu0 0.0
        %4218 = vmatprep.subr.mxu0 0.0
        %4219 = vmatpush1.msra.mxu0 0.0
        %4220 = vmatprep.subr.mxu0 0.0
        %4221 = vmatpush1.msra.mxu0 0.0
        %4222 = vmatprep.subr.mxu0 0.0
        %4223 = vmatpush1.msra.mxu0 0.0
        %4224 = vmatprep.subr.mxu0 0.0
        %4225 = vmatpush1.msra.mxu0 0.0
        %4226 = vmatprep.subr.mxu0 0.0
        %4227 = vmatpush1.msra.mxu0 0.0
        %4228 = vmatprep.subr.mxu0 0.0
        %4229 = vmatpush1.msra.mxu0 0.0
        %4230 = vmatprep.subr.mxu0 0.0
        %4231 = vmatpush1.msra.mxu0 0.0
        %4232 = vmatprep.subr.mxu0 0.0
        %4233 = vmatpush1.msra.mxu0 0.0
        %4234 = vmatprep.subr.mxu0 0.0
        %4235 = vmatpush1.msra.mxu0 0.0
        %4236 = vmatprep.subr.mxu0 0.0
        %4237 = vmatpush1.msra.mxu0 0.0
        %4238 = vmatprep.mubr.f32.mxu0 0.0
        %v4239 = vand.u32 %v213, 4294901760
        %4240 = vmatmul.mubr.f32.gmra.mrb[0].mxu0 %v4239
        %v4241 = vpop.f32.mrb[0].mxu0
        %v4242 = vadd.f32 %v4010, %v4241
        %v4243 = vpop.f32.mrb[0].mxu0
        %v4244 = vadd.f32 %v4012, %v4243
        %4245 = vdwg.mxu0
        %v4246 = vand.u32 %v223, 4294901760
        %v4247 = vsub.f32 %v223, %v4246
        %4248 = vmatprep.subr.mxu0 %v4247
        %v4249 = vand.u32 %v222, 4294901760
        %v4250 = vsub.f32 %v222, %v4249
        %4251 = vmatpush1.msra.mxu0 %v4250
        %v4252 = vand.u32 %v240, 4294901760
        %v4253 = vsub.f32 %v240, %v4252
        %4254 = vmatprep.subr.mxu0 %v4253
        %v4255 = vand.u32 %v239, 4294901760
        %v4256 = vsub.f32 %v239, %v4255
        %4257 = vmatpush1.msra.mxu0 %v4256
        %v4258 = vand.u32 %v257, 4294901760
        %v4259 = vsub.f32 %v257, %v4258
        %4260 = vmatprep.subr.mxu0 %v4259
        %v4261 = vand.u32 %v256, 4294901760
        %v4262 = vsub.f32 %v256, %v4261
        %4263 = vmatpush1.msra.mxu0 %v4262
        %v4264 = vand.u32 %v274, 4294901760
        %v4265 = vsub.f32 %v274, %v4264
        %4266 = vmatprep.subr.mxu0 %v4265
        %v4267 = vand.u32 %v273, 4294901760
        %v4268 = vsub.f32 %v273, %v4267
        %4269 = vmatpush1.msra.mxu0 %v4268
        %v4270 = vand.u32 %v291, 4294901760
        %v4271 = vsub.f32 %v291, %v4270
        %4272 = vmatprep.subr.mxu0 %v4271
        %v4273 = vand.u32 %v290, 4294901760
        %v4274 = vsub.f32 %v290, %v4273
        %4275 = vmatpush1.msra.mxu0 %v4274
        %v4276 = vand.u32 %v308, 4294901760
        %v4277 = vsub.f32 %v308, %v4276
        %4278 = vmatprep.subr.mxu0 %v4277
        %v4279 = vand.u32 %v307, 4294901760
        %v4280 = vsub.f32 %v307, %v4279
        %4281 = vmatpush1.msra.mxu0 %v4280
        %v4282 = vand.u32 %v325, 4294901760
        %v4283 = vsub.f32 %v325, %v4282
        %4284 = vmatprep.subr.mxu0 %v4283
        %v4285 = vand.u32 %v324, 4294901760
        %v4286 = vsub.f32 %v324, %v4285
        %4287 = vmatpush1.msra.mxu0 %v4286
        %v4288 = vand.u32 %v342, 4294901760
        %v4289 = vsub.f32 %v342, %v4288
        %4290 = vmatprep.subr.mxu0 %v4289
        %v4291 = vand.u32 %v341, 4294901760
        %v4292 = vsub.f32 %v341, %v4291
        %4293 = vmatpush1.msra.mxu0 %v4292
        %v4294 = vand.u32 %v359, 4294901760
        %v4295 = vsub.f32 %v359, %v4294
        %4296 = vmatprep.subr.mxu0 %v4295
        %v4297 = vand.u32 %v358, 4294901760
        %v4298 = vsub.f32 %v358, %v4297
        %4299 = vmatpush1.msra.mxu0 %v4298
        %v4300 = vand.u32 %v376, 4294901760
        %v4301 = vsub.f32 %v376, %v4300
        %4302 = vmatprep.subr.mxu0 %v4301
        %v4303 = vand.u32 %v375, 4294901760
        %v4304 = vsub.f32 %v375, %v4303
        %4305 = vmatpush1.msra.mxu0 %v4304
        %v4306 = vand.u32 %v393, 4294901760
        %v4307 = vsub.f32 %v393, %v4306
        %4308 = vmatprep.subr.mxu0 %v4307
        %v4309 = vand.u32 %v392, 4294901760
        %v4310 = vsub.f32 %v392, %v4309
        %4311 = vmatpush1.msra.mxu0 %v4310
        %v4312 = vand.u32 %v410, 4294901760
        %v4313 = vsub.f32 %v410, %v4312
        %4314 = vmatprep.subr.mxu0 %v4313
        %v4315 = vand.u32 %v409, 4294901760
        %v4316 = vsub.f32 %v409, %v4315
        %4317 = vmatpush1.msra.mxu0 %v4316
        %v4318 = vand.u32 %v427, 4294901760
        %v4319 = vsub.f32 %v427, %v4318
        %4320 = vmatprep.subr.mxu0 %v4319
        %v4321 = vand.u32 %v426, 4294901760
        %v4322 = vsub.f32 %v426, %v4321
        %4323 = vmatpush1.msra.mxu0 %v4322
        %v4324 = vand.u32 %v444, 4294901760
        %v4325 = vsub.f32 %v444, %v4324
        %4326 = vmatprep.subr.mxu0 %v4325
        %v4327 = vand.u32 %v443, 4294901760
        %v4328 = vsub.f32 %v443, %v4327
        %4329 = vmatpush1.msra.mxu0 %v4328
        %v4330 = vand.u32 %v461, 4294901760
        %v4331 = vsub.f32 %v461, %v4330
        %4332 = vmatprep.subr.mxu0 %v4331
        %v4333 = vand.u32 %v460, 4294901760
        %v4334 = vsub.f32 %v460, %v4333
        %4335 = vmatpush1.msra.mxu0 %v4334
        %v4336 = vand.u32 %v478, 4294901760
        %v4337 = vsub.f32 %v478, %v4336
        %4338 = vmatprep.subr.mxu0 %v4337
        %v4339 = vand.u32 %v477, 4294901760
        %v4340 = vsub.f32 %v477, %v4339
        %4341 = vmatpush1.msra.mxu0 %v4340
        %4342 = vmatprep.subr.mxu0 0.0
        %4343 = vmatpush1.msra.mxu0 0.0
        %4344 = vmatprep.subr.mxu0 0.0
        %4345 = vmatpush1.msra.mxu0 0.0
        %4346 = vmatprep.subr.mxu0 0.0
        %4347 = vmatpush1.msra.mxu0 0.0
        %4348 = vmatprep.subr.mxu0 0.0
        %4349 = vmatpush1.msra.mxu0 0.0
        %4350 = vmatprep.subr.mxu0 0.0
        %4351 = vmatpush1.msra.mxu0 0.0
        %4352 = vmatprep.subr.mxu0 0.0
        %4353 = vmatpush1.msra.mxu0 0.0
        %4354 = vmatprep.subr.mxu0 0.0
        %4355 = vmatpush1.msra.mxu0 0.0
        %4356 = vmatprep.subr.mxu0 0.0
        %4357 = vmatpush1.msra.mxu0 0.0
        %4358 = vmatprep.subr.mxu0 0.0
        %4359 = vmatpush1.msra.mxu0 0.0
        %4360 = vmatprep.subr.mxu0 0.0
        %4361 = vmatpush1.msra.mxu0 0.0
        %4362 = vmatprep.subr.mxu0 0.0
        %4363 = vmatpush1.msra.mxu0 0.0
        %4364 = vmatprep.subr.mxu0 0.0
        %4365 = vmatpush1.msra.mxu0 0.0
        %4366 = vmatprep.subr.mxu0 0.0
        %4367 = vmatpush1.msra.mxu0 0.0
        %4368 = vmatprep.subr.mxu0 0.0
        %4369 = vmatpush1.msra.mxu0 0.0
        %4370 = vmatprep.subr.mxu0 0.0
        %4371 = vmatpush1.msra.mxu0 0.0
        %4372 = vmatprep.subr.mxu0 0.0
        %4373 = vmatpush1.msra.mxu0 0.0
        %4374 = vmatprep.mubr.f32.mxu0 0.0
        %v4375 = vand.u32 %v213, 4294901760
        %v4376 = vsub.f32 %v213, %v4375
        %4377 = vmatmul.mubr.f32.gmra.mrb[0].mxu0 %v4376
        %v4378 = vpop.f32.mrb[0].mxu0
        %v4379 = vadd.f32 %v4242, %v4378
        %v4380 = vpop.f32.mrb[0].mxu0
        %v4381 = vadd.f32 %v4244, %v4380
        %4382 = vdwg.mxu0
        %v4383 = vand.u32 %v223, 4294901760
        %4384 = vmatprep.subr.mxu0 %v4383
        %v4385 = vand.u32 %v222, 4294901760
        %4386 = vmatpush1.msra.mxu0 %v4385
        %v4387 = vand.u32 %v240, 4294901760
        %4388 = vmatprep.subr.mxu0 %v4387
        %v4389 = vand.u32 %v239, 4294901760
        %4390 = vmatpush1.msra.mxu0 %v4389
        %v4391 = vand.u32 %v257, 4294901760
        %4392 = vmatprep.subr.mxu0 %v4391
        %v4393 = vand.u32 %v256, 4294901760
        %4394 = vmatpush1.msra.mxu0 %v4393
        %v4395 = vand.u32 %v274, 4294901760
        %4396 = vmatprep.subr.mxu0 %v4395
        %v4397 = vand.u32 %v273, 4294901760
        %4398 = vmatpush1.msra.mxu0 %v4397
        %v4399 = vand.u32 %v291, 4294901760
        %4400 = vmatprep.subr.mxu0 %v4399
        %v4401 = vand.u32 %v290, 4294901760
        %4402 = vmatpush1.msra.mxu0 %v4401
        %v4403 = vand.u32 %v308, 4294901760
        %4404 = vmatprep.subr.mxu0 %v4403
        %v4405 = vand.u32 %v307, 4294901760
        %4406 = vmatpush1.msra.mxu0 %v4405
        %v4407 = vand.u32 %v325, 4294901760
        %4408 = vmatprep.subr.mxu0 %v4407
        %v4409 = vand.u32 %v324, 4294901760
        %4410 = vmatpush1.msra.mxu0 %v4409
        %v4411 = vand.u32 %v342, 4294901760
        %4412 = vmatprep.subr.mxu0 %v4411
        %v4413 = vand.u32 %v341, 4294901760
        %4414 = vmatpush1.msra.mxu0 %v4413
        %v4415 = vand.u32 %v359, 4294901760
        %4416 = vmatprep.subr.mxu0 %v4415
        %v4417 = vand.u32 %v358, 4294901760
        %4418 = vmatpush1.msra.mxu0 %v4417
        %v4419 = vand.u32 %v376, 4294901760
        %4420 = vmatprep.subr.mxu0 %v4419
        %v4421 = vand.u32 %v375, 4294901760
        %4422 = vmatpush1.msra.mxu0 %v4421
        %v4423 = vand.u32 %v393, 4294901760
        %4424 = vmatprep.subr.mxu0 %v4423
        %v4425 = vand.u32 %v392, 4294901760
        %4426 = vmatpush1.msra.mxu0 %v4425
        %v4427 = vand.u32 %v410, 4294901760
        %4428 = vmatprep.subr.mxu0 %v4427
        %v4429 = vand.u32 %v409, 4294901760
        %4430 = vmatpush1.msra.mxu0 %v4429
        %v4431 = vand.u32 %v427, 4294901760
        %4432 = vmatprep.subr.mxu0 %v4431
        %v4433 = vand.u32 %v426, 4294901760
        %4434 = vmatpush1.msra.mxu0 %v4433
        %v4435 = vand.u32 %v444, 4294901760
        %4436 = vmatprep.subr.mxu0 %v4435
        %v4437 = vand.u32 %v443, 4294901760
        %4438 = vmatpush1.msra.mxu0 %v4437
        %v4439 = vand.u32 %v461, 4294901760
        %4440 = vmatprep.subr.mxu0 %v4439
        %v4441 = vand.u32 %v460, 4294901760
        %4442 = vmatpush1.msra.mxu0 %v4441
        %v4443 = vand.u32 %v478, 4294901760
        %4444 = vmatprep.subr.mxu0 %v4443
        %v4445 = vand.u32 %v477, 4294901760
        %4446 = vmatpush1.msra.mxu0 %v4445
        %4447 = vmatprep.subr.mxu0 0.0
        %4448 = vmatpush1.msra.mxu0 0.0
        %4449 = vmatprep.subr.mxu0 0.0
        %4450 = vmatpush1.msra.mxu0 0.0
        %4451 = vmatprep.subr.mxu0 0.0
        %4452 = vmatpush1.msra.mxu0 0.0
        %4453 = vmatprep.subr.mxu0 0.0
        %4454 = vmatpush1.msra.mxu0 0.0
        %4455 = vmatprep.subr.mxu0 0.0
        %4456 = vmatpush1.msra.mxu0 0.0
        %4457 = vmatprep.subr.mxu0 0.0
        %4458 = vmatpush1.msra.mxu0 0.0
        %4459 = vmatprep.subr.mxu0 0.0
        %4460 = vmatpush1.msra.mxu0 0.0
        %4461 = vmatprep.subr.mxu0 0.0
        %4462 = vmatpush1.msra.mxu0 0.0
        %4463 = vmatprep.subr.mxu0 0.0
        %4464 = vmatpush1.msra.mxu0 0.0
        %4465 = vmatprep.subr.mxu0 0.0
        %4466 = vmatpush1.msra.mxu0 0.0
        %4467 = vmatprep.subr.mxu0 0.0
        %4468 = vmatpush1.msra.mxu0 0.0
        %4469 = vmatprep.subr.mxu0 0.0
        %4470 = vmatpush1.msra.mxu0 0.0
        %4471 = vmatprep.subr.mxu0 0.0
        %4472 = vmatpush1.msra.mxu0 0.0
        %4473 = vmatprep.subr.mxu0 0.0
        %4474 = vmatpush1.msra.mxu0 0.0
        %4475 = vmatprep.subr.mxu0 0.0
        %4476 = vmatpush1.msra.mxu0 0.0
        %4477 = vmatprep.subr.mxu0 0.0
        %4478 = vmatpush1.msra.mxu0 0.0
        %4479 = vmatprep.mubr.f32.mxu0 0.0
        %v4480 = vand.u32 %v213, 4294901760
        %v4481 = vsub.f32 %v213, %v4480
        %v4482 = vand.u32 %v4481, 4294901760
        %4483 = vmatmul.mubr.f32.gmra.mrb[0].mxu0 %v4482
        %v4484 = vpop.f32.mrb[0].mxu0
        %v4485 = vadd.f32 %v4379, %v4484
        %v4486 = vpop.f32.mrb[0].mxu0
        %v4487 = vadd.f32 %v4381, %v4486
        %4488 = vdwg.mxu0
        %v4489 = vand.u32 %v223, 4294901760
        %v4490 = vsub.f32 %v223, %v4489
        %v4491 = vand.u32 %v4490, 4294901760
        %4492 = vmatprep.subr.mxu0 %v4491
        %v4493 = vand.u32 %v222, 4294901760
        %v4494 = vsub.f32 %v222, %v4493
        %v4495 = vand.u32 %v4494, 4294901760
        %4496 = vmatpush1.msra.mxu0 %v4495
        %v4497 = vand.u32 %v240, 4294901760
        %v4498 = vsub.f32 %v240, %v4497
        %v4499 = vand.u32 %v4498, 4294901760
        %4500 = vmatprep.subr.mxu0 %v4499
        %v4501 = vand.u32 %v239, 4294901760
        %v4502 = vsub.f32 %v239, %v4501
        %v4503 = vand.u32 %v4502, 4294901760
        %4504 = vmatpush1.msra.mxu0 %v4503
        %v4505 = vand.u32 %v257, 4294901760
        %v4506 = vsub.f32 %v257, %v4505
        %v4507 = vand.u32 %v4506, 4294901760
        %4508 = vmatprep.subr.mxu0 %v4507
        %v4509 = vand.u32 %v256, 4294901760
        %v4510 = vsub.f32 %v256, %v4509
        %v4511 = vand.u32 %v4510, 4294901760
        %4512 = vmatpush1.msra.mxu0 %v4511
        %v4513 = vand.u32 %v274, 4294901760
        %v4514 = vsub.f32 %v274, %v4513
        %v4515 = vand.u32 %v4514, 4294901760
        %4516 = vmatprep.subr.mxu0 %v4515
        %v4517 = vand.u32 %v273, 4294901760
        %v4518 = vsub.f32 %v273, %v4517
        %v4519 = vand.u32 %v4518, 4294901760
        %4520 = vmatpush1.msra.mxu0 %v4519
        %v4521 = vand.u32 %v291, 4294901760
        %v4522 = vsub.f32 %v291, %v4521
        %v4523 = vand.u32 %v4522, 4294901760
        %4524 = vmatprep.subr.mxu0 %v4523
        %v4525 = vand.u32 %v290, 4294901760
        %v4526 = vsub.f32 %v290, %v4525
        %v4527 = vand.u32 %v4526, 4294901760
        %4528 = vmatpush1.msra.mxu0 %v4527
        %v4529 = vand.u32 %v308, 4294901760
        %v4530 = vsub.f32 %v308, %v4529
        %v4531 = vand.u32 %v4530, 4294901760
        %4532 = vmatprep.subr.mxu0 %v4531
        %v4533 = vand.u32 %v307, 4294901760
        %v4534 = vsub.f32 %v307, %v4533
        %v4535 = vand.u32 %v4534, 4294901760
        %4536 = vmatpush1.msra.mxu0 %v4535
        %v4537 = vand.u32 %v325, 4294901760
        %v4538 = vsub.f32 %v325, %v4537
        %v4539 = vand.u32 %v4538, 4294901760
        %4540 = vmatprep.subr.mxu0 %v4539
        %v4541 = vand.u32 %v324, 4294901760
        %v4542 = vsub.f32 %v324, %v4541
        %v4543 = vand.u32 %v4542, 4294901760
        %4544 = vmatpush1.msra.mxu0 %v4543
        %v4545 = vand.u32 %v342, 4294901760
        %v4546 = vsub.f32 %v342, %v4545
        %v4547 = vand.u32 %v4546, 4294901760
        %4548 = vmatprep.subr.mxu0 %v4547
        %v4549 = vand.u32 %v341, 4294901760
        %v4550 = vsub.f32 %v341, %v4549
        %v4551 = vand.u32 %v4550, 4294901760
        %4552 = vmatpush1.msra.mxu0 %v4551
        %v4553 = vand.u32 %v359, 4294901760
        %v4554 = vsub.f32 %v359, %v4553
        %v4555 = vand.u32 %v4554, 4294901760
        %4556 = vmatprep.subr.mxu0 %v4555
        %v4557 = vand.u32 %v358, 4294901760
        %v4558 = vsub.f32 %v358, %v4557
        %v4559 = vand.u32 %v4558, 4294901760
        %4560 = vmatpush1.msra.mxu0 %v4559
        %v4561 = vand.u32 %v376, 4294901760
        %v4562 = vsub.f32 %v376, %v4561
        %v4563 = vand.u32 %v4562, 4294901760
        %4564 = vmatprep.subr.mxu0 %v4563
        %v4565 = vand.u32 %v375, 4294901760
        %v4566 = vsub.f32 %v375, %v4565
        %v4567 = vand.u32 %v4566, 4294901760
        %4568 = vmatpush1.msra.mxu0 %v4567
        %v4569 = vand.u32 %v393, 4294901760
        %v4570 = vsub.f32 %v393, %v4569
        %v4571 = vand.u32 %v4570, 4294901760
        %4572 = vmatprep.subr.mxu0 %v4571
        %v4573 = vand.u32 %v392, 4294901760
        %v4574 = vsub.f32 %v392, %v4573
        %v4575 = vand.u32 %v4574, 4294901760
        %4576 = vmatpush1.msra.mxu0 %v4575
        %v4577 = vand.u32 %v410, 4294901760
        %v4578 = vsub.f32 %v410, %v4577
        %v4579 = vand.u32 %v4578, 4294901760
        %4580 = vmatprep.subr.mxu0 %v4579
        %v4581 = vand.u32 %v409, 4294901760
        %v4582 = vsub.f32 %v409, %v4581
        %v4583 = vand.u32 %v4582, 4294901760
        %4584 = vmatpush1.msra.mxu0 %v4583
        %v4585 = vand.u32 %v427, 4294901760
        %v4586 = vsub.f32 %v427, %v4585
        %v4587 = vand.u32 %v4586, 4294901760
        %4588 = vmatprep.subr.mxu0 %v4587
        %v4589 = vand.u32 %v426, 4294901760
        %v4590 = vsub.f32 %v426, %v4589
        %v4591 = vand.u32 %v4590, 4294901760
        %4592 = vmatpush1.msra.mxu0 %v4591
        %v4593 = vand.u32 %v444, 4294901760
        %v4594 = vsub.f32 %v444, %v4593
        %v4595 = vand.u32 %v4594, 4294901760
        %4596 = vmatprep.subr.mxu0 %v4595
        %v4597 = vand.u32 %v443, 4294901760
        %v4598 = vsub.f32 %v443, %v4597
        %v4599 = vand.u32 %v4598, 4294901760
        %4600 = vmatpush1.msra.mxu0 %v4599
        %v4601 = vand.u32 %v461, 4294901760
        %v4602 = vsub.f32 %v461, %v4601
        %v4603 = vand.u32 %v4602, 4294901760
        %4604 = vmatprep.subr.mxu0 %v4603
        %v4605 = vand.u32 %v460, 4294901760
        %v4606 = vsub.f32 %v460, %v4605
        %v4607 = vand.u32 %v4606, 4294901760
        %4608 = vmatpush1.msra.mxu0 %v4607
        %v4609 = vand.u32 %v478, 4294901760
        %v4610 = vsub.f32 %v478, %v4609
        %v4611 = vand.u32 %v4610, 4294901760
        %4612 = vmatprep.subr.mxu0 %v4611
        %v4613 = vand.u32 %v477, 4294901760
        %v4614 = vsub.f32 %v477, %v4613
        %v4615 = vand.u32 %v4614, 4294901760
        %4616 = vmatpush1.msra.mxu0 %v4615
        %4617 = vmatprep.subr.mxu0 0.0
        %4618 = vmatpush1.msra.mxu0 0.0
        %4619 = vmatprep.subr.mxu0 0.0
        %4620 = vmatpush1.msra.mxu0 0.0
        %4621 = vmatprep.subr.mxu0 0.0
        %4622 = vmatpush1.msra.mxu0 0.0
        %4623 = vmatprep.subr.mxu0 0.0
        %4624 = vmatpush1.msra.mxu0 0.0
        %4625 = vmatprep.subr.mxu0 0.0
        %4626 = vmatpush1.msra.mxu0 0.0
        %4627 = vmatprep.subr.mxu0 0.0
        %4628 = vmatpush1.msra.mxu0 0.0
        %4629 = vmatprep.subr.mxu0 0.0
        %4630 = vmatpush1.msra.mxu0 0.0
        %4631 = vmatprep.subr.mxu0 0.0
        %4632 = vmatpush1.msra.mxu0 0.0
        %4633 = vmatprep.subr.mxu0 0.0
        %4634 = vmatpush1.msra.mxu0 0.0
        %4635 = vmatprep.subr.mxu0 0.0
        %4636 = vmatpush1.msra.mxu0 0.0
        %4637 = vmatprep.subr.mxu0 0.0
        %4638 = vmatpush1.msra.mxu0 0.0
        %4639 = vmatprep.subr.mxu0 0.0
        %4640 = vmatpush1.msra.mxu0 0.0
        %4641 = vmatprep.subr.mxu0 0.0
        %4642 = vmatpush1.msra.mxu0 0.0
        %4643 = vmatprep.subr.mxu0 0.0
        %4644 = vmatpush1.msra.mxu0 0.0
        %4645 = vmatprep.subr.mxu0 0.0
        %4646 = vmatpush1.msra.mxu0 0.0
        %4647 = vmatprep.subr.mxu0 0.0
        %4648 = vmatpush1.msra.mxu0 0.0
        %4649 = vmatprep.mubr.f32.mxu0 0.0
        %v4650 = vand.u32 %v213, 4294901760
        %4651 = vmatmul.mubr.f32.gmra.mrb[0].mxu0 %v4650
        %v4652 = vpop.f32.mrb[0].mxu0
        %v4653 = vadd.f32 %v4485, %v4652
        %v4654 = vpop.f32.mrb[0].mxu0
        %v4655 = vadd.f32 %v4487, %v4654
        %4656 = vdwg.mxu0
        %v4657 = vand.u32 %v223, 4294901760
        %4658 = vmatprep.subr.mxu0 %v4657
        %v4659 = vand.u32 %v222, 4294901760
        %4660 = vmatpush1.msra.mxu0 %v4659
        %v4661 = vand.u32 %v240, 4294901760
        %4662 = vmatprep.subr.mxu0 %v4661
        %v4663 = vand.u32 %v239, 4294901760
        %4664 = vmatpush1.msra.mxu0 %v4663
        %v4665 = vand.u32 %v257, 4294901760
        %4666 = vmatprep.subr.mxu0 %v4665
        %v4667 = vand.u32 %v256, 4294901760
        %4668 = vmatpush1.msra.mxu0 %v4667
        %v4669 = vand.u32 %v274, 4294901760
        %4670 = vmatprep.subr.mxu0 %v4669
        %v4671 = vand.u32 %v273, 4294901760
        %4672 = vmatpush1.msra.mxu0 %v4671
        %v4673 = vand.u32 %v291, 4294901760
        %4674 = vmatprep.subr.mxu0 %v4673
        %v4675 = vand.u32 %v290, 4294901760
        %4676 = vmatpush1.msra.mxu0 %v4675
        %v4677 = vand.u32 %v308, 4294901760
        %4678 = vmatprep.subr.mxu0 %v4677
        %v4679 = vand.u32 %v307, 4294901760
        %4680 = vmatpush1.msra.mxu0 %v4679
        %v4681 = vand.u32 %v325, 4294901760
        %4682 = vmatprep.subr.mxu0 %v4681
        %v4683 = vand.u32 %v324, 4294901760
        %4684 = vmatpush1.msra.mxu0 %v4683
        %v4685 = vand.u32 %v342, 4294901760
        %4686 = vmatprep.subr.mxu0 %v4685
        %v4687 = vand.u32 %v341, 4294901760
        %4688 = vmatpush1.msra.mxu0 %v4687
        %v4689 = vand.u32 %v359, 4294901760
        %4690 = vmatprep.subr.mxu0 %v4689
        %v4691 = vand.u32 %v358, 4294901760
        %4692 = vmatpush1.msra.mxu0 %v4691
        %v4693 = vand.u32 %v376, 4294901760
        %4694 = vmatprep.subr.mxu0 %v4693
        %v4695 = vand.u32 %v375, 4294901760
        %4696 = vmatpush1.msra.mxu0 %v4695
        %v4697 = vand.u32 %v393, 4294901760
        %4698 = vmatprep.subr.mxu0 %v4697
        %v4699 = vand.u32 %v392, 4294901760
        %4700 = vmatpush1.msra.mxu0 %v4699
        %v4701 = vand.u32 %v410, 4294901760
        %4702 = vmatprep.subr.mxu0 %v4701
        %v4703 = vand.u32 %v409, 4294901760
        %4704 = vmatpush1.msra.mxu0 %v4703
        %v4705 = vand.u32 %v427, 4294901760
        %4706 = vmatprep.subr.mxu0 %v4705
        %v4707 = vand.u32 %v426, 4294901760
        %4708 = vmatpush1.msra.mxu0 %v4707
        %v4709 = vand.u32 %v444, 4294901760
        %4710 = vmatprep.subr.mxu0 %v4709
        %v4711 = vand.u32 %v443, 4294901760
        %4712 = vmatpush1.msra.mxu0 %v4711
        %v4713 = vand.u32 %v461, 4294901760
        %4714 = vmatprep.subr.mxu0 %v4713
        %v4715 = vand.u32 %v460, 4294901760
        %4716 = vmatpush1.msra.mxu0 %v4715
        %v4717 = vand.u32 %v478, 4294901760
        %4718 = vmatprep.subr.mxu0 %v4717
        %v4719 = vand.u32 %v477, 4294901760
        %4720 = vmatpush1.msra.mxu0 %v4719
        %4721 = vmatprep.subr.mxu0 0.0
        %4722 = vmatpush1.msra.mxu0 0.0
        %4723 = vmatprep.subr.mxu0 0.0
        %4724 = vmatpush1.msra.mxu0 0.0
        %4725 = vmatprep.subr.mxu0 0.0
        %4726 = vmatpush1.msra.mxu0 0.0
        %4727 = vmatprep.subr.mxu0 0.0
        %4728 = vmatpush1.msra.mxu0 0.0
        %4729 = vmatprep.subr.mxu0 0.0
        %4730 = vmatpush1.msra.mxu0 0.0
        %4731 = vmatprep.subr.mxu0 0.0
        %4732 = vmatpush1.msra.mxu0 0.0
        %4733 = vmatprep.subr.mxu0 0.0
        %4734 = vmatpush1.msra.mxu0 0.0
        %4735 = vmatprep.subr.mxu0 0.0
        %4736 = vmatpush1.msra.mxu0 0.0
        %4737 = vmatprep.subr.mxu0 0.0
        %4738 = vmatpush1.msra.mxu0 0.0
        %4739 = vmatprep.subr.mxu0 0.0
        %4740 = vmatpush1.msra.mxu0 0.0
        %4741 = vmatprep.subr.mxu0 0.0
        %4742 = vmatpush1.msra.mxu0 0.0
        %4743 = vmatprep.subr.mxu0 0.0
        %4744 = vmatpush1.msra.mxu0 0.0
        %4745 = vmatprep.subr.mxu0 0.0
        %4746 = vmatpush1.msra.mxu0 0.0
        %4747 = vmatprep.subr.mxu0 0.0
        %4748 = vmatpush1.msra.mxu0 0.0
        %4749 = vmatprep.subr.mxu0 0.0
        %4750 = vmatpush1.msra.mxu0 0.0
        %4751 = vmatprep.subr.mxu0 0.0
        %4752 = vmatpush1.msra.mxu0 0.0
        %4753 = vmatprep.mubr.f32.mxu0 0.0
        %v4754 = vand.u32 %v213, 4294901760
        %4755 = vmatmul.mubr.f32.gmra.mrb[0].mxu0 %v4754
        %v4756 = vpop.f32.mrb[0].mxu0
        %v4757 = vadd.f32 %v4653, %v4756
        %v4758 = vpop.f32.mrb[0].mxu0
        %v4759 = vadd.f32 %v4655, %v4758
        %4760 = vdwg.mxu0
        %v4761 = vand.u32 %v225, 4294901760
        %4762 = vmatprep.subr.mxu0 %v4761
        %v4763 = vand.u32 %v224, 4294901760
        %4764 = vmatpush1.msra.mxu0 %v4763
        %v4765 = vand.u32 %v242, 4294901760
        %4766 = vmatprep.subr.mxu0 %v4765
        %v4767 = vand.u32 %v241, 4294901760
        %4768 = vmatpush1.msra.mxu0 %v4767
        %v4769 = vand.u32 %v259, 4294901760
        %4770 = vmatprep.subr.mxu0 %v4769
        %v4771 = vand.u32 %v258, 4294901760
        %4772 = vmatpush1.msra.mxu0 %v4771
        %v4773 = vand.u32 %v276, 4294901760
        %4774 = vmatprep.subr.mxu0 %v4773
        %v4775 = vand.u32 %v275, 4294901760
        %4776 = vmatpush1.msra.mxu0 %v4775
        %v4777 = vand.u32 %v293, 4294901760
        %4778 = vmatprep.subr.mxu0 %v4777
        %v4779 = vand.u32 %v292, 4294901760
        %4780 = vmatpush1.msra.mxu0 %v4779
        %v4781 = vand.u32 %v310, 4294901760
        %4782 = vmatprep.subr.mxu0 %v4781
        %v4783 = vand.u32 %v309, 4294901760
        %4784 = vmatpush1.msra.mxu0 %v4783
        %v4785 = vand.u32 %v327, 4294901760
        %4786 = vmatprep.subr.mxu0 %v4785
        %v4787 = vand.u32 %v326, 4294901760
        %4788 = vmatpush1.msra.mxu0 %v4787
        %v4789 = vand.u32 %v344, 4294901760
        %4790 = vmatprep.subr.mxu0 %v4789
        %v4791 = vand.u32 %v343, 4294901760
        %4792 = vmatpush1.msra.mxu0 %v4791
        %v4793 = vand.u32 %v361, 4294901760
        %4794 = vmatprep.subr.mxu0 %v4793
        %v4795 = vand.u32 %v360, 4294901760
        %4796 = vmatpush1.msra.mxu0 %v4795
        %v4797 = vand.u32 %v378, 4294901760
        %4798 = vmatprep.subr.mxu0 %v4797
        %v4799 = vand.u32 %v377, 4294901760
        %4800 = vmatpush1.msra.mxu0 %v4799
        %v4801 = vand.u32 %v395, 4294901760
        %4802 = vmatprep.subr.mxu0 %v4801
        %v4803 = vand.u32 %v394, 4294901760
        %4804 = vmatpush1.msra.mxu0 %v4803
        %v4805 = vand.u32 %v412, 4294901760
        %4806 = vmatprep.subr.mxu0 %v4805
        %v4807 = vand.u32 %v411, 4294901760
        %4808 = vmatpush1.msra.mxu0 %v4807
        %v4809 = vand.u32 %v429, 4294901760
        %4810 = vmatprep.subr.mxu0 %v4809
        %v4811 = vand.u32 %v428, 4294901760
        %4812 = vmatpush1.msra.mxu0 %v4811
        %v4813 = vand.u32 %v446, 4294901760
        %4814 = vmatprep.subr.mxu0 %v4813
        %v4815 = vand.u32 %v445, 4294901760
        %4816 = vmatpush1.msra.mxu0 %v4815
        %v4817 = vand.u32 %v463, 4294901760
        %4818 = vmatprep.subr.mxu0 %v4817
        %v4819 = vand.u32 %v462, 4294901760
        %4820 = vmatpush1.msra.mxu0 %v4819
        %v4821 = vand.u32 %v480, 4294901760
        %4822 = vmatprep.subr.mxu0 %v4821
        %v4823 = vand.u32 %v479, 4294901760
        %4824 = vmatpush1.msra.mxu0 %v4823
        %4825 = vmatprep.subr.mxu0 0.0
        %4826 = vmatpush1.msra.mxu0 0.0
        %4827 = vmatprep.subr.mxu0 0.0
        %4828 = vmatpush1.msra.mxu0 0.0
        %4829 = vmatprep.subr.mxu0 0.0
        %4830 = vmatpush1.msra.mxu0 0.0
        %4831 = vmatprep.subr.mxu0 0.0
        %4832 = vmatpush1.msra.mxu0 0.0
        %4833 = vmatprep.subr.mxu0 0.0
        %4834 = vmatpush1.msra.mxu0 0.0
        %4835 = vmatprep.subr.mxu0 0.0
        %4836 = vmatpush1.msra.mxu0 0.0
        %4837 = vmatprep.subr.mxu0 0.0
        %4838 = vmatpush1.msra.mxu0 0.0
        %4839 = vmatprep.subr.mxu0 0.0
        %4840 = vmatpush1.msra.mxu0 0.0
        %4841 = vmatprep.subr.mxu0 0.0
        %4842 = vmatpush1.msra.mxu0 0.0
        %4843 = vmatprep.subr.mxu0 0.0
        %4844 = vmatpush1.msra.mxu0 0.0
        %4845 = vmatprep.subr.mxu0 0.0
        %4846 = vmatpush1.msra.mxu0 0.0
        %4847 = vmatprep.subr.mxu0 0.0
        %4848 = vmatpush1.msra.mxu0 0.0
        %4849 = vmatprep.subr.mxu0 0.0
        %4850 = vmatpush1.msra.mxu0 0.0
        %4851 = vmatprep.subr.mxu0 0.0
        %4852 = vmatpush1.msra.mxu0 0.0
        %4853 = vmatprep.subr.mxu0 0.0
        %4854 = vmatpush1.msra.mxu0 0.0
        %4855 = vmatprep.subr.mxu0 0.0
        %4856 = vmatpush1.msra.mxu0 0.0
        %4857 = vmatprep.mubr.f32.mxu0 0.0
        %v4858 = vand.u32 %v213, 4294901760
        %v4859 = vsub.f32 %v213, %v4858
        %v4860 = vand.u32 %v4859, 4294901760
        %v4861 = vsub.f32 %v4859, %v4860
        %v4862 = vand.u32 %v4861, 4294901760
        %4863 = vmatmul.mubr.f32.gmra.mrb[0].mxu0 %v4862
        %v4864 = vpop.f32.mrb[0].mxu0
        %v4865 = vadd.f32 0.0, %v4864
        %v4866 = vpop.f32.mrb[0].mxu0
        %v4867 = vadd.f32 0.0, %v4866
        %4868 = vdwg.mxu0
        %v4869 = vand.u32 %v225, 4294901760
        %v4870 = vsub.f32 %v225, %v4869
        %v4871 = vand.u32 %v4870, 4294901760
        %v4872 = vsub.f32 %v4870, %v4871
        %v4873 = vand.u32 %v4872, 4294901760
        %4874 = vmatprep.subr.mxu0 %v4873
        %v4875 = vand.u32 %v224, 4294901760
        %v4876 = vsub.f32 %v224, %v4875
        %v4877 = vand.u32 %v4876, 4294901760
        %v4878 = vsub.f32 %v4876, %v4877
        %v4879 = vand.u32 %v4878, 4294901760
        %4880 = vmatpush1.msra.mxu0 %v4879
        %v4881 = vand.u32 %v242, 4294901760
        %v4882 = vsub.f32 %v242, %v4881
        %v4883 = vand.u32 %v4882, 4294901760
        %v4884 = vsub.f32 %v4882, %v4883
        %v4885 = vand.u32 %v4884, 4294901760
        %4886 = vmatprep.subr.mxu0 %v4885
        %v4887 = vand.u32 %v241, 4294901760
        %v4888 = vsub.f32 %v241, %v4887
        %v4889 = vand.u32 %v4888, 4294901760
        %v4890 = vsub.f32 %v4888, %v4889
        %v4891 = vand.u32 %v4890, 4294901760
        %4892 = vmatpush1.msra.mxu0 %v4891
        %v4893 = vand.u32 %v259, 4294901760
        %v4894 = vsub.f32 %v259, %v4893
        %v4895 = vand.u32 %v4894, 4294901760
        %v4896 = vsub.f32 %v4894, %v4895
        %v4897 = vand.u32 %v4896, 4294901760
        %4898 = vmatprep.subr.mxu0 %v4897
        %v4899 = vand.u32 %v258, 4294901760
        %v4900 = vsub.f32 %v258, %v4899
        %v4901 = vand.u32 %v4900, 4294901760
        %v4902 = vsub.f32 %v4900, %v4901
        %v4903 = vand.u32 %v4902, 4294901760
        %4904 = vmatpush1.msra.mxu0 %v4903
        %v4905 = vand.u32 %v276, 4294901760
        %v4906 = vsub.f32 %v276, %v4905
        %v4907 = vand.u32 %v4906, 4294901760
        %v4908 = vsub.f32 %v4906, %v4907
        %v4909 = vand.u32 %v4908, 4294901760
        %4910 = vmatprep.subr.mxu0 %v4909
        %v4911 = vand.u32 %v275, 4294901760
        %v4912 = vsub.f32 %v275, %v4911
        %v4913 = vand.u32 %v4912, 4294901760
        %v4914 = vsub.f32 %v4912, %v4913
        %v4915 = vand.u32 %v4914, 4294901760
        %4916 = vmatpush1.msra.mxu0 %v4915
        %v4917 = vand.u32 %v293, 4294901760
        %v4918 = vsub.f32 %v293, %v4917
        %v4919 = vand.u32 %v4918, 4294901760
        %v4920 = vsub.f32 %v4918, %v4919
        %v4921 = vand.u32 %v4920, 4294901760
        %4922 = vmatprep.subr.mxu0 %v4921
        %v4923 = vand.u32 %v292, 4294901760
        %v4924 = vsub.f32 %v292, %v4923
        %v4925 = vand.u32 %v4924, 4294901760
        %v4926 = vsub.f32 %v4924, %v4925
        %v4927 = vand.u32 %v4926, 4294901760
        %4928 = vmatpush1.msra.mxu0 %v4927
        %v4929 = vand.u32 %v310, 4294901760
        %v4930 = vsub.f32 %v310, %v4929
        %v4931 = vand.u32 %v4930, 4294901760
        %v4932 = vsub.f32 %v4930, %v4931
        %v4933 = vand.u32 %v4932, 4294901760
        %4934 = vmatprep.subr.mxu0 %v4933
        %v4935 = vand.u32 %v309, 4294901760
        %v4936 = vsub.f32 %v309, %v4935
        %v4937 = vand.u32 %v4936, 4294901760
        %v4938 = vsub.f32 %v4936, %v4937
        %v4939 = vand.u32 %v4938, 4294901760
        %4940 = vmatpush1.msra.mxu0 %v4939
        %v4941 = vand.u32 %v327, 4294901760
        %v4942 = vsub.f32 %v327, %v4941
        %v4943 = vand.u32 %v4942, 4294901760
        %v4944 = vsub.f32 %v4942, %v4943
        %v4945 = vand.u32 %v4944, 4294901760
        %4946 = vmatprep.subr.mxu0 %v4945
        %v4947 = vand.u32 %v326, 4294901760
        %v4948 = vsub.f32 %v326, %v4947
        %v4949 = vand.u32 %v4948, 4294901760
        %v4950 = vsub.f32 %v4948, %v4949
        %v4951 = vand.u32 %v4950, 4294901760
        %4952 = vmatpush1.msra.mxu0 %v4951
        %v4953 = vand.u32 %v344, 4294901760
        %v4954 = vsub.f32 %v344, %v4953
        %v4955 = vand.u32 %v4954, 4294901760
        %v4956 = vsub.f32 %v4954, %v4955
        %v4957 = vand.u32 %v4956, 4294901760
        %4958 = vmatprep.subr.mxu0 %v4957
        %v4959 = vand.u32 %v343, 4294901760
        %v4960 = vsub.f32 %v343, %v4959
        %v4961 = vand.u32 %v4960, 4294901760
        %v4962 = vsub.f32 %v4960, %v4961
        %v4963 = vand.u32 %v4962, 4294901760
        %4964 = vmatpush1.msra.mxu0 %v4963
        %v4965 = vand.u32 %v361, 4294901760
        %v4966 = vsub.f32 %v361, %v4965
        %v4967 = vand.u32 %v4966, 4294901760
        %v4968 = vsub.f32 %v4966, %v4967
        %v4969 = vand.u32 %v4968, 4294901760
        %4970 = vmatprep.subr.mxu0 %v4969
        %v4971 = vand.u32 %v360, 4294901760
        %v4972 = vsub.f32 %v360, %v4971
        %v4973 = vand.u32 %v4972, 4294901760
        %v4974 = vsub.f32 %v4972, %v4973
        %v4975 = vand.u32 %v4974, 4294901760
        %4976 = vmatpush1.msra.mxu0 %v4975
        %v4977 = vand.u32 %v378, 4294901760
        %v4978 = vsub.f32 %v378, %v4977
        %v4979 = vand.u32 %v4978, 4294901760
        %v4980 = vsub.f32 %v4978, %v4979
        %v4981 = vand.u32 %v4980, 4294901760
        %4982 = vmatprep.subr.mxu0 %v4981
        %v4983 = vand.u32 %v377, 4294901760
        %v4984 = vsub.f32 %v377, %v4983
        %v4985 = vand.u32 %v4984, 4294901760
        %v4986 = vsub.f32 %v4984, %v4985
        %v4987 = vand.u32 %v4986, 4294901760
        %4988 = vmatpush1.msra.mxu0 %v4987
        %v4989 = vand.u32 %v395, 4294901760
        %v4990 = vsub.f32 %v395, %v4989
        %v4991 = vand.u32 %v4990, 4294901760
        %v4992 = vsub.f32 %v4990, %v4991
        %v4993 = vand.u32 %v4992, 4294901760
        %4994 = vmatprep.subr.mxu0 %v4993
        %v4995 = vand.u32 %v394, 4294901760
        %v4996 = vsub.f32 %v394, %v4995
        %v4997 = vand.u32 %v4996, 4294901760
        %v4998 = vsub.f32 %v4996, %v4997
        %v4999 = vand.u32 %v4998, 4294901760
        %5000 = vmatpush1.msra.mxu0 %v4999
        %v5001 = vand.u32 %v412, 4294901760
        %v5002 = vsub.f32 %v412, %v5001
        %v5003 = vand.u32 %v5002, 4294901760
        %v5004 = vsub.f32 %v5002, %v5003
        %v5005 = vand.u32 %v5004, 4294901760
        %5006 = vmatprep.subr.mxu0 %v5005
        %v5007 = vand.u32 %v411, 4294901760
        %v5008 = vsub.f32 %v411, %v5007
        %v5009 = vand.u32 %v5008, 4294901760
        %v5010 = vsub.f32 %v5008, %v5009
        %v5011 = vand.u32 %v5010, 4294901760
        %5012 = vmatpush1.msra.mxu0 %v5011
        %v5013 = vand.u32 %v429, 4294901760
        %v5014 = vsub.f32 %v429, %v5013
        %v5015 = vand.u32 %v5014, 4294901760
        %v5016 = vsub.f32 %v5014, %v5015
        %v5017 = vand.u32 %v5016, 4294901760
        %5018 = vmatprep.subr.mxu0 %v5017
        %v5019 = vand.u32 %v428, 4294901760
        %v5020 = vsub.f32 %v428, %v5019
        %v5021 = vand.u32 %v5020, 4294901760
        %v5022 = vsub.f32 %v5020, %v5021
        %v5023 = vand.u32 %v5022, 4294901760
        %5024 = vmatpush1.msra.mxu0 %v5023
        %v5025 = vand.u32 %v446, 4294901760
        %v5026 = vsub.f32 %v446, %v5025
        %v5027 = vand.u32 %v5026, 4294901760
        %v5028 = vsub.f32 %v5026, %v5027
        %v5029 = vand.u32 %v5028, 4294901760
        %5030 = vmatprep.subr.mxu0 %v5029
        %v5031 = vand.u32 %v445, 4294901760
        %v5032 = vsub.f32 %v445, %v5031
        %v5033 = vand.u32 %v5032, 4294901760
        %v5034 = vsub.f32 %v5032, %v5033
        %v5035 = vand.u32 %v5034, 4294901760
        %5036 = vmatpush1.msra.mxu0 %v5035
        %v5037 = vand.u32 %v463, 4294901760
        %v5038 = vsub.f32 %v463, %v5037
        %v5039 = vand.u32 %v5038, 4294901760
        %v5040 = vsub.f32 %v5038, %v5039
        %v5041 = vand.u32 %v5040, 4294901760
        %5042 = vmatprep.subr.mxu0 %v5041
        %v5043 = vand.u32 %v462, 4294901760
        %v5044 = vsub.f32 %v462, %v5043
        %v5045 = vand.u32 %v5044, 4294901760
        %v5046 = vsub.f32 %v5044, %v5045
        %v5047 = vand.u32 %v5046, 4294901760
        %5048 = vmatpush1.msra.mxu0 %v5047
        %v5049 = vand.u32 %v480, 4294901760
        %v5050 = vsub.f32 %v480, %v5049
        %v5051 = vand.u32 %v5050, 4294901760
        %v5052 = vsub.f32 %v5050, %v5051
        %v5053 = vand.u32 %v5052, 4294901760
        %5054 = vmatprep.subr.mxu0 %v5053
        %v5055 = vand.u32 %v479, 4294901760
        %v5056 = vsub.f32 %v479, %v5055
        %v5057 = vand.u32 %v5056, 4294901760
        %v5058 = vsub.f32 %v5056, %v5057
        %v5059 = vand.u32 %v5058, 4294901760
        %5060 = vmatpush1.msra.mxu0 %v5059
        %5061 = vmatprep.subr.mxu0 0.0
        %5062 = vmatpush1.msra.mxu0 0.0
        %5063 = vmatprep.subr.mxu0 0.0
        %5064 = vmatpush1.msra.mxu0 0.0
        %5065 = vmatprep.subr.mxu0 0.0
        %5066 = vmatpush1.msra.mxu0 0.0
        %5067 = vmatprep.subr.mxu0 0.0
        %5068 = vmatpush1.msra.mxu0 0.0
        %5069 = vmatprep.subr.mxu0 0.0
        %5070 = vmatpush1.msra.mxu0 0.0
        %5071 = vmatprep.subr.mxu0 0.0
        %5072 = vmatpush1.msra.mxu0 0.0
        %5073 = vmatprep.subr.mxu0 0.0
        %5074 = vmatpush1.msra.mxu0 0.0
        %5075 = vmatprep.subr.mxu0 0.0
        %5076 = vmatpush1.msra.mxu0 0.0
        %5077 = vmatprep.subr.mxu0 0.0
        %5078 = vmatpush1.msra.mxu0 0.0
        %5079 = vmatprep.subr.mxu0 0.0
        %5080 = vmatpush1.msra.mxu0 0.0
        %5081 = vmatprep.subr.mxu0 0.0
        %5082 = vmatpush1.msra.mxu0 0.0
        %5083 = vmatprep.subr.mxu0 0.0
        %5084 = vmatpush1.msra.mxu0 0.0
        %5085 = vmatprep.subr.mxu0 0.0
        %5086 = vmatpush1.msra.mxu0 0.0
        %5087 = vmatprep.subr.mxu0 0.0
        %5088 = vmatpush1.msra.mxu0 0.0
        %5089 = vmatprep.subr.mxu0 0.0
        %5090 = vmatpush1.msra.mxu0 0.0
        %5091 = vmatprep.subr.mxu0 0.0
        %5092 = vmatpush1.msra.mxu0 0.0
        %5093 = vmatprep.mubr.f32.mxu0 0.0
        %v5094 = vand.u32 %v213, 4294901760
        %5095 = vmatmul.mubr.f32.gmra.mrb[0].mxu0 %v5094
        %v5096 = vpop.f32.mrb[0].mxu0
        %v5097 = vadd.f32 %v4865, %v5096
        %v5098 = vpop.f32.mrb[0].mxu0
        %v5099 = vadd.f32 %v4867, %v5098
        %5100 = vdwg.mxu0
        %v5101 = vand.u32 %v225, 4294901760
        %v5102 = vsub.f32 %v225, %v5101
        %5103 = vmatprep.subr.mxu0 %v5102
        %v5104 = vand.u32 %v224, 4294901760
        %v5105 = vsub.f32 %v224, %v5104
        %5106 = vmatpush1.msra.mxu0 %v5105
        %v5107 = vand.u32 %v242, 4294901760
        %v5108 = vsub.f32 %v242, %v5107
        %5109 = vmatprep.subr.mxu0 %v5108
        %v5110 = vand.u32 %v241, 4294901760
        %v5111 = vsub.f32 %v241, %v5110
        %5112 = vmatpush1.msra.mxu0 %v5111
        %v5113 = vand.u32 %v259, 4294901760
        %v5114 = vsub.f32 %v259, %v5113
        %5115 = vmatprep.subr.mxu0 %v5114
        %v5116 = vand.u32 %v258, 4294901760
        %v5117 = vsub.f32 %v258, %v5116
        %5118 = vmatpush1.msra.mxu0 %v5117
        %v5119 = vand.u32 %v276, 4294901760
        %v5120 = vsub.f32 %v276, %v5119
        %5121 = vmatprep.subr.mxu0 %v5120
        %v5122 = vand.u32 %v275, 4294901760
        %v5123 = vsub.f32 %v275, %v5122
        %5124 = vmatpush1.msra.mxu0 %v5123
        %v5125 = vand.u32 %v293, 4294901760
        %v5126 = vsub.f32 %v293, %v5125
        %5127 = vmatprep.subr.mxu0 %v5126
        %v5128 = vand.u32 %v292, 4294901760
        %v5129 = vsub.f32 %v292, %v5128
        %5130 = vmatpush1.msra.mxu0 %v5129
        %v5131 = vand.u32 %v310, 4294901760
        %v5132 = vsub.f32 %v310, %v5131
        %5133 = vmatprep.subr.mxu0 %v5132
        %v5134 = vand.u32 %v309, 4294901760
        %v5135 = vsub.f32 %v309, %v5134
        %5136 = vmatpush1.msra.mxu0 %v5135
        %v5137 = vand.u32 %v327, 4294901760
        %v5138 = vsub.f32 %v327, %v5137
        %5139 = vmatprep.subr.mxu0 %v5138
        %v5140 = vand.u32 %v326, 4294901760
        %v5141 = vsub.f32 %v326, %v5140
        %5142 = vmatpush1.msra.mxu0 %v5141
        %v5143 = vand.u32 %v344, 4294901760
        %v5144 = vsub.f32 %v344, %v5143
        %5145 = vmatprep.subr.mxu0 %v5144
        %v5146 = vand.u32 %v343, 4294901760
        %v5147 = vsub.f32 %v343, %v5146
        %5148 = vmatpush1.msra.mxu0 %v5147
        %v5149 = vand.u32 %v361, 4294901760
        %v5150 = vsub.f32 %v361, %v5149
        %5151 = vmatprep.subr.mxu0 %v5150
        %v5152 = vand.u32 %v360, 4294901760
        %v5153 = vsub.f32 %v360, %v5152
        %5154 = vmatpush1.msra.mxu0 %v5153
        %v5155 = vand.u32 %v378, 4294901760
        %v5156 = vsub.f32 %v378, %v5155
        %5157 = vmatprep.subr.mxu0 %v5156
        %v5158 = vand.u32 %v377, 4294901760
        %v5159 = vsub.f32 %v377, %v5158
        %5160 = vmatpush1.msra.mxu0 %v5159
        %v5161 = vand.u32 %v395, 4294901760
        %v5162 = vsub.f32 %v395, %v5161
        %5163 = vmatprep.subr.mxu0 %v5162
        %v5164 = vand.u32 %v394, 4294901760
        %v5165 = vsub.f32 %v394, %v5164
        %5166 = vmatpush1.msra.mxu0 %v5165
        %v5167 = vand.u32 %v412, 4294901760
        %v5168 = vsub.f32 %v412, %v5167
        %5169 = vmatprep.subr.mxu0 %v5168
        %v5170 = vand.u32 %v411, 4294901760
        %v5171 = vsub.f32 %v411, %v5170
        %5172 = vmatpush1.msra.mxu0 %v5171
        %v5173 = vand.u32 %v429, 4294901760
        %v5174 = vsub.f32 %v429, %v5173
        %5175 = vmatprep.subr.mxu0 %v5174
        %v5176 = vand.u32 %v428, 4294901760
        %v5177 = vsub.f32 %v428, %v5176
        %5178 = vmatpush1.msra.mxu0 %v5177
        %v5179 = vand.u32 %v446, 4294901760
        %v5180 = vsub.f32 %v446, %v5179
        %5181 = vmatprep.subr.mxu0 %v5180
        %v5182 = vand.u32 %v445, 4294901760
        %v5183 = vsub.f32 %v445, %v5182
        %5184 = vmatpush1.msra.mxu0 %v5183
        %v5185 = vand.u32 %v463, 4294901760
        %v5186 = vsub.f32 %v463, %v5185
        %5187 = vmatprep.subr.mxu0 %v5186
        %v5188 = vand.u32 %v462, 4294901760
        %v5189 = vsub.f32 %v462, %v5188
        %5190 = vmatpush1.msra.mxu0 %v5189
        %v5191 = vand.u32 %v480, 4294901760
        %v5192 = vsub.f32 %v480, %v5191
        %5193 = vmatprep.subr.mxu0 %v5192
        %v5194 = vand.u32 %v479, 4294901760
        %v5195 = vsub.f32 %v479, %v5194
        %5196 = vmatpush1.msra.mxu0 %v5195
        %5197 = vmatprep.subr.mxu0 0.0
        %5198 = vmatpush1.msra.mxu0 0.0
        %5199 = vmatprep.subr.mxu0 0.0
        %5200 = vmatpush1.msra.mxu0 0.0
        %5201 = vmatprep.subr.mxu0 0.0
        %5202 = vmatpush1.msra.mxu0 0.0
        %5203 = vmatprep.subr.mxu0 0.0
        %5204 = vmatpush1.msra.mxu0 0.0
        %5205 = vmatprep.subr.mxu0 0.0
        %5206 = vmatpush1.msra.mxu0 0.0
        %5207 = vmatprep.subr.mxu0 0.0
        %5208 = vmatpush1.msra.mxu0 0.0
        %5209 = vmatprep.subr.mxu0 0.0
        %5210 = vmatpush1.msra.mxu0 0.0
        %5211 = vmatprep.subr.mxu0 0.0
        %5212 = vmatpush1.msra.mxu0 0.0
        %5213 = vmatprep.subr.mxu0 0.0
        %5214 = vmatpush1.msra.mxu0 0.0
        %5215 = vmatprep.subr.mxu0 0.0
        %5216 = vmatpush1.msra.mxu0 0.0
        %5217 = vmatprep.subr.mxu0 0.0
        %5218 = vmatpush1.msra.mxu0 0.0
        %5219 = vmatprep.subr.mxu0 0.0
        %5220 = vmatpush1.msra.mxu0 0.0
        %5221 = vmatprep.subr.mxu0 0.0
        %5222 = vmatpush1.msra.mxu0 0.0
        %5223 = vmatprep.subr.mxu0 0.0
        %5224 = vmatpush1.msra.mxu0 0.0
        %5225 = vmatprep.subr.mxu0 0.0
        %5226 = vmatpush1.msra.mxu0 0.0
        %5227 = vmatprep.subr.mxu0 0.0
        %5228 = vmatpush1.msra.mxu0 0.0
        %5229 = vmatprep.mubr.f32.mxu0 0.0
        %v5230 = vand.u32 %v213, 4294901760
        %v5231 = vsub.f32 %v213, %v5230
        %5232 = vmatmul.mubr.f32.gmra.mrb[0].mxu0 %v5231
        %v5233 = vpop.f32.mrb[0].mxu0
        %v5234 = vadd.f32 %v5097, %v5233
        %v5235 = vpop.f32.mrb[0].mxu0
        %v5236 = vadd.f32 %v5099, %v5235
        %5237 = vdwg.mxu0
        %v5238 = vand.u32 %v225, 4294901760
        %5239 = vmatprep.subr.mxu0 %v5238
        %v5240 = vand.u32 %v224, 4294901760
        %5241 = vmatpush1.msra.mxu0 %v5240
        %v5242 = vand.u32 %v242, 4294901760
        %5243 = vmatprep.subr.mxu0 %v5242
        %v5244 = vand.u32 %v241, 4294901760
        %5245 = vmatpush1.msra.mxu0 %v5244
        %v5246 = vand.u32 %v259, 4294901760
        %5247 = vmatprep.subr.mxu0 %v5246
        %v5248 = vand.u32 %v258, 4294901760
        %5249 = vmatpush1.msra.mxu0 %v5248
        %v5250 = vand.u32 %v276, 4294901760
        %5251 = vmatprep.subr.mxu0 %v5250
        %v5252 = vand.u32 %v275, 4294901760
        %5253 = vmatpush1.msra.mxu0 %v5252
        %v5254 = vand.u32 %v293, 4294901760
        %5255 = vmatprep.subr.mxu0 %v5254
        %v5256 = vand.u32 %v292, 4294901760
        %5257 = vmatpush1.msra.mxu0 %v5256
        %v5258 = vand.u32 %v310, 4294901760
        %5259 = vmatprep.subr.mxu0 %v5258
        %v5260 = vand.u32 %v309, 4294901760
        %5261 = vmatpush1.msra.mxu0 %v5260
        %v5262 = vand.u32 %v327, 4294901760
        %5263 = vmatprep.subr.mxu0 %v5262
        %v5264 = vand.u32 %v326, 4294901760
        %5265 = vmatpush1.msra.mxu0 %v5264
        %v5266 = vand.u32 %v344, 4294901760
        %5267 = vmatprep.subr.mxu0 %v5266
        %v5268 = vand.u32 %v343, 4294901760
        %5269 = vmatpush1.msra.mxu0 %v5268
        %v5270 = vand.u32 %v361, 4294901760
        %5271 = vmatprep.subr.mxu0 %v5270
        %v5272 = vand.u32 %v360, 4294901760
        %5273 = vmatpush1.msra.mxu0 %v5272
        %v5274 = vand.u32 %v378, 4294901760
        %5275 = vmatprep.subr.mxu0 %v5274
        %v5276 = vand.u32 %v377, 4294901760
        %5277 = vmatpush1.msra.mxu0 %v5276
        %v5278 = vand.u32 %v395, 4294901760
        %5279 = vmatprep.subr.mxu0 %v5278
        %v5280 = vand.u32 %v394, 4294901760
        %5281 = vmatpush1.msra.mxu0 %v5280
        %v5282 = vand.u32 %v412, 4294901760
        %5283 = vmatprep.subr.mxu0 %v5282
        %v5284 = vand.u32 %v411, 4294901760
        %5285 = vmatpush1.msra.mxu0 %v5284
        %v5286 = vand.u32 %v429, 4294901760
        %5287 = vmatprep.subr.mxu0 %v5286
        %v5288 = vand.u32 %v428, 4294901760
        %5289 = vmatpush1.msra.mxu0 %v5288
        %v5290 = vand.u32 %v446, 4294901760
        %5291 = vmatprep.subr.mxu0 %v5290
        %v5292 = vand.u32 %v445, 4294901760
        %5293 = vmatpush1.msra.mxu0 %v5292
        %v5294 = vand.u32 %v463, 4294901760
        %5295 = vmatprep.subr.mxu0 %v5294
        %v5296 = vand.u32 %v462, 4294901760
        %5297 = vmatpush1.msra.mxu0 %v5296
        %v5298 = vand.u32 %v480, 4294901760
        %5299 = vmatprep.subr.mxu0 %v5298
        %v5300 = vand.u32 %v479, 4294901760
        %5301 = vmatpush1.msra.mxu0 %v5300
        %5302 = vmatprep.subr.mxu0 0.0
        %5303 = vmatpush1.msra.mxu0 0.0
        %5304 = vmatprep.subr.mxu0 0.0
        %5305 = vmatpush1.msra.mxu0 0.0
        %5306 = vmatprep.subr.mxu0 0.0
        %5307 = vmatpush1.msra.mxu0 0.0
        %5308 = vmatprep.subr.mxu0 0.0
        %5309 = vmatpush1.msra.mxu0 0.0
        %5310 = vmatprep.subr.mxu0 0.0
        %5311 = vmatpush1.msra.mxu0 0.0
        %5312 = vmatprep.subr.mxu0 0.0
        %5313 = vmatpush1.msra.mxu0 0.0
        %5314 = vmatprep.subr.mxu0 0.0
        %5315 = vmatpush1.msra.mxu0 0.0
        %5316 = vmatprep.subr.mxu0 0.0
        %5317 = vmatpush1.msra.mxu0 0.0
        %5318 = vmatprep.subr.mxu0 0.0
        %5319 = vmatpush1.msra.mxu0 0.0
        %5320 = vmatprep.subr.mxu0 0.0
        %5321 = vmatpush1.msra.mxu0 0.0
        %5322 = vmatprep.subr.mxu0 0.0
        %5323 = vmatpush1.msra.mxu0 0.0
        %5324 = vmatprep.subr.mxu0 0.0
        %5325 = vmatpush1.msra.mxu0 0.0
        %5326 = vmatprep.subr.mxu0 0.0
        %5327 = vmatpush1.msra.mxu0 0.0
        %5328 = vmatprep.subr.mxu0 0.0
        %5329 = vmatpush1.msra.mxu0 0.0
        %5330 = vmatprep.subr.mxu0 0.0
        %5331 = vmatpush1.msra.mxu0 0.0
        %5332 = vmatprep.subr.mxu0 0.0
        %5333 = vmatpush1.msra.mxu0 0.0
        %5334 = vmatprep.mubr.f32.mxu0 0.0
        %v5335 = vand.u32 %v213, 4294901760
        %v5336 = vsub.f32 %v213, %v5335
        %v5337 = vand.u32 %v5336, 4294901760
        %5338 = vmatmul.mubr.f32.gmra.mrb[0].mxu0 %v5337
        %v5339 = vpop.f32.mrb[0].mxu0
        %v5340 = vadd.f32 %v5234, %v5339
        %v5341 = vpop.f32.mrb[0].mxu0
        %v5342 = vadd.f32 %v5236, %v5341
        %5343 = vdwg.mxu0
        %v5344 = vand.u32 %v225, 4294901760
        %v5345 = vsub.f32 %v225, %v5344
        %v5346 = vand.u32 %v5345, 4294901760
        %5347 = vmatprep.subr.mxu0 %v5346
        %v5348 = vand.u32 %v224, 4294901760
        %v5349 = vsub.f32 %v224, %v5348
        %v5350 = vand.u32 %v5349, 4294901760
        %5351 = vmatpush1.msra.mxu0 %v5350
        %v5352 = vand.u32 %v242, 4294901760
        %v5353 = vsub.f32 %v242, %v5352
        %v5354 = vand.u32 %v5353, 4294901760
        %5355 = vmatprep.subr.mxu0 %v5354
        %v5356 = vand.u32 %v241, 4294901760
        %v5357 = vsub.f32 %v241, %v5356
        %v5358 = vand.u32 %v5357, 4294901760
        %5359 = vmatpush1.msra.mxu0 %v5358
        %v5360 = vand.u32 %v259, 4294901760
        %v5361 = vsub.f32 %v259, %v5360
        %v5362 = vand.u32 %v5361, 4294901760
        %5363 = vmatprep.subr.mxu0 %v5362
        %v5364 = vand.u32 %v258, 4294901760
        %v5365 = vsub.f32 %v258, %v5364
        %v5366 = vand.u32 %v5365, 4294901760
        %5367 = vmatpush1.msra.mxu0 %v5366
        %v5368 = vand.u32 %v276, 4294901760
        %v5369 = vsub.f32 %v276, %v5368
        %v5370 = vand.u32 %v5369, 4294901760
        %5371 = vmatprep.subr.mxu0 %v5370
        %v5372 = vand.u32 %v275, 4294901760
        %v5373 = vsub.f32 %v275, %v5372
        %v5374 = vand.u32 %v5373, 4294901760
        %5375 = vmatpush1.msra.mxu0 %v5374
        %v5376 = vand.u32 %v293, 4294901760
        %v5377 = vsub.f32 %v293, %v5376
        %v5378 = vand.u32 %v5377, 4294901760
        %5379 = vmatprep.subr.mxu0 %v5378
        %v5380 = vand.u32 %v292, 4294901760
        %v5381 = vsub.f32 %v292, %v5380
        %v5382 = vand.u32 %v5381, 4294901760
        %5383 = vmatpush1.msra.mxu0 %v5382
        %v5384 = vand.u32 %v310, 4294901760
        %v5385 = vsub.f32 %v310, %v5384
        %v5386 = vand.u32 %v5385, 4294901760
        %5387 = vmatprep.subr.mxu0 %v5386
        %v5388 = vand.u32 %v309, 4294901760
        %v5389 = vsub.f32 %v309, %v5388
        %v5390 = vand.u32 %v5389, 4294901760
        %5391 = vmatpush1.msra.mxu0 %v5390
        %v5392 = vand.u32 %v327, 4294901760
        %v5393 = vsub.f32 %v327, %v5392
        %v5394 = vand.u32 %v5393, 4294901760
        %5395 = vmatprep.subr.mxu0 %v5394
        %v5396 = vand.u32 %v326, 4294901760
        %v5397 = vsub.f32 %v326, %v5396
        %v5398 = vand.u32 %v5397, 4294901760
        %5399 = vmatpush1.msra.mxu0 %v5398
        %v5400 = vand.u32 %v344, 4294901760
        %v5401 = vsub.f32 %v344, %v5400
        %v5402 = vand.u32 %v5401, 4294901760
        %5403 = vmatprep.subr.mxu0 %v5402
        %v5404 = vand.u32 %v343, 4294901760
        %v5405 = vsub.f32 %v343, %v5404
        %v5406 = vand.u32 %v5405, 4294901760
        %5407 = vmatpush1.msra.mxu0 %v5406
        %v5408 = vand.u32 %v361, 4294901760
        %v5409 = vsub.f32 %v361, %v5408
        %v5410 = vand.u32 %v5409, 4294901760
        %5411 = vmatprep.subr.mxu0 %v5410
        %v5412 = vand.u32 %v360, 4294901760
        %v5413 = vsub.f32 %v360, %v5412
        %v5414 = vand.u32 %v5413, 4294901760
        %5415 = vmatpush1.msra.mxu0 %v5414
        %v5416 = vand.u32 %v378, 4294901760
        %v5417 = vsub.f32 %v378, %v5416
        %v5418 = vand.u32 %v5417, 4294901760
        %5419 = vmatprep.subr.mxu0 %v5418
        %v5420 = vand.u32 %v377, 4294901760
        %v5421 = vsub.f32 %v377, %v5420
        %v5422 = vand.u32 %v5421, 4294901760
        %5423 = vmatpush1.msra.mxu0 %v5422
        %v5424 = vand.u32 %v395, 4294901760
        %v5425 = vsub.f32 %v395, %v5424
        %v5426 = vand.u32 %v5425, 4294901760
        %5427 = vmatprep.subr.mxu0 %v5426
        %v5428 = vand.u32 %v394, 4294901760
        %v5429 = vsub.f32 %v394, %v5428
        %v5430 = vand.u32 %v5429, 4294901760
        %5431 = vmatpush1.msra.mxu0 %v5430
        %v5432 = vand.u32 %v412, 4294901760
        %v5433 = vsub.f32 %v412, %v5432
        %v5434 = vand.u32 %v5433, 4294901760
        %5435 = vmatprep.subr.mxu0 %v5434
        %v5436 = vand.u32 %v411, 4294901760
        %v5437 = vsub.f32 %v411, %v5436
        %v5438 = vand.u32 %v5437, 4294901760
        %5439 = vmatpush1.msra.mxu0 %v5438
        %v5440 = vand.u32 %v429, 4294901760
        %v5441 = vsub.f32 %v429, %v5440
        %v5442 = vand.u32 %v5441, 4294901760
        %5443 = vmatprep.subr.mxu0 %v5442
        %v5444 = vand.u32 %v428, 4294901760
        %v5445 = vsub.f32 %v428, %v5444
        %v5446 = vand.u32 %v5445, 4294901760
        %5447 = vmatpush1.msra.mxu0 %v5446
        %v5448 = vand.u32 %v446, 4294901760
        %v5449 = vsub.f32 %v446, %v5448
        %v5450 = vand.u32 %v5449, 4294901760
        %5451 = vmatprep.subr.mxu0 %v5450
        %v5452 = vand.u32 %v445, 4294901760
        %v5453 = vsub.f32 %v445, %v5452
        %v5454 = vand.u32 %v5453, 4294901760
        %5455 = vmatpush1.msra.mxu0 %v5454
        %v5456 = vand.u32 %v463, 4294901760
        %v5457 = vsub.f32 %v463, %v5456
        %v5458 = vand.u32 %v5457, 4294901760
        %5459 = vmatprep.subr.mxu0 %v5458
        %v5460 = vand.u32 %v462, 4294901760
        %v5461 = vsub.f32 %v462, %v5460
        %v5462 = vand.u32 %v5461, 4294901760
        %5463 = vmatpush1.msra.mxu0 %v5462
        %v5464 = vand.u32 %v480, 4294901760
        %v5465 = vsub.f32 %v480, %v5464
        %v5466 = vand.u32 %v5465, 4294901760
        %5467 = vmatprep.subr.mxu0 %v5466
        %v5468 = vand.u32 %v479, 4294901760
        %v5469 = vsub.f32 %v479, %v5468
        %v5470 = vand.u32 %v5469, 4294901760
        %5471 = vmatpush1.msra.mxu0 %v5470
        %5472 = vmatprep.subr.mxu0 0.0
        %5473 = vmatpush1.msra.mxu0 0.0
        %5474 = vmatprep.subr.mxu0 0.0
        %5475 = vmatpush1.msra.mxu0 0.0
        %5476 = vmatprep.subr.mxu0 0.0
        %5477 = vmatpush1.msra.mxu0 0.0
        %5478 = vmatprep.subr.mxu0 0.0
        %5479 = vmatpush1.msra.mxu0 0.0
        %5480 = vmatprep.subr.mxu0 0.0
        %5481 = vmatpush1.msra.mxu0 0.0
        %5482 = vmatprep.subr.mxu0 0.0
        %5483 = vmatpush1.msra.mxu0 0.0
        %5484 = vmatprep.subr.mxu0 0.0
        %5485 = vmatpush1.msra.mxu0 0.0
        %5486 = vmatprep.subr.mxu0 0.0
        %5487 = vmatpush1.msra.mxu0 0.0
        %5488 = vmatprep.subr.mxu0 0.0
        %5489 = vmatpush1.msra.mxu0 0.0
        %5490 = vmatprep.subr.mxu0 0.0
        %5491 = vmatpush1.msra.mxu0 0.0
        %5492 = vmatprep.subr.mxu0 0.0
        %5493 = vmatpush1.msra.mxu0 0.0
        %5494 = vmatprep.subr.mxu0 0.0
        %5495 = vmatpush1.msra.mxu0 0.0
        %5496 = vmatprep.subr.mxu0 0.0
        %5497 = vmatpush1.msra.mxu0 0.0
        %5498 = vmatprep.subr.mxu0 0.0
        %5499 = vmatpush1.msra.mxu0 0.0
        %5500 = vmatprep.subr.mxu0 0.0
        %5501 = vmatpush1.msra.mxu0 0.0
        %5502 = vmatprep.subr.mxu0 0.0
        %5503 = vmatpush1.msra.mxu0 0.0
        %5504 = vmatprep.mubr.f32.mxu0 0.0
        %v5505 = vand.u32 %v213, 4294901760
        %5506 = vmatmul.mubr.f32.gmra.mrb[0].mxu0 %v5505
        %v5507 = vpop.f32.mrb[0].mxu0
        %v5508 = vadd.f32 %v5340, %v5507
        %v5509 = vpop.f32.mrb[0].mxu0
        %v5510 = vadd.f32 %v5342, %v5509
        %5511 = vdwg.mxu0
        %v5512 = vand.u32 %v225, 4294901760
        %5513 = vmatprep.subr.mxu0 %v5512
        %v5514 = vand.u32 %v224, 4294901760
        %5515 = vmatpush1.msra.mxu0 %v5514
        %v5516 = vand.u32 %v242, 4294901760
        %5517 = vmatprep.subr.mxu0 %v5516
        %v5518 = vand.u32 %v241, 4294901760
        %5519 = vmatpush1.msra.mxu0 %v5518
        %v5520 = vand.u32 %v259, 4294901760
        %5521 = vmatprep.subr.mxu0 %v5520
        %v5522 = vand.u32 %v258, 4294901760
        %5523 = vmatpush1.msra.mxu0 %v5522
        %v5524 = vand.u32 %v276, 4294901760
        %5525 = vmatprep.subr.mxu0 %v5524
        %v5526 = vand.u32 %v275, 4294901760
        %5527 = vmatpush1.msra.mxu0 %v5526
        %v5528 = vand.u32 %v293, 4294901760
        %5529 = vmatprep.subr.mxu0 %v5528
        %v5530 = vand.u32 %v292, 4294901760
        %5531 = vmatpush1.msra.mxu0 %v5530
        %v5532 = vand.u32 %v310, 4294901760
        %5533 = vmatprep.subr.mxu0 %v5532
        %v5534 = vand.u32 %v309, 4294901760
        %5535 = vmatpush1.msra.mxu0 %v5534
        %v5536 = vand.u32 %v327, 4294901760
        %5537 = vmatprep.subr.mxu0 %v5536
        %v5538 = vand.u32 %v326, 4294901760
        %5539 = vmatpush1.msra.mxu0 %v5538
        %v5540 = vand.u32 %v344, 4294901760
        %5541 = vmatprep.subr.mxu0 %v5540
        %v5542 = vand.u32 %v343, 4294901760
        %5543 = vmatpush1.msra.mxu0 %v5542
        %v5544 = vand.u32 %v361, 4294901760
        %5545 = vmatprep.subr.mxu0 %v5544
        %v5546 = vand.u32 %v360, 4294901760
        %5547 = vmatpush1.msra.mxu0 %v5546
        %v5548 = vand.u32 %v378, 4294901760
        %5549 = vmatprep.subr.mxu0 %v5548
        %v5550 = vand.u32 %v377, 4294901760
        %5551 = vmatpush1.msra.mxu0 %v5550
        %v5552 = vand.u32 %v395, 4294901760
        %5553 = vmatprep.subr.mxu0 %v5552
        %v5554 = vand.u32 %v394, 4294901760
        %5555 = vmatpush1.msra.mxu0 %v5554
        %v5556 = vand.u32 %v412, 4294901760
        %5557 = vmatprep.subr.mxu0 %v5556
        %v5558 = vand.u32 %v411, 4294901760
        %5559 = vmatpush1.msra.mxu0 %v5558
        %v5560 = vand.u32 %v429, 4294901760
        %5561 = vmatprep.subr.mxu0 %v5560
        %v5562 = vand.u32 %v428, 4294901760
        %5563 = vmatpush1.msra.mxu0 %v5562
        %v5564 = vand.u32 %v446, 4294901760
        %5565 = vmatprep.subr.mxu0 %v5564
        %v5566 = vand.u32 %v445, 4294901760
        %5567 = vmatpush1.msra.mxu0 %v5566
        %v5568 = vand.u32 %v463, 4294901760
        %5569 = vmatprep.subr.mxu0 %v5568
        %v5570 = vand.u32 %v462, 4294901760
        %5571 = vmatpush1.msra.mxu0 %v5570
        %v5572 = vand.u32 %v480, 4294901760
        %5573 = vmatprep.subr.mxu0 %v5572
        %v5574 = vand.u32 %v479, 4294901760
        %5575 = vmatpush1.msra.mxu0 %v5574
        %5576 = vmatprep.subr.mxu0 0.0
        %5577 = vmatpush1.msra.mxu0 0.0
        %5578 = vmatprep.subr.mxu0 0.0
        %5579 = vmatpush1.msra.mxu0 0.0
        %5580 = vmatprep.subr.mxu0 0.0
        %5581 = vmatpush1.msra.mxu0 0.0
        %5582 = vmatprep.subr.mxu0 0.0
        %5583 = vmatpush1.msra.mxu0 0.0
        %5584 = vmatprep.subr.mxu0 0.0
        %5585 = vmatpush1.msra.mxu0 0.0
        %5586 = vmatprep.subr.mxu0 0.0
        %5587 = vmatpush1.msra.mxu0 0.0
        %5588 = vmatprep.subr.mxu0 0.0
        %5589 = vmatpush1.msra.mxu0 0.0
        %5590 = vmatprep.subr.mxu0 0.0
        %5591 = vmatpush1.msra.mxu0 0.0
        %5592 = vmatprep.subr.mxu0 0.0
        %5593 = vmatpush1.msra.mxu0 0.0
        %5594 = vmatprep.subr.mxu0 0.0
        %5595 = vmatpush1.msra.mxu0 0.0
        %5596 = vmatprep.subr.mxu0 0.0
        %5597 = vmatpush1.msra.mxu0 0.0
        %5598 = vmatprep.subr.mxu0 0.0
        %5599 = vmatpush1.msra.mxu0 0.0
        %5600 = vmatprep.subr.mxu0 0.0
        %5601 = vmatpush1.msra.mxu0 0.0
        %5602 = vmatprep.subr.mxu0 0.0
        %5603 = vmatpush1.msra.mxu0 0.0
        %5604 = vmatprep.subr.mxu0 0.0
        %5605 = vmatpush1.msra.mxu0 0.0
        %5606 = vmatprep.subr.mxu0 0.0
        %5607 = vmatpush1.msra.mxu0 0.0
        %5608 = vmatprep.mubr.f32.mxu0 0.0
        %v5609 = vand.u32 %v213, 4294901760
        %5610 = vmatmul.mubr.f32.gmra.mrb[0].mxu0 %v5609
        %v5611 = vpop.f32.mrb[0].mxu0
        %v5612 = vadd.f32 %v5508, %v5611
        %v5613 = vpop.f32.mrb[0].mxu0
        %v5614 = vadd.f32 %v5510, %v5613
        %5615 = vdwg.mxu0
        %v5616 = vand.u32 %v227, 4294901760
        %5617 = vmatprep.subr.mxu0 %v5616
        %v5618 = vand.u32 %v226, 4294901760
        %5619 = vmatpush1.msra.mxu0 %v5618
        %v5620 = vand.u32 %v244, 4294901760
        %5621 = vmatprep.subr.mxu0 %v5620
        %v5622 = vand.u32 %v243, 4294901760
        %5623 = vmatpush1.msra.mxu0 %v5622
        %v5624 = vand.u32 %v261, 4294901760
        %5625 = vmatprep.subr.mxu0 %v5624
        %v5626 = vand.u32 %v260, 4294901760
        %5627 = vmatpush1.msra.mxu0 %v5626
        %v5628 = vand.u32 %v278, 4294901760
        %5629 = vmatprep.subr.mxu0 %v5628
        %v5630 = vand.u32 %v277, 4294901760
        %5631 = vmatpush1.msra.mxu0 %v5630
        %v5632 = vand.u32 %v295, 4294901760
        %5633 = vmatprep.subr.mxu0 %v5632
        %v5634 = vand.u32 %v294, 4294901760
        %5635 = vmatpush1.msra.mxu0 %v5634
        %v5636 = vand.u32 %v312, 4294901760
        %5637 = vmatprep.subr.mxu0 %v5636
        %v5638 = vand.u32 %v311, 4294901760
        %5639 = vmatpush1.msra.mxu0 %v5638
        %v5640 = vand.u32 %v329, 4294901760
        %5641 = vmatprep.subr.mxu0 %v5640
        %v5642 = vand.u32 %v328, 4294901760
        %5643 = vmatpush1.msra.mxu0 %v5642
        %v5644 = vand.u32 %v346, 4294901760
        %5645 = vmatprep.subr.mxu0 %v5644
        %v5646 = vand.u32 %v345, 4294901760
        %5647 = vmatpush1.msra.mxu0 %v5646
        %v5648 = vand.u32 %v363, 4294901760
        %5649 = vmatprep.subr.mxu0 %v5648
        %v5650 = vand.u32 %v362, 4294901760
        %5651 = vmatpush1.msra.mxu0 %v5650
        %v5652 = vand.u32 %v380, 4294901760
        %5653 = vmatprep.subr.mxu0 %v5652
        %v5654 = vand.u32 %v379, 4294901760
        %5655 = vmatpush1.msra.mxu0 %v5654
        %v5656 = vand.u32 %v397, 4294901760
        %5657 = vmatprep.subr.mxu0 %v5656
        %v5658 = vand.u32 %v396, 4294901760
        %5659 = vmatpush1.msra.mxu0 %v5658
        %v5660 = vand.u32 %v414, 4294901760
        %5661 = vmatprep.subr.mxu0 %v5660
        %v5662 = vand.u32 %v413, 4294901760
        %5663 = vmatpush1.msra.mxu0 %v5662
        %v5664 = vand.u32 %v431, 4294901760
        %5665 = vmatprep.subr.mxu0 %v5664
        %v5666 = vand.u32 %v430, 4294901760
        %5667 = vmatpush1.msra.mxu0 %v5666
        %v5668 = vand.u32 %v448, 4294901760
        %5669 = vmatprep.subr.mxu0 %v5668
        %v5670 = vand.u32 %v447, 4294901760
        %5671 = vmatpush1.msra.mxu0 %v5670
        %v5672 = vand.u32 %v465, 4294901760
        %5673 = vmatprep.subr.mxu0 %v5672
        %v5674 = vand.u32 %v464, 4294901760
        %5675 = vmatpush1.msra.mxu0 %v5674
        %v5676 = vand.u32 %v482, 4294901760
        %5677 = vmatprep.subr.mxu0 %v5676
        %v5678 = vand.u32 %v481, 4294901760
        %5679 = vmatpush1.msra.mxu0 %v5678
        %5680 = vmatprep.subr.mxu0 0.0
        %5681 = vmatpush1.msra.mxu0 0.0
        %5682 = vmatprep.subr.mxu0 0.0
        %5683 = vmatpush1.msra.mxu0 0.0
        %5684 = vmatprep.subr.mxu0 0.0
        %5685 = vmatpush1.msra.mxu0 0.0
        %5686 = vmatprep.subr.mxu0 0.0
        %5687 = vmatpush1.msra.mxu0 0.0
        %5688 = vmatprep.subr.mxu0 0.0
        %5689 = vmatpush1.msra.mxu0 0.0
        %5690 = vmatprep.subr.mxu0 0.0
        %5691 = vmatpush1.msra.mxu0 0.0
        %5692 = vmatprep.subr.mxu0 0.0
        %5693 = vmatpush1.msra.mxu0 0.0
        %5694 = vmatprep.subr.mxu0 0.0
        %5695 = vmatpush1.msra.mxu0 0.0
        %5696 = vmatprep.subr.mxu0 0.0
        %5697 = vmatpush1.msra.mxu0 0.0
        %5698 = vmatprep.subr.mxu0 0.0
        %5699 = vmatpush1.msra.mxu0 0.0
        %5700 = vmatprep.subr.mxu0 0.0
        %5701 = vmatpush1.msra.mxu0 0.0
        %5702 = vmatprep.subr.mxu0 0.0
        %5703 = vmatpush1.msra.mxu0 0.0
        %5704 = vmatprep.subr.mxu0 0.0
        %5705 = vmatpush1.msra.mxu0 0.0
        %5706 = vmatprep.subr.mxu0 0.0
        %5707 = vmatpush1.msra.mxu0 0.0
        %5708 = vmatprep.subr.mxu0 0.0
        %5709 = vmatpush1.msra.mxu0 0.0
        %5710 = vmatprep.subr.mxu0 0.0
        %5711 = vmatpush1.msra.mxu0 0.0
        %5712 = vmatprep.mubr.f32.mxu0 0.0
        %v5713 = vand.u32 %v213, 4294901760
        %v5714 = vsub.f32 %v213, %v5713
        %v5715 = vand.u32 %v5714, 4294901760
        %v5716 = vsub.f32 %v5714, %v5715
        %v5717 = vand.u32 %v5716, 4294901760
        %5718 = vmatmul.mubr.f32.gmra.mrb[0].mxu0 %v5717
        %v5719 = vpop.f32.mrb[0].mxu0
        %v5720 = vadd.f32 0.0, %v5719
        %v5721 = vpop.f32.mrb[0].mxu0
        %v5722 = vadd.f32 0.0, %v5721
        %5723 = vdwg.mxu0
        %v5724 = vand.u32 %v227, 4294901760
        %v5725 = vsub.f32 %v227, %v5724
        %v5726 = vand.u32 %v5725, 4294901760
        %v5727 = vsub.f32 %v5725, %v5726
        %v5728 = vand.u32 %v5727, 4294901760
        %5729 = vmatprep.subr.mxu0 %v5728
        %v5730 = vand.u32 %v226, 4294901760
        %v5731 = vsub.f32 %v226, %v5730
        %v5732 = vand.u32 %v5731, 4294901760
        %v5733 = vsub.f32 %v5731, %v5732
        %v5734 = vand.u32 %v5733, 4294901760
        %5735 = vmatpush1.msra.mxu0 %v5734
        %v5736 = vand.u32 %v244, 4294901760
        %v5737 = vsub.f32 %v244, %v5736
        %v5738 = vand.u32 %v5737, 4294901760
        %v5739 = vsub.f32 %v5737, %v5738
        %v5740 = vand.u32 %v5739, 4294901760
        %5741 = vmatprep.subr.mxu0 %v5740
        %v5742 = vand.u32 %v243, 4294901760
        %v5743 = vsub.f32 %v243, %v5742
        %v5744 = vand.u32 %v5743, 4294901760
        %v5745 = vsub.f32 %v5743, %v5744
        %v5746 = vand.u32 %v5745, 4294901760
        %5747 = vmatpush1.msra.mxu0 %v5746
        %v5748 = vand.u32 %v261, 4294901760
        %v5749 = vsub.f32 %v261, %v5748
        %v5750 = vand.u32 %v5749, 4294901760
        %v5751 = vsub.f32 %v5749, %v5750
        %v5752 = vand.u32 %v5751, 4294901760
        %5753 = vmatprep.subr.mxu0 %v5752
        %v5754 = vand.u32 %v260, 4294901760
        %v5755 = vsub.f32 %v260, %v5754
        %v5756 = vand.u32 %v5755, 4294901760
        %v5757 = vsub.f32 %v5755, %v5756
        %v5758 = vand.u32 %v5757, 4294901760
        %5759 = vmatpush1.msra.mxu0 %v5758
        %v5760 = vand.u32 %v278, 4294901760
        %v5761 = vsub.f32 %v278, %v5760
        %v5762 = vand.u32 %v5761, 4294901760
        %v5763 = vsub.f32 %v5761, %v5762
        %v5764 = vand.u32 %v5763, 4294901760
        %5765 = vmatprep.subr.mxu0 %v5764
        %v5766 = vand.u32 %v277, 4294901760
        %v5767 = vsub.f32 %v277, %v5766
        %v5768 = vand.u32 %v5767, 4294901760
        %v5769 = vsub.f32 %v5767, %v5768
        %v5770 = vand.u32 %v5769, 4294901760
        %5771 = vmatpush1.msra.mxu0 %v5770
        %v5772 = vand.u32 %v295, 4294901760
        %v5773 = vsub.f32 %v295, %v5772
        %v5774 = vand.u32 %v5773, 4294901760
        %v5775 = vsub.f32 %v5773, %v5774
        %v5776 = vand.u32 %v5775, 4294901760
        %5777 = vmatprep.subr.mxu0 %v5776
        %v5778 = vand.u32 %v294, 4294901760
        %v5779 = vsub.f32 %v294, %v5778
        %v5780 = vand.u32 %v5779, 4294901760
        %v5781 = vsub.f32 %v5779, %v5780
        %v5782 = vand.u32 %v5781, 4294901760
        %5783 = vmatpush1.msra.mxu0 %v5782
        %v5784 = vand.u32 %v312, 4294901760
        %v5785 = vsub.f32 %v312, %v5784
        %v5786 = vand.u32 %v5785, 4294901760
        %v5787 = vsub.f32 %v5785, %v5786
        %v5788 = vand.u32 %v5787, 4294901760
        %5789 = vmatprep.subr.mxu0 %v5788
        %v5790 = vand.u32 %v311, 4294901760
        %v5791 = vsub.f32 %v311, %v5790
        %v5792 = vand.u32 %v5791, 4294901760
        %v5793 = vsub.f32 %v5791, %v5792
        %v5794 = vand.u32 %v5793, 4294901760
        %5795 = vmatpush1.msra.mxu0 %v5794
        %v5796 = vand.u32 %v329, 4294901760
        %v5797 = vsub.f32 %v329, %v5796
        %v5798 = vand.u32 %v5797, 4294901760
        %v5799 = vsub.f32 %v5797, %v5798
        %v5800 = vand.u32 %v5799, 4294901760
        %5801 = vmatprep.subr.mxu0 %v5800
        %v5802 = vand.u32 %v328, 4294901760
        %v5803 = vsub.f32 %v328, %v5802
        %v5804 = vand.u32 %v5803, 4294901760
        %v5805 = vsub.f32 %v5803, %v5804
        %v5806 = vand.u32 %v5805, 4294901760
        %5807 = vmatpush1.msra.mxu0 %v5806
        %v5808 = vand.u32 %v346, 4294901760
        %v5809 = vsub.f32 %v346, %v5808
        %v5810 = vand.u32 %v5809, 4294901760
        %v5811 = vsub.f32 %v5809, %v5810
        %v5812 = vand.u32 %v5811, 4294901760
        %5813 = vmatprep.subr.mxu0 %v5812
        %v5814 = vand.u32 %v345, 4294901760
        %v5815 = vsub.f32 %v345, %v5814
        %v5816 = vand.u32 %v5815, 4294901760
        %v5817 = vsub.f32 %v5815, %v5816
        %v5818 = vand.u32 %v5817, 4294901760
        %5819 = vmatpush1.msra.mxu0 %v5818
        %v5820 = vand.u32 %v363, 4294901760
        %v5821 = vsub.f32 %v363, %v5820
        %v5822 = vand.u32 %v5821, 4294901760
        %v5823 = vsub.f32 %v5821, %v5822
        %v5824 = vand.u32 %v5823, 4294901760
        %5825 = vmatprep.subr.mxu0 %v5824
        %v5826 = vand.u32 %v362, 4294901760
        %v5827 = vsub.f32 %v362, %v5826
        %v5828 = vand.u32 %v5827, 4294901760
        %v5829 = vsub.f32 %v5827, %v5828
        %v5830 = vand.u32 %v5829, 4294901760
        %5831 = vmatpush1.msra.mxu0 %v5830
        %v5832 = vand.u32 %v380, 4294901760
        %v5833 = vsub.f32 %v380, %v5832
        %v5834 = vand.u32 %v5833, 4294901760
        %v5835 = vsub.f32 %v5833, %v5834
        %v5836 = vand.u32 %v5835, 4294901760
        %5837 = vmatprep.subr.mxu0 %v5836
        %v5838 = vand.u32 %v379, 4294901760
        %v5839 = vsub.f32 %v379, %v5838
        %v5840 = vand.u32 %v5839, 4294901760
        %v5841 = vsub.f32 %v5839, %v5840
        %v5842 = vand.u32 %v5841, 4294901760
        %5843 = vmatpush1.msra.mxu0 %v5842
        %v5844 = vand.u32 %v397, 4294901760
        %v5845 = vsub.f32 %v397, %v5844
        %v5846 = vand.u32 %v5845, 4294901760
        %v5847 = vsub.f32 %v5845, %v5846
        %v5848 = vand.u32 %v5847, 4294901760
        %5849 = vmatprep.subr.mxu0 %v5848
        %v5850 = vand.u32 %v396, 4294901760
        %v5851 = vsub.f32 %v396, %v5850
        %v5852 = vand.u32 %v5851, 4294901760
        %v5853 = vsub.f32 %v5851, %v5852
        %v5854 = vand.u32 %v5853, 4294901760
        %5855 = vmatpush1.msra.mxu0 %v5854
        %v5856 = vand.u32 %v414, 4294901760
        %v5857 = vsub.f32 %v414, %v5856
        %v5858 = vand.u32 %v5857, 4294901760
        %v5859 = vsub.f32 %v5857, %v5858
        %v5860 = vand.u32 %v5859, 4294901760
        %5861 = vmatprep.subr.mxu0 %v5860
        %v5862 = vand.u32 %v413, 4294901760
        %v5863 = vsub.f32 %v413, %v5862
        %v5864 = vand.u32 %v5863, 4294901760
        %v5865 = vsub.f32 %v5863, %v5864
        %v5866 = vand.u32 %v5865, 4294901760
        %5867 = vmatpush1.msra.mxu0 %v5866
        %v5868 = vand.u32 %v431, 4294901760
        %v5869 = vsub.f32 %v431, %v5868
        %v5870 = vand.u32 %v5869, 4294901760
        %v5871 = vsub.f32 %v5869, %v5870
        %v5872 = vand.u32 %v5871, 4294901760
        %5873 = vmatprep.subr.mxu0 %v5872
        %v5874 = vand.u32 %v430, 4294901760
        %v5875 = vsub.f32 %v430, %v5874
        %v5876 = vand.u32 %v5875, 4294901760
        %v5877 = vsub.f32 %v5875, %v5876
        %v5878 = vand.u32 %v5877, 4294901760
        %5879 = vmatpush1.msra.mxu0 %v5878
        %v5880 = vand.u32 %v448, 4294901760
        %v5881 = vsub.f32 %v448, %v5880
        %v5882 = vand.u32 %v5881, 4294901760
        %v5883 = vsub.f32 %v5881, %v5882
        %v5884 = vand.u32 %v5883, 4294901760
        %5885 = vmatprep.subr.mxu0 %v5884
        %v5886 = vand.u32 %v447, 4294901760
        %v5887 = vsub.f32 %v447, %v5886
        %v5888 = vand.u32 %v5887, 4294901760
        %v5889 = vsub.f32 %v5887, %v5888
        %v5890 = vand.u32 %v5889, 4294901760
        %5891 = vmatpush1.msra.mxu0 %v5890
        %v5892 = vand.u32 %v465, 4294901760
        %v5893 = vsub.f32 %v465, %v5892
        %v5894 = vand.u32 %v5893, 4294901760
        %v5895 = vsub.f32 %v5893, %v5894
        %v5896 = vand.u32 %v5895, 4294901760
        %5897 = vmatprep.subr.mxu0 %v5896
        %v5898 = vand.u32 %v464, 4294901760
        %v5899 = vsub.f32 %v464, %v5898
        %v5900 = vand.u32 %v5899, 4294901760
        %v5901 = vsub.f32 %v5899, %v5900
        %v5902 = vand.u32 %v5901, 4294901760
        %5903 = vmatpush1.msra.mxu0 %v5902
        %v5904 = vand.u32 %v482, 4294901760
        %v5905 = vsub.f32 %v482, %v5904
        %v5906 = vand.u32 %v5905, 4294901760
        %v5907 = vsub.f32 %v5905, %v5906
        %v5908 = vand.u32 %v5907, 4294901760
        %5909 = vmatprep.subr.mxu0 %v5908
        %v5910 = vand.u32 %v481, 4294901760
        %v5911 = vsub.f32 %v481, %v5910
        %v5912 = vand.u32 %v5911, 4294901760
        %v5913 = vsub.f32 %v5911, %v5912
        %v5914 = vand.u32 %v5913, 4294901760
        %5915 = vmatpush1.msra.mxu0 %v5914
        %5916 = vmatprep.subr.mxu0 0.0
        %5917 = vmatpush1.msra.mxu0 0.0
        %5918 = vmatprep.subr.mxu0 0.0
        %5919 = vmatpush1.msra.mxu0 0.0
        %5920 = vmatprep.subr.mxu0 0.0
        %5921 = vmatpush1.msra.mxu0 0.0
        %5922 = vmatprep.subr.mxu0 0.0
        %5923 = vmatpush1.msra.mxu0 0.0
        %5924 = vmatprep.subr.mxu0 0.0
        %5925 = vmatpush1.msra.mxu0 0.0
        %5926 = vmatprep.subr.mxu0 0.0
        %5927 = vmatpush1.msra.mxu0 0.0
        %5928 = vmatprep.subr.mxu0 0.0
        %5929 = vmatpush1.msra.mxu0 0.0
        %5930 = vmatprep.subr.mxu0 0.0
        %5931 = vmatpush1.msra.mxu0 0.0
        %5932 = vmatprep.subr.mxu0 0.0
        %5933 = vmatpush1.msra.mxu0 0.0
        %5934 = vmatprep.subr.mxu0 0.0
        %5935 = vmatpush1.msra.mxu0 0.0
        %5936 = vmatprep.subr.mxu0 0.0
        %5937 = vmatpush1.msra.mxu0 0.0
        %5938 = vmatprep.subr.mxu0 0.0
        %5939 = vmatpush1.msra.mxu0 0.0
        %5940 = vmatprep.subr.mxu0 0.0
        %5941 = vmatpush1.msra.mxu0 0.0
        %5942 = vmatprep.subr.mxu0 0.0
        %5943 = vmatpush1.msra.mxu0 0.0
        %5944 = vmatprep.subr.mxu0 0.0
        %5945 = vmatpush1.msra.mxu0 0.0
        %5946 = vmatprep.subr.mxu0 0.0
        %5947 = vmatpush1.msra.mxu0 0.0
        %5948 = vmatprep.mubr.f32.mxu0 0.0
        %v5949 = vand.u32 %v213, 4294901760
        %5950 = vmatmul.mubr.f32.gmra.mrb[0].mxu0 %v5949
        %v5951 = vpop.f32.mrb[0].mxu0
        %v5952 = vadd.f32 %v5720, %v5951
        %v5953 = vpop.f32.mrb[0].mxu0
        %v5954 = vadd.f32 %v5722, %v5953
        %5955 = vdwg.mxu0
        %v5956 = vand.u32 %v227, 4294901760
        %v5957 = vsub.f32 %v227, %v5956
        %5958 = vmatprep.subr.mxu0 %v5957
        %v5959 = vand.u32 %v226, 4294901760
        %v5960 = vsub.f32 %v226, %v5959
        %5961 = vmatpush1.msra.mxu0 %v5960
        %v5962 = vand.u32 %v244, 4294901760
        %v5963 = vsub.f32 %v244, %v5962
        %5964 = vmatprep.subr.mxu0 %v5963
        %v5965 = vand.u32 %v243, 4294901760
        %v5966 = vsub.f32 %v243, %v5965
        %5967 = vmatpush1.msra.mxu0 %v5966
        %v5968 = vand.u32 %v261, 4294901760
        %v5969 = vsub.f32 %v261, %v5968
        %5970 = vmatprep.subr.mxu0 %v5969
        %v5971 = vand.u32 %v260, 4294901760
        %v5972 = vsub.f32 %v260, %v5971
        %5973 = vmatpush1.msra.mxu0 %v5972
        %v5974 = vand.u32 %v278, 4294901760
        %v5975 = vsub.f32 %v278, %v5974
        %5976 = vmatprep.subr.mxu0 %v5975
        %v5977 = vand.u32 %v277, 4294901760
        %v5978 = vsub.f32 %v277, %v5977
        %5979 = vmatpush1.msra.mxu0 %v5978
        %v5980 = vand.u32 %v295, 4294901760
        %v5981 = vsub.f32 %v295, %v5980
        %5982 = vmatprep.subr.mxu0 %v5981
        %v5983 = vand.u32 %v294, 4294901760
        %v5984 = vsub.f32 %v294, %v5983
        %5985 = vmatpush1.msra.mxu0 %v5984
        %v5986 = vand.u32 %v312, 4294901760
        %v5987 = vsub.f32 %v312, %v5986
        %5988 = vmatprep.subr.mxu0 %v5987
        %v5989 = vand.u32 %v311, 4294901760
        %v5990 = vsub.f32 %v311, %v5989
        %5991 = vmatpush1.msra.mxu0 %v5990
        %v5992 = vand.u32 %v329, 4294901760
        %v5993 = vsub.f32 %v329, %v5992
        %5994 = vmatprep.subr.mxu0 %v5993
        %v5995 = vand.u32 %v328, 4294901760
        %v5996 = vsub.f32 %v328, %v5995
        %5997 = vmatpush1.msra.mxu0 %v5996
        %v5998 = vand.u32 %v346, 4294901760
        %v5999 = vsub.f32 %v346, %v5998
        %6000 = vmatprep.subr.mxu0 %v5999
        %v6001 = vand.u32 %v345, 4294901760
        %v6002 = vsub.f32 %v345, %v6001
        %6003 = vmatpush1.msra.mxu0 %v6002
        %v6004 = vand.u32 %v363, 4294901760
        %v6005 = vsub.f32 %v363, %v6004
        %6006 = vmatprep.subr.mxu0 %v6005
        %v6007 = vand.u32 %v362, 4294901760
        %v6008 = vsub.f32 %v362, %v6007
        %6009 = vmatpush1.msra.mxu0 %v6008
        %v6010 = vand.u32 %v380, 4294901760
        %v6011 = vsub.f32 %v380, %v6010
        %6012 = vmatprep.subr.mxu0 %v6011
        %v6013 = vand.u32 %v379, 4294901760
        %v6014 = vsub.f32 %v379, %v6013
        %6015 = vmatpush1.msra.mxu0 %v6014
        %v6016 = vand.u32 %v397, 4294901760
        %v6017 = vsub.f32 %v397, %v6016
        %6018 = vmatprep.subr.mxu0 %v6017
        %v6019 = vand.u32 %v396, 4294901760
        %v6020 = vsub.f32 %v396, %v6019
        %6021 = vmatpush1.msra.mxu0 %v6020
        %v6022 = vand.u32 %v414, 4294901760
        %v6023 = vsub.f32 %v414, %v6022
        %6024 = vmatprep.subr.mxu0 %v6023
        %v6025 = vand.u32 %v413, 4294901760
        %v6026 = vsub.f32 %v413, %v6025
        %6027 = vmatpush1.msra.mxu0 %v6026
        %v6028 = vand.u32 %v431, 4294901760
        %v6029 = vsub.f32 %v431, %v6028
        %6030 = vmatprep.subr.mxu0 %v6029
        %v6031 = vand.u32 %v430, 4294901760
        %v6032 = vsub.f32 %v430, %v6031
        %6033 = vmatpush1.msra.mxu0 %v6032
        %v6034 = vand.u32 %v448, 4294901760
        %v6035 = vsub.f32 %v448, %v6034
        %6036 = vmatprep.subr.mxu0 %v6035
        %v6037 = vand.u32 %v447, 4294901760
        %v6038 = vsub.f32 %v447, %v6037
        %6039 = vmatpush1.msra.mxu0 %v6038
        %v6040 = vand.u32 %v465, 4294901760
        %v6041 = vsub.f32 %v465, %v6040
        %6042 = vmatprep.subr.mxu0 %v6041
        %v6043 = vand.u32 %v464, 4294901760
        %v6044 = vsub.f32 %v464, %v6043
        %6045 = vmatpush1.msra.mxu0 %v6044
        %v6046 = vand.u32 %v482, 4294901760
        %v6047 = vsub.f32 %v482, %v6046
        %6048 = vmatprep.subr.mxu0 %v6047
        %v6049 = vand.u32 %v481, 4294901760
        %v6050 = vsub.f32 %v481, %v6049
        %6051 = vmatpush1.msra.mxu0 %v6050
        %6052 = vmatprep.subr.mxu0 0.0
        %6053 = vmatpush1.msra.mxu0 0.0
        %6054 = vmatprep.subr.mxu0 0.0
        %6055 = vmatpush1.msra.mxu0 0.0
        %6056 = vmatprep.subr.mxu0 0.0
        %6057 = vmatpush1.msra.mxu0 0.0
        %6058 = vmatprep.subr.mxu0 0.0
        %6059 = vmatpush1.msra.mxu0 0.0
        %6060 = vmatprep.subr.mxu0 0.0
        %6061 = vmatpush1.msra.mxu0 0.0
        %6062 = vmatprep.subr.mxu0 0.0
        %6063 = vmatpush1.msra.mxu0 0.0
        %6064 = vmatprep.subr.mxu0 0.0
        %6065 = vmatpush1.msra.mxu0 0.0
        %6066 = vmatprep.subr.mxu0 0.0
        %6067 = vmatpush1.msra.mxu0 0.0
        %6068 = vmatprep.subr.mxu0 0.0
        %6069 = vmatpush1.msra.mxu0 0.0
        %6070 = vmatprep.subr.mxu0 0.0
        %6071 = vmatpush1.msra.mxu0 0.0
        %6072 = vmatprep.subr.mxu0 0.0
        %6073 = vmatpush1.msra.mxu0 0.0
        %6074 = vmatprep.subr.mxu0 0.0
        %6075 = vmatpush1.msra.mxu0 0.0
        %6076 = vmatprep.subr.mxu0 0.0
        %6077 = vmatpush1.msra.mxu0 0.0
        %6078 = vmatprep.subr.mxu0 0.0
        %6079 = vmatpush1.msra.mxu0 0.0
        %6080 = vmatprep.subr.mxu0 0.0
        %6081 = vmatpush1.msra.mxu0 0.0
        %6082 = vmatprep.subr.mxu0 0.0
        %6083 = vmatpush1.msra.mxu0 0.0
        %6084 = vmatprep.mubr.f32.mxu0 0.0
        %v6085 = vand.u32 %v213, 4294901760
        %v6086 = vsub.f32 %v213, %v6085
        %6087 = vmatmul.mubr.f32.gmra.mrb[0].mxu0 %v6086
        %v6088 = vpop.f32.mrb[0].mxu0
        %v6089 = vadd.f32 %v5952, %v6088
        %v6090 = vpop.f32.mrb[0].mxu0
        %v6091 = vadd.f32 %v5954, %v6090
        %6092 = vdwg.mxu0
        %v6093 = vand.u32 %v227, 4294901760
        %6094 = vmatprep.subr.mxu0 %v6093
        %v6095 = vand.u32 %v226, 4294901760
        %6096 = vmatpush1.msra.mxu0 %v6095
        %v6097 = vand.u32 %v244, 4294901760
        %6098 = vmatprep.subr.mxu0 %v6097
        %v6099 = vand.u32 %v243, 4294901760
        %6100 = vmatpush1.msra.mxu0 %v6099
        %v6101 = vand.u32 %v261, 4294901760
        %6102 = vmatprep.subr.mxu0 %v6101
        %v6103 = vand.u32 %v260, 4294901760
        %6104 = vmatpush1.msra.mxu0 %v6103
        %v6105 = vand.u32 %v278, 4294901760
        %6106 = vmatprep.subr.mxu0 %v6105
        %v6107 = vand.u32 %v277, 4294901760
        %6108 = vmatpush1.msra.mxu0 %v6107
        %v6109 = vand.u32 %v295, 4294901760
        %6110 = vmatprep.subr.mxu0 %v6109
        %v6111 = vand.u32 %v294, 4294901760
        %6112 = vmatpush1.msra.mxu0 %v6111
        %v6113 = vand.u32 %v312, 4294901760
        %6114 = vmatprep.subr.mxu0 %v6113
        %v6115 = vand.u32 %v311, 4294901760
        %6116 = vmatpush1.msra.mxu0 %v6115
        %v6117 = vand.u32 %v329, 4294901760
        %6118 = vmatprep.subr.mxu0 %v6117
        %v6119 = vand.u32 %v328, 4294901760
        %6120 = vmatpush1.msra.mxu0 %v6119
        %v6121 = vand.u32 %v346, 4294901760
        %6122 = vmatprep.subr.mxu0 %v6121
        %v6123 = vand.u32 %v345, 4294901760
        %6124 = vmatpush1.msra.mxu0 %v6123
        %v6125 = vand.u32 %v363, 4294901760
        %6126 = vmatprep.subr.mxu0 %v6125
        %v6127 = vand.u32 %v362, 4294901760
        %6128 = vmatpush1.msra.mxu0 %v6127
        %v6129 = vand.u32 %v380, 4294901760
        %6130 = vmatprep.subr.mxu0 %v6129
        %v6131 = vand.u32 %v379, 4294901760
        %6132 = vmatpush1.msra.mxu0 %v6131
        %v6133 = vand.u32 %v397, 4294901760
        %6134 = vmatprep.subr.mxu0 %v6133
        %v6135 = vand.u32 %v396, 4294901760
        %6136 = vmatpush1.msra.mxu0 %v6135
        %v6137 = vand.u32 %v414, 4294901760
        %6138 = vmatprep.subr.mxu0 %v6137
        %v6139 = vand.u32 %v413, 4294901760
        %6140 = vmatpush1.msra.mxu0 %v6139
        %v6141 = vand.u32 %v431, 4294901760
        %6142 = vmatprep.subr.mxu0 %v6141
        %v6143 = vand.u32 %v430, 4294901760
        %6144 = vmatpush1.msra.mxu0 %v6143
        %v6145 = vand.u32 %v448, 4294901760
        %6146 = vmatprep.subr.mxu0 %v6145
        %v6147 = vand.u32 %v447, 4294901760
        %6148 = vmatpush1.msra.mxu0 %v6147
        %v6149 = vand.u32 %v465, 4294901760
        %6150 = vmatprep.subr.mxu0 %v6149
        %v6151 = vand.u32 %v464, 4294901760
        %6152 = vmatpush1.msra.mxu0 %v6151
        %v6153 = vand.u32 %v482, 4294901760
        %6154 = vmatprep.subr.mxu0 %v6153
        %v6155 = vand.u32 %v481, 4294901760
        %6156 = vmatpush1.msra.mxu0 %v6155
        %6157 = vmatprep.subr.mxu0 0.0
        %6158 = vmatpush1.msra.mxu0 0.0
        %6159 = vmatprep.subr.mxu0 0.0
        %6160 = vmatpush1.msra.mxu0 0.0
        %6161 = vmatprep.subr.mxu0 0.0
        %6162 = vmatpush1.msra.mxu0 0.0
        %6163 = vmatprep.subr.mxu0 0.0
        %6164 = vmatpush1.msra.mxu0 0.0
        %6165 = vmatprep.subr.mxu0 0.0
        %6166 = vmatpush1.msra.mxu0 0.0
        %6167 = vmatprep.subr.mxu0 0.0
        %6168 = vmatpush1.msra.mxu0 0.0
        %6169 = vmatprep.subr.mxu0 0.0
        %6170 = vmatpush1.msra.mxu0 0.0
        %6171 = vmatprep.subr.mxu0 0.0
        %6172 = vmatpush1.msra.mxu0 0.0
        %6173 = vmatprep.subr.mxu0 0.0
        %6174 = vmatpush1.msra.mxu0 0.0
        %6175 = vmatprep.subr.mxu0 0.0
        %6176 = vmatpush1.msra.mxu0 0.0
        %6177 = vmatprep.subr.mxu0 0.0
        %6178 = vmatpush1.msra.mxu0 0.0
        %6179 = vmatprep.subr.mxu0 0.0
        %6180 = vmatpush1.msra.mxu0 0.0
        %6181 = vmatprep.subr.mxu0 0.0
        %6182 = vmatpush1.msra.mxu0 0.0
        %6183 = vmatprep.subr.mxu0 0.0
        %6184 = vmatpush1.msra.mxu0 0.0
        %6185 = vmatprep.subr.mxu0 0.0
        %6186 = vmatpush1.msra.mxu0 0.0
        %6187 = vmatprep.subr.mxu0 0.0
        %6188 = vmatpush1.msra.mxu0 0.0
        %6189 = vmatprep.mubr.f32.mxu0 0.0
        %v6190 = vand.u32 %v213, 4294901760
        %v6191 = vsub.f32 %v213, %v6190
        %v6192 = vand.u32 %v6191, 4294901760
        %6193 = vmatmul.mubr.f32.gmra.mrb[0].mxu0 %v6192
        %v6194 = vpop.f32.mrb[0].mxu0
        %v6195 = vadd.f32 %v6089, %v6194
        %v6196 = vpop.f32.mrb[0].mxu0
        %v6197 = vadd.f32 %v6091, %v6196
        %6198 = vdwg.mxu0
        %v6199 = vand.u32 %v227, 4294901760
        %v6200 = vsub.f32 %v227, %v6199
        %v6201 = vand.u32 %v6200, 4294901760
        %6202 = vmatprep.subr.mxu0 %v6201
        %v6203 = vand.u32 %v226, 4294901760
        %v6204 = vsub.f32 %v226, %v6203
        %v6205 = vand.u32 %v6204, 4294901760
        %6206 = vmatpush1.msra.mxu0 %v6205
        %v6207 = vand.u32 %v244, 4294901760
        %v6208 = vsub.f32 %v244, %v6207
        %v6209 = vand.u32 %v6208, 4294901760
        %6210 = vmatprep.subr.mxu0 %v6209
        %v6211 = vand.u32 %v243, 4294901760
        %v6212 = vsub.f32 %v243, %v6211
        %v6213 = vand.u32 %v6212, 4294901760
        %6214 = vmatpush1.msra.mxu0 %v6213
        %v6215 = vand.u32 %v261, 4294901760
        %v6216 = vsub.f32 %v261, %v6215
        %v6217 = vand.u32 %v6216, 4294901760
        %6218 = vmatprep.subr.mxu0 %v6217
        %v6219 = vand.u32 %v260, 4294901760
        %v6220 = vsub.f32 %v260, %v6219
        %v6221 = vand.u32 %v6220, 4294901760
        %6222 = vmatpush1.msra.mxu0 %v6221
        %v6223 = vand.u32 %v278, 4294901760
        %v6224 = vsub.f32 %v278, %v6223
        %v6225 = vand.u32 %v6224, 4294901760
        %6226 = vmatprep.subr.mxu0 %v6225
        %v6227 = vand.u32 %v277, 4294901760
        %v6228 = vsub.f32 %v277, %v6227
        %v6229 = vand.u32 %v6228, 4294901760
        %6230 = vmatpush1.msra.mxu0 %v6229
        %v6231 = vand.u32 %v295, 4294901760
        %v6232 = vsub.f32 %v295, %v6231
        %v6233 = vand.u32 %v6232, 4294901760
        %6234 = vmatprep.subr.mxu0 %v6233
        %v6235 = vand.u32 %v294, 4294901760
        %v6236 = vsub.f32 %v294, %v6235
        %v6237 = vand.u32 %v6236, 4294901760
        %6238 = vmatpush1.msra.mxu0 %v6237
        %v6239 = vand.u32 %v312, 4294901760
        %v6240 = vsub.f32 %v312, %v6239
        %v6241 = vand.u32 %v6240, 4294901760
        %6242 = vmatprep.subr.mxu0 %v6241
        %v6243 = vand.u32 %v311, 4294901760
        %v6244 = vsub.f32 %v311, %v6243
        %v6245 = vand.u32 %v6244, 4294901760
        %6246 = vmatpush1.msra.mxu0 %v6245
        %v6247 = vand.u32 %v329, 4294901760
        %v6248 = vsub.f32 %v329, %v6247
        %v6249 = vand.u32 %v6248, 4294901760
        %6250 = vmatprep.subr.mxu0 %v6249
        %v6251 = vand.u32 %v328, 4294901760
        %v6252 = vsub.f32 %v328, %v6251
        %v6253 = vand.u32 %v6252, 4294901760
        %6254 = vmatpush1.msra.mxu0 %v6253
        %v6255 = vand.u32 %v346, 4294901760
        %v6256 = vsub.f32 %v346, %v6255
        %v6257 = vand.u32 %v6256, 4294901760
        %6258 = vmatprep.subr.mxu0 %v6257
        %v6259 = vand.u32 %v345, 4294901760
        %v6260 = vsub.f32 %v345, %v6259
        %v6261 = vand.u32 %v6260, 4294901760
        %6262 = vmatpush1.msra.mxu0 %v6261
        %v6263 = vand.u32 %v363, 4294901760
        %v6264 = vsub.f32 %v363, %v6263
        %v6265 = vand.u32 %v6264, 4294901760
        %6266 = vmatprep.subr.mxu0 %v6265
        %v6267 = vand.u32 %v362, 4294901760
        %v6268 = vsub.f32 %v362, %v6267
        %v6269 = vand.u32 %v6268, 4294901760
        %6270 = vmatpush1.msra.mxu0 %v6269
        %v6271 = vand.u32 %v380, 4294901760
        %v6272 = vsub.f32 %v380, %v6271
        %v6273 = vand.u32 %v6272, 4294901760
        %6274 = vmatprep.subr.mxu0 %v6273
        %v6275 = vand.u32 %v379, 4294901760
        %v6276 = vsub.f32 %v379, %v6275
        %v6277 = vand.u32 %v6276, 4294901760
        %6278 = vmatpush1.msra.mxu0 %v6277
        %v6279 = vand.u32 %v397, 4294901760
        %v6280 = vsub.f32 %v397, %v6279
        %v6281 = vand.u32 %v6280, 4294901760
        %6282 = vmatprep.subr.mxu0 %v6281
        %v6283 = vand.u32 %v396, 4294901760
        %v6284 = vsub.f32 %v396, %v6283
        %v6285 = vand.u32 %v6284, 4294901760
        %6286 = vmatpush1.msra.mxu0 %v6285
        %v6287 = vand.u32 %v414, 4294901760
        %v6288 = vsub.f32 %v414, %v6287
        %v6289 = vand.u32 %v6288, 4294901760
        %6290 = vmatprep.subr.mxu0 %v6289
        %v6291 = vand.u32 %v413, 4294901760
        %v6292 = vsub.f32 %v413, %v6291
        %v6293 = vand.u32 %v6292, 4294901760
        %6294 = vmatpush1.msra.mxu0 %v6293
        %v6295 = vand.u32 %v431, 4294901760
        %v6296 = vsub.f32 %v431, %v6295
        %v6297 = vand.u32 %v6296, 4294901760
        %6298 = vmatprep.subr.mxu0 %v6297
        %v6299 = vand.u32 %v430, 4294901760
        %v6300 = vsub.f32 %v430, %v6299
        %v6301 = vand.u32 %v6300, 4294901760
        %6302 = vmatpush1.msra.mxu0 %v6301
        %v6303 = vand.u32 %v448, 4294901760
        %v6304 = vsub.f32 %v448, %v6303
        %v6305 = vand.u32 %v6304, 4294901760
        %6306 = vmatprep.subr.mxu0 %v6305
        %v6307 = vand.u32 %v447, 4294901760
        %v6308 = vsub.f32 %v447, %v6307
        %v6309 = vand.u32 %v6308, 4294901760
        %6310 = vmatpush1.msra.mxu0 %v6309
        %v6311 = vand.u32 %v465, 4294901760
        %v6312 = vsub.f32 %v465, %v6311
        %v6313 = vand.u32 %v6312, 4294901760
        %6314 = vmatprep.subr.mxu0 %v6313
        %v6315 = vand.u32 %v464, 4294901760
        %v6316 = vsub.f32 %v464, %v6315
        %v6317 = vand.u32 %v6316, 4294901760
        %6318 = vmatpush1.msra.mxu0 %v6317
        %v6319 = vand.u32 %v482, 4294901760
        %v6320 = vsub.f32 %v482, %v6319
        %v6321 = vand.u32 %v6320, 4294901760
        %6322 = vmatprep.subr.mxu0 %v6321
        %v6323 = vand.u32 %v481, 4294901760
        %v6324 = vsub.f32 %v481, %v6323
        %v6325 = vand.u32 %v6324, 4294901760
        %6326 = vmatpush1.msra.mxu0 %v6325
        %6327 = vmatprep.subr.mxu0 0.0
        %6328 = vmatpush1.msra.mxu0 0.0
        %6329 = vmatprep.subr.mxu0 0.0
        %6330 = vmatpush1.msra.mxu0 0.0
        %6331 = vmatprep.subr.mxu0 0.0
        %6332 = vmatpush1.msra.mxu0 0.0
        %6333 = vmatprep.subr.mxu0 0.0
        %6334 = vmatpush1.msra.mxu0 0.0
        %6335 = vmatprep.subr.mxu0 0.0
        %6336 = vmatpush1.msra.mxu0 0.0
        %6337 = vmatprep.subr.mxu0 0.0
        %6338 = vmatpush1.msra.mxu0 0.0
        %6339 = vmatprep.subr.mxu0 0.0
        %6340 = vmatpush1.msra.mxu0 0.0
        %6341 = vmatprep.subr.mxu0 0.0
        %6342 = vmatpush1.msra.mxu0 0.0
        %6343 = vmatprep.subr.mxu0 0.0
        %6344 = vmatpush1.msra.mxu0 0.0
        %6345 = vmatprep.subr.mxu0 0.0
        %6346 = vmatpush1.msra.mxu0 0.0
        %6347 = vmatprep.subr.mxu0 0.0
        %6348 = vmatpush1.msra.mxu0 0.0
        %6349 = vmatprep.subr.mxu0 0.0
        %6350 = vmatpush1.msra.mxu0 0.0
        %6351 = vmatprep.subr.mxu0 0.0
        %6352 = vmatpush1.msra.mxu0 0.0
        %6353 = vmatprep.subr.mxu0 0.0
        %6354 = vmatpush1.msra.mxu0 0.0
        %6355 = vmatprep.subr.mxu0 0.0
        %6356 = vmatpush1.msra.mxu0 0.0
        %6357 = vmatprep.subr.mxu0 0.0
        %6358 = vmatpush1.msra.mxu0 0.0
        %6359 = vmatprep.mubr.f32.mxu0 0.0
        %v6360 = vand.u32 %v213, 4294901760
        %6361 = vmatmul.mubr.f32.gmra.mrb[0].mxu0 %v6360
        %v6362 = vpop.f32.mrb[0].mxu0
        %v6363 = vadd.f32 %v6195, %v6362
        %v6364 = vpop.f32.mrb[0].mxu0
        %v6365 = vadd.f32 %v6197, %v6364
        %6366 = vdwg.mxu0
        %v6367 = vand.u32 %v227, 4294901760
        %6368 = vmatprep.subr.mxu0 %v6367
        %v6369 = vand.u32 %v226, 4294901760
        %6370 = vmatpush1.msra.mxu0 %v6369
        %v6371 = vand.u32 %v244, 4294901760
        %6372 = vmatprep.subr.mxu0 %v6371
        %v6373 = vand.u32 %v243, 4294901760
        %6374 = vmatpush1.msra.mxu0 %v6373
        %v6375 = vand.u32 %v261, 4294901760
        %6376 = vmatprep.subr.mxu0 %v6375
        %v6377 = vand.u32 %v260, 4294901760
        %6378 = vmatpush1.msra.mxu0 %v6377
        %v6379 = vand.u32 %v278, 4294901760
        %6380 = vmatprep.subr.mxu0 %v6379
        %v6381 = vand.u32 %v277, 4294901760
        %6382 = vmatpush1.msra.mxu0 %v6381
        %v6383 = vand.u32 %v295, 4294901760
        %6384 = vmatprep.subr.mxu0 %v6383
        %v6385 = vand.u32 %v294, 4294901760
        %6386 = vmatpush1.msra.mxu0 %v6385
        %v6387 = vand.u32 %v312, 4294901760
        %6388 = vmatprep.subr.mxu0 %v6387
        %v6389 = vand.u32 %v311, 4294901760
        %6390 = vmatpush1.msra.mxu0 %v6389
        %v6391 = vand.u32 %v329, 4294901760
        %6392 = vmatprep.subr.mxu0 %v6391
        %v6393 = vand.u32 %v328, 4294901760
        %6394 = vmatpush1.msra.mxu0 %v6393
        %v6395 = vand.u32 %v346, 4294901760
        %6396 = vmatprep.subr.mxu0 %v6395
        %v6397 = vand.u32 %v345, 4294901760
        %6398 = vmatpush1.msra.mxu0 %v6397
        %v6399 = vand.u32 %v363, 4294901760
        %6400 = vmatprep.subr.mxu0 %v6399
        %v6401 = vand.u32 %v362, 4294901760
        %6402 = vmatpush1.msra.mxu0 %v6401
        %v6403 = vand.u32 %v380, 4294901760
        %6404 = vmatprep.subr.mxu0 %v6403
        %v6405 = vand.u32 %v379, 4294901760
        %6406 = vmatpush1.msra.mxu0 %v6405
        %v6407 = vand.u32 %v397, 4294901760
        %6408 = vmatprep.subr.mxu0 %v6407
        %v6409 = vand.u32 %v396, 4294901760
        %6410 = vmatpush1.msra.mxu0 %v6409
        %v6411 = vand.u32 %v414, 4294901760
        %6412 = vmatprep.subr.mxu0 %v6411
        %v6413 = vand.u32 %v413, 4294901760
        %6414 = vmatpush1.msra.mxu0 %v6413
        %v6415 = vand.u32 %v431, 4294901760
        %6416 = vmatprep.subr.mxu0 %v6415
        %v6417 = vand.u32 %v430, 4294901760
        %6418 = vmatpush1.msra.mxu0 %v6417
        %v6419 = vand.u32 %v448, 4294901760
        %6420 = vmatprep.subr.mxu0 %v6419
        %v6421 = vand.u32 %v447, 4294901760
        %6422 = vmatpush1.msra.mxu0 %v6421
        %v6423 = vand.u32 %v465, 4294901760
        %6424 = vmatprep.subr.mxu0 %v6423
        %v6425 = vand.u32 %v464, 4294901760
        %6426 = vmatpush1.msra.mxu0 %v6425
        %v6427 = vand.u32 %v482, 4294901760
        %6428 = vmatprep.subr.mxu0 %v6427
        %v6429 = vand.u32 %v481, 4294901760
        %6430 = vmatpush1.msra.mxu0 %v6429
        %6431 = vmatprep.subr.mxu0 0.0
        %6432 = vmatpush1.msra.mxu0 0.0
        %6433 = vmatprep.subr.mxu0 0.0
        %6434 = vmatpush1.msra.mxu0 0.0
        %6435 = vmatprep.subr.mxu0 0.0
        %6436 = vmatpush1.msra.mxu0 0.0
        %6437 = vmatprep.subr.mxu0 0.0
        %6438 = vmatpush1.msra.mxu0 0.0
        %6439 = vmatprep.subr.mxu0 0.0
        %6440 = vmatpush1.msra.mxu0 0.0
        %6441 = vmatprep.subr.mxu0 0.0
        %6442 = vmatpush1.msra.mxu0 0.0
        %6443 = vmatprep.subr.mxu0 0.0
        %6444 = vmatpush1.msra.mxu0 0.0
        %6445 = vmatprep.subr.mxu0 0.0
        %6446 = vmatpush1.msra.mxu0 0.0
        %6447 = vmatprep.subr.mxu0 0.0
        %6448 = vmatpush1.msra.mxu0 0.0
        %6449 = vmatprep.subr.mxu0 0.0
        %6450 = vmatpush1.msra.mxu0 0.0
        %6451 = vmatprep.subr.mxu0 0.0
        %6452 = vmatpush1.msra.mxu0 0.0
        %6453 = vmatprep.subr.mxu0 0.0
        %6454 = vmatpush1.msra.mxu0 0.0
        %6455 = vmatprep.subr.mxu0 0.0
        %6456 = vmatpush1.msra.mxu0 0.0
        %6457 = vmatprep.subr.mxu0 0.0
        %6458 = vmatpush1.msra.mxu0 0.0
        %6459 = vmatprep.subr.mxu0 0.0
        %6460 = vmatpush1.msra.mxu0 0.0
        %6461 = vmatprep.subr.mxu0 0.0
        %6462 = vmatpush1.msra.mxu0 0.0
        %6463 = vmatprep.mubr.f32.mxu0 0.0
        %v6464 = vand.u32 %v213, 4294901760
        %6465 = vmatmul.mubr.f32.gmra.mrb[0].mxu0 %v6464
        %v6466 = vpop.f32.mrb[0].mxu0
        %v6467 = vadd.f32 %v6363, %v6466
        %v6468 = vpop.f32.mrb[0].mxu0
        %v6469 = vadd.f32 %v6365, %v6468
        %6470 = vdwg.mxu0
        %v6471 = vand.u32 %v229, 4294901760
        %6472 = vmatprep.subr.mxu0 %v6471
        %v6473 = vand.u32 %v228, 4294901760
        %6474 = vmatpush1.msra.mxu0 %v6473
        %v6475 = vand.u32 %v246, 4294901760
        %6476 = vmatprep.subr.mxu0 %v6475
        %v6477 = vand.u32 %v245, 4294901760
        %6478 = vmatpush1.msra.mxu0 %v6477
        %v6479 = vand.u32 %v263, 4294901760
        %6480 = vmatprep.subr.mxu0 %v6479
        %v6481 = vand.u32 %v262, 4294901760
        %6482 = vmatpush1.msra.mxu0 %v6481
        %v6483 = vand.u32 %v280, 4294901760
        %6484 = vmatprep.subr.mxu0 %v6483
        %v6485 = vand.u32 %v279, 4294901760
        %6486 = vmatpush1.msra.mxu0 %v6485
        %v6487 = vand.u32 %v297, 4294901760
        %6488 = vmatprep.subr.mxu0 %v6487
        %v6489 = vand.u32 %v296, 4294901760
        %6490 = vmatpush1.msra.mxu0 %v6489
        %v6491 = vand.u32 %v314, 4294901760
        %6492 = vmatprep.subr.mxu0 %v6491
        %v6493 = vand.u32 %v313, 4294901760
        %6494 = vmatpush1.msra.mxu0 %v6493
        %v6495 = vand.u32 %v331, 4294901760
        %6496 = vmatprep.subr.mxu0 %v6495
        %v6497 = vand.u32 %v330, 4294901760
        %6498 = vmatpush1.msra.mxu0 %v6497
        %v6499 = vand.u32 %v348, 4294901760
        %6500 = vmatprep.subr.mxu0 %v6499
        %v6501 = vand.u32 %v347, 4294901760
        %6502 = vmatpush1.msra.mxu0 %v6501
        %v6503 = vand.u32 %v365, 4294901760
        %6504 = vmatprep.subr.mxu0 %v6503
        %v6505 = vand.u32 %v364, 4294901760
        %6506 = vmatpush1.msra.mxu0 %v6505
        %v6507 = vand.u32 %v382, 4294901760
        %6508 = vmatprep.subr.mxu0 %v6507
        %v6509 = vand.u32 %v381, 4294901760
        %6510 = vmatpush1.msra.mxu0 %v6509
        %v6511 = vand.u32 %v399, 4294901760
        %6512 = vmatprep.subr.mxu0 %v6511
        %v6513 = vand.u32 %v398, 4294901760
        %6514 = vmatpush1.msra.mxu0 %v6513
        %v6515 = vand.u32 %v416, 4294901760
        %6516 = vmatprep.subr.mxu0 %v6515
        %v6517 = vand.u32 %v415, 4294901760
        %6518 = vmatpush1.msra.mxu0 %v6517
        %v6519 = vand.u32 %v433, 4294901760
        %6520 = vmatprep.subr.mxu0 %v6519
        %v6521 = vand.u32 %v432, 4294901760
        %6522 = vmatpush1.msra.mxu0 %v6521
        %v6523 = vand.u32 %v450, 4294901760
        %6524 = vmatprep.subr.mxu0 %v6523
        %v6525 = vand.u32 %v449, 4294901760
        %6526 = vmatpush1.msra.mxu0 %v6525
        %v6527 = vand.u32 %v467, 4294901760
        %6528 = vmatprep.subr.mxu0 %v6527
        %v6529 = vand.u32 %v466, 4294901760
        %6530 = vmatpush1.msra.mxu0 %v6529
        %v6531 = vand.u32 %v484, 4294901760
        %6532 = vmatprep.subr.mxu0 %v6531
        %v6533 = vand.u32 %v483, 4294901760
        %6534 = vmatpush1.msra.mxu0 %v6533
        %6535 = vmatprep.subr.mxu0 0.0
        %6536 = vmatpush1.msra.mxu0 0.0
        %6537 = vmatprep.subr.mxu0 0.0
        %6538 = vmatpush1.msra.mxu0 0.0
        %6539 = vmatprep.subr.mxu0 0.0
        %6540 = vmatpush1.msra.mxu0 0.0
        %6541 = vmatprep.subr.mxu0 0.0
        %6542 = vmatpush1.msra.mxu0 0.0
        %6543 = vmatprep.subr.mxu0 0.0
        %6544 = vmatpush1.msra.mxu0 0.0
        %6545 = vmatprep.subr.mxu0 0.0
        %6546 = vmatpush1.msra.mxu0 0.0
        %6547 = vmatprep.subr.mxu0 0.0
        %6548 = vmatpush1.msra.mxu0 0.0
        %6549 = vmatprep.subr.mxu0 0.0
        %6550 = vmatpush1.msra.mxu0 0.0
        %6551 = vmatprep.subr.mxu0 0.0
        %6552 = vmatpush1.msra.mxu0 0.0
        %6553 = vmatprep.subr.mxu0 0.0
        %6554 = vmatpush1.msra.mxu0 0.0
        %6555 = vmatprep.subr.mxu0 0.0
        %6556 = vmatpush1.msra.mxu0 0.0
        %6557 = vmatprep.subr.mxu0 0.0
        %6558 = vmatpush1.msra.mxu0 0.0
        %6559 = vmatprep.subr.mxu0 0.0
        %6560 = vmatpush1.msra.mxu0 0.0
        %6561 = vmatprep.subr.mxu0 0.0
        %6562 = vmatpush1.msra.mxu0 0.0
        %6563 = vmatprep.subr.mxu0 0.0
        %6564 = vmatpush1.msra.mxu0 0.0
        %6565 = vmatprep.subr.mxu0 0.0
        %6566 = vmatpush1.msra.mxu0 0.0
        %6567 = vmatprep.mubr.f32.mxu0 0.0
        %v6568 = vand.u32 %v213, 4294901760
        %v6569 = vsub.f32 %v213, %v6568
        %v6570 = vand.u32 %v6569, 4294901760
        %v6571 = vsub.f32 %v6569, %v6570
        %v6572 = vand.u32 %v6571, 4294901760
        %6573 = vmatmul.mubr.f32.gmra.mrb[0].mxu0 %v6572
        %v6574 = vpop.f32.mrb[0].mxu0
        %v6575 = vadd.f32 0.0, %v6574
        %v6576 = vpop.f32.mrb[0].mxu0
        %v6577 = vadd.f32 0.0, %v6576
        %6578 = vdwg.mxu0
        %v6579 = vand.u32 %v229, 4294901760
        %v6580 = vsub.f32 %v229, %v6579
        %v6581 = vand.u32 %v6580, 4294901760
        %v6582 = vsub.f32 %v6580, %v6581
        %v6583 = vand.u32 %v6582, 4294901760
        %6584 = vmatprep.subr.mxu0 %v6583
        %v6585 = vand.u32 %v228, 4294901760
        %v6586 = vsub.f32 %v228, %v6585
        %v6587 = vand.u32 %v6586, 4294901760
        %v6588 = vsub.f32 %v6586, %v6587
        %v6589 = vand.u32 %v6588, 4294901760
        %6590 = vmatpush1.msra.mxu0 %v6589
        %v6591 = vand.u32 %v246, 4294901760
        %v6592 = vsub.f32 %v246, %v6591
        %v6593 = vand.u32 %v6592, 4294901760
        %v6594 = vsub.f32 %v6592, %v6593
        %v6595 = vand.u32 %v6594, 4294901760
        %6596 = vmatprep.subr.mxu0 %v6595
        %v6597 = vand.u32 %v245, 4294901760
        %v6598 = vsub.f32 %v245, %v6597
        %v6599 = vand.u32 %v6598, 4294901760
        %v6600 = vsub.f32 %v6598, %v6599
        %v6601 = vand.u32 %v6600, 4294901760
        %6602 = vmatpush1.msra.mxu0 %v6601
        %v6603 = vand.u32 %v263, 4294901760
        %v6604 = vsub.f32 %v263, %v6603
        %v6605 = vand.u32 %v6604, 4294901760
        %v6606 = vsub.f32 %v6604, %v6605
        %v6607 = vand.u32 %v6606, 4294901760
        %6608 = vmatprep.subr.mxu0 %v6607
        %v6609 = vand.u32 %v262, 4294901760
        %v6610 = vsub.f32 %v262, %v6609
        %v6611 = vand.u32 %v6610, 4294901760
        %v6612 = vsub.f32 %v6610, %v6611
        %v6613 = vand.u32 %v6612, 4294901760
        %6614 = vmatpush1.msra.mxu0 %v6613
        %v6615 = vand.u32 %v280, 4294901760
        %v6616 = vsub.f32 %v280, %v6615
        %v6617 = vand.u32 %v6616, 4294901760
        %v6618 = vsub.f32 %v6616, %v6617
        %v6619 = vand.u32 %v6618, 4294901760
        %6620 = vmatprep.subr.mxu0 %v6619
        %v6621 = vand.u32 %v279, 4294901760
        %v6622 = vsub.f32 %v279, %v6621
        %v6623 = vand.u32 %v6622, 4294901760
        %v6624 = vsub.f32 %v6622, %v6623
        %v6625 = vand.u32 %v6624, 4294901760
        %6626 = vmatpush1.msra.mxu0 %v6625
        %v6627 = vand.u32 %v297, 4294901760
        %v6628 = vsub.f32 %v297, %v6627
        %v6629 = vand.u32 %v6628, 4294901760
        %v6630 = vsub.f32 %v6628, %v6629
        %v6631 = vand.u32 %v6630, 4294901760
        %6632 = vmatprep.subr.mxu0 %v6631
        %v6633 = vand.u32 %v296, 4294901760
        %v6634 = vsub.f32 %v296, %v6633
        %v6635 = vand.u32 %v6634, 4294901760
        %v6636 = vsub.f32 %v6634, %v6635
        %v6637 = vand.u32 %v6636, 4294901760
        %6638 = vmatpush1.msra.mxu0 %v6637
        %v6639 = vand.u32 %v314, 4294901760
        %v6640 = vsub.f32 %v314, %v6639
        %v6641 = vand.u32 %v6640, 4294901760
        %v6642 = vsub.f32 %v6640, %v6641
        %v6643 = vand.u32 %v6642, 4294901760
        %6644 = vmatprep.subr.mxu0 %v6643
        %v6645 = vand.u32 %v313, 4294901760
        %v6646 = vsub.f32 %v313, %v6645
        %v6647 = vand.u32 %v6646, 4294901760
        %v6648 = vsub.f32 %v6646, %v6647
        %v6649 = vand.u32 %v6648, 4294901760
        %6650 = vmatpush1.msra.mxu0 %v6649
        %v6651 = vand.u32 %v331, 4294901760
        %v6652 = vsub.f32 %v331, %v6651
        %v6653 = vand.u32 %v6652, 4294901760
        %v6654 = vsub.f32 %v6652, %v6653
        %v6655 = vand.u32 %v6654, 4294901760
        %6656 = vmatprep.subr.mxu0 %v6655
        %v6657 = vand.u32 %v330, 4294901760
        %v6658 = vsub.f32 %v330, %v6657
        %v6659 = vand.u32 %v6658, 4294901760
        %v6660 = vsub.f32 %v6658, %v6659
        %v6661 = vand.u32 %v6660, 4294901760
        %6662 = vmatpush1.msra.mxu0 %v6661
        %v6663 = vand.u32 %v348, 4294901760
        %v6664 = vsub.f32 %v348, %v6663
        %v6665 = vand.u32 %v6664, 4294901760
        %v6666 = vsub.f32 %v6664, %v6665
        %v6667 = vand.u32 %v6666, 4294901760
        %6668 = vmatprep.subr.mxu0 %v6667
        %v6669 = vand.u32 %v347, 4294901760
        %v6670 = vsub.f32 %v347, %v6669
        %v6671 = vand.u32 %v6670, 4294901760
        %v6672 = vsub.f32 %v6670, %v6671
        %v6673 = vand.u32 %v6672, 4294901760
        %6674 = vmatpush1.msra.mxu0 %v6673
        %v6675 = vand.u32 %v365, 4294901760
        %v6676 = vsub.f32 %v365, %v6675
        %v6677 = vand.u32 %v6676, 4294901760
        %v6678 = vsub.f32 %v6676, %v6677
        %v6679 = vand.u32 %v6678, 4294901760
        %6680 = vmatprep.subr.mxu0 %v6679
        %v6681 = vand.u32 %v364, 4294901760
        %v6682 = vsub.f32 %v364, %v6681
        %v6683 = vand.u32 %v6682, 4294901760
        %v6684 = vsub.f32 %v6682, %v6683
        %v6685 = vand.u32 %v6684, 4294901760
        %6686 = vmatpush1.msra.mxu0 %v6685
        %v6687 = vand.u32 %v382, 4294901760
        %v6688 = vsub.f32 %v382, %v6687
        %v6689 = vand.u32 %v6688, 4294901760
        %v6690 = vsub.f32 %v6688, %v6689
        %v6691 = vand.u32 %v6690, 4294901760
        %6692 = vmatprep.subr.mxu0 %v6691
        %v6693 = vand.u32 %v381, 4294901760
        %v6694 = vsub.f32 %v381, %v6693
        %v6695 = vand.u32 %v6694, 4294901760
        %v6696 = vsub.f32 %v6694, %v6695
        %v6697 = vand.u32 %v6696, 4294901760
        %6698 = vmatpush1.msra.mxu0 %v6697
        %v6699 = vand.u32 %v399, 4294901760
        %v6700 = vsub.f32 %v399, %v6699
        %v6701 = vand.u32 %v6700, 4294901760
        %v6702 = vsub.f32 %v6700, %v6701
        %v6703 = vand.u32 %v6702, 4294901760
        %6704 = vmatprep.subr.mxu0 %v6703
        %v6705 = vand.u32 %v398, 4294901760
        %v6706 = vsub.f32 %v398, %v6705
        %v6707 = vand.u32 %v6706, 4294901760
        %v6708 = vsub.f32 %v6706, %v6707
        %v6709 = vand.u32 %v6708, 4294901760
        %6710 = vmatpush1.msra.mxu0 %v6709
        %v6711 = vand.u32 %v416, 4294901760
        %v6712 = vsub.f32 %v416, %v6711
        %v6713 = vand.u32 %v6712, 4294901760
        %v6714 = vsub.f32 %v6712, %v6713
        %v6715 = vand.u32 %v6714, 4294901760
        %6716 = vmatprep.subr.mxu0 %v6715
        %v6717 = vand.u32 %v415, 4294901760
        %v6718 = vsub.f32 %v415, %v6717
        %v6719 = vand.u32 %v6718, 4294901760
        %v6720 = vsub.f32 %v6718, %v6719
        %v6721 = vand.u32 %v6720, 4294901760
        %6722 = vmatpush1.msra.mxu0 %v6721
        %v6723 = vand.u32 %v433, 4294901760
        %v6724 = vsub.f32 %v433, %v6723
        %v6725 = vand.u32 %v6724, 4294901760
        %v6726 = vsub.f32 %v6724, %v6725
        %v6727 = vand.u32 %v6726, 4294901760
        %6728 = vmatprep.subr.mxu0 %v6727
        %v6729 = vand.u32 %v432, 4294901760
        %v6730 = vsub.f32 %v432, %v6729
        %v6731 = vand.u32 %v6730, 4294901760
        %v6732 = vsub.f32 %v6730, %v6731
        %v6733 = vand.u32 %v6732, 4294901760
        %6734 = vmatpush1.msra.mxu0 %v6733
        %v6735 = vand.u32 %v450, 4294901760
        %v6736 = vsub.f32 %v450, %v6735
        %v6737 = vand.u32 %v6736, 4294901760
        %v6738 = vsub.f32 %v6736, %v6737
        %v6739 = vand.u32 %v6738, 4294901760
        %6740 = vmatprep.subr.mxu0 %v6739
        %v6741 = vand.u32 %v449, 4294901760
        %v6742 = vsub.f32 %v449, %v6741
        %v6743 = vand.u32 %v6742, 4294901760
        %v6744 = vsub.f32 %v6742, %v6743
        %v6745 = vand.u32 %v6744, 4294901760
        %6746 = vmatpush1.msra.mxu0 %v6745
        %v6747 = vand.u32 %v467, 4294901760
        %v6748 = vsub.f32 %v467, %v6747
        %v6749 = vand.u32 %v6748, 4294901760
        %v6750 = vsub.f32 %v6748, %v6749
        %v6751 = vand.u32 %v6750, 4294901760
        %6752 = vmatprep.subr.mxu0 %v6751
        %v6753 = vand.u32 %v466, 4294901760
        %v6754 = vsub.f32 %v466, %v6753
        %v6755 = vand.u32 %v6754, 4294901760
        %v6756 = vsub.f32 %v6754, %v6755
        %v6757 = vand.u32 %v6756, 4294901760
        %6758 = vmatpush1.msra.mxu0 %v6757
        %v6759 = vand.u32 %v484, 4294901760
        %v6760 = vsub.f32 %v484, %v6759
        %v6761 = vand.u32 %v6760, 4294901760
        %v6762 = vsub.f32 %v6760, %v6761
        %v6763 = vand.u32 %v6762, 4294901760
        %6764 = vmatprep.subr.mxu0 %v6763
        %v6765 = vand.u32 %v483, 4294901760
        %v6766 = vsub.f32 %v483, %v6765
        %v6767 = vand.u32 %v6766, 4294901760
        %v6768 = vsub.f32 %v6766, %v6767
        %v6769 = vand.u32 %v6768, 4294901760
        %6770 = vmatpush1.msra.mxu0 %v6769
        %6771 = vmatprep.subr.mxu0 0.0
        %6772 = vmatpush1.msra.mxu0 0.0
        %6773 = vmatprep.subr.mxu0 0.0
        %6774 = vmatpush1.msra.mxu0 0.0
        %6775 = vmatprep.subr.mxu0 0.0
        %6776 = vmatpush1.msra.mxu0 0.0
        %6777 = vmatprep.subr.mxu0 0.0
        %6778 = vmatpush1.msra.mxu0 0.0
        %6779 = vmatprep.subr.mxu0 0.0
        %6780 = vmatpush1.msra.mxu0 0.0
        %6781 = vmatprep.subr.mxu0 0.0
        %6782 = vmatpush1.msra.mxu0 0.0
        %6783 = vmatprep.subr.mxu0 0.0
        %6784 = vmatpush1.msra.mxu0 0.0
        %6785 = vmatprep.subr.mxu0 0.0
        %6786 = vmatpush1.msra.mxu0 0.0
        %6787 = vmatprep.subr.mxu0 0.0
        %6788 = vmatpush1.msra.mxu0 0.0
        %6789 = vmatprep.subr.mxu0 0.0
        %6790 = vmatpush1.msra.mxu0 0.0
        %6791 = vmatprep.subr.mxu0 0.0
        %6792 = vmatpush1.msra.mxu0 0.0
        %6793 = vmatprep.subr.mxu0 0.0
        %6794 = vmatpush1.msra.mxu0 0.0
        %6795 = vmatprep.subr.mxu0 0.0
        %6796 = vmatpush1.msra.mxu0 0.0
        %6797 = vmatprep.subr.mxu0 0.0
        %6798 = vmatpush1.msra.mxu0 0.0
        %6799 = vmatprep.subr.mxu0 0.0
        %6800 = vmatpush1.msra.mxu0 0.0
        %6801 = vmatprep.subr.mxu0 0.0
        %6802 = vmatpush1.msra.mxu0 0.0
        %6803 = vmatprep.mubr.f32.mxu0 0.0
        %v6804 = vand.u32 %v213, 4294901760
        %6805 = vmatmul.mubr.f32.gmra.mrb[0].mxu0 %v6804
        %v6806 = vpop.f32.mrb[0].mxu0
        %v6807 = vadd.f32 %v6575, %v6806
        %v6808 = vpop.f32.mrb[0].mxu0
        %v6809 = vadd.f32 %v6577, %v6808
        %6810 = vdwg.mxu0
        %v6811 = vand.u32 %v229, 4294901760
        %v6812 = vsub.f32 %v229, %v6811
        %6813 = vmatprep.subr.mxu0 %v6812
        %v6814 = vand.u32 %v228, 4294901760
        %v6815 = vsub.f32 %v228, %v6814
        %6816 = vmatpush1.msra.mxu0 %v6815
        %v6817 = vand.u32 %v246, 4294901760
        %v6818 = vsub.f32 %v246, %v6817
        %6819 = vmatprep.subr.mxu0 %v6818
        %v6820 = vand.u32 %v245, 4294901760
        %v6821 = vsub.f32 %v245, %v6820
        %6822 = vmatpush1.msra.mxu0 %v6821
        %v6823 = vand.u32 %v263, 4294901760
        %v6824 = vsub.f32 %v263, %v6823
        %6825 = vmatprep.subr.mxu0 %v6824
        %v6826 = vand.u32 %v262, 4294901760
        %v6827 = vsub.f32 %v262, %v6826
        %6828 = vmatpush1.msra.mxu0 %v6827
        %v6829 = vand.u32 %v280, 4294901760
        %v6830 = vsub.f32 %v280, %v6829
        %6831 = vmatprep.subr.mxu0 %v6830
        %v6832 = vand.u32 %v279, 4294901760
        %v6833 = vsub.f32 %v279, %v6832
        %6834 = vmatpush1.msra.mxu0 %v6833
        %v6835 = vand.u32 %v297, 4294901760
        %v6836 = vsub.f32 %v297, %v6835
        %6837 = vmatprep.subr.mxu0 %v6836
        %v6838 = vand.u32 %v296, 4294901760
        %v6839 = vsub.f32 %v296, %v6838
        %6840 = vmatpush1.msra.mxu0 %v6839
        %v6841 = vand.u32 %v314, 4294901760
        %v6842 = vsub.f32 %v314, %v6841
        %6843 = vmatprep.subr.mxu0 %v6842
        %v6844 = vand.u32 %v313, 4294901760
        %v6845 = vsub.f32 %v313, %v6844
        %6846 = vmatpush1.msra.mxu0 %v6845
        %v6847 = vand.u32 %v331, 4294901760
        %v6848 = vsub.f32 %v331, %v6847
        %6849 = vmatprep.subr.mxu0 %v6848
        %v6850 = vand.u32 %v330, 4294901760
        %v6851 = vsub.f32 %v330, %v6850
        %6852 = vmatpush1.msra.mxu0 %v6851
        %v6853 = vand.u32 %v348, 4294901760
        %v6854 = vsub.f32 %v348, %v6853
        %6855 = vmatprep.subr.mxu0 %v6854
        %v6856 = vand.u32 %v347, 4294901760
        %v6857 = vsub.f32 %v347, %v6856
        %6858 = vmatpush1.msra.mxu0 %v6857
        %v6859 = vand.u32 %v365, 4294901760
        %v6860 = vsub.f32 %v365, %v6859
        %6861 = vmatprep.subr.mxu0 %v6860
        %v6862 = vand.u32 %v364, 4294901760
        %v6863 = vsub.f32 %v364, %v6862
        %6864 = vmatpush1.msra.mxu0 %v6863
        %v6865 = vand.u32 %v382, 4294901760
        %v6866 = vsub.f32 %v382, %v6865
        %6867 = vmatprep.subr.mxu0 %v6866
        %v6868 = vand.u32 %v381, 4294901760
        %v6869 = vsub.f32 %v381, %v6868
        %6870 = vmatpush1.msra.mxu0 %v6869
        %v6871 = vand.u32 %v399, 4294901760
        %v6872 = vsub.f32 %v399, %v6871
        %6873 = vmatprep.subr.mxu0 %v6872
        %v6874 = vand.u32 %v398, 4294901760
        %v6875 = vsub.f32 %v398, %v6874
        %6876 = vmatpush1.msra.mxu0 %v6875
        %v6877 = vand.u32 %v416, 4294901760
        %v6878 = vsub.f32 %v416, %v6877
        %6879 = vmatprep.subr.mxu0 %v6878
        %v6880 = vand.u32 %v415, 4294901760
        %v6881 = vsub.f32 %v415, %v6880
        %6882 = vmatpush1.msra.mxu0 %v6881
        %v6883 = vand.u32 %v433, 4294901760
        %v6884 = vsub.f32 %v433, %v6883
        %6885 = vmatprep.subr.mxu0 %v6884
        %v6886 = vand.u32 %v432, 4294901760
        %v6887 = vsub.f32 %v432, %v6886
        %6888 = vmatpush1.msra.mxu0 %v6887
        %v6889 = vand.u32 %v450, 4294901760
        %v6890 = vsub.f32 %v450, %v6889
        %6891 = vmatprep.subr.mxu0 %v6890
        %v6892 = vand.u32 %v449, 4294901760
        %v6893 = vsub.f32 %v449, %v6892
        %6894 = vmatpush1.msra.mxu0 %v6893
        %v6895 = vand.u32 %v467, 4294901760
        %v6896 = vsub.f32 %v467, %v6895
        %6897 = vmatprep.subr.mxu0 %v6896
        %v6898 = vand.u32 %v466, 4294901760
        %v6899 = vsub.f32 %v466, %v6898
        %6900 = vmatpush1.msra.mxu0 %v6899
        %v6901 = vand.u32 %v484, 4294901760
        %v6902 = vsub.f32 %v484, %v6901
        %6903 = vmatprep.subr.mxu0 %v6902
        %v6904 = vand.u32 %v483, 4294901760
        %v6905 = vsub.f32 %v483, %v6904
        %6906 = vmatpush1.msra.mxu0 %v6905
        %6907 = vmatprep.subr.mxu0 0.0
        %6908 = vmatpush1.msra.mxu0 0.0
        %6909 = vmatprep.subr.mxu0 0.0
        %6910 = vmatpush1.msra.mxu0 0.0
        %6911 = vmatprep.subr.mxu0 0.0
        %6912 = vmatpush1.msra.mxu0 0.0
        %6913 = vmatprep.subr.mxu0 0.0
        %6914 = vmatpush1.msra.mxu0 0.0
        %6915 = vmatprep.subr.mxu0 0.0
        %6916 = vmatpush1.msra.mxu0 0.0
        %6917 = vmatprep.subr.mxu0 0.0
        %6918 = vmatpush1.msra.mxu0 0.0
        %6919 = vmatprep.subr.mxu0 0.0
        %6920 = vmatpush1.msra.mxu0 0.0
        %6921 = vmatprep.subr.mxu0 0.0
        %6922 = vmatpush1.msra.mxu0 0.0
        %6923 = vmatprep.subr.mxu0 0.0
        %6924 = vmatpush1.msra.mxu0 0.0
        %6925 = vmatprep.subr.mxu0 0.0
        %6926 = vmatpush1.msra.mxu0 0.0
        %6927 = vmatprep.subr.mxu0 0.0
        %6928 = vmatpush1.msra.mxu0 0.0
        %6929 = vmatprep.subr.mxu0 0.0
        %6930 = vmatpush1.msra.mxu0 0.0
        %6931 = vmatprep.subr.mxu0 0.0
        %6932 = vmatpush1.msra.mxu0 0.0
        %6933 = vmatprep.subr.mxu0 0.0
        %6934 = vmatpush1.msra.mxu0 0.0
        %6935 = vmatprep.subr.mxu0 0.0
        %6936 = vmatpush1.msra.mxu0 0.0
        %6937 = vmatprep.subr.mxu0 0.0
        %6938 = vmatpush1.msra.mxu0 0.0
        %6939 = vmatprep.mubr.f32.mxu0 0.0
        %v6940 = vand.u32 %v213, 4294901760
        %v6941 = vsub.f32 %v213, %v6940
        %6942 = vmatmul.mubr.f32.gmra.mrb[0].mxu0 %v6941
        %v6943 = vpop.f32.mrb[0].mxu0
        %v6944 = vadd.f32 %v6807, %v6943
        %v6945 = vpop.f32.mrb[0].mxu0
        %v6946 = vadd.f32 %v6809, %v6945
        %6947 = vdwg.mxu0
        %v6948 = vand.u32 %v229, 4294901760
        %6949 = vmatprep.subr.mxu0 %v6948
        %v6950 = vand.u32 %v228, 4294901760
        %6951 = vmatpush1.msra.mxu0 %v6950
        %v6952 = vand.u32 %v246, 4294901760
        %6953 = vmatprep.subr.mxu0 %v6952
        %v6954 = vand.u32 %v245, 4294901760
        %6955 = vmatpush1.msra.mxu0 %v6954
        %v6956 = vand.u32 %v263, 4294901760
        %6957 = vmatprep.subr.mxu0 %v6956
        %v6958 = vand.u32 %v262, 4294901760
        %6959 = vmatpush1.msra.mxu0 %v6958
        %v6960 = vand.u32 %v280, 4294901760
        %6961 = vmatprep.subr.mxu0 %v6960
        %v6962 = vand.u32 %v279, 4294901760
        %6963 = vmatpush1.msra.mxu0 %v6962
        %v6964 = vand.u32 %v297, 4294901760
        %6965 = vmatprep.subr.mxu0 %v6964
        %v6966 = vand.u32 %v296, 4294901760
        %6967 = vmatpush1.msra.mxu0 %v6966
        %v6968 = vand.u32 %v314, 4294901760
        %6969 = vmatprep.subr.mxu0 %v6968
        %v6970 = vand.u32 %v313, 4294901760
        %6971 = vmatpush1.msra.mxu0 %v6970
        %v6972 = vand.u32 %v331, 4294901760
        %6973 = vmatprep.subr.mxu0 %v6972
        %v6974 = vand.u32 %v330, 4294901760
        %6975 = vmatpush1.msra.mxu0 %v6974
        %v6976 = vand.u32 %v348, 4294901760
        %6977 = vmatprep.subr.mxu0 %v6976
        %v6978 = vand.u32 %v347, 4294901760
        %6979 = vmatpush1.msra.mxu0 %v6978
        %v6980 = vand.u32 %v365, 4294901760
        %6981 = vmatprep.subr.mxu0 %v6980
        %v6982 = vand.u32 %v364, 4294901760
        %6983 = vmatpush1.msra.mxu0 %v6982
        %v6984 = vand.u32 %v382, 4294901760
        %6985 = vmatprep.subr.mxu0 %v6984
        %v6986 = vand.u32 %v381, 4294901760
        %6987 = vmatpush1.msra.mxu0 %v6986
        %v6988 = vand.u32 %v399, 4294901760
        %6989 = vmatprep.subr.mxu0 %v6988
        %v6990 = vand.u32 %v398, 4294901760
        %6991 = vmatpush1.msra.mxu0 %v6990
        %v6992 = vand.u32 %v416, 4294901760
        %6993 = vmatprep.subr.mxu0 %v6992
        %v6994 = vand.u32 %v415, 4294901760
        %6995 = vmatpush1.msra.mxu0 %v6994
        %v6996 = vand.u32 %v433, 4294901760
        %6997 = vmatprep.subr.mxu0 %v6996
        %v6998 = vand.u32 %v432, 4294901760
        %6999 = vmatpush1.msra.mxu0 %v6998
        %v7000 = vand.u32 %v450, 4294901760
        %7001 = vmatprep.subr.mxu0 %v7000
        %v7002 = vand.u32 %v449, 4294901760
        %7003 = vmatpush1.msra.mxu0 %v7002
        %v7004 = vand.u32 %v467, 4294901760
        %7005 = vmatprep.subr.mxu0 %v7004
        %v7006 = vand.u32 %v466, 4294901760
        %7007 = vmatpush1.msra.mxu0 %v7006
        %v7008 = vand.u32 %v484, 4294901760
        %7009 = vmatprep.subr.mxu0 %v7008
        %v7010 = vand.u32 %v483, 4294901760
        %7011 = vmatpush1.msra.mxu0 %v7010
        %7012 = vmatprep.subr.mxu0 0.0
        %7013 = vmatpush1.msra.mxu0 0.0
        %7014 = vmatprep.subr.mxu0 0.0
        %7015 = vmatpush1.msra.mxu0 0.0
        %7016 = vmatprep.subr.mxu0 0.0
        %7017 = vmatpush1.msra.mxu0 0.0
        %7018 = vmatprep.subr.mxu0 0.0
        %7019 = vmatpush1.msra.mxu0 0.0
        %7020 = vmatprep.subr.mxu0 0.0
        %7021 = vmatpush1.msra.mxu0 0.0
        %7022 = vmatprep.subr.mxu0 0.0
        %7023 = vmatpush1.msra.mxu0 0.0
        %7024 = vmatprep.subr.mxu0 0.0
        %7025 = vmatpush1.msra.mxu0 0.0
        %7026 = vmatprep.subr.mxu0 0.0
        %7027 = vmatpush1.msra.mxu0 0.0
        %7028 = vmatprep.subr.mxu0 0.0
        %7029 = vmatpush1.msra.mxu0 0.0
        %7030 = vmatprep.subr.mxu0 0.0
        %7031 = vmatpush1.msra.mxu0 0.0
        %7032 = vmatprep.subr.mxu0 0.0
        %7033 = vmatpush1.msra.mxu0 0.0
        %7034 = vmatprep.subr.mxu0 0.0
        %7035 = vmatpush1.msra.mxu0 0.0
        %7036 = vmatprep.subr.mxu0 0.0
        %7037 = vmatpush1.msra.mxu0 0.0
        %7038 = vmatprep.subr.mxu0 0.0
        %7039 = vmatpush1.msra.mxu0 0.0
        %7040 = vmatprep.subr.mxu0 0.0
        %7041 = vmatpush1.msra.mxu0 0.0
        %7042 = vmatprep.subr.mxu0 0.0
        %7043 = vmatpush1.msra.mxu0 0.0
        %7044 = vmatprep.mubr.f32.mxu0 0.0
        %v7045 = vand.u32 %v213, 4294901760
        %v7046 = vsub.f32 %v213, %v7045
        %v7047 = vand.u32 %v7046, 4294901760
        %7048 = vmatmul.mubr.f32.gmra.mrb[0].mxu0 %v7047
        %v7049 = vpop.f32.mrb[0].mxu0
        %v7050 = vadd.f32 %v6944, %v7049
        %v7051 = vpop.f32.mrb[0].mxu0
        %v7052 = vadd.f32 %v6946, %v7051
        %7053 = vdwg.mxu0
        %v7054 = vand.u32 %v229, 4294901760
        %v7055 = vsub.f32 %v229, %v7054
        %v7056 = vand.u32 %v7055, 4294901760
        %7057 = vmatprep.subr.mxu0 %v7056
        %v7058 = vand.u32 %v228, 4294901760
        %v7059 = vsub.f32 %v228, %v7058
        %v7060 = vand.u32 %v7059, 4294901760
        %7061 = vmatpush1.msra.mxu0 %v7060
        %v7062 = vand.u32 %v246, 4294901760
        %v7063 = vsub.f32 %v246, %v7062
        %v7064 = vand.u32 %v7063, 4294901760
        %7065 = vmatprep.subr.mxu0 %v7064
        %v7066 = vand.u32 %v245, 4294901760
        %v7067 = vsub.f32 %v245, %v7066
        %v7068 = vand.u32 %v7067, 4294901760
        %7069 = vmatpush1.msra.mxu0 %v7068
        %v7070 = vand.u32 %v263, 4294901760
        %v7071 = vsub.f32 %v263, %v7070
        %v7072 = vand.u32 %v7071, 4294901760
        %7073 = vmatprep.subr.mxu0 %v7072
        %v7074 = vand.u32 %v262, 4294901760
        %v7075 = vsub.f32 %v262, %v7074
        %v7076 = vand.u32 %v7075, 4294901760
        %7077 = vmatpush1.msra.mxu0 %v7076
        %v7078 = vand.u32 %v280, 4294901760
        %v7079 = vsub.f32 %v280, %v7078
        %v7080 = vand.u32 %v7079, 4294901760
        %7081 = vmatprep.subr.mxu0 %v7080
        %v7082 = vand.u32 %v279, 4294901760
        %v7083 = vsub.f32 %v279, %v7082
        %v7084 = vand.u32 %v7083, 4294901760
        %7085 = vmatpush1.msra.mxu0 %v7084
        %v7086 = vand.u32 %v297, 4294901760
        %v7087 = vsub.f32 %v297, %v7086
        %v7088 = vand.u32 %v7087, 4294901760
        %7089 = vmatprep.subr.mxu0 %v7088
        %v7090 = vand.u32 %v296, 4294901760
        %v7091 = vsub.f32 %v296, %v7090
        %v7092 = vand.u32 %v7091, 4294901760
        %7093 = vmatpush1.msra.mxu0 %v7092
        %v7094 = vand.u32 %v314, 4294901760
        %v7095 = vsub.f32 %v314, %v7094
        %v7096 = vand.u32 %v7095, 4294901760
        %7097 = vmatprep.subr.mxu0 %v7096
        %v7098 = vand.u32 %v313, 4294901760
        %v7099 = vsub.f32 %v313, %v7098
        %v7100 = vand.u32 %v7099, 4294901760
        %7101 = vmatpush1.msra.mxu0 %v7100
        %v7102 = vand.u32 %v331, 4294901760
        %v7103 = vsub.f32 %v331, %v7102
        %v7104 = vand.u32 %v7103, 4294901760
        %7105 = vmatprep.subr.mxu0 %v7104
        %v7106 = vand.u32 %v330, 4294901760
        %v7107 = vsub.f32 %v330, %v7106
        %v7108 = vand.u32 %v7107, 4294901760
        %7109 = vmatpush1.msra.mxu0 %v7108
        %v7110 = vand.u32 %v348, 4294901760
        %v7111 = vsub.f32 %v348, %v7110
        %v7112 = vand.u32 %v7111, 4294901760
        %7113 = vmatprep.subr.mxu0 %v7112
        %v7114 = vand.u32 %v347, 4294901760
        %v7115 = vsub.f32 %v347, %v7114
        %v7116 = vand.u32 %v7115, 4294901760
        %7117 = vmatpush1.msra.mxu0 %v7116
        %v7118 = vand.u32 %v365, 4294901760
        %v7119 = vsub.f32 %v365, %v7118
        %v7120 = vand.u32 %v7119, 4294901760
        %7121 = vmatprep.subr.mxu0 %v7120
        %v7122 = vand.u32 %v364, 4294901760
        %v7123 = vsub.f32 %v364, %v7122
        %v7124 = vand.u32 %v7123, 4294901760
        %7125 = vmatpush1.msra.mxu0 %v7124
        %v7126 = vand.u32 %v382, 4294901760
        %v7127 = vsub.f32 %v382, %v7126
        %v7128 = vand.u32 %v7127, 4294901760
        %7129 = vmatprep.subr.mxu0 %v7128
        %v7130 = vand.u32 %v381, 4294901760
        %v7131 = vsub.f32 %v381, %v7130
        %v7132 = vand.u32 %v7131, 4294901760
        %7133 = vmatpush1.msra.mxu0 %v7132
        %v7134 = vand.u32 %v399, 4294901760
        %v7135 = vsub.f32 %v399, %v7134
        %v7136 = vand.u32 %v7135, 4294901760
        %7137 = vmatprep.subr.mxu0 %v7136
        %v7138 = vand.u32 %v398, 4294901760
        %v7139 = vsub.f32 %v398, %v7138
        %v7140 = vand.u32 %v7139, 4294901760
        %7141 = vmatpush1.msra.mxu0 %v7140
        %v7142 = vand.u32 %v416, 4294901760
        %v7143 = vsub.f32 %v416, %v7142
        %v7144 = vand.u32 %v7143, 4294901760
        %7145 = vmatprep.subr.mxu0 %v7144
        %v7146 = vand.u32 %v415, 4294901760
        %v7147 = vsub.f32 %v415, %v7146
        %v7148 = vand.u32 %v7147, 4294901760
        %7149 = vmatpush1.msra.mxu0 %v7148
        %v7150 = vand.u32 %v433, 4294901760
        %v7151 = vsub.f32 %v433, %v7150
        %v7152 = vand.u32 %v7151, 4294901760
        %7153 = vmatprep.subr.mxu0 %v7152
        %v7154 = vand.u32 %v432, 4294901760
        %v7155 = vsub.f32 %v432, %v7154
        %v7156 = vand.u32 %v7155, 4294901760
        %7157 = vmatpush1.msra.mxu0 %v7156
        %v7158 = vand.u32 %v450, 4294901760
        %v7159 = vsub.f32 %v450, %v7158
        %v7160 = vand.u32 %v7159, 4294901760
        %7161 = vmatprep.subr.mxu0 %v7160
        %v7162 = vand.u32 %v449, 4294901760
        %v7163 = vsub.f32 %v449, %v7162
        %v7164 = vand.u32 %v7163, 4294901760
        %7165 = vmatpush1.msra.mxu0 %v7164
        %v7166 = vand.u32 %v467, 4294901760
        %v7167 = vsub.f32 %v467, %v7166
        %v7168 = vand.u32 %v7167, 4294901760
        %7169 = vmatprep.subr.mxu0 %v7168
        %v7170 = vand.u32 %v466, 4294901760
        %v7171 = vsub.f32 %v466, %v7170
        %v7172 = vand.u32 %v7171, 4294901760
        %7173 = vmatpush1.msra.mxu0 %v7172
        %v7174 = vand.u32 %v484, 4294901760
        %v7175 = vsub.f32 %v484, %v7174
        %v7176 = vand.u32 %v7175, 4294901760
        %7177 = vmatprep.subr.mxu0 %v7176
        %v7178 = vand.u32 %v483, 4294901760
        %v7179 = vsub.f32 %v483, %v7178
        %v7180 = vand.u32 %v7179, 4294901760
        %7181 = vmatpush1.msra.mxu0 %v7180
        %7182 = vmatprep.subr.mxu0 0.0
        %7183 = vmatpush1.msra.mxu0 0.0
        %7184 = vmatprep.subr.mxu0 0.0
        %7185 = vmatpush1.msra.mxu0 0.0
        %7186 = vmatprep.subr.mxu0 0.0
        %7187 = vmatpush1.msra.mxu0 0.0
        %7188 = vmatprep.subr.mxu0 0.0
        %7189 = vmatpush1.msra.mxu0 0.0
        %7190 = vmatprep.subr.mxu0 0.0
        %7191 = vmatpush1.msra.mxu0 0.0
        %7192 = vmatprep.subr.mxu0 0.0
        %7193 = vmatpush1.msra.mxu0 0.0
        %7194 = vmatprep.subr.mxu0 0.0
        %7195 = vmatpush1.msra.mxu0 0.0
        %7196 = vmatprep.subr.mxu0 0.0
        %7197 = vmatpush1.msra.mxu0 0.0
        %7198 = vmatprep.subr.mxu0 0.0
        %7199 = vmatpush1.msra.mxu0 0.0
        %7200 = vmatprep.subr.mxu0 0.0
        %7201 = vmatpush1.msra.mxu0 0.0
        %7202 = vmatprep.subr.mxu0 0.0
        %7203 = vmatpush1.msra.mxu0 0.0
        %7204 = vmatprep.subr.mxu0 0.0
        %7205 = vmatpush1.msra.mxu0 0.0
        %7206 = vmatprep.subr.mxu0 0.0
        %7207 = vmatpush1.msra.mxu0 0.0
        %7208 = vmatprep.subr.mxu0 0.0
        %7209 = vmatpush1.msra.mxu0 0.0
        %7210 = vmatprep.subr.mxu0 0.0
        %7211 = vmatpush1.msra.mxu0 0.0
        %7212 = vmatprep.subr.mxu0 0.0
        %7213 = vmatpush1.msra.mxu0 0.0
        %7214 = vmatprep.mubr.f32.mxu0 0.0
        %v7215 = vand.u32 %v213, 4294901760
        %7216 = vmatmul.mubr.f32.gmra.mrb[0].mxu0 %v7215
        %v7217 = vpop.f32.mrb[0].mxu0
        %v7218 = vadd.f32 %v7050, %v7217
        %v7219 = vpop.f32.mrb[0].mxu0
        %v7220 = vadd.f32 %v7052, %v7219
        %7221 = vdwg.mxu0
        %v7222 = vand.u32 %v229, 4294901760
        %7223 = vmatprep.subr.mxu0 %v7222
        %v7224 = vand.u32 %v228, 4294901760
        %7225 = vmatpush1.msra.mxu0 %v7224
        %v7226 = vand.u32 %v246, 4294901760
        %7227 = vmatprep.subr.mxu0 %v7226
        %v7228 = vand.u32 %v245, 4294901760
        %7229 = vmatpush1.msra.mxu0 %v7228
        %v7230 = vand.u32 %v263, 4294901760
        %7231 = vmatprep.subr.mxu0 %v7230
        %v7232 = vand.u32 %v262, 4294901760
        %7233 = vmatpush1.msra.mxu0 %v7232
        %v7234 = vand.u32 %v280, 4294901760
        %7235 = vmatprep.subr.mxu0 %v7234
        %v7236 = vand.u32 %v279, 4294901760
        %7237 = vmatpush1.msra.mxu0 %v7236
        %v7238 = vand.u32 %v297, 4294901760
        %7239 = vmatprep.subr.mxu0 %v7238
        %v7240 = vand.u32 %v296, 4294901760
        %7241 = vmatpush1.msra.mxu0 %v7240
        %v7242 = vand.u32 %v314, 4294901760
        %7243 = vmatprep.subr.mxu0 %v7242
        %v7244 = vand.u32 %v313, 4294901760
        %7245 = vmatpush1.msra.mxu0 %v7244
        %v7246 = vand.u32 %v331, 4294901760
        %7247 = vmatprep.subr.mxu0 %v7246
        %v7248 = vand.u32 %v330, 4294901760
        %7249 = vmatpush1.msra.mxu0 %v7248
        %v7250 = vand.u32 %v348, 4294901760
        %7251 = vmatprep.subr.mxu0 %v7250
        %v7252 = vand.u32 %v347, 4294901760
        %7253 = vmatpush1.msra.mxu0 %v7252
        %v7254 = vand.u32 %v365, 4294901760
        %7255 = vmatprep.subr.mxu0 %v7254
        %v7256 = vand.u32 %v364, 4294901760
        %7257 = vmatpush1.msra.mxu0 %v7256
        %v7258 = vand.u32 %v382, 4294901760
        %7259 = vmatprep.subr.mxu0 %v7258
        %v7260 = vand.u32 %v381, 4294901760
        %7261 = vmatpush1.msra.mxu0 %v7260
        %v7262 = vand.u32 %v399, 4294901760
        %7263 = vmatprep.subr.mxu0 %v7262
        %v7264 = vand.u32 %v398, 4294901760
        %7265 = vmatpush1.msra.mxu0 %v7264
        %v7266 = vand.u32 %v416, 4294901760
        %7267 = vmatprep.subr.mxu0 %v7266
        %v7268 = vand.u32 %v415, 4294901760
        %7269 = vmatpush1.msra.mxu0 %v7268
        %v7270 = vand.u32 %v433, 4294901760
        %7271 = vmatprep.subr.mxu0 %v7270
        %v7272 = vand.u32 %v432, 4294901760
        %7273 = vmatpush1.msra.mxu0 %v7272
        %v7274 = vand.u32 %v450, 4294901760
        %7275 = vmatprep.subr.mxu0 %v7274
        %v7276 = vand.u32 %v449, 4294901760
        %7277 = vmatpush1.msra.mxu0 %v7276
        %v7278 = vand.u32 %v467, 4294901760
        %7279 = vmatprep.subr.mxu0 %v7278
        %v7280 = vand.u32 %v466, 4294901760
        %7281 = vmatpush1.msra.mxu0 %v7280
        %v7282 = vand.u32 %v484, 4294901760
        %7283 = vmatprep.subr.mxu0 %v7282
        %v7284 = vand.u32 %v483, 4294901760
        %7285 = vmatpush1.msra.mxu0 %v7284
        %7286 = vmatprep.subr.mxu0 0.0
        %7287 = vmatpush1.msra.mxu0 0.0
        %7288 = vmatprep.subr.mxu0 0.0
        %7289 = vmatpush1.msra.mxu0 0.0
        %7290 = vmatprep.subr.mxu0 0.0
        %7291 = vmatpush1.msra.mxu0 0.0
        %7292 = vmatprep.subr.mxu0 0.0
        %7293 = vmatpush1.msra.mxu0 0.0
        %7294 = vmatprep.subr.mxu0 0.0
        %7295 = vmatpush1.msra.mxu0 0.0
        %7296 = vmatprep.subr.mxu0 0.0
        %7297 = vmatpush1.msra.mxu0 0.0
        %7298 = vmatprep.subr.mxu0 0.0
        %7299 = vmatpush1.msra.mxu0 0.0
        %7300 = vmatprep.subr.mxu0 0.0
        %7301 = vmatpush1.msra.mxu0 0.0
        %7302 = vmatprep.subr.mxu0 0.0
        %7303 = vmatpush1.msra.mxu0 0.0
        %7304 = vmatprep.subr.mxu0 0.0
        %7305 = vmatpush1.msra.mxu0 0.0
        %7306 = vmatprep.subr.mxu0 0.0
        %7307 = vmatpush1.msra.mxu0 0.0
        %7308 = vmatprep.subr.mxu0 0.0
        %7309 = vmatpush1.msra.mxu0 0.0
        %7310 = vmatprep.subr.mxu0 0.0
        %7311 = vmatpush1.msra.mxu0 0.0
        %7312 = vmatprep.subr.mxu0 0.0
        %7313 = vmatpush1.msra.mxu0 0.0
        %7314 = vmatprep.subr.mxu0 0.0
        %7315 = vmatpush1.msra.mxu0 0.0
        %7316 = vmatprep.subr.mxu0 0.0
        %7317 = vmatpush1.msra.mxu0 0.0
        %7318 = vmatprep.mubr.f32.mxu0 0.0
        %v7319 = vand.u32 %v213, 4294901760
        %7320 = vmatmul.mubr.f32.gmra.mrb[0].mxu0 %v7319
        %v7321 = vpop.f32.mrb[0].mxu0
        %v7322 = vadd.f32 %v7218, %v7321
        %v7323 = vpop.f32.mrb[0].mxu0
        %v7324 = vadd.f32 %v7220, %v7323
        %7325 = vdwg.mxu0
        %7326 = vmatprep.subr.mxu0 0.0
        %v7327 = vand.u32 %v230, 4294901760
        %7328 = vmatpush1.msra.mxu0 %v7327
        %7329 = vmatprep.subr.mxu0 0.0
        %v7330 = vand.u32 %v247, 4294901760
        %7331 = vmatpush1.msra.mxu0 %v7330
        %7332 = vmatprep.subr.mxu0 0.0
        %v7333 = vand.u32 %v264, 4294901760
        %7334 = vmatpush1.msra.mxu0 %v7333
        %7335 = vmatprep.subr.mxu0 0.0
        %v7336 = vand.u32 %v281, 4294901760
        %7337 = vmatpush1.msra.mxu0 %v7336
        %7338 = vmatprep.subr.mxu0 0.0
        %v7339 = vand.u32 %v298, 4294901760
        %7340 = vmatpush1.msra.mxu0 %v7339
        %7341 = vmatprep.subr.mxu0 0.0
        %v7342 = vand.u32 %v315, 4294901760
        %7343 = vmatpush1.msra.mxu0 %v7342
        %7344 = vmatprep.subr.mxu0 0.0
        %v7345 = vand.u32 %v332, 4294901760
        %7346 = vmatpush1.msra.mxu0 %v7345
        %7347 = vmatprep.subr.mxu0 0.0
        %v7348 = vand.u32 %v349, 4294901760
        %7349 = vmatpush1.msra.mxu0 %v7348
        %7350 = vmatprep.subr.mxu0 0.0
        %v7351 = vand.u32 %v366, 4294901760
        %7352 = vmatpush1.msra.mxu0 %v7351
        %7353 = vmatprep.subr.mxu0 0.0
        %v7354 = vand.u32 %v383, 4294901760
        %7355 = vmatpush1.msra.mxu0 %v7354
        %7356 = vmatprep.subr.mxu0 0.0
        %v7357 = vand.u32 %v400, 4294901760
        %7358 = vmatpush1.msra.mxu0 %v7357
        %7359 = vmatprep.subr.mxu0 0.0
        %v7360 = vand.u32 %v417, 4294901760
        %7361 = vmatpush1.msra.mxu0 %v7360
        %7362 = vmatprep.subr.mxu0 0.0
        %v7363 = vand.u32 %v434, 4294901760
        %7364 = vmatpush1.msra.mxu0 %v7363
        %7365 = vmatprep.subr.mxu0 0.0
        %v7366 = vand.u32 %v451, 4294901760
        %7367 = vmatpush1.msra.mxu0 %v7366
        %7368 = vmatprep.subr.mxu0 0.0
        %v7369 = vand.u32 %v468, 4294901760
        %7370 = vmatpush1.msra.mxu0 %v7369
        %7371 = vmatprep.subr.mxu0 0.0
        %v7372 = vand.u32 %v485, 4294901760
        %7373 = vmatpush1.msra.mxu0 %v7372
        %7374 = vmatprep.subr.mxu0 0.0
        %7375 = vmatpush1.msra.mxu0 0.0
        %7376 = vmatprep.subr.mxu0 0.0
        %7377 = vmatpush1.msra.mxu0 0.0
        %7378 = vmatprep.subr.mxu0 0.0
        %7379 = vmatpush1.msra.mxu0 0.0
        %7380 = vmatprep.subr.mxu0 0.0
        %7381 = vmatpush1.msra.mxu0 0.0
        %7382 = vmatprep.subr.mxu0 0.0
        %7383 = vmatpush1.msra.mxu0 0.0
        %7384 = vmatprep.subr.mxu0 0.0
        %7385 = vmatpush1.msra.mxu0 0.0
        %7386 = vmatprep.subr.mxu0 0.0
        %7387 = vmatpush1.msra.mxu0 0.0
        %7388 = vmatprep.subr.mxu0 0.0
        %7389 = vmatpush1.msra.mxu0 0.0
        %7390 = vmatprep.subr.mxu0 0.0
        %7391 = vmatpush1.msra.mxu0 0.0
        %7392 = vmatprep.subr.mxu0 0.0
        %7393 = vmatpush1.msra.mxu0 0.0
        %7394 = vmatprep.subr.mxu0 0.0
        %7395 = vmatpush1.msra.mxu0 0.0
        %7396 = vmatprep.subr.mxu0 0.0
        %7397 = vmatpush1.msra.mxu0 0.0
        %7398 = vmatprep.subr.mxu0 0.0
        %7399 = vmatpush1.msra.mxu0 0.0
        %7400 = vmatprep.subr.mxu0 0.0
        %7401 = vmatpush1.msra.mxu0 0.0
        %7402 = vmatprep.subr.mxu0 0.0
        %7403 = vmatpush1.msra.mxu0 0.0
        %7404 = vmatprep.subr.mxu0 0.0
        %7405 = vmatpush1.msra.mxu0 0.0
        %7406 = vmatprep.mubr.f32.mxu0 0.0
        %v7407 = vand.u32 %v213, 4294901760
        %v7408 = vsub.f32 %v213, %v7407
        %v7409 = vand.u32 %v7408, 4294901760
        %v7410 = vsub.f32 %v7408, %v7409
        %v7411 = vand.u32 %v7410, 4294901760
        %7412 = vmatmul.mubr.f32.gmra.mrb[0].mxu0 %v7411
        %v7413 = vpop.f32.mrb[0].mxu0
        %v7414 = vadd.f32 0.0, %v7413
        %v7415 = vpop.f32.mrb[0].mxu0
        %7416 = vdwg.mxu0
        %7417 = vmatprep.subr.mxu0 0.0
        %v7418 = vand.u32 %v230, 4294901760
        %v7419 = vsub.f32 %v230, %v7418
        %v7420 = vand.u32 %v7419, 4294901760
        %v7421 = vsub.f32 %v7419, %v7420
        %v7422 = vand.u32 %v7421, 4294901760
        %7423 = vmatpush1.msra.mxu0 %v7422
        %7424 = vmatprep.subr.mxu0 0.0
        %v7425 = vand.u32 %v247, 4294901760
        %v7426 = vsub.f32 %v247, %v7425
        %v7427 = vand.u32 %v7426, 4294901760
        %v7428 = vsub.f32 %v7426, %v7427
        %v7429 = vand.u32 %v7428, 4294901760
        %7430 = vmatpush1.msra.mxu0 %v7429
        %7431 = vmatprep.subr.mxu0 0.0
        %v7432 = vand.u32 %v264, 4294901760
        %v7433 = vsub.f32 %v264, %v7432
        %v7434 = vand.u32 %v7433, 4294901760
        %v7435 = vsub.f32 %v7433, %v7434
        %v7436 = vand.u32 %v7435, 4294901760
        %7437 = vmatpush1.msra.mxu0 %v7436
        %7438 = vmatprep.subr.mxu0 0.0
        %v7439 = vand.u32 %v281, 4294901760
        %v7440 = vsub.f32 %v281, %v7439
        %v7441 = vand.u32 %v7440, 4294901760
        %v7442 = vsub.f32 %v7440, %v7441
        %v7443 = vand.u32 %v7442, 4294901760
        %7444 = vmatpush1.msra.mxu0 %v7443
        %7445 = vmatprep.subr.mxu0 0.0
        %v7446 = vand.u32 %v298, 4294901760
        %v7447 = vsub.f32 %v298, %v7446
        %v7448 = vand.u32 %v7447, 4294901760
        %v7449 = vsub.f32 %v7447, %v7448
        %v7450 = vand.u32 %v7449, 4294901760
        %7451 = vmatpush1.msra.mxu0 %v7450
        %7452 = vmatprep.subr.mxu0 0.0
        %v7453 = vand.u32 %v315, 4294901760
        %v7454 = vsub.f32 %v315, %v7453
        %v7455 = vand.u32 %v7454, 4294901760
        %v7456 = vsub.f32 %v7454, %v7455
        %v7457 = vand.u32 %v7456, 4294901760
        %7458 = vmatpush1.msra.mxu0 %v7457
        %7459 = vmatprep.subr.mxu0 0.0
        %v7460 = vand.u32 %v332, 4294901760
        %v7461 = vsub.f32 %v332, %v7460
        %v7462 = vand.u32 %v7461, 4294901760
        %v7463 = vsub.f32 %v7461, %v7462
        %v7464 = vand.u32 %v7463, 4294901760
        %7465 = vmatpush1.msra.mxu0 %v7464
        %7466 = vmatprep.subr.mxu0 0.0
        %v7467 = vand.u32 %v349, 4294901760
        %v7468 = vsub.f32 %v349, %v7467
        %v7469 = vand.u32 %v7468, 4294901760
        %v7470 = vsub.f32 %v7468, %v7469
        %v7471 = vand.u32 %v7470, 4294901760
        %7472 = vmatpush1.msra.mxu0 %v7471
        %7473 = vmatprep.subr.mxu0 0.0
        %v7474 = vand.u32 %v366, 4294901760
        %v7475 = vsub.f32 %v366, %v7474
        %v7476 = vand.u32 %v7475, 4294901760
        %v7477 = vsub.f32 %v7475, %v7476
        %v7478 = vand.u32 %v7477, 4294901760
        %7479 = vmatpush1.msra.mxu0 %v7478
        %7480 = vmatprep.subr.mxu0 0.0
        %v7481 = vand.u32 %v383, 4294901760
        %v7482 = vsub.f32 %v383, %v7481
        %v7483 = vand.u32 %v7482, 4294901760
        %v7484 = vsub.f32 %v7482, %v7483
        %v7485 = vand.u32 %v7484, 4294901760
        %7486 = vmatpush1.msra.mxu0 %v7485
        %7487 = vmatprep.subr.mxu0 0.0
        %v7488 = vand.u32 %v400, 4294901760
        %v7489 = vsub.f32 %v400, %v7488
        %v7490 = vand.u32 %v7489, 4294901760
        %v7491 = vsub.f32 %v7489, %v7490
        %v7492 = vand.u32 %v7491, 4294901760
        %7493 = vmatpush1.msra.mxu0 %v7492
        %7494 = vmatprep.subr.mxu0 0.0
        %v7495 = vand.u32 %v417, 4294901760
        %v7496 = vsub.f32 %v417, %v7495
        %v7497 = vand.u32 %v7496, 4294901760
        %v7498 = vsub.f32 %v7496, %v7497
        %v7499 = vand.u32 %v7498, 4294901760
        %7500 = vmatpush1.msra.mxu0 %v7499
        %7501 = vmatprep.subr.mxu0 0.0
        %v7502 = vand.u32 %v434, 4294901760
        %v7503 = vsub.f32 %v434, %v7502
        %v7504 = vand.u32 %v7503, 4294901760
        %v7505 = vsub.f32 %v7503, %v7504
        %v7506 = vand.u32 %v7505, 4294901760
        %7507 = vmatpush1.msra.mxu0 %v7506
        %7508 = vmatprep.subr.mxu0 0.0
        %v7509 = vand.u32 %v451, 4294901760
        %v7510 = vsub.f32 %v451, %v7509
        %v7511 = vand.u32 %v7510, 4294901760
        %v7512 = vsub.f32 %v7510, %v7511
        %v7513 = vand.u32 %v7512, 4294901760
        %7514 = vmatpush1.msra.mxu0 %v7513
        %7515 = vmatprep.subr.mxu0 0.0
        %v7516 = vand.u32 %v468, 4294901760
        %v7517 = vsub.f32 %v468, %v7516
        %v7518 = vand.u32 %v7517, 4294901760
        %v7519 = vsub.f32 %v7517, %v7518
        %v7520 = vand.u32 %v7519, 4294901760
        %7521 = vmatpush1.msra.mxu0 %v7520
        %7522 = vmatprep.subr.mxu0 0.0
        %v7523 = vand.u32 %v485, 4294901760
        %v7524 = vsub.f32 %v485, %v7523
        %v7525 = vand.u32 %v7524, 4294901760
        %v7526 = vsub.f32 %v7524, %v7525
        %v7527 = vand.u32 %v7526, 4294901760
        %7528 = vmatpush1.msra.mxu0 %v7527
        %7529 = vmatprep.subr.mxu0 0.0
        %7530 = vmatpush1.msra.mxu0 0.0
        %7531 = vmatprep.subr.mxu0 0.0
        %7532 = vmatpush1.msra.mxu0 0.0
        %7533 = vmatprep.subr.mxu0 0.0
        %7534 = vmatpush1.msra.mxu0 0.0
        %7535 = vmatprep.subr.mxu0 0.0
        %7536 = vmatpush1.msra.mxu0 0.0
        %7537 = vmatprep.subr.mxu0 0.0
        %7538 = vmatpush1.msra.mxu0 0.0
        %7539 = vmatprep.subr.mxu0 0.0
        %7540 = vmatpush1.msra.mxu0 0.0
        %7541 = vmatprep.subr.mxu0 0.0
        %7542 = vmatpush1.msra.mxu0 0.0
        %7543 = vmatprep.subr.mxu0 0.0
        %7544 = vmatpush1.msra.mxu0 0.0
        %7545 = vmatprep.subr.mxu0 0.0
        %7546 = vmatpush1.msra.mxu0 0.0
        %7547 = vmatprep.subr.mxu0 0.0
        %7548 = vmatpush1.msra.mxu0 0.0
        %7549 = vmatprep.subr.mxu0 0.0
        %7550 = vmatpush1.msra.mxu0 0.0
        %7551 = vmatprep.subr.mxu0 0.0
        %7552 = vmatpush1.msra.mxu0 0.0
        %7553 = vmatprep.subr.mxu0 0.0
        %7554 = vmatpush1.msra.mxu0 0.0
        %7555 = vmatprep.subr.mxu0 0.0
        %7556 = vmatpush1.msra.mxu0 0.0
        %7557 = vmatprep.subr.mxu0 0.0
        %7558 = vmatpush1.msra.mxu0 0.0
        %7559 = vmatprep.subr.mxu0 0.0
        %7560 = vmatpush1.msra.mxu0 0.0
        %7561 = vmatprep.mubr.f32.mxu0 0.0
        %v7562 = vand.u32 %v213, 4294901760
        %7563 = vmatmul.mubr.f32.gmra.mrb[0].mxu0 %v7562
        %v7564 = vpop.f32.mrb[0].mxu0
        %v7565 = vadd.f32 %v7414, %v7564
        %v7566 = vpop.f32.mrb[0].mxu0
        %7567 = vdwg.mxu0
        %7568 = vmatprep.subr.mxu0 0.0
        %v7569 = vand.u32 %v230, 4294901760
        %v7570 = vsub.f32 %v230, %v7569
        %7571 = vmatpush1.msra.mxu0 %v7570
        %7572 = vmatprep.subr.mxu0 0.0
        %v7573 = vand.u32 %v247, 4294901760
        %v7574 = vsub.f32 %v247, %v7573
        %7575 = vmatpush1.msra.mxu0 %v7574
        %7576 = vmatprep.subr.mxu0 0.0
        %v7577 = vand.u32 %v264, 4294901760
        %v7578 = vsub.f32 %v264, %v7577
        %7579 = vmatpush1.msra.mxu0 %v7578
        %7580 = vmatprep.subr.mxu0 0.0
        %v7581 = vand.u32 %v281, 4294901760
        %v7582 = vsub.f32 %v281, %v7581
        %7583 = vmatpush1.msra.mxu0 %v7582
        %7584 = vmatprep.subr.mxu0 0.0
        %v7585 = vand.u32 %v298, 4294901760
        %v7586 = vsub.f32 %v298, %v7585
        %7587 = vmatpush1.msra.mxu0 %v7586
        %7588 = vmatprep.subr.mxu0 0.0
        %v7589 = vand.u32 %v315, 4294901760
        %v7590 = vsub.f32 %v315, %v7589
        %7591 = vmatpush1.msra.mxu0 %v7590
        %7592 = vmatprep.subr.mxu0 0.0
        %v7593 = vand.u32 %v332, 4294901760
        %v7594 = vsub.f32 %v332, %v7593
        %7595 = vmatpush1.msra.mxu0 %v7594
        %7596 = vmatprep.subr.mxu0 0.0
        %v7597 = vand.u32 %v349, 4294901760
        %v7598 = vsub.f32 %v349, %v7597
        %7599 = vmatpush1.msra.mxu0 %v7598
        %7600 = vmatprep.subr.mxu0 0.0
        %v7601 = vand.u32 %v366, 4294901760
        %v7602 = vsub.f32 %v366, %v7601
        %7603 = vmatpush1.msra.mxu0 %v7602
        %7604 = vmatprep.subr.mxu0 0.0
        %v7605 = vand.u32 %v383, 4294901760
        %v7606 = vsub.f32 %v383, %v7605
        %7607 = vmatpush1.msra.mxu0 %v7606
        %7608 = vmatprep.subr.mxu0 0.0
        %v7609 = vand.u32 %v400, 4294901760
        %v7610 = vsub.f32 %v400, %v7609
        %7611 = vmatpush1.msra.mxu0 %v7610
        %7612 = vmatprep.subr.mxu0 0.0
        %v7613 = vand.u32 %v417, 4294901760
        %v7614 = vsub.f32 %v417, %v7613
        %7615 = vmatpush1.msra.mxu0 %v7614
        %7616 = vmatprep.subr.mxu0 0.0
        %v7617 = vand.u32 %v434, 4294901760
        %v7618 = vsub.f32 %v434, %v7617
        %7619 = vmatpush1.msra.mxu0 %v7618
        %7620 = vmatprep.subr.mxu0 0.0
        %v7621 = vand.u32 %v451, 4294901760
        %v7622 = vsub.f32 %v451, %v7621
        %7623 = vmatpush1.msra.mxu0 %v7622
        %7624 = vmatprep.subr.mxu0 0.0
        %v7625 = vand.u32 %v468, 4294901760
        %v7626 = vsub.f32 %v468, %v7625
        %7627 = vmatpush1.msra.mxu0 %v7626
        %7628 = vmatprep.subr.mxu0 0.0
        %v7629 = vand.u32 %v485, 4294901760
        %v7630 = vsub.f32 %v485, %v7629
        %7631 = vmatpush1.msra.mxu0 %v7630
        %7632 = vmatprep.subr.mxu0 0.0
        %7633 = vmatpush1.msra.mxu0 0.0
        %7634 = vmatprep.subr.mxu0 0.0
        %7635 = vmatpush1.msra.mxu0 0.0
        %7636 = vmatprep.subr.mxu0 0.0
        %7637 = vmatpush1.msra.mxu0 0.0
        %7638 = vmatprep.subr.mxu0 0.0
        %7639 = vmatpush1.msra.mxu0 0.0
        %7640 = vmatprep.subr.mxu0 0.0
        %7641 = vmatpush1.msra.mxu0 0.0
        %7642 = vmatprep.subr.mxu0 0.0
        %7643 = vmatpush1.msra.mxu0 0.0
        %7644 = vmatprep.subr.mxu0 0.0
        %7645 = vmatpush1.msra.mxu0 0.0
        %7646 = vmatprep.subr.mxu0 0.0
        %7647 = vmatpush1.msra.mxu0 0.0
        %7648 = vmatprep.subr.mxu0 0.0
        %7649 = vmatpush1.msra.mxu0 0.0
        %7650 = vmatprep.subr.mxu0 0.0
        %7651 = vmatpush1.msra.mxu0 0.0
        %7652 = vmatprep.subr.mxu0 0.0
        %7653 = vmatpush1.msra.mxu0 0.0
        %7654 = vmatprep.subr.mxu0 0.0
        %7655 = vmatpush1.msra.mxu0 0.0
        %7656 = vmatprep.subr.mxu0 0.0
        %7657 = vmatpush1.msra.mxu0 0.0
        %7658 = vmatprep.subr.mxu0 0.0
        %7659 = vmatpush1.msra.mxu0 0.0
        %7660 = vmatprep.subr.mxu0 0.0
        %7661 = vmatpush1.msra.mxu0 0.0
        %7662 = vmatprep.subr.mxu0 0.0
        %7663 = vmatpush1.msra.mxu0 0.0
        %7664 = vmatprep.mubr.f32.mxu0 0.0
        %v7665 = vand.u32 %v213, 4294901760
        %v7666 = vsub.f32 %v213, %v7665
        %7667 = vmatmul.mubr.f32.gmra.mrb[0].mxu0 %v7666
        %v7668 = vpop.f32.mrb[0].mxu0
        %v7669 = vadd.f32 %v7565, %v7668
        %v7670 = vpop.f32.mrb[0].mxu0
        %7671 = vdwg.mxu0
        %7672 = vmatprep.subr.mxu0 0.0
        %v7673 = vand.u32 %v230, 4294901760
        %7674 = vmatpush1.msra.mxu0 %v7673
        %7675 = vmatprep.subr.mxu0 0.0
        %v7676 = vand.u32 %v247, 4294901760
        %7677 = vmatpush1.msra.mxu0 %v7676
        %7678 = vmatprep.subr.mxu0 0.0
        %v7679 = vand.u32 %v264, 4294901760
        %7680 = vmatpush1.msra.mxu0 %v7679
        %7681 = vmatprep.subr.mxu0 0.0
        %v7682 = vand.u32 %v281, 4294901760
        %7683 = vmatpush1.msra.mxu0 %v7682
        %7684 = vmatprep.subr.mxu0 0.0
        %v7685 = vand.u32 %v298, 4294901760
        %7686 = vmatpush1.msra.mxu0 %v7685
        %7687 = vmatprep.subr.mxu0 0.0
        %v7688 = vand.u32 %v315, 4294901760
        %7689 = vmatpush1.msra.mxu0 %v7688
        %7690 = vmatprep.subr.mxu0 0.0
        %v7691 = vand.u32 %v332, 4294901760
        %7692 = vmatpush1.msra.mxu0 %v7691
        %7693 = vmatprep.subr.mxu0 0.0
        %v7694 = vand.u32 %v349, 4294901760
        %7695 = vmatpush1.msra.mxu0 %v7694
        %7696 = vmatprep.subr.mxu0 0.0
        %v7697 = vand.u32 %v366, 4294901760
        %7698 = vmatpush1.msra.mxu0 %v7697
        %7699 = vmatprep.subr.mxu0 0.0
        %v7700 = vand.u32 %v383, 4294901760
        %7701 = vmatpush1.msra.mxu0 %v7700
        %7702 = vmatprep.subr.mxu0 0.0
        %v7703 = vand.u32 %v400, 4294901760
        %7704 = vmatpush1.msra.mxu0 %v7703
        %7705 = vmatprep.subr.mxu0 0.0
        %v7706 = vand.u32 %v417, 4294901760
        %7707 = vmatpush1.msra.mxu0 %v7706
        %7708 = vmatprep.subr.mxu0 0.0
        %v7709 = vand.u32 %v434, 4294901760
        %7710 = vmatpush1.msra.mxu0 %v7709
        %7711 = vmatprep.subr.mxu0 0.0
        %v7712 = vand.u32 %v451, 4294901760
        %7713 = vmatpush1.msra.mxu0 %v7712
        %7714 = vmatprep.subr.mxu0 0.0
        %v7715 = vand.u32 %v468, 4294901760
        %7716 = vmatpush1.msra.mxu0 %v7715
        %7717 = vmatprep.subr.mxu0 0.0
        %v7718 = vand.u32 %v485, 4294901760
        %7719 = vmatpush1.msra.mxu0 %v7718
        %7720 = vmatprep.subr.mxu0 0.0
        %7721 = vmatpush1.msra.mxu0 0.0
        %7722 = vmatprep.subr.mxu0 0.0
        %7723 = vmatpush1.msra.mxu0 0.0
        %7724 = vmatprep.subr.mxu0 0.0
        %7725 = vmatpush1.msra.mxu0 0.0
        %7726 = vmatprep.subr.mxu0 0.0
        %7727 = vmatpush1.msra.mxu0 0.0
        %7728 = vmatprep.subr.mxu0 0.0
        %7729 = vmatpush1.msra.mxu0 0.0
        %7730 = vmatprep.subr.mxu0 0.0
        %7731 = vmatpush1.msra.mxu0 0.0
        %7732 = vmatprep.subr.mxu0 0.0
        %7733 = vmatpush1.msra.mxu0 0.0
        %7734 = vmatprep.subr.mxu0 0.0
        %7735 = vmatpush1.msra.mxu0 0.0
        %7736 = vmatprep.subr.mxu0 0.0
        %7737 = vmatpush1.msra.mxu0 0.0
        %7738 = vmatprep.subr.mxu0 0.0
        %7739 = vmatpush1.msra.mxu0 0.0
        %7740 = vmatprep.subr.mxu0 0.0
        %7741 = vmatpush1.msra.mxu0 0.0
        %7742 = vmatprep.subr.mxu0 0.0
        %7743 = vmatpush1.msra.mxu0 0.0
        %7744 = vmatprep.subr.mxu0 0.0
        %7745 = vmatpush1.msra.mxu0 0.0
        %7746 = vmatprep.subr.mxu0 0.0
        %7747 = vmatpush1.msra.mxu0 0.0
        %7748 = vmatprep.subr.mxu0 0.0
        %7749 = vmatpush1.msra.mxu0 0.0
        %7750 = vmatprep.subr.mxu0 0.0
        %7751 = vmatpush1.msra.mxu0 0.0
        %7752 = vmatprep.mubr.f32.mxu0 0.0
        %v7753 = vand.u32 %v213, 4294901760
        %v7754 = vsub.f32 %v213, %v7753
        %v7755 = vand.u32 %v7754, 4294901760
        %7756 = vmatmul.mubr.f32.gmra.mrb[0].mxu0 %v7755
        %v7757 = vpop.f32.mrb[0].mxu0
        %v7758 = vadd.f32 %v7669, %v7757
        %v7759 = vpop.f32.mrb[0].mxu0
        %7760 = vdwg.mxu0
        %7761 = vmatprep.subr.mxu0 0.0
        %v7762 = vand.u32 %v230, 4294901760
        %v7763 = vsub.f32 %v230, %v7762
        %v7764 = vand.u32 %v7763, 4294901760
        %7765 = vmatpush1.msra.mxu0 %v7764
        %7766 = vmatprep.subr.mxu0 0.0
        %v7767 = vand.u32 %v247, 4294901760
        %v7768 = vsub.f32 %v247, %v7767
        %v7769 = vand.u32 %v7768, 4294901760
        %7770 = vmatpush1.msra.mxu0 %v7769
        %7771 = vmatprep.subr.mxu0 0.0
        %v7772 = vand.u32 %v264, 4294901760
        %v7773 = vsub.f32 %v264, %v7772
        %v7774 = vand.u32 %v7773, 4294901760
        %7775 = vmatpush1.msra.mxu0 %v7774
        %7776 = vmatprep.subr.mxu0 0.0
        %v7777 = vand.u32 %v281, 4294901760
        %v7778 = vsub.f32 %v281, %v7777
        %v7779 = vand.u32 %v7778, 4294901760
        %7780 = vmatpush1.msra.mxu0 %v7779
        %7781 = vmatprep.subr.mxu0 0.0
        %v7782 = vand.u32 %v298, 4294901760
        %v7783 = vsub.f32 %v298, %v7782
        %v7784 = vand.u32 %v7783, 4294901760
        %7785 = vmatpush1.msra.mxu0 %v7784
        %7786 = vmatprep.subr.mxu0 0.0
        %v7787 = vand.u32 %v315, 4294901760
        %v7788 = vsub.f32 %v315, %v7787
        %v7789 = vand.u32 %v7788, 4294901760
        %7790 = vmatpush1.msra.mxu0 %v7789
        %7791 = vmatprep.subr.mxu0 0.0
        %v7792 = vand.u32 %v332, 4294901760
        %v7793 = vsub.f32 %v332, %v7792
        %v7794 = vand.u32 %v7793, 4294901760
        %7795 = vmatpush1.msra.mxu0 %v7794
        %7796 = vmatprep.subr.mxu0 0.0
        %v7797 = vand.u32 %v349, 4294901760
        %v7798 = vsub.f32 %v349, %v7797
        %v7799 = vand.u32 %v7798, 4294901760
        %7800 = vmatpush1.msra.mxu0 %v7799
        %7801 = vmatprep.subr.mxu0 0.0
        %v7802 = vand.u32 %v366, 4294901760
        %v7803 = vsub.f32 %v366, %v7802
        %v7804 = vand.u32 %v7803, 4294901760
        %7805 = vmatpush1.msra.mxu0 %v7804
        %7806 = vmatprep.subr.mxu0 0.0
        %v7807 = vand.u32 %v383, 4294901760
        %v7808 = vsub.f32 %v383, %v7807
        %v7809 = vand.u32 %v7808, 4294901760
        %7810 = vmatpush1.msra.mxu0 %v7809
        %7811 = vmatprep.subr.mxu0 0.0
        %v7812 = vand.u32 %v400, 4294901760
        %v7813 = vsub.f32 %v400, %v7812
        %v7814 = vand.u32 %v7813, 4294901760
        %7815 = vmatpush1.msra.mxu0 %v7814
        %7816 = vmatprep.subr.mxu0 0.0
        %v7817 = vand.u32 %v417, 4294901760
        %v7818 = vsub.f32 %v417, %v7817
        %v7819 = vand.u32 %v7818, 4294901760
        %7820 = vmatpush1.msra.mxu0 %v7819
        %7821 = vmatprep.subr.mxu0 0.0
        %v7822 = vand.u32 %v434, 4294901760
        %v7823 = vsub.f32 %v434, %v7822
        %v7824 = vand.u32 %v7823, 4294901760
        %7825 = vmatpush1.msra.mxu0 %v7824
        %7826 = vmatprep.subr.mxu0 0.0
        %v7827 = vand.u32 %v451, 4294901760
        %v7828 = vsub.f32 %v451, %v7827
        %v7829 = vand.u32 %v7828, 4294901760
        %7830 = vmatpush1.msra.mxu0 %v7829
        %7831 = vmatprep.subr.mxu0 0.0
        %v7832 = vand.u32 %v468, 4294901760
        %v7833 = vsub.f32 %v468, %v7832
        %v7834 = vand.u32 %v7833, 4294901760
        %7835 = vmatpush1.msra.mxu0 %v7834
        %7836 = vmatprep.subr.mxu0 0.0
        %v7837 = vand.u32 %v485, 4294901760
        %v7838 = vsub.f32 %v485, %v7837
        %v7839 = vand.u32 %v7838, 4294901760
        %7840 = vmatpush1.msra.mxu0 %v7839
        %7841 = vmatprep.subr.mxu0 0.0
        %7842 = vmatpush1.msra.mxu0 0.0
        %7843 = vmatprep.subr.mxu0 0.0
        %7844 = vmatpush1.msra.mxu0 0.0
        %7845 = vmatprep.subr.mxu0 0.0
        %7846 = vmatpush1.msra.mxu0 0.0
        %7847 = vmatprep.subr.mxu0 0.0
        %7848 = vmatpush1.msra.mxu0 0.0
        %7849 = vmatprep.subr.mxu0 0.0
        %7850 = vmatpush1.msra.mxu0 0.0
        %7851 = vmatprep.subr.mxu0 0.0
        %7852 = vmatpush1.msra.mxu0 0.0
        %7853 = vmatprep.subr.mxu0 0.0
        %7854 = vmatpush1.msra.mxu0 0.0
        %7855 = vmatprep.subr.mxu0 0.0
        %7856 = vmatpush1.msra.mxu0 0.0
        %7857 = vmatprep.subr.mxu0 0.0
        %7858 = vmatpush1.msra.mxu0 0.0
        %7859 = vmatprep.subr.mxu0 0.0
        %7860 = vmatpush1.msra.mxu0 0.0
        %7861 = vmatprep.subr.mxu0 0.0
        %7862 = vmatpush1.msra.mxu0 0.0
        %7863 = vmatprep.subr.mxu0 0.0
        %7864 = vmatpush1.msra.mxu0 0.0
        %7865 = vmatprep.subr.mxu0 0.0
        %7866 = vmatpush1.msra.mxu0 0.0
        %7867 = vmatprep.subr.mxu0 0.0
        %7868 = vmatpush1.msra.mxu0 0.0
        %7869 = vmatprep.subr.mxu0 0.0
        %7870 = vmatpush1.msra.mxu0 0.0
        %7871 = vmatprep.subr.mxu0 0.0
        %7872 = vmatpush1.msra.mxu0 0.0
        %7873 = vmatprep.mubr.f32.mxu0 0.0
        %v7874 = vand.u32 %v213, 4294901760
        %7875 = vmatmul.mubr.f32.gmra.mrb[0].mxu0 %v7874
        %v7876 = vpop.f32.mrb[0].mxu0
        %v7877 = vadd.f32 %v7758, %v7876
        %v7878 = vpop.f32.mrb[0].mxu0
        %7879 = vdwg.mxu0
        %7880 = vmatprep.subr.mxu0 0.0
        %v7881 = vand.u32 %v230, 4294901760
        %7882 = vmatpush1.msra.mxu0 %v7881
        %7883 = vmatprep.subr.mxu0 0.0
        %v7884 = vand.u32 %v247, 4294901760
        %7885 = vmatpush1.msra.mxu0 %v7884
        %7886 = vmatprep.subr.mxu0 0.0
        %v7887 = vand.u32 %v264, 4294901760
        %7888 = vmatpush1.msra.mxu0 %v7887
        %7889 = vmatprep.subr.mxu0 0.0
        %v7890 = vand.u32 %v281, 4294901760
        %7891 = vmatpush1.msra.mxu0 %v7890
        %7892 = vmatprep.subr.mxu0 0.0
        %v7893 = vand.u32 %v298, 4294901760
        %7894 = vmatpush1.msra.mxu0 %v7893
        %7895 = vmatprep.subr.mxu0 0.0
        %v7896 = vand.u32 %v315, 4294901760
        %7897 = vmatpush1.msra.mxu0 %v7896
        %7898 = vmatprep.subr.mxu0 0.0
        %v7899 = vand.u32 %v332, 4294901760
        %7900 = vmatpush1.msra.mxu0 %v7899
        %7901 = vmatprep.subr.mxu0 0.0
        %v7902 = vand.u32 %v349, 4294901760
        %7903 = vmatpush1.msra.mxu0 %v7902
        %7904 = vmatprep.subr.mxu0 0.0
        %v7905 = vand.u32 %v366, 4294901760
        %7906 = vmatpush1.msra.mxu0 %v7905
        %7907 = vmatprep.subr.mxu0 0.0
        %v7908 = vand.u32 %v383, 4294901760
        %7909 = vmatpush1.msra.mxu0 %v7908
        %7910 = vmatprep.subr.mxu0 0.0
        %v7911 = vand.u32 %v400, 4294901760
        %7912 = vmatpush1.msra.mxu0 %v7911
        %7913 = vmatprep.subr.mxu0 0.0
        %v7914 = vand.u32 %v417, 4294901760
        %7915 = vmatpush1.msra.mxu0 %v7914
        %7916 = vmatprep.subr.mxu0 0.0
        %v7917 = vand.u32 %v434, 4294901760
        %7918 = vmatpush1.msra.mxu0 %v7917
        %7919 = vmatprep.subr.mxu0 0.0
        %v7920 = vand.u32 %v451, 4294901760
        %7921 = vmatpush1.msra.mxu0 %v7920
        %7922 = vmatprep.subr.mxu0 0.0
        %v7923 = vand.u32 %v468, 4294901760
        %7924 = vmatpush1.msra.mxu0 %v7923
        %7925 = vmatprep.subr.mxu0 0.0
        %v7926 = vand.u32 %v485, 4294901760
        %7927 = vmatpush1.msra.mxu0 %v7926
        %7928 = vmatprep.subr.mxu0 0.0
        %7929 = vmatpush1.msra.mxu0 0.0
        %7930 = vmatprep.subr.mxu0 0.0
        %7931 = vmatpush1.msra.mxu0 0.0
        %7932 = vmatprep.subr.mxu0 0.0
        %7933 = vmatpush1.msra.mxu0 0.0
        %7934 = vmatprep.subr.mxu0 0.0
        %7935 = vmatpush1.msra.mxu0 0.0
        %7936 = vmatprep.subr.mxu0 0.0
        %7937 = vmatpush1.msra.mxu0 0.0
        %7938 = vmatprep.subr.mxu0 0.0
        %7939 = vmatpush1.msra.mxu0 0.0
        %7940 = vmatprep.subr.mxu0 0.0
        %7941 = vmatpush1.msra.mxu0 0.0
        %7942 = vmatprep.subr.mxu0 0.0
        %7943 = vmatpush1.msra.mxu0 0.0
        %7944 = vmatprep.subr.mxu0 0.0
        %7945 = vmatpush1.msra.mxu0 0.0
        %7946 = vmatprep.subr.mxu0 0.0
        %7947 = vmatpush1.msra.mxu0 0.0
        %7948 = vmatprep.subr.mxu0 0.0
        %7949 = vmatpush1.msra.mxu0 0.0
        %7950 = vmatprep.subr.mxu0 0.0
        %7951 = vmatpush1.msra.mxu0 0.0
        %7952 = vmatprep.subr.mxu0 0.0
        %7953 = vmatpush1.msra.mxu0 0.0
        %7954 = vmatprep.subr.mxu0 0.0
        %7955 = vmatpush1.msra.mxu0 0.0
        %7956 = vmatprep.subr.mxu0 0.0
        %7957 = vmatpush1.msra.mxu0 0.0
        %7958 = vmatprep.subr.mxu0 0.0
        %7959 = vmatpush1.msra.mxu0 0.0
        %7960 = vmatprep.mubr.f32.mxu0 0.0
        %v7961 = vand.u32 %v213, 4294901760
        %7962 = vmatmul.mubr.f32.gmra.mrb[0].mxu0 %v7961
        %v7963 = vpop.f32.mrb[0].mxu0
        %v7964 = vadd.f32 %v7877, %v7963
        %v7965 = vpop.f32.mrb[0].mxu0
        %7966 = vdwg.mxu0
        %v7967 = vld [vmem:[#allocation7] ss:$8 sm:$0xf]
        %v7968 = vld [vmem:[#allocation7] ss:$8 sm:$0xf0]
        %v7969 = vor.u32 %v7967, %v7968
        %s7970 = scalar_lea.vmem [#allocation7], 64
        %v7971 = vld [vmem:[%s7970] ss:$8 sm:$0xf]
        %v7972 = vld [vmem:[%s7970] ss:$8 sm:$0xf0]
        %v7973 = vor.u32 %v7971, %v7972
        %s7974 = scalar_lea.vmem [#allocation7], 128
        %v7975 = vld [vmem:[%s7974] ss:$8 sm:$0x1]
        %s7976 = scalar_lea.vmem [#allocation7], 1
        %v7977 = vld [vmem:[%s7976] ss:$8 sm:$0xf]
        %v7978 = vld [vmem:[%s7976] ss:$8 sm:$0xf0]
        %v7979 = vor.u32 %v7977, %v7978
        %s7980 = scalar_lea.vmem [#allocation7], 65
        %v7981 = vld [vmem:[%s7980] ss:$8 sm:$0xf]
        %v7982 = vld [vmem:[%s7980] ss:$8 sm:$0xf0]
        %v7983 = vor.u32 %v7981, %v7982
        %s7984 = scalar_lea.vmem [#allocation7], 129
        %v7985 = vld [vmem:[%s7984] ss:$8 sm:$0x1]
        %s7986 = scalar_lea.vmem [#allocation7], 2
        %v7987 = vld [vmem:[%s7986] ss:$8 sm:$0xf]
        %v7988 = vld [vmem:[%s7986] ss:$8 sm:$0xf0]
        %v7989 = vor.u32 %v7987, %v7988
        %s7990 = scalar_lea.vmem [#allocation7], 66
        %v7991 = vld [vmem:[%s7990] ss:$8 sm:$0xf]
        %v7992 = vld [vmem:[%s7990] ss:$8 sm:$0xf0]
        %v7993 = vor.u32 %v7991, %v7992
        %s7994 = scalar_lea.vmem [#allocation7], 130
        %v7995 = vld [vmem:[%s7994] ss:$8 sm:$0x1]
        %s7996 = scalar_lea.vmem [#allocation7], 3
        %v7997 = vld [vmem:[%s7996] ss:$8 sm:$0xf]
        %v7998 = vld [vmem:[%s7996] ss:$8 sm:$0xf0]
        %v7999 = vor.u32 %v7997, %v7998
        %s8000 = scalar_lea.vmem [#allocation7], 67
        %v8001 = vld [vmem:[%s8000] ss:$8 sm:$0xf]
        %v8002 = vld [vmem:[%s8000] ss:$8 sm:$0xf0]
        %v8003 = vor.u32 %v8001, %v8002
        %s8004 = scalar_lea.vmem [#allocation7], 131
        %v8005 = vld [vmem:[%s8004] ss:$8 sm:$0x1]
        %v8009 = vlaneseq
        %v8010 = vshrl.u32 %v8009, 7
        %v8011 = vsub.s32 0, %v8010
        %v8012 = vrot.slane %v7999, %v8011
        %v8013 = vlaneseq
        %v8014 = vshrl.u32 %v8013, 7
        %v8015 = vsub.s32 1, %v8014
        %v8016 = vrot.slane %v7999, %v8015
        %v8017 = vlaneseq
        %v8018 = vshrl.u32 %v8017, 7
        %v8019 = vsub.s32 2, %v8018
        %v8020 = vrot.slane %v7999, %v8019
        %v8021 = vlaneseq
        %v8022 = vshrl.u32 %v8021, 7
        %v8023 = vsub.s32 3, %v8022
        %v8024 = vrot.slane %v7999, %v8023
        %v8025 = vlaneseq
        %v8026 = vshrl.u32 %v8025, 7
        %v8027 = vsub.s32 4, %v8026
        %v8028 = vrot.slane %v7999, %v8027
        %v8029 = vlaneseq
        %v8030 = vshrl.u32 %v8029, 7
        %v8031 = vsub.s32 5, %v8030
        %v8032 = vrot.slane %v7999, %v8031
        %v8033 = vlaneseq
        %v8034 = vshrl.u32 %v8033, 7
        %v8035 = vsub.s32 6, %v8034
        %v8036 = vrot.slane %v7999, %v8035
        %v8037 = vlaneseq
        %v8038 = vshrl.u32 %v8037, 7
        %v8039 = vsub.s32 7, %v8038
        %v8040 = vrot.slane %v7999, %v8039
        %v8041 = vlaneseq
        %v8042 = vshrl.u32 %v8041, 7
        %v8043 = vsub.s32 0, %v8042
        %v8044 = vrot.slane %v8003, %v8043
        %v8045 = vlaneseq
        %v8046 = vshrl.u32 %v8045, 7
        %v8047 = vsub.s32 1, %v8046
        %v8048 = vrot.slane %v8003, %v8047
        %v8049 = vlaneseq
        %v8050 = vshrl.u32 %v8049, 7
        %v8051 = vsub.s32 2, %v8050
        %v8052 = vrot.slane %v8003, %v8051
        %v8053 = vlaneseq
        %v8054 = vshrl.u32 %v8053, 7
        %v8055 = vsub.s32 3, %v8054
        %v8056 = vrot.slane %v8003, %v8055
        %v8057 = vlaneseq
        %v8058 = vshrl.u32 %v8057, 7
        %v8059 = vsub.s32 4, %v8058
        %v8060 = vrot.slane %v8003, %v8059
        %v8061 = vlaneseq
        %v8062 = vshrl.u32 %v8061, 7
        %v8063 = vsub.s32 5, %v8062
        %v8064 = vrot.slane %v8003, %v8063
        %v8065 = vlaneseq
        %v8066 = vshrl.u32 %v8065, 7
        %v8067 = vsub.s32 6, %v8066
        %v8068 = vrot.slane %v8003, %v8067
        %v8069 = vlaneseq
        %v8070 = vshrl.u32 %v8069, 7
        %v8071 = vsub.s32 7, %v8070
        %v8072 = vrot.slane %v8003, %v8071
        %v8073 = vlaneseq
        %v8074 = vshrl.u32 %v8073, 7
        %v8075 = vsub.s32 0, %v8074
        %v8076 = vrot.slane %v8005, %v8075
        %v8094 = vmul.f32 %v8012, %v1337
        %v8095 = vmul.f32 %v8016, %v1339
        %v8096 = vmul.f32 %v8020, %v2192
        %v8097 = vmul.f32 %v8024, %v2194
        %v8098 = vmul.f32 %v8028, %v3047
        %v8099 = vmul.f32 %v8032, %v3049
        %v8100 = vmul.f32 %v8036, %v3902
        %v8101 = vmul.f32 %v8040, %v3904
        %v8102 = vmul.f32 %v8044, %v4757
        %v8103 = vmul.f32 %v8048, %v4759
        %v8104 = vmul.f32 %v8052, %v5612
        %v8105 = vmul.f32 %v8056, %v5614
        %v8106 = vmul.f32 %v8060, %v6467
        %v8107 = vmul.f32 %v8064, %v6469
        %v8108 = vmul.f32 %v8068, %v7322
        %v8109 = vmul.f32 %v8072, %v7324
        %v8110 = vmul.f32 %v8076, %v7964
        %v8114 = vlaneseq
        %v8115 = vshrl.u32 %v8114, 7
        %v8116 = vsub.s32 0, %v8115
        %v8117 = vrot.slane %v7969, %v8116
        %v8118 = vlaneseq
        %v8119 = vshrl.u32 %v8118, 7
        %v8120 = vsub.s32 1, %v8119
        %v8121 = vrot.slane %v7969, %v8120
        %v8122 = vlaneseq
        %v8123 = vshrl.u32 %v8122, 7
        %v8124 = vsub.s32 2, %v8123
        %v8125 = vrot.slane %v7969, %v8124
        %v8126 = vlaneseq
        %v8127 = vshrl.u32 %v8126, 7
        %v8128 = vsub.s32 3, %v8127
        %v8129 = vrot.slane %v7969, %v8128
        %v8130 = vlaneseq
        %v8131 = vshrl.u32 %v8130, 7
        %v8132 = vsub.s32 4, %v8131
        %v8133 = vrot.slane %v7969, %v8132
        %v8134 = vlaneseq
        %v8135 = vshrl.u32 %v8134, 7
        %v8136 = vsub.s32 5, %v8135
        %v8137 = vrot.slane %v7969, %v8136
        %v8138 = vlaneseq
        %v8139 = vshrl.u32 %v8138, 7
        %v8140 = vsub.s32 6, %v8139
        %v8141 = vrot.slane %v7969, %v8140
        %v8142 = vlaneseq
        %v8143 = vshrl.u32 %v8142, 7
        %v8144 = vsub.s32 7, %v8143
        %v8145 = vrot.slane %v7969, %v8144
        %v8146 = vlaneseq
        %v8147 = vshrl.u32 %v8146, 7
        %v8148 = vsub.s32 0, %v8147
        %v8149 = vrot.slane %v7973, %v8148
        %v8150 = vlaneseq
        %v8151 = vshrl.u32 %v8150, 7
        %v8152 = vsub.s32 1, %v8151
        %v8153 = vrot.slane %v7973, %v8152
        %v8154 = vlaneseq
        %v8155 = vshrl.u32 %v8154, 7
        %v8156 = vsub.s32 2, %v8155
        %v8157 = vrot.slane %v7973, %v8156
        %v8158 = vlaneseq
        %v8159 = vshrl.u32 %v8158, 7
        %v8160 = vsub.s32 3, %v8159
        %v8161 = vrot.slane %v7973, %v8160
        %v8162 = vlaneseq
        %v8163 = vshrl.u32 %v8162, 7
        %v8164 = vsub.s32 4, %v8163
        %v8165 = vrot.slane %v7973, %v8164
        %v8166 = vlaneseq
        %v8167 = vshrl.u32 %v8166, 7
        %v8168 = vsub.s32 5, %v8167
        %v8169 = vrot.slane %v7973, %v8168
        %v8170 = vlaneseq
        %v8171 = vshrl.u32 %v8170, 7
        %v8172 = vsub.s32 6, %v8171
        %v8173 = vrot.slane %v7973, %v8172
        %v8174 = vlaneseq
        %v8175 = vshrl.u32 %v8174, 7
        %v8176 = vsub.s32 7, %v8175
        %v8177 = vrot.slane %v7973, %v8176
        %v8178 = vlaneseq
        %v8179 = vshrl.u32 %v8178, 7
        %v8180 = vsub.s32 0, %v8179
        %v8181 = vrot.slane %v7975, %v8180
        %v8199 = vmul.f32 %v1337, %v8117
        %v8200 = vmul.f32 %v1339, %v8121
        %v8201 = vmul.f32 %v2192, %v8125
        %v8202 = vmul.f32 %v2194, %v8129
        %v8203 = vmul.f32 %v3047, %v8133
        %v8204 = vmul.f32 %v3049, %v8137
        %v8205 = vmul.f32 %v3902, %v8141
        %v8206 = vmul.f32 %v3904, %v8145
        %v8207 = vmul.f32 %v4757, %v8149
        %v8208 = vmul.f32 %v4759, %v8153
        %v8209 = vmul.f32 %v5612, %v8157
        %v8210 = vmul.f32 %v5614, %v8161
        %v8211 = vmul.f32 %v6467, %v8165
        %v8212 = vmul.f32 %v6469, %v8169
        %v8213 = vmul.f32 %v7322, %v8173
        %v8214 = vmul.f32 %v7324, %v8177
        %v8215 = vmul.f32 %v7964, %v8181
        %v8219 = vlaneseq
        %v8220 = vshrl.u32 %v8219, 7
        %v8221 = vsub.s32 0, %v8220
        %v8222 = vrot.slane %v7979, %v8221
        %v8223 = vlaneseq
        %v8224 = vshrl.u32 %v8223, 7
        %v8225 = vsub.s32 1, %v8224
        %v8226 = vrot.slane %v7979, %v8225
        %v8227 = vlaneseq
        %v8228 = vshrl.u32 %v8227, 7
        %v8229 = vsub.s32 2, %v8228
        %v8230 = vrot.slane %v7979, %v8229
        %v8231 = vlaneseq
        %v8232 = vshrl.u32 %v8231, 7
        %v8233 = vsub.s32 3, %v8232
        %v8234 = vrot.slane %v7979, %v8233
        %v8235 = vlaneseq
        %v8236 = vshrl.u32 %v8235, 7
        %v8237 = vsub.s32 4, %v8236
        %v8238 = vrot.slane %v7979, %v8237
        %v8239 = vlaneseq
        %v8240 = vshrl.u32 %v8239, 7
        %v8241 = vsub.s32 5, %v8240
        %v8242 = vrot.slane %v7979, %v8241
        %v8243 = vlaneseq
        %v8244 = vshrl.u32 %v8243, 7
        %v8245 = vsub.s32 6, %v8244
        %v8246 = vrot.slane %v7979, %v8245
        %v8247 = vlaneseq
        %v8248 = vshrl.u32 %v8247, 7
        %v8249 = vsub.s32 7, %v8248
        %v8250 = vrot.slane %v7979, %v8249
        %v8251 = vlaneseq
        %v8252 = vshrl.u32 %v8251, 7
        %v8253 = vsub.s32 0, %v8252
        %v8254 = vrot.slane %v7983, %v8253
        %v8255 = vlaneseq
        %v8256 = vshrl.u32 %v8255, 7
        %v8257 = vsub.s32 1, %v8256
        %v8258 = vrot.slane %v7983, %v8257
        %v8259 = vlaneseq
        %v8260 = vshrl.u32 %v8259, 7
        %v8261 = vsub.s32 2, %v8260
        %v8262 = vrot.slane %v7983, %v8261
        %v8263 = vlaneseq
        %v8264 = vshrl.u32 %v8263, 7
        %v8265 = vsub.s32 3, %v8264
        %v8266 = vrot.slane %v7983, %v8265
        %v8267 = vlaneseq
        %v8268 = vshrl.u32 %v8267, 7
        %v8269 = vsub.s32 4, %v8268
        %v8270 = vrot.slane %v7983, %v8269
        %v8271 = vlaneseq
        %v8272 = vshrl.u32 %v8271, 7
        %v8273 = vsub.s32 5, %v8272
        %v8274 = vrot.slane %v7983, %v8273
        %v8275 = vlaneseq
        %v8276 = vshrl.u32 %v8275, 7
        %v8277 = vsub.s32 6, %v8276
        %v8278 = vrot.slane %v7983, %v8277
        %v8279 = vlaneseq
        %v8280 = vshrl.u32 %v8279, 7
        %v8281 = vsub.s32 7, %v8280
        %v8282 = vrot.slane %v7983, %v8281
        %v8283 = vlaneseq
        %v8284 = vshrl.u32 %v8283, 7
        %v8285 = vsub.s32 0, %v8284
        %v8286 = vrot.slane %v7985, %v8285
        %v8304 = vadd.f32 %v8199, %v8222
        %v8305 = vadd.f32 %v8200, %v8226
        %v8306 = vadd.f32 %v8201, %v8230
        %v8307 = vadd.f32 %v8202, %v8234
        %v8308 = vadd.f32 %v8203, %v8238
        %v8309 = vadd.f32 %v8204, %v8242
        %v8310 = vadd.f32 %v8205, %v8246
        %v8311 = vadd.f32 %v8206, %v8250
        %v8312 = vadd.f32 %v8207, %v8254
        %v8313 = vadd.f32 %v8208, %v8258
        %v8314 = vadd.f32 %v8209, %v8262
        %v8315 = vadd.f32 %v8210, %v8266
        %v8316 = vadd.f32 %v8211, %v8270
        %v8317 = vadd.f32 %v8212, %v8274
        %v8318 = vadd.f32 %v8213, %v8278
        %v8319 = vadd.f32 %v8214, %v8282
        %v8320 = vadd.f32 %v8215, %v8286
        %v8321 = vand.u32 2147483647, %v8304
        %vm8322 = vcmp.le.f32.partialorder %v8321, 0.7853982
        %vm8323 = vcmp.lt.s32.totalorder %v8304, 0
        %v8324 = vand.u32 %v8304, 2139095040
        %v8325 = vshrl.u32 %v8324, 23
        %v8326 = vsub.s32 %v8325, 127
        %v8327 = vand.u32 2147483647, %v8304
        %v8328 = vand.u32 %v8327, 8388607
        %v8329 = vor.u32 %v8328, 8388608
        %v8330 = vsub.s32 0, %v8329
        %v8331 = vadd.s32 %v8326, 1
        %vm8332 = vcmp.gt.s32.totalorder %v8331, 0
        %v8333 = vsel %vm8332, %v8331, 0
        %v8334 = vshrl.u32 %v8333, 5
        %v8335 = vand.u32 %v8333, 31
        %v8336 = vsub.s32 32, %v8335
        %v8337 = vshrl.u32 683565275, %v8336
        %v8338 = vshll.u32 683565275, %v8335
        %v8339 = vshrl.u32 2475754826, %v8336
        %v8340 = vor.u32 %v8338, %v8339
        %v8341 = vshll.u32 2475754826, %v8335
        %v8342 = vshrl.u32 2131351028, %v8336
        %v8343 = vor.u32 %v8341, %v8342
        %v8344 = vshll.u32 2131351028, %v8335
        %v8345 = vshrl.u32 2102212464, %v8336
        %v8346 = vor.u32 %v8344, %v8345
        %v8347 = vshll.u32 2102212464, %v8335
        %v8348 = vshrl.u32 920167782, %v8336
        %v8349 = vor.u32 %v8347, %v8348
        %v8350 = vshll.u32 920167782, %v8335
        %v8351 = vshrl.u32 1326507024, %v8336
        %v8352 = vor.u32 %v8350, %v8351
        %vm8353 = vcmp.lt.s32.totalorder %v8334, 1
        %vm8354 = vcmp.lt.s32.totalorder %v8334, 2
        %vm8355 = vcmp.lt.s32.totalorder %v8334, 3
        %vm8356 = vcmp.lt.s32.totalorder %v8334, 4
        %v8357 = vsel %vm8353, %v8337, %v8340
        %v8358 = vsel %vm8356, %v8346, 2102212464
        %v8359 = vsel %vm8355, %v8343, %v8358
        %v8360 = vsel %vm8354, %v8357, %v8359
        %v8361 = vsel %vm8353, %v8340, %v8343
        %v8362 = vsel %vm8356, %v8349, 920167782
        %v8363 = vsel %vm8355, %v8346, %v8362
        %v8364 = vsel %vm8354, %v8361, %v8363
        %v8365 = vsel %vm8353, %v8343, %v8346
        %v8366 = vsel %vm8356, %v8352, 1326507024
        %v8367 = vsel %vm8355, %v8349, %v8366
        %v8368 = vsel %vm8354, %v8365, %v8367
        %v8369 = vshll.u32 %v8329, 8
        %v8370 = vmul.u32.u64.compose %v8369, %v8368
        %v8371 = vextract.low.u32 %v8370
        %v8372 = vextract.high.u32 %v8370
        %v8373 = vmul.u32.u64.compose %v8369, %v8364
        %v8374 = vextract.low.u32 %v8373
        %v8375 = vextract.high.u32 %v8373
        %v8376 = vmul.u32 %v8369, %v8360
        %v8377 = vadd.s32 %v8372, %v8374
        %vm8378 = vc.u32 %v8372, %v8374
        %v8379 = vadd.s32 %v8375, 1
        %v8380 = vsel %vm8378, %v8379, %v8375
        %v8381 = vadd.s32 %v8376, %v8380
        %v8382 = vadd.s32 %v8381, 536870912
        %v8383 = vshrl.u32 %v8382, 30
        %v8384 = vshll.u32 %v8383, 30
        %v8385 = vsub.s32 %v8381, %v8384
        %vm8386 = vcmp.lt.s32.totalorder %v8385, 0
        %v8387 = vsub.s32 0, %v8385
        %v8388 = vsel %vm8386, %v8387, %v8385
        %v8389 = vclz %v8388
        %v8390 = vsub.s32 %v8389, 2
        %vm8391 = vcmp.gt.s32.totalorder 0, %v8390
        %v8392 = vsel %vm8391, 0, %v8390
        %v8393 = vsub.s32 32, %v8392
        %v8394 = vshll.u32 %v8385, %v8392
        %v8395 = vshrl.u32 %v8377, %v8393
        %v8396 = vor.u32 %v8394, %v8395
        %v8397 = vsub.s32 4294967266, %v8392
        %v8398 = vadd.s32 %v8397, 127
        %v8399 = vshll.u32 %v8398, 23
        %v8400 = vor.u32 4788187, %v8399
        %v8401 = vand.u32 2147483647, %v8400
        %v8403 = vcvt.s32.f32 %v8396
        %v8404 = vmul.f32 %v8403, %v8401
        %v8405 = vxor.u32 %v8404, 2147483648
        %v8406 = vsel %vm8323, %v8405, %v8404
        %v8407 = vsub.s32 4, %v8383
        %v8408 = vsel %vm8323, %v8407, %v8383
        %v8409 = vsel %vm8322, %v8304, %v8406
        %v8410 = vsel %vm8322, 0, %v8408
        %v8411 = vcosq.f32.pop %v8409
        %v8412 = vsinq.f32.pop %v8409
        %vm8413 = vweird.f32 %v8304
        %v8414 = vand.u32 %v8410, 3
        %vm8415 = vcmp.lt.s32.totalorder %v8414, 2
        %vm8416 = vcmp.eq.s32.totalorder %v8414, 0
        %v8417 = vxor.u32 %v8412, 2147483648
        %v8418 = vsel %vm8416, %v8411, %v8417
        %vm8419 = vcmp.eq.s32.totalorder %v8414, 2
        %v8420 = vxor.u32 %v8411, 2147483648
        %v8421 = vsel %vm8419, %v8420, %v8412
        %v8422 = vsel %vm8415, %v8418, %v8421
        %v8423 = vsel %vm8413, nan, %v8422
        %v8424 = vand.u32 2147483647, %v8305
        %vm8425 = vcmp.le.f32.partialorder %v8424, 0.7853982
        %vm8426 = vcmp.lt.s32.totalorder %v8305, 0
        %v8427 = vand.u32 %v8305, 2139095040
        %v8428 = vshrl.u32 %v8427, 23
        %v8429 = vsub.s32 %v8428, 127
        %v8430 = vand.u32 2147483647, %v8305
        %v8431 = vand.u32 %v8430, 8388607
        %v8432 = vor.u32 %v8431, 8388608
        %v8433 = vsub.s32 0, %v8432
        %v8434 = vadd.s32 %v8429, 1
        %vm8435 = vcmp.gt.s32.totalorder %v8434, 0
        %v8436 = vsel %vm8435, %v8434, 0
        %v8437 = vshrl.u32 %v8436, 5
        %v8438 = vand.u32 %v8436, 31
        %v8439 = vsub.s32 32, %v8438
        %v8440 = vshrl.u32 683565275, %v8439
        %v8441 = vshll.u32 683565275, %v8438
        %v8442 = vshrl.u32 2475754826, %v8439
        %v8443 = vor.u32 %v8441, %v8442
        %v8444 = vshll.u32 2475754826, %v8438
        %v8445 = vshrl.u32 2131351028, %v8439
        %v8446 = vor.u32 %v8444, %v8445
        %v8447 = vshll.u32 2131351028, %v8438
        %v8448 = vshrl.u32 2102212464, %v8439
        %v8449 = vor.u32 %v8447, %v8448
        %v8450 = vshll.u32 2102212464, %v8438
        %v8451 = vshrl.u32 920167782, %v8439
        %v8452 = vor.u32 %v8450, %v8451
        %v8453 = vshll.u32 920167782, %v8438
        %v8454 = vshrl.u32 1326507024, %v8439
        %v8455 = vor.u32 %v8453, %v8454
        %vm8456 = vcmp.lt.s32.totalorder %v8437, 1
        %vm8457 = vcmp.lt.s32.totalorder %v8437, 2
        %vm8458 = vcmp.lt.s32.totalorder %v8437, 3
        %vm8459 = vcmp.lt.s32.totalorder %v8437, 4
        %v8460 = vsel %vm8456, %v8440, %v8443
        %v8461 = vsel %vm8459, %v8449, 2102212464
        %v8462 = vsel %vm8458, %v8446, %v8461
        %v8463 = vsel %vm8457, %v8460, %v8462
        %v8464 = vsel %vm8456, %v8443, %v8446
        %v8465 = vsel %vm8459, %v8452, 920167782
        %v8466 = vsel %vm8458, %v8449, %v8465
        %v8467 = vsel %vm8457, %v8464, %v8466
        %v8468 = vsel %vm8456, %v8446, %v8449
        %v8469 = vsel %vm8459, %v8455, 1326507024
        %v8470 = vsel %vm8458, %v8452, %v8469
        %v8471 = vsel %vm8457, %v8468, %v8470
        %v8472 = vshll.u32 %v8432, 8
        %v8473 = vmul.u32.u64.compose %v8472, %v8471
        %v8474 = vextract.low.u32 %v8473
        %v8475 = vextract.high.u32 %v8473
        %v8476 = vmul.u32.u64.compose %v8472, %v8467
        %v8477 = vextract.low.u32 %v8476
        %v8478 = vextract.high.u32 %v8476
        %v8479 = vmul.u32 %v8472, %v8463
        %v8480 = vadd.s32 %v8475, %v8477
        %vm8481 = vc.u32 %v8475, %v8477
        %v8482 = vadd.s32 %v8478, 1
        %v8483 = vsel %vm8481, %v8482, %v8478
        %v8484 = vadd.s32 %v8479, %v8483
        %v8485 = vadd.s32 %v8484, 536870912
        %v8486 = vshrl.u32 %v8485, 30
        %v8487 = vshll.u32 %v8486, 30
        %v8488 = vsub.s32 %v8484, %v8487
        %vm8489 = vcmp.lt.s32.totalorder %v8488, 0
        %v8490 = vsub.s32 0, %v8488
        %v8491 = vsel %vm8489, %v8490, %v8488
        %v8492 = vclz %v8491
        %v8493 = vsub.s32 %v8492, 2
        %vm8494 = vcmp.gt.s32.totalorder 0, %v8493
        %v8495 = vsel %vm8494, 0, %v8493
        %v8496 = vsub.s32 32, %v8495
        %v8497 = vshll.u32 %v8488, %v8495
        %v8498 = vshrl.u32 %v8480, %v8496
        %v8499 = vor.u32 %v8497, %v8498
        %v8500 = vsub.s32 4294967266, %v8495
        %v8501 = vadd.s32 %v8500, 127
        %v8502 = vshll.u32 %v8501, 23
        %v8503 = vor.u32 4788187, %v8502
        %v8504 = vand.u32 2147483647, %v8503
        %v8506 = vcvt.s32.f32 %v8499
        %v8507 = vmul.f32 %v8506, %v8504
        %v8508 = vxor.u32 %v8507, 2147483648
        %v8509 = vsel %vm8426, %v8508, %v8507
        %v8510 = vsub.s32 4, %v8486
        %v8511 = vsel %vm8426, %v8510, %v8486
        %v8512 = vsel %vm8425, %v8305, %v8509
        %v8513 = vsel %vm8425, 0, %v8511
        %v8514 = vcosq.f32.pop %v8512
        %v8515 = vsinq.f32.pop %v8512
        %vm8516 = vweird.f32 %v8305
        %v8517 = vand.u32 %v8513, 3
        %vm8518 = vcmp.lt.s32.totalorder %v8517, 2
        %vm8519 = vcmp.eq.s32.totalorder %v8517, 0
        %v8520 = vxor.u32 %v8515, 2147483648
        %v8521 = vsel %vm8519, %v8514, %v8520
        %vm8522 = vcmp.eq.s32.totalorder %v8517, 2
        %v8523 = vxor.u32 %v8514, 2147483648
        %v8524 = vsel %vm8522, %v8523, %v8515
        %v8525 = vsel %vm8518, %v8521, %v8524
        %v8526 = vsel %vm8516, nan, %v8525
        %v8527 = vand.u32 2147483647, %v8306
        %vm8528 = vcmp.le.f32.partialorder %v8527, 0.7853982
        %vm8529 = vcmp.lt.s32.totalorder %v8306, 0
        %v8530 = vand.u32 %v8306, 2139095040
        %v8531 = vshrl.u32 %v8530, 23
        %v8532 = vsub.s32 %v8531, 127
        %v8533 = vand.u32 2147483647, %v8306
        %v8534 = vand.u32 %v8533, 8388607
        %v8535 = vor.u32 %v8534, 8388608
        %v8536 = vsub.s32 0, %v8535
        %v8537 = vadd.s32 %v8532, 1
        %vm8538 = vcmp.gt.s32.totalorder %v8537, 0
        %v8539 = vsel %vm8538, %v8537, 0
        %v8540 = vshrl.u32 %v8539, 5
        %v8541 = vand.u32 %v8539, 31
        %v8542 = vsub.s32 32, %v8541
        %v8543 = vshrl.u32 683565275, %v8542
        %v8544 = vshll.u32 683565275, %v8541
        %v8545 = vshrl.u32 2475754826, %v8542
        %v8546 = vor.u32 %v8544, %v8545
        %v8547 = vshll.u32 2475754826, %v8541
        %v8548 = vshrl.u32 2131351028, %v8542
        %v8549 = vor.u32 %v8547, %v8548
        %v8550 = vshll.u32 2131351028, %v8541
        %v8551 = vshrl.u32 2102212464, %v8542
        %v8552 = vor.u32 %v8550, %v8551
        %v8553 = vshll.u32 2102212464, %v8541
        %v8554 = vshrl.u32 920167782, %v8542
        %v8555 = vor.u32 %v8553, %v8554
        %v8556 = vshll.u32 920167782, %v8541
        %v8557 = vshrl.u32 1326507024, %v8542
        %v8558 = vor.u32 %v8556, %v8557
        %vm8559 = vcmp.lt.s32.totalorder %v8540, 1
        %vm8560 = vcmp.lt.s32.totalorder %v8540, 2
        %vm8561 = vcmp.lt.s32.totalorder %v8540, 3
        %vm8562 = vcmp.lt.s32.totalorder %v8540, 4
        %v8563 = vsel %vm8559, %v8543, %v8546
        %v8564 = vsel %vm8562, %v8552, 2102212464
        %v8565 = vsel %vm8561, %v8549, %v8564
        %v8566 = vsel %vm8560, %v8563, %v8565
        %v8567 = vsel %vm8559, %v8546, %v8549
        %v8568 = vsel %vm8562, %v8555, 920167782
        %v8569 = vsel %vm8561, %v8552, %v8568
        %v8570 = vsel %vm8560, %v8567, %v8569
        %v8571 = vsel %vm8559, %v8549, %v8552
        %v8572 = vsel %vm8562, %v8558, 1326507024
        %v8573 = vsel %vm8561, %v8555, %v8572
        %v8574 = vsel %vm8560, %v8571, %v8573
        %v8575 = vshll.u32 %v8535, 8
        %v8576 = vmul.u32.u64.compose %v8575, %v8574
        %v8577 = vextract.low.u32 %v8576
        %v8578 = vextract.high.u32 %v8576
        %v8579 = vmul.u32.u64.compose %v8575, %v8570
        %v8580 = vextract.low.u32 %v8579
        %v8581 = vextract.high.u32 %v8579
        %v8582 = vmul.u32 %v8575, %v8566
        %v8583 = vadd.s32 %v8578, %v8580
        %vm8584 = vc.u32 %v8578, %v8580
        %v8585 = vadd.s32 %v8581, 1
        %v8586 = vsel %vm8584, %v8585, %v8581
        %v8587 = vadd.s32 %v8582, %v8586
        %v8588 = vadd.s32 %v8587, 536870912
        %v8589 = vshrl.u32 %v8588, 30
        %v8590 = vshll.u32 %v8589, 30
        %v8591 = vsub.s32 %v8587, %v8590
        %vm8592 = vcmp.lt.s32.totalorder %v8591, 0
        %v8593 = vsub.s32 0, %v8591
        %v8594 = vsel %vm8592, %v8593, %v8591
        %v8595 = vclz %v8594
        %v8596 = vsub.s32 %v8595, 2
        %vm8597 = vcmp.gt.s32.totalorder 0, %v8596
        %v8598 = vsel %vm8597, 0, %v8596
        %v8599 = vsub.s32 32, %v8598
        %v8600 = vshll.u32 %v8591, %v8598
        %v8601 = vshrl.u32 %v8583, %v8599
        %v8602 = vor.u32 %v8600, %v8601
        %v8603 = vsub.s32 4294967266, %v8598
        %v8604 = vadd.s32 %v8603, 127
        %v8605 = vshll.u32 %v8604, 23
        %v8606 = vor.u32 4788187, %v8605
        %v8607 = vand.u32 2147483647, %v8606
        %v8609 = vcvt.s32.f32 %v8602
        %v8610 = vmul.f32 %v8609, %v8607
        %v8611 = vxor.u32 %v8610, 2147483648
        %v8612 = vsel %vm8529, %v8611, %v8610
        %v8613 = vsub.s32 4, %v8589
        %v8614 = vsel %vm8529, %v8613, %v8589
        %v8615 = vsel %vm8528, %v8306, %v8612
        %v8616 = vsel %vm8528, 0, %v8614
        %v8617 = vcosq.f32.pop %v8615
        %v8618 = vsinq.f32.pop %v8615
        %vm8619 = vweird.f32 %v8306
        %v8620 = vand.u32 %v8616, 3
        %vm8621 = vcmp.lt.s32.totalorder %v8620, 2
        %vm8622 = vcmp.eq.s32.totalorder %v8620, 0
        %v8623 = vxor.u32 %v8618, 2147483648
        %v8624 = vsel %vm8622, %v8617, %v8623
        %vm8625 = vcmp.eq.s32.totalorder %v8620, 2
        %v8626 = vxor.u32 %v8617, 2147483648
        %v8627 = vsel %vm8625, %v8626, %v8618
        %v8628 = vsel %vm8621, %v8624, %v8627
        %v8629 = vsel %vm8619, nan, %v8628
        %v8630 = vand.u32 2147483647, %v8307
        %vm8631 = vcmp.le.f32.partialorder %v8630, 0.7853982
        %vm8632 = vcmp.lt.s32.totalorder %v8307, 0
        %v8633 = vand.u32 %v8307, 2139095040
        %v8634 = vshrl.u32 %v8633, 23
        %v8635 = vsub.s32 %v8634, 127
        %v8636 = vand.u32 2147483647, %v8307
        %v8637 = vand.u32 %v8636, 8388607
        %v8638 = vor.u32 %v8637, 8388608
        %v8639 = vsub.s32 0, %v8638
        %v8640 = vadd.s32 %v8635, 1
        %vm8641 = vcmp.gt.s32.totalorder %v8640, 0
        %v8642 = vsel %vm8641, %v8640, 0
        %v8643 = vshrl.u32 %v8642, 5
        %v8644 = vand.u32 %v8642, 31
        %v8645 = vsub.s32 32, %v8644
        %v8646 = vshrl.u32 683565275, %v8645
        %v8647 = vshll.u32 683565275, %v8644
        %v8648 = vshrl.u32 2475754826, %v8645
        %v8649 = vor.u32 %v8647, %v8648
        %v8650 = vshll.u32 2475754826, %v8644
        %v8651 = vshrl.u32 2131351028, %v8645
        %v8652 = vor.u32 %v8650, %v8651
        %v8653 = vshll.u32 2131351028, %v8644
        %v8654 = vshrl.u32 2102212464, %v8645
        %v8655 = vor.u32 %v8653, %v8654
        %v8656 = vshll.u32 2102212464, %v8644
        %v8657 = vshrl.u32 920167782, %v8645
        %v8658 = vor.u32 %v8656, %v8657
        %v8659 = vshll.u32 920167782, %v8644
        %v8660 = vshrl.u32 1326507024, %v8645
        %v8661 = vor.u32 %v8659, %v8660
        %vm8662 = vcmp.lt.s32.totalorder %v8643, 1
        %vm8663 = vcmp.lt.s32.totalorder %v8643, 2
        %vm8664 = vcmp.lt.s32.totalorder %v8643, 3
        %vm8665 = vcmp.lt.s32.totalorder %v8643, 4
        %v8666 = vsel %vm8662, %v8646, %v8649
        %v8667 = vsel %vm8665, %v8655, 2102212464
        %v8668 = vsel %vm8664, %v8652, %v8667
        %v8669 = vsel %vm8663, %v8666, %v8668
        %v8670 = vsel %vm8662, %v8649, %v8652
        %v8671 = vsel %vm8665, %v8658, 920167782
        %v8672 = vsel %vm8664, %v8655, %v8671
        %v8673 = vsel %vm8663, %v8670, %v8672
        %v8674 = vsel %vm8662, %v8652, %v8655
        %v8675 = vsel %vm8665, %v8661, 1326507024
        %v8676 = vsel %vm8664, %v8658, %v8675
        %v8677 = vsel %vm8663, %v8674, %v8676
        %v8678 = vshll.u32 %v8638, 8
        %v8679 = vmul.u32.u64.compose %v8678, %v8677
        %v8680 = vextract.low.u32 %v8679
        %v8681 = vextract.high.u32 %v8679
        %v8682 = vmul.u32.u64.compose %v8678, %v8673
        %v8683 = vextract.low.u32 %v8682
        %v8684 = vextract.high.u32 %v8682
        %v8685 = vmul.u32 %v8678, %v8669
        %v8686 = vadd.s32 %v8681, %v8683
        %vm8687 = vc.u32 %v8681, %v8683
        %v8688 = vadd.s32 %v8684, 1
        %v8689 = vsel %vm8687, %v8688, %v8684
        %v8690 = vadd.s32 %v8685, %v8689
        %v8691 = vadd.s32 %v8690, 536870912
        %v8692 = vshrl.u32 %v8691, 30
        %v8693 = vshll.u32 %v8692, 30
        %v8694 = vsub.s32 %v8690, %v8693
        %vm8695 = vcmp.lt.s32.totalorder %v8694, 0
        %v8696 = vsub.s32 0, %v8694
        %v8697 = vsel %vm8695, %v8696, %v8694
        %v8698 = vclz %v8697
        %v8699 = vsub.s32 %v8698, 2
        %vm8700 = vcmp.gt.s32.totalorder 0, %v8699
        %v8701 = vsel %vm8700, 0, %v8699
        %v8702 = vsub.s32 32, %v8701
        %v8703 = vshll.u32 %v8694, %v8701
        %v8704 = vshrl.u32 %v8686, %v8702
        %v8705 = vor.u32 %v8703, %v8704
        %v8706 = vsub.s32 4294967266, %v8701
        %v8707 = vadd.s32 %v8706, 127
        %v8708 = vshll.u32 %v8707, 23
        %v8709 = vor.u32 4788187, %v8708
        %v8710 = vand.u32 2147483647, %v8709
        %v8712 = vcvt.s32.f32 %v8705
        %v8713 = vmul.f32 %v8712, %v8710
        %v8714 = vxor.u32 %v8713, 2147483648
        %v8715 = vsel %vm8632, %v8714, %v8713
        %v8716 = vsub.s32 4, %v8692
        %v8717 = vsel %vm8632, %v8716, %v8692
        %v8718 = vsel %vm8631, %v8307, %v8715
        %v8719 = vsel %vm8631, 0, %v8717
        %v8720 = vcosq.f32.pop %v8718
        %v8721 = vsinq.f32.pop %v8718
        %vm8722 = vweird.f32 %v8307
        %v8723 = vand.u32 %v8719, 3
        %vm8724 = vcmp.lt.s32.totalorder %v8723, 2
        %vm8725 = vcmp.eq.s32.totalorder %v8723, 0
        %v8726 = vxor.u32 %v8721, 2147483648
        %v8727 = vsel %vm8725, %v8720, %v8726
        %vm8728 = vcmp.eq.s32.totalorder %v8723, 2
        %v8729 = vxor.u32 %v8720, 2147483648
        %v8730 = vsel %vm8728, %v8729, %v8721
        %v8731 = vsel %vm8724, %v8727, %v8730
        %v8732 = vsel %vm8722, nan, %v8731
        %v8733 = vand.u32 2147483647, %v8308
        %vm8734 = vcmp.le.f32.partialorder %v8733, 0.7853982
        %vm8735 = vcmp.lt.s32.totalorder %v8308, 0
        %v8736 = vand.u32 %v8308, 2139095040
        %v8737 = vshrl.u32 %v8736, 23
        %v8738 = vsub.s32 %v8737, 127
        %v8739 = vand.u32 2147483647, %v8308
        %v8740 = vand.u32 %v8739, 8388607
        %v8741 = vor.u32 %v8740, 8388608
        %v8742 = vsub.s32 0, %v8741
        %v8743 = vadd.s32 %v8738, 1
        %vm8744 = vcmp.gt.s32.totalorder %v8743, 0
        %v8745 = vsel %vm8744, %v8743, 0
        %v8746 = vshrl.u32 %v8745, 5
        %v8747 = vand.u32 %v8745, 31
        %v8748 = vsub.s32 32, %v8747
        %v8749 = vshrl.u32 683565275, %v8748
        %v8750 = vshll.u32 683565275, %v8747
        %v8751 = vshrl.u32 2475754826, %v8748
        %v8752 = vor.u32 %v8750, %v8751
        %v8753 = vshll.u32 2475754826, %v8747
        %v8754 = vshrl.u32 2131351028, %v8748
        %v8755 = vor.u32 %v8753, %v8754
        %v8756 = vshll.u32 2131351028, %v8747
        %v8757 = vshrl.u32 2102212464, %v8748
        %v8758 = vor.u32 %v8756, %v8757
        %v8759 = vshll.u32 2102212464, %v8747
        %v8760 = vshrl.u32 920167782, %v8748
        %v8761 = vor.u32 %v8759, %v8760
        %v8762 = vshll.u32 920167782, %v8747
        %v8763 = vshrl.u32 1326507024, %v8748
        %v8764 = vor.u32 %v8762, %v8763
        %vm8765 = vcmp.lt.s32.totalorder %v8746, 1
        %vm8766 = vcmp.lt.s32.totalorder %v8746, 2
        %vm8767 = vcmp.lt.s32.totalorder %v8746, 3
        %vm8768 = vcmp.lt.s32.totalorder %v8746, 4
        %v8769 = vsel %vm8765, %v8749, %v8752
        %v8770 = vsel %vm8768, %v8758, 2102212464
        %v8771 = vsel %vm8767, %v8755, %v8770
        %v8772 = vsel %vm8766, %v8769, %v8771
        %v8773 = vsel %vm8765, %v8752, %v8755
        %v8774 = vsel %vm8768, %v8761, 920167782
        %v8775 = vsel %vm8767, %v8758, %v8774
        %v8776 = vsel %vm8766, %v8773, %v8775
        %v8777 = vsel %vm8765, %v8755, %v8758
        %v8778 = vsel %vm8768, %v8764, 1326507024
        %v8779 = vsel %vm8767, %v8761, %v8778
        %v8780 = vsel %vm8766, %v8777, %v8779
        %v8781 = vshll.u32 %v8741, 8
        %v8782 = vmul.u32.u64.compose %v8781, %v8780
        %v8783 = vextract.low.u32 %v8782
        %v8784 = vextract.high.u32 %v8782
        %v8785 = vmul.u32.u64.compose %v8781, %v8776
        %v8786 = vextract.low.u32 %v8785
        %v8787 = vextract.high.u32 %v8785
        %v8788 = vmul.u32 %v8781, %v8772
        %v8789 = vadd.s32 %v8784, %v8786
        %vm8790 = vc.u32 %v8784, %v8786
        %v8791 = vadd.s32 %v8787, 1
        %v8792 = vsel %vm8790, %v8791, %v8787
        %v8793 = vadd.s32 %v8788, %v8792
        %v8794 = vadd.s32 %v8793, 536870912
        %v8795 = vshrl.u32 %v8794, 30
        %v8796 = vshll.u32 %v8795, 30
        %v8797 = vsub.s32 %v8793, %v8796
        %vm8798 = vcmp.lt.s32.totalorder %v8797, 0
        %v8799 = vsub.s32 0, %v8797
        %v8800 = vsel %vm8798, %v8799, %v8797
        %v8801 = vclz %v8800
        %v8802 = vsub.s32 %v8801, 2
        %vm8803 = vcmp.gt.s32.totalorder 0, %v8802
        %v8804 = vsel %vm8803, 0, %v8802
        %v8805 = vsub.s32 32, %v8804
        %v8806 = vshll.u32 %v8797, %v8804
        %v8807 = vshrl.u32 %v8789, %v8805
        %v8808 = vor.u32 %v8806, %v8807
        %v8809 = vsub.s32 4294967266, %v8804
        %v8810 = vadd.s32 %v8809, 127
        %v8811 = vshll.u32 %v8810, 23
        %v8812 = vor.u32 4788187, %v8811
        %v8813 = vand.u32 2147483647, %v8812
        %v8815 = vcvt.s32.f32 %v8808
        %v8816 = vmul.f32 %v8815, %v8813
        %v8817 = vxor.u32 %v8816, 2147483648
        %v8818 = vsel %vm8735, %v8817, %v8816
        %v8819 = vsub.s32 4, %v8795
        %v8820 = vsel %vm8735, %v8819, %v8795
        %v8821 = vsel %vm8734, %v8308, %v8818
        %v8822 = vsel %vm8734, 0, %v8820
        %v8823 = vcosq.f32.pop %v8821
        %v8824 = vsinq.f32.pop %v8821
        %vm8825 = vweird.f32 %v8308
        %v8826 = vand.u32 %v8822, 3
        %vm8827 = vcmp.lt.s32.totalorder %v8826, 2
        %vm8828 = vcmp.eq.s32.totalorder %v8826, 0
        %v8829 = vxor.u32 %v8824, 2147483648
        %v8830 = vsel %vm8828, %v8823, %v8829
        %vm8831 = vcmp.eq.s32.totalorder %v8826, 2
        %v8832 = vxor.u32 %v8823, 2147483648
        %v8833 = vsel %vm8831, %v8832, %v8824
        %v8834 = vsel %vm8827, %v8830, %v8833
        %v8835 = vsel %vm8825, nan, %v8834
        %v8836 = vand.u32 2147483647, %v8309
        %vm8837 = vcmp.le.f32.partialorder %v8836, 0.7853982
        %vm8838 = vcmp.lt.s32.totalorder %v8309, 0
        %v8839 = vand.u32 %v8309, 2139095040
        %v8840 = vshrl.u32 %v8839, 23
        %v8841 = vsub.s32 %v8840, 127
        %v8842 = vand.u32 2147483647, %v8309
        %v8843 = vand.u32 %v8842, 8388607
        %v8844 = vor.u32 %v8843, 8388608
        %v8845 = vsub.s32 0, %v8844
        %v8846 = vadd.s32 %v8841, 1
        %vm8847 = vcmp.gt.s32.totalorder %v8846, 0
        %v8848 = vsel %vm8847, %v8846, 0
        %v8849 = vshrl.u32 %v8848, 5
        %v8850 = vand.u32 %v8848, 31
        %v8851 = vsub.s32 32, %v8850
        %v8852 = vshrl.u32 683565275, %v8851
        %v8853 = vshll.u32 683565275, %v8850
        %v8854 = vshrl.u32 2475754826, %v8851
        %v8855 = vor.u32 %v8853, %v8854
        %v8856 = vshll.u32 2475754826, %v8850
        %v8857 = vshrl.u32 2131351028, %v8851
        %v8858 = vor.u32 %v8856, %v8857
        %v8859 = vshll.u32 2131351028, %v8850
        %v8860 = vshrl.u32 2102212464, %v8851
        %v8861 = vor.u32 %v8859, %v8860
        %v8862 = vshll.u32 2102212464, %v8850
        %v8863 = vshrl.u32 920167782, %v8851
        %v8864 = vor.u32 %v8862, %v8863
        %v8865 = vshll.u32 920167782, %v8850
        %v8866 = vshrl.u32 1326507024, %v8851
        %v8867 = vor.u32 %v8865, %v8866
        %vm8868 = vcmp.lt.s32.totalorder %v8849, 1
        %vm8869 = vcmp.lt.s32.totalorder %v8849, 2
        %vm8870 = vcmp.lt.s32.totalorder %v8849, 3
        %vm8871 = vcmp.lt.s32.totalorder %v8849, 4
        %v8872 = vsel %vm8868, %v8852, %v8855
        %v8873 = vsel %vm8871, %v8861, 2102212464
        %v8874 = vsel %vm8870, %v8858, %v8873
        %v8875 = vsel %vm8869, %v8872, %v8874
        %v8876 = vsel %vm8868, %v8855, %v8858
        %v8877 = vsel %vm8871, %v8864, 920167782
        %v8878 = vsel %vm8870, %v8861, %v8877
        %v8879 = vsel %vm8869, %v8876, %v8878
        %v8880 = vsel %vm8868, %v8858, %v8861
        %v8881 = vsel %vm8871, %v8867, 1326507024
        %v8882 = vsel %vm8870, %v8864, %v8881
        %v8883 = vsel %vm8869, %v8880, %v8882
        %v8884 = vshll.u32 %v8844, 8
        %v8885 = vmul.u32.u64.compose %v8884, %v8883
        %v8886 = vextract.low.u32 %v8885
        %v8887 = vextract.high.u32 %v8885
        %v8888 = vmul.u32.u64.compose %v8884, %v8879
        %v8889 = vextract.low.u32 %v8888
        %v8890 = vextract.high.u32 %v8888
        %v8891 = vmul.u32 %v8884, %v8875
        %v8892 = vadd.s32 %v8887, %v8889
        %vm8893 = vc.u32 %v8887, %v8889
        %v8894 = vadd.s32 %v8890, 1
        %v8895 = vsel %vm8893, %v8894, %v8890
        %v8896 = vadd.s32 %v8891, %v8895
        %v8897 = vadd.s32 %v8896, 536870912
        %v8898 = vshrl.u32 %v8897, 30
        %v8899 = vshll.u32 %v8898, 30
        %v8900 = vsub.s32 %v8896, %v8899
        %vm8901 = vcmp.lt.s32.totalorder %v8900, 0
        %v8902 = vsub.s32 0, %v8900
        %v8903 = vsel %vm8901, %v8902, %v8900
        %v8904 = vclz %v8903
        %v8905 = vsub.s32 %v8904, 2
        %vm8906 = vcmp.gt.s32.totalorder 0, %v8905
        %v8907 = vsel %vm8906, 0, %v8905
        %v8908 = vsub.s32 32, %v8907
        %v8909 = vshll.u32 %v8900, %v8907
        %v8910 = vshrl.u32 %v8892, %v8908
        %v8911 = vor.u32 %v8909, %v8910
        %v8912 = vsub.s32 4294967266, %v8907
        %v8913 = vadd.s32 %v8912, 127
        %v8914 = vshll.u32 %v8913, 23
        %v8915 = vor.u32 4788187, %v8914
        %v8916 = vand.u32 2147483647, %v8915
        %v8918 = vcvt.s32.f32 %v8911
        %v8919 = vmul.f32 %v8918, %v8916
        %v8920 = vxor.u32 %v8919, 2147483648
        %v8921 = vsel %vm8838, %v8920, %v8919
        %v8922 = vsub.s32 4, %v8898
        %v8923 = vsel %vm8838, %v8922, %v8898
        %v8924 = vsel %vm8837, %v8309, %v8921
        %v8925 = vsel %vm8837, 0, %v8923
        %v8926 = vcosq.f32.pop %v8924
        %v8927 = vsinq.f32.pop %v8924
        %vm8928 = vweird.f32 %v8309
        %v8929 = vand.u32 %v8925, 3
        %vm8930 = vcmp.lt.s32.totalorder %v8929, 2
        %vm8931 = vcmp.eq.s32.totalorder %v8929, 0
        %v8932 = vxor.u32 %v8927, 2147483648
        %v8933 = vsel %vm8931, %v8926, %v8932
        %vm8934 = vcmp.eq.s32.totalorder %v8929, 2
        %v8935 = vxor.u32 %v8926, 2147483648
        %v8936 = vsel %vm8934, %v8935, %v8927
        %v8937 = vsel %vm8930, %v8933, %v8936
        %v8938 = vsel %vm8928, nan, %v8937
        %v8939 = vand.u32 2147483647, %v8310
        %vm8940 = vcmp.le.f32.partialorder %v8939, 0.7853982
        %vm8941 = vcmp.lt.s32.totalorder %v8310, 0
        %v8942 = vand.u32 %v8310, 2139095040
        %v8943 = vshrl.u32 %v8942, 23
        %v8944 = vsub.s32 %v8943, 127
        %v8945 = vand.u32 2147483647, %v8310
        %v8946 = vand.u32 %v8945, 8388607
        %v8947 = vor.u32 %v8946, 8388608
        %v8948 = vsub.s32 0, %v8947
        %v8949 = vadd.s32 %v8944, 1
        %vm8950 = vcmp.gt.s32.totalorder %v8949, 0
        %v8951 = vsel %vm8950, %v8949, 0
        %v8952 = vshrl.u32 %v8951, 5
        %v8953 = vand.u32 %v8951, 31
        %v8954 = vsub.s32 32, %v8953
        %v8955 = vshrl.u32 683565275, %v8954
        %v8956 = vshll.u32 683565275, %v8953
        %v8957 = vshrl.u32 2475754826, %v8954
        %v8958 = vor.u32 %v8956, %v8957
        %v8959 = vshll.u32 2475754826, %v8953
        %v8960 = vshrl.u32 2131351028, %v8954
        %v8961 = vor.u32 %v8959, %v8960
        %v8962 = vshll.u32 2131351028, %v8953
        %v8963 = vshrl.u32 2102212464, %v8954
        %v8964 = vor.u32 %v8962, %v8963
        %v8965 = vshll.u32 2102212464, %v8953
        %v8966 = vshrl.u32 920167782, %v8954
        %v8967 = vor.u32 %v8965, %v8966
        %v8968 = vshll.u32 920167782, %v8953
        %v8969 = vshrl.u32 1326507024, %v8954
        %v8970 = vor.u32 %v8968, %v8969
        %vm8971 = vcmp.lt.s32.totalorder %v8952, 1
        %vm8972 = vcmp.lt.s32.totalorder %v8952, 2
        %vm8973 = vcmp.lt.s32.totalorder %v8952, 3
        %vm8974 = vcmp.lt.s32.totalorder %v8952, 4
        %v8975 = vsel %vm8971, %v8955, %v8958
        %v8976 = vsel %vm8974, %v8964, 2102212464
        %v8977 = vsel %vm8973, %v8961, %v8976
        %v8978 = vsel %vm8972, %v8975, %v8977
        %v8979 = vsel %vm8971, %v8958, %v8961
        %v8980 = vsel %vm8974, %v8967, 920167782
        %v8981 = vsel %vm8973, %v8964, %v8980
        %v8982 = vsel %vm8972, %v8979, %v8981
        %v8983 = vsel %vm8971, %v8961, %v8964
        %v8984 = vsel %vm8974, %v8970, 1326507024
        %v8985 = vsel %vm8973, %v8967, %v8984
        %v8986 = vsel %vm8972, %v8983, %v8985
        %v8987 = vshll.u32 %v8947, 8
        %v8988 = vmul.u32.u64.compose %v8987, %v8986
        %v8989 = vextract.low.u32 %v8988
        %v8990 = vextract.high.u32 %v8988
        %v8991 = vmul.u32.u64.compose %v8987, %v8982
        %v8992 = vextract.low.u32 %v8991
        %v8993 = vextract.high.u32 %v8991
        %v8994 = vmul.u32 %v8987, %v8978
        %v8995 = vadd.s32 %v8990, %v8992
        %vm8996 = vc.u32 %v8990, %v8992
        %v8997 = vadd.s32 %v8993, 1
        %v8998 = vsel %vm8996, %v8997, %v8993
        %v8999 = vadd.s32 %v8994, %v8998
        %v9000 = vadd.s32 %v8999, 536870912
        %v9001 = vshrl.u32 %v9000, 30
        %v9002 = vshll.u32 %v9001, 30
        %v9003 = vsub.s32 %v8999, %v9002
        %vm9004 = vcmp.lt.s32.totalorder %v9003, 0
        %v9005 = vsub.s32 0, %v9003
        %v9006 = vsel %vm9004, %v9005, %v9003
        %v9007 = vclz %v9006
        %v9008 = vsub.s32 %v9007, 2
        %vm9009 = vcmp.gt.s32.totalorder 0, %v9008
        %v9010 = vsel %vm9009, 0, %v9008
        %v9011 = vsub.s32 32, %v9010
        %v9012 = vshll.u32 %v9003, %v9010
        %v9013 = vshrl.u32 %v8995, %v9011
        %v9014 = vor.u32 %v9012, %v9013
        %v9015 = vsub.s32 4294967266, %v9010
        %v9016 = vadd.s32 %v9015, 127
        %v9017 = vshll.u32 %v9016, 23
        %v9018 = vor.u32 4788187, %v9017
        %v9019 = vand.u32 2147483647, %v9018
        %v9021 = vcvt.s32.f32 %v9014
        %v9022 = vmul.f32 %v9021, %v9019
        %v9023 = vxor.u32 %v9022, 2147483648
        %v9024 = vsel %vm8941, %v9023, %v9022
        %v9025 = vsub.s32 4, %v9001
        %v9026 = vsel %vm8941, %v9025, %v9001
        %v9027 = vsel %vm8940, %v8310, %v9024
        %v9028 = vsel %vm8940, 0, %v9026
        %v9029 = vcosq.f32.pop %v9027
        %v9030 = vsinq.f32.pop %v9027
        %vm9031 = vweird.f32 %v8310
        %v9032 = vand.u32 %v9028, 3
        %vm9033 = vcmp.lt.s32.totalorder %v9032, 2
        %vm9034 = vcmp.eq.s32.totalorder %v9032, 0
        %v9035 = vxor.u32 %v9030, 2147483648
        %v9036 = vsel %vm9034, %v9029, %v9035
        %vm9037 = vcmp.eq.s32.totalorder %v9032, 2
        %v9038 = vxor.u32 %v9029, 2147483648
        %v9039 = vsel %vm9037, %v9038, %v9030
        %v9040 = vsel %vm9033, %v9036, %v9039
        %v9041 = vsel %vm9031, nan, %v9040
        %v9042 = vand.u32 2147483647, %v8311
        %vm9043 = vcmp.le.f32.partialorder %v9042, 0.7853982
        %vm9044 = vcmp.lt.s32.totalorder %v8311, 0
        %v9045 = vand.u32 %v8311, 2139095040
        %v9046 = vshrl.u32 %v9045, 23
        %v9047 = vsub.s32 %v9046, 127
        %v9048 = vand.u32 2147483647, %v8311
        %v9049 = vand.u32 %v9048, 8388607
        %v9050 = vor.u32 %v9049, 8388608
        %v9051 = vsub.s32 0, %v9050
        %v9052 = vadd.s32 %v9047, 1
        %vm9053 = vcmp.gt.s32.totalorder %v9052, 0
        %v9054 = vsel %vm9053, %v9052, 0
        %v9055 = vshrl.u32 %v9054, 5
        %v9056 = vand.u32 %v9054, 31
        %v9057 = vsub.s32 32, %v9056
        %v9058 = vshrl.u32 683565275, %v9057
        %v9059 = vshll.u32 683565275, %v9056
        %v9060 = vshrl.u32 2475754826, %v9057
        %v9061 = vor.u32 %v9059, %v9060
        %v9062 = vshll.u32 2475754826, %v9056
        %v9063 = vshrl.u32 2131351028, %v9057
        %v9064 = vor.u32 %v9062, %v9063
        %v9065 = vshll.u32 2131351028, %v9056
        %v9066 = vshrl.u32 2102212464, %v9057
        %v9067 = vor.u32 %v9065, %v9066
        %v9068 = vshll.u32 2102212464, %v9056
        %v9069 = vshrl.u32 920167782, %v9057
        %v9070 = vor.u32 %v9068, %v9069
        %v9071 = vshll.u32 920167782, %v9056
        %v9072 = vshrl.u32 1326507024, %v9057
        %v9073 = vor.u32 %v9071, %v9072
        %vm9074 = vcmp.lt.s32.totalorder %v9055, 1
        %vm9075 = vcmp.lt.s32.totalorder %v9055, 2
        %vm9076 = vcmp.lt.s32.totalorder %v9055, 3
        %vm9077 = vcmp.lt.s32.totalorder %v9055, 4
        %v9078 = vsel %vm9074, %v9058, %v9061
        %v9079 = vsel %vm9077, %v9067, 2102212464
        %v9080 = vsel %vm9076, %v9064, %v9079
        %v9081 = vsel %vm9075, %v9078, %v9080
        %v9082 = vsel %vm9074, %v9061, %v9064
        %v9083 = vsel %vm9077, %v9070, 920167782
        %v9084 = vsel %vm9076, %v9067, %v9083
        %v9085 = vsel %vm9075, %v9082, %v9084
        %v9086 = vsel %vm9074, %v9064, %v9067
        %v9087 = vsel %vm9077, %v9073, 1326507024
        %v9088 = vsel %vm9076, %v9070, %v9087
        %v9089 = vsel %vm9075, %v9086, %v9088
        %v9090 = vshll.u32 %v9050, 8
        %v9091 = vmul.u32.u64.compose %v9090, %v9089
        %v9092 = vextract.low.u32 %v9091
        %v9093 = vextract.high.u32 %v9091
        %v9094 = vmul.u32.u64.compose %v9090, %v9085
        %v9095 = vextract.low.u32 %v9094
        %v9096 = vextract.high.u32 %v9094
        %v9097 = vmul.u32 %v9090, %v9081
        %v9098 = vadd.s32 %v9093, %v9095
        %vm9099 = vc.u32 %v9093, %v9095
        %v9100 = vadd.s32 %v9096, 1
        %v9101 = vsel %vm9099, %v9100, %v9096
        %v9102 = vadd.s32 %v9097, %v9101
        %v9103 = vadd.s32 %v9102, 536870912
        %v9104 = vshrl.u32 %v9103, 30
        %v9105 = vshll.u32 %v9104, 30
        %v9106 = vsub.s32 %v9102, %v9105
        %vm9107 = vcmp.lt.s32.totalorder %v9106, 0
        %v9108 = vsub.s32 0, %v9106
        %v9109 = vsel %vm9107, %v9108, %v9106
        %v9110 = vclz %v9109
        %v9111 = vsub.s32 %v9110, 2
        %vm9112 = vcmp.gt.s32.totalorder 0, %v9111
        %v9113 = vsel %vm9112, 0, %v9111
        %v9114 = vsub.s32 32, %v9113
        %v9115 = vshll.u32 %v9106, %v9113
        %v9116 = vshrl.u32 %v9098, %v9114
        %v9117 = vor.u32 %v9115, %v9116
        %v9118 = vsub.s32 4294967266, %v9113
        %v9119 = vadd.s32 %v9118, 127
        %v9120 = vshll.u32 %v9119, 23
        %v9121 = vor.u32 4788187, %v9120
        %v9122 = vand.u32 2147483647, %v9121
        %v9124 = vcvt.s32.f32 %v9117
        %v9125 = vmul.f32 %v9124, %v9122
        %v9126 = vxor.u32 %v9125, 2147483648
        %v9127 = vsel %vm9044, %v9126, %v9125
        %v9128 = vsub.s32 4, %v9104
        %v9129 = vsel %vm9044, %v9128, %v9104
        %v9130 = vsel %vm9043, %v8311, %v9127
        %v9131 = vsel %vm9043, 0, %v9129
        %v9132 = vcosq.f32.pop %v9130
        %v9133 = vsinq.f32.pop %v9130
        %vm9134 = vweird.f32 %v8311
        %v9135 = vand.u32 %v9131, 3
        %vm9136 = vcmp.lt.s32.totalorder %v9135, 2
        %vm9137 = vcmp.eq.s32.totalorder %v9135, 0
        %v9138 = vxor.u32 %v9133, 2147483648
        %v9139 = vsel %vm9137, %v9132, %v9138
        %vm9140 = vcmp.eq.s32.totalorder %v9135, 2
        %v9141 = vxor.u32 %v9132, 2147483648
        %v9142 = vsel %vm9140, %v9141, %v9133
        %v9143 = vsel %vm9136, %v9139, %v9142
        %v9144 = vsel %vm9134, nan, %v9143
        %v9145 = vand.u32 2147483647, %v8312
        %vm9146 = vcmp.le.f32.partialorder %v9145, 0.7853982
        %vm9147 = vcmp.lt.s32.totalorder %v8312, 0
        %v9148 = vand.u32 %v8312, 2139095040
        %v9149 = vshrl.u32 %v9148, 23
        %v9150 = vsub.s32 %v9149, 127
        %v9151 = vand.u32 2147483647, %v8312
        %v9152 = vand.u32 %v9151, 8388607
        %v9153 = vor.u32 %v9152, 8388608
        %v9154 = vsub.s32 0, %v9153
        %v9155 = vadd.s32 %v9150, 1
        %vm9156 = vcmp.gt.s32.totalorder %v9155, 0
        %v9157 = vsel %vm9156, %v9155, 0
        %v9158 = vshrl.u32 %v9157, 5
        %v9159 = vand.u32 %v9157, 31
        %v9160 = vsub.s32 32, %v9159
        %v9161 = vshrl.u32 683565275, %v9160
        %v9162 = vshll.u32 683565275, %v9159
        %v9163 = vshrl.u32 2475754826, %v9160
        %v9164 = vor.u32 %v9162, %v9163
        %v9165 = vshll.u32 2475754826, %v9159
        %v9166 = vshrl.u32 2131351028, %v9160
        %v9167 = vor.u32 %v9165, %v9166
        %v9168 = vshll.u32 2131351028, %v9159
        %v9169 = vshrl.u32 2102212464, %v9160
        %v9170 = vor.u32 %v9168, %v9169
        %v9171 = vshll.u32 2102212464, %v9159
        %v9172 = vshrl.u32 920167782, %v9160
        %v9173 = vor.u32 %v9171, %v9172
        %v9174 = vshll.u32 920167782, %v9159
        %v9175 = vshrl.u32 1326507024, %v9160
        %v9176 = vor.u32 %v9174, %v9175
        %vm9177 = vcmp.lt.s32.totalorder %v9158, 1
        %vm9178 = vcmp.lt.s32.totalorder %v9158, 2
        %vm9179 = vcmp.lt.s32.totalorder %v9158, 3
        %vm9180 = vcmp.lt.s32.totalorder %v9158, 4
        %v9181 = vsel %vm9177, %v9161, %v9164
        %v9182 = vsel %vm9180, %v9170, 2102212464
        %v9183 = vsel %vm9179, %v9167, %v9182
        %v9184 = vsel %vm9178, %v9181, %v9183
        %v9185 = vsel %vm9177, %v9164, %v9167
        %v9186 = vsel %vm9180, %v9173, 920167782
        %v9187 = vsel %vm9179, %v9170, %v9186
        %v9188 = vsel %vm9178, %v9185, %v9187
        %v9189 = vsel %vm9177, %v9167, %v9170
        %v9190 = vsel %vm9180, %v9176, 1326507024
        %v9191 = vsel %vm9179, %v9173, %v9190
        %v9192 = vsel %vm9178, %v9189, %v9191
        %v9193 = vshll.u32 %v9153, 8
        %v9194 = vmul.u32.u64.compose %v9193, %v9192
        %v9195 = vextract.low.u32 %v9194
        %v9196 = vextract.high.u32 %v9194
        %v9197 = vmul.u32.u64.compose %v9193, %v9188
        %v9198 = vextract.low.u32 %v9197
        %v9199 = vextract.high.u32 %v9197
        %v9200 = vmul.u32 %v9193, %v9184
        %v9201 = vadd.s32 %v9196, %v9198
        %vm9202 = vc.u32 %v9196, %v9198
        %v9203 = vadd.s32 %v9199, 1
        %v9204 = vsel %vm9202, %v9203, %v9199
        %v9205 = vadd.s32 %v9200, %v9204
        %v9206 = vadd.s32 %v9205, 536870912
        %v9207 = vshrl.u32 %v9206, 30
        %v9208 = vshll.u32 %v9207, 30
        %v9209 = vsub.s32 %v9205, %v9208
        %vm9210 = vcmp.lt.s32.totalorder %v9209, 0
        %v9211 = vsub.s32 0, %v9209
        %v9212 = vsel %vm9210, %v9211, %v9209
        %v9213 = vclz %v9212
        %v9214 = vsub.s32 %v9213, 2
        %vm9215 = vcmp.gt.s32.totalorder 0, %v9214
        %v9216 = vsel %vm9215, 0, %v9214
        %v9217 = vsub.s32 32, %v9216
        %v9218 = vshll.u32 %v9209, %v9216
        %v9219 = vshrl.u32 %v9201, %v9217
        %v9220 = vor.u32 %v9218, %v9219
        %v9221 = vsub.s32 4294967266, %v9216
        %v9222 = vadd.s32 %v9221, 127
        %v9223 = vshll.u32 %v9222, 23
        %v9224 = vor.u32 4788187, %v9223
        %v9225 = vand.u32 2147483647, %v9224
        %v9227 = vcvt.s32.f32 %v9220
        %v9228 = vmul.f32 %v9227, %v9225
        %v9229 = vxor.u32 %v9228, 2147483648
        %v9230 = vsel %vm9147, %v9229, %v9228
        %v9231 = vsub.s32 4, %v9207
        %v9232 = vsel %vm9147, %v9231, %v9207
        %v9233 = vsel %vm9146, %v8312, %v9230
        %v9234 = vsel %vm9146, 0, %v9232
        %v9235 = vcosq.f32.pop %v9233
        %v9236 = vsinq.f32.pop %v9233
        %vm9237 = vweird.f32 %v8312
        %v9238 = vand.u32 %v9234, 3
        %vm9239 = vcmp.lt.s32.totalorder %v9238, 2
        %vm9240 = vcmp.eq.s32.totalorder %v9238, 0
        %v9241 = vxor.u32 %v9236, 2147483648
        %v9242 = vsel %vm9240, %v9235, %v9241
        %vm9243 = vcmp.eq.s32.totalorder %v9238, 2
        %v9244 = vxor.u32 %v9235, 2147483648
        %v9245 = vsel %vm9243, %v9244, %v9236
        %v9246 = vsel %vm9239, %v9242, %v9245
        %v9247 = vsel %vm9237, nan, %v9246
        %v9248 = vand.u32 2147483647, %v8313
        %vm9249 = vcmp.le.f32.partialorder %v9248, 0.7853982
        %vm9250 = vcmp.lt.s32.totalorder %v8313, 0
        %v9251 = vand.u32 %v8313, 2139095040
        %v9252 = vshrl.u32 %v9251, 23
        %v9253 = vsub.s32 %v9252, 127
        %v9254 = vand.u32 2147483647, %v8313
        %v9255 = vand.u32 %v9254, 8388607
        %v9256 = vor.u32 %v9255, 8388608
        %v9257 = vsub.s32 0, %v9256
        %v9258 = vadd.s32 %v9253, 1
        %vm9259 = vcmp.gt.s32.totalorder %v9258, 0
        %v9260 = vsel %vm9259, %v9258, 0
        %v9261 = vshrl.u32 %v9260, 5
        %v9262 = vand.u32 %v9260, 31
        %v9263 = vsub.s32 32, %v9262
        %v9264 = vshrl.u32 683565275, %v9263
        %v9265 = vshll.u32 683565275, %v9262
        %v9266 = vshrl.u32 2475754826, %v9263
        %v9267 = vor.u32 %v9265, %v9266
        %v9268 = vshll.u32 2475754826, %v9262
        %v9269 = vshrl.u32 2131351028, %v9263
        %v9270 = vor.u32 %v9268, %v9269
        %v9271 = vshll.u32 2131351028, %v9262
        %v9272 = vshrl.u32 2102212464, %v9263
        %v9273 = vor.u32 %v9271, %v9272
        %v9274 = vshll.u32 2102212464, %v9262
        %v9275 = vshrl.u32 920167782, %v9263
        %v9276 = vor.u32 %v9274, %v9275
        %v9277 = vshll.u32 920167782, %v9262
        %v9278 = vshrl.u32 1326507024, %v9263
        %v9279 = vor.u32 %v9277, %v9278
        %vm9280 = vcmp.lt.s32.totalorder %v9261, 1
        %vm9281 = vcmp.lt.s32.totalorder %v9261, 2
        %vm9282 = vcmp.lt.s32.totalorder %v9261, 3
        %vm9283 = vcmp.lt.s32.totalorder %v9261, 4
        %v9284 = vsel %vm9280, %v9264, %v9267
        %v9285 = vsel %vm9283, %v9273, 2102212464
        %v9286 = vsel %vm9282, %v9270, %v9285
        %v9287 = vsel %vm9281, %v9284, %v9286
        %v9288 = vsel %vm9280, %v9267, %v9270
        %v9289 = vsel %vm9283, %v9276, 920167782
        %v9290 = vsel %vm9282, %v9273, %v9289
        %v9291 = vsel %vm9281, %v9288, %v9290
        %v9292 = vsel %vm9280, %v9270, %v9273
        %v9293 = vsel %vm9283, %v9279, 1326507024
        %v9294 = vsel %vm9282, %v9276, %v9293
        %v9295 = vsel %vm9281, %v9292, %v9294
        %v9296 = vshll.u32 %v9256, 8
        %v9297 = vmul.u32.u64.compose %v9296, %v9295
        %v9298 = vextract.low.u32 %v9297
        %v9299 = vextract.high.u32 %v9297
        %v9300 = vmul.u32.u64.compose %v9296, %v9291
        %v9301 = vextract.low.u32 %v9300
        %v9302 = vextract.high.u32 %v9300
        %v9303 = vmul.u32 %v9296, %v9287
        %v9304 = vadd.s32 %v9299, %v9301
        %vm9305 = vc.u32 %v9299, %v9301
        %v9306 = vadd.s32 %v9302, 1
        %v9307 = vsel %vm9305, %v9306, %v9302
        %v9308 = vadd.s32 %v9303, %v9307
        %v9309 = vadd.s32 %v9308, 536870912
        %v9310 = vshrl.u32 %v9309, 30
        %v9311 = vshll.u32 %v9310, 30
        %v9312 = vsub.s32 %v9308, %v9311
        %vm9313 = vcmp.lt.s32.totalorder %v9312, 0
        %v9314 = vsub.s32 0, %v9312
        %v9315 = vsel %vm9313, %v9314, %v9312
        %v9316 = vclz %v9315
        %v9317 = vsub.s32 %v9316, 2
        %vm9318 = vcmp.gt.s32.totalorder 0, %v9317
        %v9319 = vsel %vm9318, 0, %v9317
        %v9320 = vsub.s32 32, %v9319
        %v9321 = vshll.u32 %v9312, %v9319
        %v9322 = vshrl.u32 %v9304, %v9320
        %v9323 = vor.u32 %v9321, %v9322
        %v9324 = vsub.s32 4294967266, %v9319
        %v9325 = vadd.s32 %v9324, 127
        %v9326 = vshll.u32 %v9325, 23
        %v9327 = vor.u32 4788187, %v9326
        %v9328 = vand.u32 2147483647, %v9327
        %v9330 = vcvt.s32.f32 %v9323
        %v9331 = vmul.f32 %v9330, %v9328
        %v9332 = vxor.u32 %v9331, 2147483648
        %v9333 = vsel %vm9250, %v9332, %v9331
        %v9334 = vsub.s32 4, %v9310
        %v9335 = vsel %vm9250, %v9334, %v9310
        %v9336 = vsel %vm9249, %v8313, %v9333
        %v9337 = vsel %vm9249, 0, %v9335
        %v9338 = vcosq.f32.pop %v9336
        %v9339 = vsinq.f32.pop %v9336
        %vm9340 = vweird.f32 %v8313
        %v9341 = vand.u32 %v9337, 3
        %vm9342 = vcmp.lt.s32.totalorder %v9341, 2
        %vm9343 = vcmp.eq.s32.totalorder %v9341, 0
        %v9344 = vxor.u32 %v9339, 2147483648
        %v9345 = vsel %vm9343, %v9338, %v9344
        %vm9346 = vcmp.eq.s32.totalorder %v9341, 2
        %v9347 = vxor.u32 %v9338, 2147483648
        %v9348 = vsel %vm9346, %v9347, %v9339
        %v9349 = vsel %vm9342, %v9345, %v9348
        %v9350 = vsel %vm9340, nan, %v9349
        %v9351 = vand.u32 2147483647, %v8314
        %vm9352 = vcmp.le.f32.partialorder %v9351, 0.7853982
        %vm9353 = vcmp.lt.s32.totalorder %v8314, 0
        %v9354 = vand.u32 %v8314, 2139095040
        %v9355 = vshrl.u32 %v9354, 23
        %v9356 = vsub.s32 %v9355, 127
        %v9357 = vand.u32 2147483647, %v8314
        %v9358 = vand.u32 %v9357, 8388607
        %v9359 = vor.u32 %v9358, 8388608
        %v9360 = vsub.s32 0, %v9359
        %v9361 = vadd.s32 %v9356, 1
        %vm9362 = vcmp.gt.s32.totalorder %v9361, 0
        %v9363 = vsel %vm9362, %v9361, 0
        %v9364 = vshrl.u32 %v9363, 5
        %v9365 = vand.u32 %v9363, 31
        %v9366 = vsub.s32 32, %v9365
        %v9367 = vshrl.u32 683565275, %v9366
        %v9368 = vshll.u32 683565275, %v9365
        %v9369 = vshrl.u32 2475754826, %v9366
        %v9370 = vor.u32 %v9368, %v9369
        %v9371 = vshll.u32 2475754826, %v9365
        %v9372 = vshrl.u32 2131351028, %v9366
        %v9373 = vor.u32 %v9371, %v9372
        %v9374 = vshll.u32 2131351028, %v9365
        %v9375 = vshrl.u32 2102212464, %v9366
        %v9376 = vor.u32 %v9374, %v9375
        %v9377 = vshll.u32 2102212464, %v9365
        %v9378 = vshrl.u32 920167782, %v9366
        %v9379 = vor.u32 %v9377, %v9378
        %v9380 = vshll.u32 920167782, %v9365
        %v9381 = vshrl.u32 1326507024, %v9366
        %v9382 = vor.u32 %v9380, %v9381
        %vm9383 = vcmp.lt.s32.totalorder %v9364, 1
        %vm9384 = vcmp.lt.s32.totalorder %v9364, 2
        %vm9385 = vcmp.lt.s32.totalorder %v9364, 3
        %vm9386 = vcmp.lt.s32.totalorder %v9364, 4
        %v9387 = vsel %vm9383, %v9367, %v9370
        %v9388 = vsel %vm9386, %v9376, 2102212464
        %v9389 = vsel %vm9385, %v9373, %v9388
        %v9390 = vsel %vm9384, %v9387, %v9389
        %v9391 = vsel %vm9383, %v9370, %v9373
        %v9392 = vsel %vm9386, %v9379, 920167782
        %v9393 = vsel %vm9385, %v9376, %v9392
        %v9394 = vsel %vm9384, %v9391, %v9393
        %v9395 = vsel %vm9383, %v9373, %v9376
        %v9396 = vsel %vm9386, %v9382, 1326507024
        %v9397 = vsel %vm9385, %v9379, %v9396
        %v9398 = vsel %vm9384, %v9395, %v9397
        %v9399 = vshll.u32 %v9359, 8
        %v9400 = vmul.u32.u64.compose %v9399, %v9398
        %v9401 = vextract.low.u32 %v9400
        %v9402 = vextract.high.u32 %v9400
        %v9403 = vmul.u32.u64.compose %v9399, %v9394
        %v9404 = vextract.low.u32 %v9403
        %v9405 = vextract.high.u32 %v9403
        %v9406 = vmul.u32 %v9399, %v9390
        %v9407 = vadd.s32 %v9402, %v9404
        %vm9408 = vc.u32 %v9402, %v9404
        %v9409 = vadd.s32 %v9405, 1
        %v9410 = vsel %vm9408, %v9409, %v9405
        %v9411 = vadd.s32 %v9406, %v9410
        %v9412 = vadd.s32 %v9411, 536870912
        %v9413 = vshrl.u32 %v9412, 30
        %v9414 = vshll.u32 %v9413, 30
        %v9415 = vsub.s32 %v9411, %v9414
        %vm9416 = vcmp.lt.s32.totalorder %v9415, 0
        %v9417 = vsub.s32 0, %v9415
        %v9418 = vsel %vm9416, %v9417, %v9415
        %v9419 = vclz %v9418
        %v9420 = vsub.s32 %v9419, 2
        %vm9421 = vcmp.gt.s32.totalorder 0, %v9420
        %v9422 = vsel %vm9421, 0, %v9420
        %v9423 = vsub.s32 32, %v9422
        %v9424 = vshll.u32 %v9415, %v9422
        %v9425 = vshrl.u32 %v9407, %v9423
        %v9426 = vor.u32 %v9424, %v9425
        %v9427 = vsub.s32 4294967266, %v9422
        %v9428 = vadd.s32 %v9427, 127
        %v9429 = vshll.u32 %v9428, 23
        %v9430 = vor.u32 4788187, %v9429
        %v9431 = vand.u32 2147483647, %v9430
        %v9433 = vcvt.s32.f32 %v9426
        %v9434 = vmul.f32 %v9433, %v9431
        %v9435 = vxor.u32 %v9434, 2147483648
        %v9436 = vsel %vm9353, %v9435, %v9434
        %v9437 = vsub.s32 4, %v9413
        %v9438 = vsel %vm9353, %v9437, %v9413
        %v9439 = vsel %vm9352, %v8314, %v9436
        %v9440 = vsel %vm9352, 0, %v9438
        %v9441 = vcosq.f32.pop %v9439
        %v9442 = vsinq.f32.pop %v9439
        %vm9443 = vweird.f32 %v8314
        %v9444 = vand.u32 %v9440, 3
        %vm9445 = vcmp.lt.s32.totalorder %v9444, 2
        %vm9446 = vcmp.eq.s32.totalorder %v9444, 0
        %v9447 = vxor.u32 %v9442, 2147483648
        %v9448 = vsel %vm9446, %v9441, %v9447
        %vm9449 = vcmp.eq.s32.totalorder %v9444, 2
        %v9450 = vxor.u32 %v9441, 2147483648
        %v9451 = vsel %vm9449, %v9450, %v9442
        %v9452 = vsel %vm9445, %v9448, %v9451
        %v9453 = vsel %vm9443, nan, %v9452
        %v9454 = vand.u32 2147483647, %v8315
        %vm9455 = vcmp.le.f32.partialorder %v9454, 0.7853982
        %vm9456 = vcmp.lt.s32.totalorder %v8315, 0
        %v9457 = vand.u32 %v8315, 2139095040
        %v9458 = vshrl.u32 %v9457, 23
        %v9459 = vsub.s32 %v9458, 127
        %v9460 = vand.u32 2147483647, %v8315
        %v9461 = vand.u32 %v9460, 8388607
        %v9462 = vor.u32 %v9461, 8388608
        %v9463 = vsub.s32 0, %v9462
        %v9464 = vadd.s32 %v9459, 1
        %vm9465 = vcmp.gt.s32.totalorder %v9464, 0
        %v9466 = vsel %vm9465, %v9464, 0
        %v9467 = vshrl.u32 %v9466, 5
        %v9468 = vand.u32 %v9466, 31
        %v9469 = vsub.s32 32, %v9468
        %v9470 = vshrl.u32 683565275, %v9469
        %v9471 = vshll.u32 683565275, %v9468
        %v9472 = vshrl.u32 2475754826, %v9469
        %v9473 = vor.u32 %v9471, %v9472
        %v9474 = vshll.u32 2475754826, %v9468
        %v9475 = vshrl.u32 2131351028, %v9469
        %v9476 = vor.u32 %v9474, %v9475
        %v9477 = vshll.u32 2131351028, %v9468
        %v9478 = vshrl.u32 2102212464, %v9469
        %v9479 = vor.u32 %v9477, %v9478
        %v9480 = vshll.u32 2102212464, %v9468
        %v9481 = vshrl.u32 920167782, %v9469
        %v9482 = vor.u32 %v9480, %v9481
        %v9483 = vshll.u32 920167782, %v9468
        %v9484 = vshrl.u32 1326507024, %v9469
        %v9485 = vor.u32 %v9483, %v9484
        %vm9486 = vcmp.lt.s32.totalorder %v9467, 1
        %vm9487 = vcmp.lt.s32.totalorder %v9467, 2
        %vm9488 = vcmp.lt.s32.totalorder %v9467, 3
        %vm9489 = vcmp.lt.s32.totalorder %v9467, 4
        %v9490 = vsel %vm9486, %v9470, %v9473
        %v9491 = vsel %vm9489, %v9479, 2102212464
        %v9492 = vsel %vm9488, %v9476, %v9491
        %v9493 = vsel %vm9487, %v9490, %v9492
        %v9494 = vsel %vm9486, %v9473, %v9476
        %v9495 = vsel %vm9489, %v9482, 920167782
        %v9496 = vsel %vm9488, %v9479, %v9495
        %v9497 = vsel %vm9487, %v9494, %v9496
        %v9498 = vsel %vm9486, %v9476, %v9479
        %v9499 = vsel %vm9489, %v9485, 1326507024
        %v9500 = vsel %vm9488, %v9482, %v9499
        %v9501 = vsel %vm9487, %v9498, %v9500
        %v9502 = vshll.u32 %v9462, 8
        %v9503 = vmul.u32.u64.compose %v9502, %v9501
        %v9504 = vextract.low.u32 %v9503
        %v9505 = vextract.high.u32 %v9503
        %v9506 = vmul.u32.u64.compose %v9502, %v9497
        %v9507 = vextract.low.u32 %v9506
        %v9508 = vextract.high.u32 %v9506
        %v9509 = vmul.u32 %v9502, %v9493
        %v9510 = vadd.s32 %v9505, %v9507
        %vm9511 = vc.u32 %v9505, %v9507
        %v9512 = vadd.s32 %v9508, 1
        %v9513 = vsel %vm9511, %v9512, %v9508
        %v9514 = vadd.s32 %v9509, %v9513
        %v9515 = vadd.s32 %v9514, 536870912
        %v9516 = vshrl.u32 %v9515, 30
        %v9517 = vshll.u32 %v9516, 30
        %v9518 = vsub.s32 %v9514, %v9517
        %vm9519 = vcmp.lt.s32.totalorder %v9518, 0
        %v9520 = vsub.s32 0, %v9518
        %v9521 = vsel %vm9519, %v9520, %v9518
        %v9522 = vclz %v9521
        %v9523 = vsub.s32 %v9522, 2
        %vm9524 = vcmp.gt.s32.totalorder 0, %v9523
        %v9525 = vsel %vm9524, 0, %v9523
        %v9526 = vsub.s32 32, %v9525
        %v9527 = vshll.u32 %v9518, %v9525
        %v9528 = vshrl.u32 %v9510, %v9526
        %v9529 = vor.u32 %v9527, %v9528
        %v9530 = vsub.s32 4294967266, %v9525
        %v9531 = vadd.s32 %v9530, 127
        %v9532 = vshll.u32 %v9531, 23
        %v9533 = vor.u32 4788187, %v9532
        %v9534 = vand.u32 2147483647, %v9533
        %v9536 = vcvt.s32.f32 %v9529
        %v9537 = vmul.f32 %v9536, %v9534
        %v9538 = vxor.u32 %v9537, 2147483648
        %v9539 = vsel %vm9456, %v9538, %v9537
        %v9540 = vsub.s32 4, %v9516
        %v9541 = vsel %vm9456, %v9540, %v9516
        %v9542 = vsel %vm9455, %v8315, %v9539
        %v9543 = vsel %vm9455, 0, %v9541
        %v9544 = vcosq.f32.pop %v9542
        %v9545 = vsinq.f32.pop %v9542
        %vm9546 = vweird.f32 %v8315
        %v9547 = vand.u32 %v9543, 3
        %vm9548 = vcmp.lt.s32.totalorder %v9547, 2
        %vm9549 = vcmp.eq.s32.totalorder %v9547, 0
        %v9550 = vxor.u32 %v9545, 2147483648
        %v9551 = vsel %vm9549, %v9544, %v9550
        %vm9552 = vcmp.eq.s32.totalorder %v9547, 2
        %v9553 = vxor.u32 %v9544, 2147483648
        %v9554 = vsel %vm9552, %v9553, %v9545
        %v9555 = vsel %vm9548, %v9551, %v9554
        %v9556 = vsel %vm9546, nan, %v9555
        %v9557 = vand.u32 2147483647, %v8316
        %vm9558 = vcmp.le.f32.partialorder %v9557, 0.7853982
        %vm9559 = vcmp.lt.s32.totalorder %v8316, 0
        %v9560 = vand.u32 %v8316, 2139095040
        %v9561 = vshrl.u32 %v9560, 23
        %v9562 = vsub.s32 %v9561, 127
        %v9563 = vand.u32 2147483647, %v8316
        %v9564 = vand.u32 %v9563, 8388607
        %v9565 = vor.u32 %v9564, 8388608
        %v9566 = vsub.s32 0, %v9565
        %v9567 = vadd.s32 %v9562, 1
        %vm9568 = vcmp.gt.s32.totalorder %v9567, 0
        %v9569 = vsel %vm9568, %v9567, 0
        %v9570 = vshrl.u32 %v9569, 5
        %v9571 = vand.u32 %v9569, 31
        %v9572 = vsub.s32 32, %v9571
        %v9573 = vshrl.u32 683565275, %v9572
        %v9574 = vshll.u32 683565275, %v9571
        %v9575 = vshrl.u32 2475754826, %v9572
        %v9576 = vor.u32 %v9574, %v9575
        %v9577 = vshll.u32 2475754826, %v9571
        %v9578 = vshrl.u32 2131351028, %v9572
        %v9579 = vor.u32 %v9577, %v9578
        %v9580 = vshll.u32 2131351028, %v9571
        %v9581 = vshrl.u32 2102212464, %v9572
        %v9582 = vor.u32 %v9580, %v9581
        %v9583 = vshll.u32 2102212464, %v9571
        %v9584 = vshrl.u32 920167782, %v9572
        %v9585 = vor.u32 %v9583, %v9584
        %v9586 = vshll.u32 920167782, %v9571
        %v9587 = vshrl.u32 1326507024, %v9572
        %v9588 = vor.u32 %v9586, %v9587
        %vm9589 = vcmp.lt.s32.totalorder %v9570, 1
        %vm9590 = vcmp.lt.s32.totalorder %v9570, 2
        %vm9591 = vcmp.lt.s32.totalorder %v9570, 3
        %vm9592 = vcmp.lt.s32.totalorder %v9570, 4
        %v9593 = vsel %vm9589, %v9573, %v9576
        %v9594 = vsel %vm9592, %v9582, 2102212464
        %v9595 = vsel %vm9591, %v9579, %v9594
        %v9596 = vsel %vm9590, %v9593, %v9595
        %v9597 = vsel %vm9589, %v9576, %v9579
        %v9598 = vsel %vm9592, %v9585, 920167782
        %v9599 = vsel %vm9591, %v9582, %v9598
        %v9600 = vsel %vm9590, %v9597, %v9599
        %v9601 = vsel %vm9589, %v9579, %v9582
        %v9602 = vsel %vm9592, %v9588, 1326507024
        %v9603 = vsel %vm9591, %v9585, %v9602
        %v9604 = vsel %vm9590, %v9601, %v9603
        %v9605 = vshll.u32 %v9565, 8
        %v9606 = vmul.u32.u64.compose %v9605, %v9604
        %v9607 = vextract.low.u32 %v9606
        %v9608 = vextract.high.u32 %v9606
        %v9609 = vmul.u32.u64.compose %v9605, %v9600
        %v9610 = vextract.low.u32 %v9609
        %v9611 = vextract.high.u32 %v9609
        %v9612 = vmul.u32 %v9605, %v9596
        %v9613 = vadd.s32 %v9608, %v9610
        %vm9614 = vc.u32 %v9608, %v9610
        %v9615 = vadd.s32 %v9611, 1
        %v9616 = vsel %vm9614, %v9615, %v9611
        %v9617 = vadd.s32 %v9612, %v9616
        %v9618 = vadd.s32 %v9617, 536870912
        %v9619 = vshrl.u32 %v9618, 30
        %v9620 = vshll.u32 %v9619, 30
        %v9621 = vsub.s32 %v9617, %v9620
        %vm9622 = vcmp.lt.s32.totalorder %v9621, 0
        %v9623 = vsub.s32 0, %v9621
        %v9624 = vsel %vm9622, %v9623, %v9621
        %v9625 = vclz %v9624
        %v9626 = vsub.s32 %v9625, 2
        %vm9627 = vcmp.gt.s32.totalorder 0, %v9626
        %v9628 = vsel %vm9627, 0, %v9626
        %v9629 = vsub.s32 32, %v9628
        %v9630 = vshll.u32 %v9621, %v9628
        %v9631 = vshrl.u32 %v9613, %v9629
        %v9632 = vor.u32 %v9630, %v9631
        %v9633 = vsub.s32 4294967266, %v9628
        %v9634 = vadd.s32 %v9633, 127
        %v9635 = vshll.u32 %v9634, 23
        %v9636 = vor.u32 4788187, %v9635
        %v9637 = vand.u32 2147483647, %v9636
        %v9639 = vcvt.s32.f32 %v9632
        %v9640 = vmul.f32 %v9639, %v9637
        %v9641 = vxor.u32 %v9640, 2147483648
        %v9642 = vsel %vm9559, %v9641, %v9640
        %v9643 = vsub.s32 4, %v9619
        %v9644 = vsel %vm9559, %v9643, %v9619
        %v9645 = vsel %vm9558, %v8316, %v9642
        %v9646 = vsel %vm9558, 0, %v9644
        %v9647 = vcosq.f32.pop %v9645
        %v9648 = vsinq.f32.pop %v9645
        %vm9649 = vweird.f32 %v8316
        %v9650 = vand.u32 %v9646, 3
        %vm9651 = vcmp.lt.s32.totalorder %v9650, 2
        %vm9652 = vcmp.eq.s32.totalorder %v9650, 0
        %v9653 = vxor.u32 %v9648, 2147483648
        %v9654 = vsel %vm9652, %v9647, %v9653
        %vm9655 = vcmp.eq.s32.totalorder %v9650, 2
        %v9656 = vxor.u32 %v9647, 2147483648
        %v9657 = vsel %vm9655, %v9656, %v9648
        %v9658 = vsel %vm9651, %v9654, %v9657
        %v9659 = vsel %vm9649, nan, %v9658
        %v9660 = vand.u32 2147483647, %v8317
        %vm9661 = vcmp.le.f32.partialorder %v9660, 0.7853982
        %vm9662 = vcmp.lt.s32.totalorder %v8317, 0
        %v9663 = vand.u32 %v8317, 2139095040
        %v9664 = vshrl.u32 %v9663, 23
        %v9665 = vsub.s32 %v9664, 127
        %v9666 = vand.u32 2147483647, %v8317
        %v9667 = vand.u32 %v9666, 8388607
        %v9668 = vor.u32 %v9667, 8388608
        %v9669 = vsub.s32 0, %v9668
        %v9670 = vadd.s32 %v9665, 1
        %vm9671 = vcmp.gt.s32.totalorder %v9670, 0
        %v9672 = vsel %vm9671, %v9670, 0
        %v9673 = vshrl.u32 %v9672, 5
        %v9674 = vand.u32 %v9672, 31
        %v9675 = vsub.s32 32, %v9674
        %v9676 = vshrl.u32 683565275, %v9675
        %v9677 = vshll.u32 683565275, %v9674
        %v9678 = vshrl.u32 2475754826, %v9675
        %v9679 = vor.u32 %v9677, %v9678
        %v9680 = vshll.u32 2475754826, %v9674
        %v9681 = vshrl.u32 2131351028, %v9675
        %v9682 = vor.u32 %v9680, %v9681
        %v9683 = vshll.u32 2131351028, %v9674
        %v9684 = vshrl.u32 2102212464, %v9675
        %v9685 = vor.u32 %v9683, %v9684
        %v9686 = vshll.u32 2102212464, %v9674
        %v9687 = vshrl.u32 920167782, %v9675
        %v9688 = vor.u32 %v9686, %v9687
        %v9689 = vshll.u32 920167782, %v9674
        %v9690 = vshrl.u32 1326507024, %v9675
        %v9691 = vor.u32 %v9689, %v9690
        %vm9692 = vcmp.lt.s32.totalorder %v9673, 1
        %vm9693 = vcmp.lt.s32.totalorder %v9673, 2
        %vm9694 = vcmp.lt.s32.totalorder %v9673, 3
        %vm9695 = vcmp.lt.s32.totalorder %v9673, 4
        %v9696 = vsel %vm9692, %v9676, %v9679
        %v9697 = vsel %vm9695, %v9685, 2102212464
        %v9698 = vsel %vm9694, %v9682, %v9697
        %v9699 = vsel %vm9693, %v9696, %v9698
        %v9700 = vsel %vm9692, %v9679, %v9682
        %v9701 = vsel %vm9695, %v9688, 920167782
        %v9702 = vsel %vm9694, %v9685, %v9701
        %v9703 = vsel %vm9693, %v9700, %v9702
        %v9704 = vsel %vm9692, %v9682, %v9685
        %v9705 = vsel %vm9695, %v9691, 1326507024
        %v9706 = vsel %vm9694, %v9688, %v9705
        %v9707 = vsel %vm9693, %v9704, %v9706
        %v9708 = vshll.u32 %v9668, 8
        %v9709 = vmul.u32.u64.compose %v9708, %v9707
        %v9710 = vextract.low.u32 %v9709
        %v9711 = vextract.high.u32 %v9709
        %v9712 = vmul.u32.u64.compose %v9708, %v9703
        %v9713 = vextract.low.u32 %v9712
        %v9714 = vextract.high.u32 %v9712
        %v9715 = vmul.u32 %v9708, %v9699
        %v9716 = vadd.s32 %v9711, %v9713
        %vm9717 = vc.u32 %v9711, %v9713
        %v9718 = vadd.s32 %v9714, 1
        %v9719 = vsel %vm9717, %v9718, %v9714
        %v9720 = vadd.s32 %v9715, %v9719
        %v9721 = vadd.s32 %v9720, 536870912
        %v9722 = vshrl.u32 %v9721, 30
        %v9723 = vshll.u32 %v9722, 30
        %v9724 = vsub.s32 %v9720, %v9723
        %vm9725 = vcmp.lt.s32.totalorder %v9724, 0
        %v9726 = vsub.s32 0, %v9724
        %v9727 = vsel %vm9725, %v9726, %v9724
        %v9728 = vclz %v9727
        %v9729 = vsub.s32 %v9728, 2
        %vm9730 = vcmp.gt.s32.totalorder 0, %v9729
        %v9731 = vsel %vm9730, 0, %v9729
        %v9732 = vsub.s32 32, %v9731
        %v9733 = vshll.u32 %v9724, %v9731
        %v9734 = vshrl.u32 %v9716, %v9732
        %v9735 = vor.u32 %v9733, %v9734
        %v9736 = vsub.s32 4294967266, %v9731
        %v9737 = vadd.s32 %v9736, 127
        %v9738 = vshll.u32 %v9737, 23
        %v9739 = vor.u32 4788187, %v9738
        %v9740 = vand.u32 2147483647, %v9739
        %v9742 = vcvt.s32.f32 %v9735
        %v9743 = vmul.f32 %v9742, %v9740
        %v9744 = vxor.u32 %v9743, 2147483648
        %v9745 = vsel %vm9662, %v9744, %v9743
        %v9746 = vsub.s32 4, %v9722
        %v9747 = vsel %vm9662, %v9746, %v9722
        %v9748 = vsel %vm9661, %v8317, %v9745
        %v9749 = vsel %vm9661, 0, %v9747
        %v9750 = vcosq.f32.pop %v9748
        %v9751 = vsinq.f32.pop %v9748
        %vm9752 = vweird.f32 %v8317
        %v9753 = vand.u32 %v9749, 3
        %vm9754 = vcmp.lt.s32.totalorder %v9753, 2
        %vm9755 = vcmp.eq.s32.totalorder %v9753, 0
        %v9756 = vxor.u32 %v9751, 2147483648
        %v9757 = vsel %vm9755, %v9750, %v9756
        %vm9758 = vcmp.eq.s32.totalorder %v9753, 2
        %v9759 = vxor.u32 %v9750, 2147483648
        %v9760 = vsel %vm9758, %v9759, %v9751
        %v9761 = vsel %vm9754, %v9757, %v9760
        %v9762 = vsel %vm9752, nan, %v9761
        %v9763 = vand.u32 2147483647, %v8318
        %vm9764 = vcmp.le.f32.partialorder %v9763, 0.7853982
        %vm9765 = vcmp.lt.s32.totalorder %v8318, 0
        %v9766 = vand.u32 %v8318, 2139095040
        %v9767 = vshrl.u32 %v9766, 23
        %v9768 = vsub.s32 %v9767, 127
        %v9769 = vand.u32 2147483647, %v8318
        %v9770 = vand.u32 %v9769, 8388607
        %v9771 = vor.u32 %v9770, 8388608
        %v9772 = vsub.s32 0, %v9771
        %v9773 = vadd.s32 %v9768, 1
        %vm9774 = vcmp.gt.s32.totalorder %v9773, 0
        %v9775 = vsel %vm9774, %v9773, 0
        %v9776 = vshrl.u32 %v9775, 5
        %v9777 = vand.u32 %v9775, 31
        %v9778 = vsub.s32 32, %v9777
        %v9779 = vshrl.u32 683565275, %v9778
        %v9780 = vshll.u32 683565275, %v9777
        %v9781 = vshrl.u32 2475754826, %v9778
        %v9782 = vor.u32 %v9780, %v9781
        %v9783 = vshll.u32 2475754826, %v9777
        %v9784 = vshrl.u32 2131351028, %v9778
        %v9785 = vor.u32 %v9783, %v9784
        %v9786 = vshll.u32 2131351028, %v9777
        %v9787 = vshrl.u32 2102212464, %v9778
        %v9788 = vor.u32 %v9786, %v9787
        %v9789 = vshll.u32 2102212464, %v9777
        %v9790 = vshrl.u32 920167782, %v9778
        %v9791 = vor.u32 %v9789, %v9790
        %v9792 = vshll.u32 920167782, %v9777
        %v9793 = vshrl.u32 1326507024, %v9778
        %v9794 = vor.u32 %v9792, %v9793
        %vm9795 = vcmp.lt.s32.totalorder %v9776, 1
        %vm9796 = vcmp.lt.s32.totalorder %v9776, 2
        %vm9797 = vcmp.lt.s32.totalorder %v9776, 3
        %vm9798 = vcmp.lt.s32.totalorder %v9776, 4
        %v9799 = vsel %vm9795, %v9779, %v9782
        %v9800 = vsel %vm9798, %v9788, 2102212464
        %v9801 = vsel %vm9797, %v9785, %v9800
        %v9802 = vsel %vm9796, %v9799, %v9801
        %v9803 = vsel %vm9795, %v9782, %v9785
        %v9804 = vsel %vm9798, %v9791, 920167782
        %v9805 = vsel %vm9797, %v9788, %v9804
        %v9806 = vsel %vm9796, %v9803, %v9805
        %v9807 = vsel %vm9795, %v9785, %v9788
        %v9808 = vsel %vm9798, %v9794, 1326507024
        %v9809 = vsel %vm9797, %v9791, %v9808
        %v9810 = vsel %vm9796, %v9807, %v9809
        %v9811 = vshll.u32 %v9771, 8
        %v9812 = vmul.u32.u64.compose %v9811, %v9810
        %v9813 = vextract.low.u32 %v9812
        %v9814 = vextract.high.u32 %v9812
        %v9815 = vmul.u32.u64.compose %v9811, %v9806
        %v9816 = vextract.low.u32 %v9815
        %v9817 = vextract.high.u32 %v9815
        %v9818 = vmul.u32 %v9811, %v9802
        %v9819 = vadd.s32 %v9814, %v9816
        %vm9820 = vc.u32 %v9814, %v9816
        %v9821 = vadd.s32 %v9817, 1
        %v9822 = vsel %vm9820, %v9821, %v9817
        %v9823 = vadd.s32 %v9818, %v9822
        %v9824 = vadd.s32 %v9823, 536870912
        %v9825 = vshrl.u32 %v9824, 30
        %v9826 = vshll.u32 %v9825, 30
        %v9827 = vsub.s32 %v9823, %v9826
        %vm9828 = vcmp.lt.s32.totalorder %v9827, 0
        %v9829 = vsub.s32 0, %v9827
        %v9830 = vsel %vm9828, %v9829, %v9827
        %v9831 = vclz %v9830
        %v9832 = vsub.s32 %v9831, 2
        %vm9833 = vcmp.gt.s32.totalorder 0, %v9832
        %v9834 = vsel %vm9833, 0, %v9832
        %v9835 = vsub.s32 32, %v9834
        %v9836 = vshll.u32 %v9827, %v9834
        %v9837 = vshrl.u32 %v9819, %v9835
        %v9838 = vor.u32 %v9836, %v9837
        %v9839 = vsub.s32 4294967266, %v9834
        %v9840 = vadd.s32 %v9839, 127
        %v9841 = vshll.u32 %v9840, 23
        %v9842 = vor.u32 4788187, %v9841
        %v9843 = vand.u32 2147483647, %v9842
        %v9845 = vcvt.s32.f32 %v9838
        %v9846 = vmul.f32 %v9845, %v9843
        %v9847 = vxor.u32 %v9846, 2147483648
        %v9848 = vsel %vm9765, %v9847, %v9846
        %v9849 = vsub.s32 4, %v9825
        %v9850 = vsel %vm9765, %v9849, %v9825
        %v9851 = vsel %vm9764, %v8318, %v9848
        %v9852 = vsel %vm9764, 0, %v9850
        %v9853 = vcosq.f32.pop %v9851
        %v9854 = vsinq.f32.pop %v9851
        %vm9855 = vweird.f32 %v8318
        %v9856 = vand.u32 %v9852, 3
        %vm9857 = vcmp.lt.s32.totalorder %v9856, 2
        %vm9858 = vcmp.eq.s32.totalorder %v9856, 0
        %v9859 = vxor.u32 %v9854, 2147483648
        %v9860 = vsel %vm9858, %v9853, %v9859
        %vm9861 = vcmp.eq.s32.totalorder %v9856, 2
        %v9862 = vxor.u32 %v9853, 2147483648
        %v9863 = vsel %vm9861, %v9862, %v9854
        %v9864 = vsel %vm9857, %v9860, %v9863
        %v9865 = vsel %vm9855, nan, %v9864
        %v9866 = vand.u32 2147483647, %v8319
        %vm9867 = vcmp.le.f32.partialorder %v9866, 0.7853982
        %vm9868 = vcmp.lt.s32.totalorder %v8319, 0
        %v9869 = vand.u32 %v8319, 2139095040
        %v9870 = vshrl.u32 %v9869, 23
        %v9871 = vsub.s32 %v9870, 127
        %v9872 = vand.u32 2147483647, %v8319
        %v9873 = vand.u32 %v9872, 8388607
        %v9874 = vor.u32 %v9873, 8388608
        %v9875 = vsub.s32 0, %v9874
        %v9876 = vadd.s32 %v9871, 1
        %vm9877 = vcmp.gt.s32.totalorder %v9876, 0
        %v9878 = vsel %vm9877, %v9876, 0
        %v9879 = vshrl.u32 %v9878, 5
        %v9880 = vand.u32 %v9878, 31
        %v9881 = vsub.s32 32, %v9880
        %v9882 = vshrl.u32 683565275, %v9881
        %v9883 = vshll.u32 683565275, %v9880
        %v9884 = vshrl.u32 2475754826, %v9881
        %v9885 = vor.u32 %v9883, %v9884
        %v9886 = vshll.u32 2475754826, %v9880
        %v9887 = vshrl.u32 2131351028, %v9881
        %v9888 = vor.u32 %v9886, %v9887
        %v9889 = vshll.u32 2131351028, %v9880
        %v9890 = vshrl.u32 2102212464, %v9881
        %v9891 = vor.u32 %v9889, %v9890
        %v9892 = vshll.u32 2102212464, %v9880
        %v9893 = vshrl.u32 920167782, %v9881
        %v9894 = vor.u32 %v9892, %v9893
        %v9895 = vshll.u32 920167782, %v9880
        %v9896 = vshrl.u32 1326507024, %v9881
        %v9897 = vor.u32 %v9895, %v9896
        %vm9898 = vcmp.lt.s32.totalorder %v9879, 1
        %vm9899 = vcmp.lt.s32.totalorder %v9879, 2
        %vm9900 = vcmp.lt.s32.totalorder %v9879, 3
        %vm9901 = vcmp.lt.s32.totalorder %v9879, 4
        %v9902 = vsel %vm9898, %v9882, %v9885
        %v9903 = vsel %vm9901, %v9891, 2102212464
        %v9904 = vsel %vm9900, %v9888, %v9903
        %v9905 = vsel %vm9899, %v9902, %v9904
        %v9906 = vsel %vm9898, %v9885, %v9888
        %v9907 = vsel %vm9901, %v9894, 920167782
        %v9908 = vsel %vm9900, %v9891, %v9907
        %v9909 = vsel %vm9899, %v9906, %v9908
        %v9910 = vsel %vm9898, %v9888, %v9891
        %v9911 = vsel %vm9901, %v9897, 1326507024
        %v9912 = vsel %vm9900, %v9894, %v9911
        %v9913 = vsel %vm9899, %v9910, %v9912
        %v9914 = vshll.u32 %v9874, 8
        %v9915 = vmul.u32.u64.compose %v9914, %v9913
        %v9916 = vextract.low.u32 %v9915
        %v9917 = vextract.high.u32 %v9915
        %v9918 = vmul.u32.u64.compose %v9914, %v9909
        %v9919 = vextract.low.u32 %v9918
        %v9920 = vextract.high.u32 %v9918
        %v9921 = vmul.u32 %v9914, %v9905
        %v9922 = vadd.s32 %v9917, %v9919
        %vm9923 = vc.u32 %v9917, %v9919
        %v9924 = vadd.s32 %v9920, 1
        %v9925 = vsel %vm9923, %v9924, %v9920
        %v9926 = vadd.s32 %v9921, %v9925
        %v9927 = vadd.s32 %v9926, 536870912
        %v9928 = vshrl.u32 %v9927, 30
        %v9929 = vshll.u32 %v9928, 30
        %v9930 = vsub.s32 %v9926, %v9929
        %vm9931 = vcmp.lt.s32.totalorder %v9930, 0
        %v9932 = vsub.s32 0, %v9930
        %v9933 = vsel %vm9931, %v9932, %v9930
        %v9934 = vclz %v9933
        %v9935 = vsub.s32 %v9934, 2
        %vm9936 = vcmp.gt.s32.totalorder 0, %v9935
        %v9937 = vsel %vm9936, 0, %v9935
        %v9938 = vsub.s32 32, %v9937
        %v9939 = vshll.u32 %v9930, %v9937
        %v9940 = vshrl.u32 %v9922, %v9938
        %v9941 = vor.u32 %v9939, %v9940
        %v9942 = vsub.s32 4294967266, %v9937
        %v9943 = vadd.s32 %v9942, 127
        %v9944 = vshll.u32 %v9943, 23
        %v9945 = vor.u32 4788187, %v9944
        %v9946 = vand.u32 2147483647, %v9945
        %v9948 = vcvt.s32.f32 %v9941
        %v9949 = vmul.f32 %v9948, %v9946
        %v9950 = vxor.u32 %v9949, 2147483648
        %v9951 = vsel %vm9868, %v9950, %v9949
        %v9952 = vsub.s32 4, %v9928
        %v9953 = vsel %vm9868, %v9952, %v9928
        %v9954 = vsel %vm9867, %v8319, %v9951
        %v9955 = vsel %vm9867, 0, %v9953
        %v9956 = vcosq.f32.pop %v9954
        %v9957 = vsinq.f32.pop %v9954
        %vm9958 = vweird.f32 %v8319
        %v9959 = vand.u32 %v9955, 3
        %vm9960 = vcmp.lt.s32.totalorder %v9959, 2
        %vm9961 = vcmp.eq.s32.totalorder %v9959, 0
        %v9962 = vxor.u32 %v9957, 2147483648
        %v9963 = vsel %vm9961, %v9956, %v9962
        %vm9964 = vcmp.eq.s32.totalorder %v9959, 2
        %v9965 = vxor.u32 %v9956, 2147483648
        %v9966 = vsel %vm9964, %v9965, %v9957
        %v9967 = vsel %vm9960, %v9963, %v9966
        %v9968 = vsel %vm9958, nan, %v9967
        %v9969 = vand.u32 2147483647, %v8320
        %vm9970 = vcmp.le.f32.partialorder %v9969, 0.7853982
        %vm9971 = vcmp.lt.s32.totalorder %v8320, 0
        %v9972 = vand.u32 %v8320, 2139095040
        %v9973 = vshrl.u32 %v9972, 23
        %v9974 = vsub.s32 %v9973, 127
        %v9975 = vand.u32 2147483647, %v8320
        %v9976 = vand.u32 %v9975, 8388607
        %v9977 = vor.u32 %v9976, 8388608
        %v9978 = vsub.s32 0, %v9977
        %v9979 = vadd.s32 %v9974, 1
        %vm9980 = vcmp.gt.s32.totalorder %v9979, 0
        %v9981 = vsel %vm9980, %v9979, 0
        %v9982 = vshrl.u32 %v9981, 5
        %v9983 = vand.u32 %v9981, 31
        %v9984 = vsub.s32 32, %v9983
        %v9985 = vshrl.u32 683565275, %v9984
        %v9986 = vshll.u32 683565275, %v9983
        %v9987 = vshrl.u32 2475754826, %v9984
        %v9988 = vor.u32 %v9986, %v9987
        %v9989 = vshll.u32 2475754826, %v9983
        %v9990 = vshrl.u32 2131351028, %v9984
        %v9991 = vor.u32 %v9989, %v9990
        %v9992 = vshll.u32 2131351028, %v9983
        %v9993 = vshrl.u32 2102212464, %v9984
        %v9994 = vor.u32 %v9992, %v9993
        %v9995 = vshll.u32 2102212464, %v9983
        %v9996 = vshrl.u32 920167782, %v9984
        %v9997 = vor.u32 %v9995, %v9996
        %v9998 = vshll.u32 920167782, %v9983
        %v9999 = vshrl.u32 1326507024, %v9984
        %v10000 = vor.u32 %v9998, %v9999
        %vm10001 = vcmp.lt.s32.totalorder %v9982, 1
        %vm10002 = vcmp.lt.s32.totalorder %v9982, 2
        %vm10003 = vcmp.lt.s32.totalorder %v9982, 3
        %vm10004 = vcmp.lt.s32.totalorder %v9982, 4
        %v10005 = vsel %vm10001, %v9985, %v9988
        %v10006 = vsel %vm10004, %v9994, 2102212464
        %v10007 = vsel %vm10003, %v9991, %v10006
        %v10008 = vsel %vm10002, %v10005, %v10007
        %v10009 = vsel %vm10001, %v9988, %v9991
        %v10010 = vsel %vm10004, %v9997, 920167782
        %v10011 = vsel %vm10003, %v9994, %v10010
        %v10012 = vsel %vm10002, %v10009, %v10011
        %v10013 = vsel %vm10001, %v9991, %v9994
        %v10014 = vsel %vm10004, %v10000, 1326507024
        %v10015 = vsel %vm10003, %v9997, %v10014
        %v10016 = vsel %vm10002, %v10013, %v10015
        %v10017 = vshll.u32 %v9977, 8
        %v10018 = vmul.u32.u64.compose %v10017, %v10016
        %v10019 = vextract.low.u32 %v10018
        %v10020 = vextract.high.u32 %v10018
        %v10021 = vmul.u32.u64.compose %v10017, %v10012
        %v10022 = vextract.low.u32 %v10021
        %v10023 = vextract.high.u32 %v10021
        %v10024 = vmul.u32 %v10017, %v10008
        %v10025 = vadd.s32 %v10020, %v10022
        %vm10026 = vc.u32 %v10020, %v10022
        %v10027 = vadd.s32 %v10023, 1
        %v10028 = vsel %vm10026, %v10027, %v10023
        %v10029 = vadd.s32 %v10024, %v10028
        %v10030 = vadd.s32 %v10029, 536870912
        %v10031 = vshrl.u32 %v10030, 30
        %v10032 = vshll.u32 %v10031, 30
        %v10033 = vsub.s32 %v10029, %v10032
        %vm10034 = vcmp.lt.s32.totalorder %v10033, 0
        %v10035 = vsub.s32 0, %v10033
        %v10036 = vsel %vm10034, %v10035, %v10033
        %v10037 = vclz %v10036
        %v10038 = vsub.s32 %v10037, 2
        %vm10039 = vcmp.gt.s32.totalorder 0, %v10038
        %v10040 = vsel %vm10039, 0, %v10038
        %v10041 = vsub.s32 32, %v10040
        %v10042 = vshll.u32 %v10033, %v10040
        %v10043 = vshrl.u32 %v10025, %v10041
        %v10044 = vor.u32 %v10042, %v10043
        %v10045 = vsub.s32 4294967266, %v10040
        %v10046 = vadd.s32 %v10045, 127
        %v10047 = vshll.u32 %v10046, 23
        %v10048 = vor.u32 4788187, %v10047
        %v10049 = vand.u32 2147483647, %v10048
        %v10051 = vcvt.s32.f32 %v10044
        %v10052 = vmul.f32 %v10051, %v10049
        %v10053 = vxor.u32 %v10052, 2147483648
        %v10054 = vsel %vm9971, %v10053, %v10052
        %v10055 = vsub.s32 4, %v10031
        %v10056 = vsel %vm9971, %v10055, %v10031
        %v10057 = vsel %vm9970, %v8320, %v10054
        %v10058 = vsel %vm9970, 0, %v10056
        %v10059 = vcosq.f32.pop %v10057
        %v10060 = vsinq.f32.pop %v10057
        %vm10061 = vweird.f32 %v8320
        %v10062 = vand.u32 %v10058, 3
        %vm10063 = vcmp.lt.s32.totalorder %v10062, 2
        %vm10064 = vcmp.eq.s32.totalorder %v10062, 0
        %v10065 = vxor.u32 %v10060, 2147483648
        %v10066 = vsel %vm10064, %v10059, %v10065
        %vm10067 = vcmp.eq.s32.totalorder %v10062, 2
        %v10068 = vxor.u32 %v10059, 2147483648
        %v10069 = vsel %vm10067, %v10068, %v10060
        %v10070 = vsel %vm10063, %v10066, %v10069
        %v10071 = vsel %vm10061, nan, %v10070
        %v10075 = vlaneseq
        %v10076 = vshrl.u32 %v10075, 7
        %v10077 = vsub.s32 0, %v10076
        %v10078 = vrot.slane %v7989, %v10077
        %v10079 = vlaneseq
        %v10080 = vshrl.u32 %v10079, 7
        %v10081 = vsub.s32 1, %v10080
        %v10082 = vrot.slane %v7989, %v10081
        %v10083 = vlaneseq
        %v10084 = vshrl.u32 %v10083, 7
        %v10085 = vsub.s32 2, %v10084
        %v10086 = vrot.slane %v7989, %v10085
        %v10087 = vlaneseq
        %v10088 = vshrl.u32 %v10087, 7
        %v10089 = vsub.s32 3, %v10088
        %v10090 = vrot.slane %v7989, %v10089
        %v10091 = vlaneseq
        %v10092 = vshrl.u32 %v10091, 7
        %v10093 = vsub.s32 4, %v10092
        %v10094 = vrot.slane %v7989, %v10093
        %v10095 = vlaneseq
        %v10096 = vshrl.u32 %v10095, 7
        %v10097 = vsub.s32 5, %v10096
        %v10098 = vrot.slane %v7989, %v10097
        %v10099 = vlaneseq
        %v10100 = vshrl.u32 %v10099, 7
        %v10101 = vsub.s32 6, %v10100
        %v10102 = vrot.slane %v7989, %v10101
        %v10103 = vlaneseq
        %v10104 = vshrl.u32 %v10103, 7
        %v10105 = vsub.s32 7, %v10104
        %v10106 = vrot.slane %v7989, %v10105
        %v10107 = vlaneseq
        %v10108 = vshrl.u32 %v10107, 7
        %v10109 = vsub.s32 0, %v10108
        %v10110 = vrot.slane %v7993, %v10109
        %v10111 = vlaneseq
        %v10112 = vshrl.u32 %v10111, 7
        %v10113 = vsub.s32 1, %v10112
        %v10114 = vrot.slane %v7993, %v10113
        %v10115 = vlaneseq
        %v10116 = vshrl.u32 %v10115, 7
        %v10117 = vsub.s32 2, %v10116
        %v10118 = vrot.slane %v7993, %v10117
        %v10119 = vlaneseq
        %v10120 = vshrl.u32 %v10119, 7
        %v10121 = vsub.s32 3, %v10120
        %v10122 = vrot.slane %v7993, %v10121
        %v10123 = vlaneseq
        %v10124 = vshrl.u32 %v10123, 7
        %v10125 = vsub.s32 4, %v10124
        %v10126 = vrot.slane %v7993, %v10125
        %v10127 = vlaneseq
        %v10128 = vshrl.u32 %v10127, 7
        %v10129 = vsub.s32 5, %v10128
        %v10130 = vrot.slane %v7993, %v10129
        %v10131 = vlaneseq
        %v10132 = vshrl.u32 %v10131, 7
        %v10133 = vsub.s32 6, %v10132
        %v10134 = vrot.slane %v7993, %v10133
        %v10135 = vlaneseq
        %v10136 = vshrl.u32 %v10135, 7
        %v10137 = vsub.s32 7, %v10136
        %v10138 = vrot.slane %v7993, %v10137
        %v10139 = vlaneseq
        %v10140 = vshrl.u32 %v10139, 7
        %v10141 = vsub.s32 0, %v10140
        %v10142 = vrot.slane %v7995, %v10141
        %v10160 = vmul.f32 %v10078, %v8423
        %v10161 = vmul.f32 %v10082, %v8526
        %v10162 = vmul.f32 %v10086, %v8629
        %v10163 = vmul.f32 %v10090, %v8732
        %v10164 = vmul.f32 %v10094, %v8835
        %v10165 = vmul.f32 %v10098, %v8938
        %v10166 = vmul.f32 %v10102, %v9041
        %v10167 = vmul.f32 %v10106, %v9144
        %v10168 = vmul.f32 %v10110, %v9247
        %v10169 = vmul.f32 %v10114, %v9350
        %v10170 = vmul.f32 %v10118, %v9453
        %v10171 = vmul.f32 %v10122, %v9556
        %v10172 = vmul.f32 %v10126, %v9659
        %v10173 = vmul.f32 %v10130, %v9762
        %v10174 = vmul.f32 %v10134, %v9865
        %v10175 = vmul.f32 %v10138, %v9968
        %v10176 = vmul.f32 %v10142, %v10071
        %v10177 = vadd.f32 %v8094, %v10160
        %v10178 = vadd.f32 %v8095, %v10161
        %v10179 = vadd.f32 %v8096, %v10162
        %v10180 = vadd.f32 %v8097, %v10163
        %v10181 = vadd.f32 %v8098, %v10164
        %v10182 = vadd.f32 %v8099, %v10165
        %v10183 = vadd.f32 %v8100, %v10166
        %v10184 = vadd.f32 %v8101, %v10167
        %v10185 = vadd.f32 %v8102, %v10168
        %v10186 = vadd.f32 %v8103, %v10169
        %v10187 = vadd.f32 %v8104, %v10170
        %v10188 = vadd.f32 %v8105, %v10171
        %v10189 = vadd.f32 %v8106, %v10172
        %v10190 = vadd.f32 %v8107, %v10173
        %v10191 = vadd.f32 %v8108, %v10174
        %v10192 = vadd.f32 %v8109, %v10175
        %v10193 = vadd.f32 %v8110, %v10176
        %10194 = vst [vmem:[%s212] sm:$0xff] %v10177
        %10195 = vst [vmem:[%s212 + $0x8] sm:$0xff] %v10178
        %10196 = vst [vmem:[%s212 + $0x10] sm:$0xff] %v10179
        %10197 = vst [vmem:[%s212 + $0x18] sm:$0xff] %v10180
        %10198 = vst [vmem:[%s212 + $0x20] sm:$0xff] %v10181
        %10199 = vst [vmem:[%s212 + $0x28] sm:$0xff] %v10182
        %10200 = vst [vmem:[%s212 + $0x30] sm:$0xff] %v10183
        %10201 = vst [vmem:[%s212 + $0x38] sm:$0xff] %v10184
        %10202 = vst [vmem:[%s212 + $0x40] sm:$0xff] %v10185
        %10203 = vst [vmem:[%s212 + $0x48] sm:$0xff] %v10186
        %10204 = vst [vmem:[%s212 + $0x50] sm:$0xff] %v10187
        %10205 = vst [vmem:[%s212 + $0x58] sm:$0xff] %v10188
        %10206 = vst [vmem:[%s212 + $0x60] sm:$0xff] %v10189
        %10207 = vst [vmem:[%s212 + $0x68] sm:$0xff] %v10190
        %10208 = vst [vmem:[%s212 + $0x70] sm:$0xff] %v10191
        %10209 = vst [vmem:[%s212 + $0x78] sm:$0xff] %v10192
        %10210 = vst [vmem:[%s212 + $0x80] sm:$0xff] %v10193
        %s10211 = sand.u32 %s97, 1
        %s10212 = scalar_lea.sflag [#allocation4], %s10211
        %s10213 = sand.u32 %s97, 1
        %s10214 = smul.addr %s10213, 136
        %s10215 = scalar_lea.vmem [#allocation8], %s10214
        // Predicated region
        $region45: #{tpu_custom_call.1} parent=31 // pred_check
          %p10216 = pneg %p107
        $region46: #{tpu_custom_call.1} parent=31 // pred_check_branch
          %10218 = sbr.rel (%p10216) target = $region48
        $region47: #{tpu_custom_call.1} parent=31 // pred_region
          %s10220 = ssub.s32 2176, 2176
          %10221 = vsyncadd %s10212, %s10220
          %s10222 = smul.addr %s21, 17
          %s10223 = smul.addr %s10222, 128
          %s10224 = scalar_lea.hbm %s3, %s10223
          %s10226 = sshll.u32 %s10215, 4
          %s10227 = int_to_ptr.vmem [resolvable:$true] %s10226
          %10229 = dma.vmem_to_hbm [thread:$0]  %s10227, 2176, %s10224, %s10212
        $region48: #{tpu_custom_call.1} parent=31 // pred_fallthru
          _
      $region32: #{tpu_custom_call.1} parent=5 // pred_fallthru
        _
      %p10230 = scmp.le.s32.totalorder 2, %s16
      // Predicated region
      $region49: #{tpu_custom_call.1} parent=5 // pred_check
        %p10231 = pneg %p10230
      $region50: #{tpu_custom_call.1} parent=5 // pred_check_branch
        %10233 = sbr.rel (%p10231) target = $region52
      $region51: #{tpu_custom_call.1} parent=5 // pred_region
        %s10234 = ssub.s32 %s16, 2
        // Predicated region
        $region53: #{tpu_custom_call.1} parent=51 // pred_check
          %p10235 = pneg %p113
        $region54: #{tpu_custom_call.1} parent=51 // pred_check_branch
          %10237 = sbr.rel (%p10235) target = $region56
        $region55: #{tpu_custom_call.1} parent=51 // pred_region
          %s10238 = sand.u32 %s98, 1
          %s10239 = scalar_lea.sflag [#allocation4], %s10238
          %s10240 = sand.u32 %s98, 1
          %s10241 = smul.addr %s10240, 136
          %s10242 = scalar_lea.vmem [#allocation8], %s10241
          %10243 = dma.done %s10239, 2176
        $region56: #{tpu_custom_call.1} parent=51 // pred_fallthru
          _
      $region52: #{tpu_custom_call.1} parent=5 // pred_fallthru
        _
    $region6: #{tpu_custom_call.1} parent=1 // loop_footer
      %s20 = sadd.s32 1, %s16
    $region7: #{tpu_custom_call.1} parent=1 // loop_footer_branch
      %15 = sbr.rel target = $region3
    $region8: #{tpu_custom_call.1} parent=1 // loop_exit
      _
    %10244 = vsyncpa [#allocation3], 1
    %s10245 = scalar_lea.sflag [#allocation3], 1
    %10246 = vsyncpa %s10245, 1
    %10247 = vsyncpa [#allocation6], 1
    %10248 = vsyncpa [#allocation4], 1
    %s10249 = scalar_lea.sflag [#allocation4], 1
    %10250 = vsyncpa %s10249, 1

</llo_original>
